<compile_context>
chip_gen: v7x
topology: tpu7x:2x2x1
jax: 0.10.0
libtpu: 0.0.40
codegen_flags: <defaults>
</compile_context>

<pallas_src>
import functools

import jax
import jax.numpy as jnp
from jax.experimental import pallas as pl
from jax.experimental.pallas import tpu as pltpu

_EPS = 1e-5
_PAD = 128  # lane-aligned zero padding used for in-register spatial shifts


# ----------------------------------------------------------------------------
# The fused Pallas kernel (one grid step == one batch element)
# ----------------------------------------------------------------------------

def _refinenet_kernel(x1_ref, x2_ref, w1a_ref, b1a_ref, w1b_ref, b1b_ref,
                      w3_ref, b3_ref, normp_ref, o_ref, *, H, W, eps):
    HW = H * W
    f32 = jnp.float32

    # Column index of every flat spatial position (1, HW); used to mask lane
    # shifts that would wrap across image rows.
    col = jax.lax.broadcasted_iota(jnp.int32, (1, HW), 1) % W
    cmask = {dx: jnp.logical_and(col + dx >= 0, col + dx < W).astype(f32)
             for dx in (-2, -1, 1, 2)}

    def padded(x):
        # (C, HW) -> (C, HW + 2*_PAD) with lane-aligned zero blocks.
        z = jnp.zeros((x.shape[0], _PAD), f32)
        return jnp.concatenate([z, x, z], axis=1)

    def shifted(xp, off):
        # y[:, p] = x[:, p + off], zero outside [0, HW).
        return xp[:, _PAD + off:_PAD + off + HW]

    def conv3x3(x, j):
        # x: (C, HW); w3_ref[j]: (C, 9C) with column order (kh, kw, cin).
        xp = padded(x)
        taps = []
        for kh in range(3):
            for kw in range(3):
                dy, dx = kh - 1, kw - 1
                t = shifted(xp, dy * W + dx)
                if dx != 0:
                    t = t * cmask[dx]          # zero taps that cross a row edge
                taps.append(t)
        patches = jnp.concatenate(taps, axis=0)                 # (9C, HW)
        w = w3_ref[j]                                           # (C, 9C)
        b = b3_ref[j]                                           # (C, 1)
        return jnp.dot(w, patches, preferred_element_type=f32) + b

    def conv1x1(x, w_ref, b_ref):
        # w_ref: (Cout, Cin), b_ref: (Cout, 1)
        return jnp.dot(w_ref[...], x, preferred_element_type=f32) + b_ref[...]

    def cin(x, j):
        # Conditional instance norm; normp_ref[0, j] is (C, 3) = [gamma|beta|alpha].
        C = x.shape[0]
        gba = normp_ref[0, j]
        g, b, a = gba[:, 0:1], gba[:, 1:2], gba[:, 2:3]
        mu = jnp.mean(x, axis=1, keepdims=True)                        # (C, 1)
        # torch.var default is unbiased (divide by N-1) -> keep that here.
        var = jnp.sum((x - mu) ** 2, axis=1, keepdims=True) * (1.0 / (HW - 1))
        y = g * ((x - mu) * jax.lax.rsqrt(var + eps)) + b
        m = jnp.mean(mu, axis=0, keepdims=True)                        # (1, 1)
        if C == 1:
            shift = a * (mu - m)
        else:
            v = jnp.sum((mu - m) ** 2, axis=0, keepdims=True) * (1.0 / (C - 1))
            shift = a * (mu - m) * jax.lax.rsqrt(v + eps)
        return y + shift

    def elu(x):
        return jnp.where(x > 0.0, x, jnp.exp(jnp.minimum(x, 0.0)) - 1.0)

    def avgpool5(x):
        # Separable 5x5 avg pool, stride 1, pad 2, count_include_pad=True (/25).
        xp = padded(x)
        h = x
        for dx in (-2, -1, 1, 2):
            h = h + shifted(xp, dx) * cmask[dx]
        hp = padded(h)
        v = h
        for dy in (-2, -1, 1, 2):
            v = v + shifted(hp, dy * W)
        return v * (1.0 / 25.0)

    def rcu(x, nb, cb):          # ResidualConvUnit
        h = conv3x3(elu(cin(x, nb)), cb)
        h = conv3x3(elu(cin(h, nb + 1)), cb + 1)
        return x + h

    def acb(x, w_ref, b_ref, nb, cb):   # AdaptiveConvBlock
        h = conv1x1(x, w_ref, b_ref)
        h = rcu(h, nb, cb)
        return rcu(h, nb + 2, cb + 2)

    def rpb(x, nb, cb):          # ResidualPoolingBlock
        return conv3x3(cin(avgpool5(cin(x, nb)), nb + 1), cb)

    x1 = x1_ref[0].astype(f32)   # (C1, HW)
    x2 = x2_ref[0].astype(f32)   # (C2, HW)

    # --- AdaptiveConvBlocks (norm idx 0..7, conv3 idx 0..7) ---
    h1 = acb(x1, w1a_ref, b1a_ref, nb=0, cb=0)
    h2 = acb(x2, w1b_ref, b1b_ref, nb=4, cb=4)

    # --- MultiResolutionFusion (norm 8,9; conv3 8,9) ---
    h = conv3x3(cin(h1, 8), 8) + conv3x3(cin(h2, 9), 9)

    # --- ChainedResidualPool (norm 10..13; conv3 10,11) ---
    h = elu(h)
    p1 = rpb(h, 10, 10)
    acc = h + p1
    p2 = rpb(p1, 12, 11)
    acc = acc + p2

    # --- Output ResidualConvUnit (norm 14,15; conv3 12,13) ---
    out = rcu(acc, 14, 12)

    o_ref[0] = out.astype(o_ref.dtype)


# ----------------------------------------------------------------------------
# Parameter packing (gathers + reshapes done once per call in plain JAX)
# ----------------------------------------------------------------------------

def _pack_params(params, idx):
    p = params
    C = p["out"]["conv1"]["w"].shape[3]

    norm_order = [
        p["adap_x1"]["rcu2"]["norm1"], p["adap_x1"]["rcu2"]["norm2"],
        p["adap_x1"]["rcu3"]["norm1"], p["adap_x1"]["rcu3"]["norm2"],
        p["adap_x2"]["rcu2"]["norm1"], p["adap_x2"]["rcu2"]["norm2"],
        p["adap_x2"]["rcu3"]["norm1"], p["adap_x2"]["rcu3"]["norm2"],
        p["fusion"]["norm1"], p["fusion"]["norm2"],
        p["pool"]["pool1"]["norm1"], p["pool"]["pool1"]["norm2"],
        p["pool"]["pool2"]["norm1"], p["pool"]["pool2"]["norm2"],
        p["out"]["norm1"], p["out"]["norm2"],
    ]
    conv3_order = [
        p["adap_x1"]["rcu2"]["conv1"], p["adap_x1"]["rcu2"]["conv2"],
        p["adap_x1"]["rcu3"]["conv1"], p["adap_x1"]["rcu3"]["conv2"],
        p["adap_x2"]["rcu2"]["conv1"], p["adap_x2"]["rcu2"]["conv2"],
        p["adap_x2"]["rcu3"]["conv1"], p["adap_x2"]["rcu3"]["conv2"],
        p["fusion"]["conv1"], p["fusion"]["conv2"],
        p["pool"]["pool1"]["conv1"], p["pool"]["pool2"]["conv1"],
        p["out"]["conv1"], p["out"]["conv2"],
    ]

    # (B, 16, C, 3): per-sample gathered (gamma, beta, alpha) per channel.
    normp = jnp.stack(
        [jnp.stack([n["gamma"][idx], n["beta"][idx], n["alpha"][idx]], axis=-1)
         for n in norm_order], axis=1)

    # (14, C, 9C): w3[j][cout, (kh*3+kw)*C + cin] = w[kh, kw, cin, cout]
    w3 = jnp.stack([c["w"].transpose(3, 0, 1, 2).reshape(C, 9 * C)
                    for c in conv3_order], axis=0)
    b3 = jnp.stack([c["b"] for c in conv3_order], axis=0)[:, :, None]   # (14, C, 1)

    w1a = p["adap_x1"]["conv1"]["w"][0, 0].T       # (C, C1)
    b1a = p["adap_x1"]["conv1"]["b"][:, None]      # (C, 1)
    w1b = p["adap_x2"]["conv1"]["w"][0, 0].T       # (C, C2)
    b1b = p["adap_x2"]["conv1"]["b"][:, None]      # (C, 1)
    return normp, w3, b3, w1a, b1a, w1b, b1b


# ----------------------------------------------------------------------------
# Public forward (one pallas_call)
# ----------------------------------------------------------------------------

def refinenet_apply(params, x1, x2, noise_scale_idx):
    """Fused RefineNetBlock forward. x1/x2 are NCHW: (B, C_in, H, W)."""
    if x2 is None:
        # TODO(synk): x2=None path (fusion is the identity) is not fused here.
        raise NotImplementedError("fused kernel requires both x1 and x2")

    B, C1, H, W = x1.shape
    C2 = x2.shape[1]
    HW = H * W

    normp, w3, b3, w1a, b1a, w1b, b1b = _pack_params(params, noise_scale_idx)
    C = w3.shape[1]
    n_norm, n_conv3 = normp.shape[1], w3.shape[0]

    out = pl.pallas_call(
        functools.partial(_refinenet_kernel, H=H, W=W, eps=_EPS),
        out_shape=jax.ShapeDtypeStruct((B, C, HW), x1.dtype),
        grid=(B,),
        in_specs=[
            pl.BlockSpec((1, C1, HW), lambda i: (i, 0, 0)),
            pl.BlockSpec((1, C2, HW), lambda i: (i, 0, 0)),
            pl.BlockSpec((C, C1), lambda i: (0, 0)),
            pl.BlockSpec((C, 1), lambda i: (0, 0)),
            pl.BlockSpec((C, C2), lambda i: (0, 0)),
            pl.BlockSpec((C, 1), lambda i: (0, 0)),
            pl.BlockSpec((n_conv3, C, 9 * C), lambda i: (0, 0, 0)),
            pl.BlockSpec((n_conv3, C, 1), lambda i: (0, 0, 0)),
            pl.BlockSpec((1, n_norm, C, 3), lambda i: (i, 0, 0, 0)),
        ],
        out_specs=pl.BlockSpec((1, C, HW), lambda i: (i, 0, 0)),
        compiler_params=pltpu.CompilerParams(
            dimension_semantics=("parallel",)),   # shard batch across v7x TCs
    )(x1.reshape(B, C1, HW), x2.reshape(B, C2, HW),
      w1a, b1a, w1b, b1b, w3, b3, normp)
    return out.reshape(B, C, H, W)


# ----------------------------------------------------------------------------
# Pure-JAX (XLA) reference of the same module, for in-script verification
# ----------------------------------------------------------------------------

def _ref_forward(params, x1, x2, idx, eps=_EPS):
    def cin(p, x):
        g = p["gamma"][idx][:, :, None, None]
        b = p["beta"][idx][:, :, None, None]
        a = p["alpha"][idx][:, :, None, None]
        mu = jnp.mean(x, axis=(2, 3), keepdims=True)
        var = jnp.var(x, axis=(2, 3), keepdims=True, ddof=1)
        y = g * (x - mu) / jnp.sqrt(var + eps) + b
        m = jnp.mean(mu, axis=1, keepdims=True)
        if x.shape[1] == 1:
            s = jnp.ones_like(mu)
        else:
            s = jnp.sqrt(jnp.var(mu, axis=1, keepdims=True, ddof=1) + eps)
        return y + a * (mu - m) / s

    def conv(p, x):
        w = jnp.transpose(p["w"], (3, 2, 0, 1))  # (Cout, Cin, K, K)
        out = jax.lax.conv_general_dilated(
            x, w, (1, 1), "SAME",
            dimension_numbers=("NCHW", "OIHW", "NCHW"),
            precision=jax.lax.Precision.HIGHEST)
        return out + p["b"][None, :, None, None]

    def elu(x):
        return jnp.where(x > 0.0, x, jnp.exp(jnp.minimum(x, 0.0)) - 1.0)

    def pool5(x):
        s = jax.lax.reduce_window(x, 0.0, jax.lax.add, (1, 1, 5, 5), (1, 1, 1, 1),
                                  ((0, 0), (0, 0), (2, 2), (2, 2)))
        return s / 25.0

    def rcu(p, x):
        h = conv(p["conv1"], elu(cin(p["norm1"], x)))
        h = conv(p["conv2"], elu(cin(p["norm2"], h)))
        return x + h

    def acb(p, x):
        h = conv(p["conv1"], x)
        h = rcu(p["rcu2"], h)
        return rcu(p["rcu3"], h)

    def rpb(p, x):
        return conv(p["conv1"], cin(p["norm2"], pool5(cin(p["norm1"], x))))

    h1 = acb(params["adap_x1"], x1)
    h2 = acb(params["adap_x2"], x2)
    h = (conv(params["fusion"]["conv1"], cin(params["fusion"]["norm1"], h1))
         + conv(params["fusion"]["conv2"], cin(params["fusion"]["norm2"], h2)))
    h = elu(h)
    p1 = rpb(params["pool"]["pool1"], h)
    xx = h + p1
    p2 = rpb(params["pool"]["pool2"], p1)
    xx = xx + p2
    return rcu(params["out"], xx)


# ----------------------------------------------------------------------------
# Deterministic parameter initialization (shapes follow the PyTorch __init__)
# ----------------------------------------------------------------------------

def init_params(key, x1_in, x2_in, channels, n_noise):
    keys = iter(jax.random.split(key, 256))

    def conv_p(cin, cout, k):
        scale = 1.0 / ((k * k * cin) ** 0.5)
        w = jax.random.normal(next(keys), (k, k, cin, cout), jnp.float32) * scale
        b = jax.random.normal(next(keys), (cout,), jnp.float32) * 0.05
        return {"w": w, "b": b}

    def cin_p(c):
        return {
            "gamma": 1.0 + 0.1 * jax.random.normal(next(keys), (n_noise, c), jnp.float32),
            "beta": 0.1 * jax.random.normal(next(keys), (n_noise, c), jnp.float32),
            "alpha": 0.1 * jax.random.normal(next(keys), (n_noise, c), jnp.float32),
        }

    def rcu_p(c):
        return {"conv1": conv_p(c, c, 3), "conv2": conv_p(c, c, 3),
                "norm1": cin_p(c), "norm2": cin_p(c)}

    def acb_p(cin, c):
        return {"conv1": conv_p(cin, c, 1), "rcu2": rcu_p(c), "rcu3": rcu_p(c)}

    def rpb_p(c):
        return {"norm1": cin_p(c), "norm2": cin_p(c), "conv1": conv_p(c, c, 3)}

    return {
        "adap_x1": acb_p(x1_in, channels),
        "adap_x2": acb_p(x2_in, channels),
        "fusion": {"conv1": conv_p(channels, channels, 3),
                   "conv2": conv_p(channels, channels, 3),
                   "norm1": cin_p(channels), "norm2": cin_p(channels)},
        "pool": {"pool1": rpb_p(channels), "pool2": rpb_p(channels)},
        "out": rcu_p(channels),
    }


# ----------------------------------------------------------------------------
# Main
# ----------------------------------------------------------------------------

if __name__ == "__main__":
    B, H, W = 2, 16, 16
    x1_in, x2_in, channels, n_noise = 4, 6, 8, 10

    key = jax.random.PRNGKey(0)
    k1, k2, kp = jax.random.split(key, 3)
    # NCHW inputs, exactly like the PyTorch module.
    x1 = jax.random.normal(k1, (B, x1_in, H, W), jnp.float32)
    x2 = jax.random.normal(k2, (B, x2_in, H, W), jnp.float32)
    noise_scale_idx = jnp.array([1, 4], dtype=jnp.int32)

    params = init_params(kp, x1_in, x2_in, channels, n_noise)

    fwd = jax.jit(refinenet_apply)
    out = fwd(params, x1, x2, noise_scale_idx)
    jax.block_until_ready(out)

    assert out.shape == (B, channels, H, W)
    assert bool(jnp.all(jnp.isfinite(out)))

    # Verify against the pure-JAX reference.  Loose bound covers MXU f32-matmul
    # emulation/precision differences; any indexing/masking bug would be O(1).
    ref = jax.jit(_ref_forward)(params, x1, x2, noise_scale_idx)
    err = float(jnp.max(jnp.abs(out - ref)))
    assert err < 0.3, f"kernel/reference mismatch: max abs err = {err}"

    print("KERNEL_OK")
</pallas_src>

<mosaic_0001>
module attributes {stable_mosaic.version = 11 : i64} {
  func.func @_refinenet_kernel(%arg0: i32, %arg1: memref<1x4x256xf32, #tpu.memory_space<vmem>>, %arg2: memref<1x6x256xf32, #tpu.memory_space<vmem>>, %arg3: memref<8x4xf32, #tpu.memory_space<vmem>>, %arg4: memref<8x1xf32, #tpu.memory_space<vmem>>, %arg5: memref<8x6xf32, #tpu.memory_space<vmem>>, %arg6: memref<8x1xf32, #tpu.memory_space<vmem>>, %arg7: memref<14x8x72xf32, #tpu.memory_space<vmem>>, %arg8: memref<14x8x1xf32, #tpu.memory_space<vmem>>, %arg9: memref<1x16x8x3xf32, #tpu.memory_space<vmem>>, %arg10: memref<1x8x256xf32, #tpu.memory_space<vmem>>) attributes {dimension_semantics = [#tpu.dimension_semantics<parallel>], iteration_bounds = array<i64: 2>, scalar_prefetch = 0 : i64, scratch_operands = 0 : i64, tpu.core_type = #tpu.core_type<tc>, window_params = [{transform_indices = @transform_0, window_bounds = array<i64: 1, 4, 256>}, {transform_indices = @transform_1, window_bounds = array<i64: 1, 6, 256>}, {pipeline_mode = #tpu.pipeline_mode<synchronous>, transform_indices = @transform_2, window_bounds = array<i64: 8, 4>}, {pipeline_mode = #tpu.pipeline_mode<synchronous>, transform_indices = @transform_3, window_bounds = array<i64: 8, 1>}, {pipeline_mode = #tpu.pipeline_mode<synchronous>, transform_indices = @transform_4, window_bounds = array<i64: 8, 6>}, {pipeline_mode = #tpu.pipeline_mode<synchronous>, transform_indices = @transform_5, window_bounds = array<i64: 8, 1>}, {pipeline_mode = #tpu.pipeline_mode<synchronous>, transform_indices = @transform_6, window_bounds = array<i64: 14, 8, 72>}, {pipeline_mode = #tpu.pipeline_mode<synchronous>, transform_indices = @transform_7, window_bounds = array<i64: 14, 8, 1>}, {transform_indices = @transform_8, window_bounds = array<i64: 1, 16, 8, 3>}, {transform_indices = @transform_9, window_bounds = array<i64: 1, 8, 256>}]} {
    %0 = tpu.iota {dimensions = array<i32: 1>} : vector<1x256xi32>
    %c16_i32 = arith.constant 16 : i32
    %c0_i32 = arith.constant 0 : i32
    %1 = arith.cmpi eq, %c16_i32, %c0_i32 : i32
    %c1_i32 = arith.constant 1 : i32
    %2 = arith.select %1, %c1_i32, %c16_i32 : i32
    %3 = vector.broadcast %2 : i32 to vector<1x256xi32>
    %4 = arith.remsi %0, %3 : vector<1x256xi32>
    %c0_i32_0 = arith.constant 0 : i32
    %5 = vector.broadcast %c0_i32_0 : i32 to vector<1x256xi32>
    %6 = arith.cmpi ne, %4, %5 : vector<1x256xi32>
    %c0_i32_1 = arith.constant 0 : i32
    %7 = vector.broadcast %c0_i32_1 : i32 to vector<1x256xi32>
    %8 = arith.cmpi slt, %4, %7 : vector<1x256xi32>
    %c0_i32_2 = arith.constant 0 : i32
    %9 = arith.cmpi slt, %2, %c0_i32_2 : i32
    %10 = vector.broadcast %9 : i1 to vector<1x256xi1>
    %11 = vector.broadcast %10 : vector<1x256xi1> to vector<1x256xi1>
    %12 = arith.xori %8, %11 : vector<1x256xi1>
    %13 = arith.andi %12, %6 : vector<1x256xi1>
    %14 = vector.broadcast %2 : i32 to vector<1x256xi32>
    %15 = arith.addi %4, %14 : vector<1x256xi32>
    %16 = arith.select %13, %15, %4 : vector<1x256xi1>, vector<1x256xi32>
    %c-2_i32 = arith.constant -2 : i32
    %17 = vector.broadcast %c-2_i32 : i32 to vector<1x256xi32>
    %18 = arith.addi %16, %17 : vector<1x256xi32>
    %c0_i32_3 = arith.constant 0 : i32
    %19 = vector.broadcast %c0_i32_3 : i32 to vector<1x256xi32>
    %20 = arith.cmpi sge, %18, %19 : vector<1x256xi32>
    %c-2_i32_4 = arith.constant -2 : i32
    %21 = vector.broadcast %c-2_i32_4 : i32 to vector<1x256xi32>
    %22 = arith.addi %16, %21 : vector<1x256xi32>
    %c16_i32_5 = arith.constant 16 : i32
    %23 = vector.broadcast %c16_i32_5 : i32 to vector<1x256xi32>
    %24 = arith.cmpi slt, %22, %23 : vector<1x256xi32>
    %25 = arith.andi %20, %24 : vector<1x256xi1>
    %26 = arith.extui %25 : vector<1x256xi1> to vector<1x256xi32>
    %27 = arith.sitofp %26 : vector<1x256xi32> to vector<1x256xf32>
    %c-1_i32 = arith.constant -1 : i32
    %28 = vector.broadcast %c-1_i32 : i32 to vector<1x256xi32>
    %29 = arith.addi %16, %28 : vector<1x256xi32>
    %c0_i32_6 = arith.constant 0 : i32
    %30 = vector.broadcast %c0_i32_6 : i32 to vector<1x256xi32>
    %31 = arith.cmpi sge, %29, %30 : vector<1x256xi32>
    %c-1_i32_7 = arith.constant -1 : i32
    %32 = vector.broadcast %c-1_i32_7 : i32 to vector<1x256xi32>
    %33 = arith.addi %16, %32 : vector<1x256xi32>
    %c16_i32_8 = arith.constant 16 : i32
    %34 = vector.broadcast %c16_i32_8 : i32 to vector<1x256xi32>
    %35 = arith.cmpi slt, %33, %34 : vector<1x256xi32>
    %36 = arith.andi %31, %35 : vector<1x256xi1>
    %37 = arith.extui %36 : vector<1x256xi1> to vector<1x256xi32>
    %38 = arith.sitofp %37 : vector<1x256xi32> to vector<1x256xf32>
    %c1_i32_9 = arith.constant 1 : i32
    %39 = vector.broadcast %c1_i32_9 : i32 to vector<1x256xi32>
    %40 = arith.addi %16, %39 : vector<1x256xi32>
    %c0_i32_10 = arith.constant 0 : i32
    %41 = vector.broadcast %c0_i32_10 : i32 to vector<1x256xi32>
    %42 = arith.cmpi sge, %40, %41 : vector<1x256xi32>
    %c1_i32_11 = arith.constant 1 : i32
    %43 = vector.broadcast %c1_i32_11 : i32 to vector<1x256xi32>
    %44 = arith.addi %16, %43 : vector<1x256xi32>
    %c16_i32_12 = arith.constant 16 : i32
    %45 = vector.broadcast %c16_i32_12 : i32 to vector<1x256xi32>
    %46 = arith.cmpi slt, %44, %45 : vector<1x256xi32>
    %47 = arith.andi %42, %46 : vector<1x256xi1>
    %48 = arith.extui %47 : vector<1x256xi1> to vector<1x256xi32>
    %49 = arith.sitofp %48 : vector<1x256xi32> to vector<1x256xf32>
    %c2_i32 = arith.constant 2 : i32
    %50 = vector.broadcast %c2_i32 : i32 to vector<1x256xi32>
    %51 = arith.addi %16, %50 : vector<1x256xi32>
    %c0_i32_13 = arith.constant 0 : i32
    %52 = vector.broadcast %c0_i32_13 : i32 to vector<1x256xi32>
    %53 = arith.cmpi sge, %51, %52 : vector<1x256xi32>
    %c2_i32_14 = arith.constant 2 : i32
    %54 = vector.broadcast %c2_i32_14 : i32 to vector<1x256xi32>
    %55 = arith.addi %16, %54 : vector<1x256xi32>
    %c16_i32_15 = arith.constant 16 : i32
    %56 = vector.broadcast %c16_i32_15 : i32 to vector<1x256xi32>
    %57 = arith.cmpi slt, %55, %56 : vector<1x256xi32>
    %58 = arith.andi %53, %57 : vector<1x256xi1>
    %59 = arith.extui %58 : vector<1x256xi1> to vector<1x256xi32>
    %60 = arith.sitofp %59 : vector<1x256xi32> to vector<1x256xf32>
    %c0 = arith.constant 0 : index
    %c0_16 = arith.constant 0 : index
    %c0_17 = arith.constant 0 : index
    %61 = vector.load %arg1[%c0, %c0_16, %c0_17] : memref<1x4x256xf32, #tpu.memory_space<vmem>>, vector<1x4x256xf32>
    %62 = vector.shape_cast %61 : vector<1x4x256xf32> to vector<4x256xf32>
    %c0_18 = arith.constant 0 : index
    %c0_19 = arith.constant 0 : index
    %c0_20 = arith.constant 0 : index
    %63 = vector.load %arg2[%c0_18, %c0_19, %c0_20] : memref<1x6x256xf32, #tpu.memory_space<vmem>>, vector<1x6x256xf32>
    %64 = vector.shape_cast %63 : vector<1x6x256xf32> to vector<6x256xf32>
    %c0_21 = arith.constant 0 : index
    %c0_22 = arith.constant 0 : index
    %65 = vector.load %arg3[%c0_21, %c0_22] : memref<8x4xf32, #tpu.memory_space<vmem>>, vector<8x4xf32>
    %cst = arith.constant dense<0.000000e+00> : vector<8x256xf32>
    %66 = tpu.matmul %65, %62, %cst {dimension_numbers = #tpu.dot_dimension_numbers<[1], [0], [0], [1], [0, 0, 1, 1], [], []>} : vector<8x4xf32>, vector<4x256xf32>, vector<8x256xf32> -> vector<8x256xf32>
    %c0_23 = arith.constant 0 : index
    %c0_24 = arith.constant 0 : index
    %67 = vector.load %arg4[%c0_23, %c0_24] : memref<8x1xf32, #tpu.memory_space<vmem>>, vector<8x1xf32>
    %68 = vector.broadcast %67 : vector<8x1xf32> to vector<8x256xf32>
    %69 = arith.addf %66, %68 : vector<8x256xf32>
    %c0_25 = arith.constant 0 : index
    %c0_26 = arith.constant 0 : index
    %c0_27 = arith.constant 0 : index
    %c0_28 = arith.constant 0 : index
    %70 = vector.load %arg9[%c0_25, %c0_26, %c0_27, %c0_28] : memref<1x16x8x3xf32, #tpu.memory_space<vmem>>, vector<1x1x8x3xf32>
    %71 = vector.shape_cast %70 : vector<1x1x8x3xf32> to vector<8x3xf32>
    %72 = vector.extract_strided_slice %71 {offsets = [0, 0], sizes = [8, 1], strides = [1, 1]} : vector<8x3xf32> to vector<8x1xf32>
    %73 = vector.extract_strided_slice %71 {offsets = [0, 1], sizes = [8, 1], strides = [1, 1]} : vector<8x3xf32> to vector<8x1xf32>
    %74 = vector.extract_strided_slice %71 {offsets = [0, 2], sizes = [8, 1], strides = [1, 1]} : vector<8x3xf32> to vector<8x1xf32>
    %cst_29 = arith.constant dense<0.000000e+00> : vector<8xf32>
    %75 = vector.multi_reduction <add>, %69, %cst_29 [1] : vector<8x256xf32> to vector<8xf32>
    %76 = vector.shape_cast %75 : vector<8xf32> to vector<8x1xf32>
    %cst_30 = arith.constant 2.560000e+02 : f32
    %77 = vector.broadcast %cst_30 : f32 to vector<8x1xf32>
    %78 = arith.divf %76, %77 : vector<8x1xf32>
    %79 = vector.broadcast %78 : vector<8x1xf32> to vector<8x256xf32>
    %80 = arith.subf %69, %79 : vector<8x256xf32>
    %81 = arith.mulf %80, %80 : vector<8x256xf32>
    %cst_31 = arith.constant dense<0.000000e+00> : vector<8xf32>
    %82 = vector.multi_reduction <add>, %81, %cst_31 [1] : vector<8x256xf32> to vector<8xf32>
    %83 = vector.shape_cast %82 : vector<8xf32> to vector<8x1xf32>
    %cst_32 = arith.constant 0.00392156886 : f32
    %84 = vector.broadcast %cst_32 : f32 to vector<8x1xf32>
    %85 = arith.mulf %83, %84 : vector<8x1xf32>
    %86 = vector.broadcast %78 : vector<8x1xf32> to vector<8x256xf32>
    %87 = arith.subf %69, %86 : vector<8x256xf32>
    %cst_33 = arith.constant 9.99999974E-6 : f32
    %88 = vector.broadcast %cst_33 : f32 to vector<8x1xf32>
    %89 = arith.addf %85, %88 : vector<8x1xf32>
    %90 = math.rsqrt %89 : vector<8x1xf32>
    %91 = vector.broadcast %90 : vector<8x1xf32> to vector<8x256xf32>
    %92 = arith.mulf %87, %91 : vector<8x256xf32>
    %93 = vector.broadcast %72 : vector<8x1xf32> to vector<8x256xf32>
    %94 = arith.mulf %93, %92 : vector<8x256xf32>
    %95 = vector.broadcast %73 : vector<8x1xf32> to vector<8x256xf32>
    %96 = arith.addf %94, %95 : vector<8x256xf32>
    %cst_34 = arith.constant dense<0.000000e+00> : vector<1xf32>
    %97 = vector.multi_reduction <add>, %78, %cst_34 [0] : vector<8x1xf32> to vector<1xf32>
    %98 = vector.shape_cast %97 : vector<1xf32> to vector<1x1xf32>
    %cst_35 = arith.constant 8.000000e+00 : f32
    %99 = vector.broadcast %cst_35 : f32 to vector<1x1xf32>
    %100 = arith.divf %98, %99 : vector<1x1xf32>
    %101 = vector.broadcast %100 : vector<1x1xf32> to vector<8x1xf32>
    %102 = arith.subf %78, %101 : vector<8x1xf32>
    %103 = arith.mulf %102, %102 : vector<8x1xf32>
    %cst_36 = arith.constant dense<0.000000e+00> : vector<1xf32>
    %104 = vector.multi_reduction <add>, %103, %cst_36 [0] : vector<8x1xf32> to vector<1xf32>
    %105 = vector.shape_cast %104 : vector<1xf32> to vector<1x1xf32>
    %cst_37 = arith.constant 0.142857149 : f32
    %106 = vector.broadcast %cst_37 : f32 to vector<1x1xf32>
    %107 = arith.mulf %105, %106 : vector<1x1xf32>
    %108 = vector.broadcast %100 : vector<1x1xf32> to vector<8x1xf32>
    %109 = arith.subf %78, %108 : vector<8x1xf32>
    %110 = arith.mulf %74, %109 : vector<8x1xf32>
    %cst_38 = arith.constant 9.99999974E-6 : f32
    %111 = vector.broadcast %cst_38 : f32 to vector<1x1xf32>
    %112 = arith.addf %107, %111 : vector<1x1xf32>
    %113 = math.rsqrt %112 : vector<1x1xf32>
    %114 = vector.broadcast %113 : vector<1x1xf32> to vector<8x1xf32>
    %115 = arith.mulf %110, %114 : vector<8x1xf32>
    %116 = vector.broadcast %115 : vector<8x1xf32> to vector<8x256xf32>
    %117 = arith.addf %96, %116 : vector<8x256xf32>
    %cst_39 = arith.constant 0.000000e+00 : f32
    %118 = vector.broadcast %cst_39 : f32 to vector<8x256xf32>
    %119 = arith.cmpf ogt, %117, %118 : vector<8x256xf32>
    %cst_40 = arith.constant 0.000000e+00 : f32
    %120 = vector.broadcast %cst_40 : f32 to vector<8x256xf32>
    %121 = arith.minimumf %117, %120 : vector<8x256xf32>
    %122 = math.exp %121 : vector<8x256xf32>
    %cst_41 = arith.constant 1.000000e+00 : f32
    %123 = vector.broadcast %cst_41 : f32 to vector<8x256xf32>
    %124 = arith.subf %122, %123 : vector<8x256xf32>
    %125 = arith.select %119, %117, %124 : vector<8x256xi1>, vector<8x256xf32>
    %cst_42 = arith.constant 0.000000e+00 : f32
    %126 = vector.broadcast %cst_42 : f32 to vector<8x128xf32>
    %127 = tpu.concatenate %126, %125, %126 in 1 : vector<8x128xf32>, vector<8x256xf32>, vector<8x128xf32> -> vector<8x512xf32>
    %128 = vector.extract_strided_slice %127 {offsets = [0, 111], sizes = [8, 256], strides = [1, 1]} : vector<8x512xf32> to vector<8x256xf32>
    %129 = vector.broadcast %38 : vector<1x256xf32> to vector<8x256xf32>
    %130 = arith.mulf %128, %129 : vector<8x256xf32>
    %131 = vector.extract_strided_slice %127 {offsets = [0, 112], sizes = [8, 256], strides = [1, 1]} : vector<8x512xf32> to vector<8x256xf32>
    %132 = vector.extract_strided_slice %127 {offsets = [0, 113], sizes = [8, 256], strides = [1, 1]} : vector<8x512xf32> to vector<8x256xf32>
    %133 = vector.broadcast %49 : vector<1x256xf32> to vector<8x256xf32>
    %134 = arith.mulf %132, %133 : vector<8x256xf32>
    %135 = vector.extract_strided_slice %127 {offsets = [0, 127], sizes = [8, 256], strides = [1, 1]} : vector<8x512xf32> to vector<8x256xf32>
    %136 = vector.broadcast %38 : vector<1x256xf32> to vector<8x256xf32>
    %137 = arith.mulf %135, %136 : vector<8x256xf32>
    %138 = vector.extract_strided_slice %127 {offsets = [0, 128], sizes = [8, 256], strides = [1, 1]} : vector<8x512xf32> to vector<8x256xf32>
    %139 = vector.extract_strided_slice %127 {offsets = [0, 129], sizes = [8, 256], strides = [1, 1]} : vector<8x512xf32> to vector<8x256xf32>
    %140 = vector.broadcast %49 : vector<1x256xf32> to vector<8x256xf32>
    %141 = arith.mulf %139, %140 : vector<8x256xf32>
    %142 = vector.extract_strided_slice %127 {offsets = [0, 143], sizes = [8, 256], strides = [1, 1]} : vector<8x512xf32> to vector<8x256xf32>
    %143 = vector.broadcast %38 : vector<1x256xf32> to vector<8x256xf32>
    %144 = arith.mulf %142, %143 : vector<8x256xf32>
    %145 = vector.extract_strided_slice %127 {offsets = [0, 144], sizes = [8, 256], strides = [1, 1]} : vector<8x512xf32> to vector<8x256xf32>
    %146 = vector.extract_strided_slice %127 {offsets = [0, 145], sizes = [8, 256], strides = [1, 1]} : vector<8x512xf32> to vector<8x256xf32>
    %147 = vector.broadcast %49 : vector<1x256xf32> to vector<8x256xf32>
    %148 = arith.mulf %146, %147 : vector<8x256xf32>
    %149 = tpu.concatenate %130, %131, %134, %137, %138, %141, %144, %145, %148 in 0 : vector<8x256xf32>, vector<8x256xf32>, vector<8x256xf32>, vector<8x256xf32>, vector<8x256xf32>, vector<8x256xf32>, vector<8x256xf32>, vector<8x256xf32>, vector<8x256xf32> -> vector<72x256xf32>
    %c0_43 = arith.constant 0 : index
    %c0_44 = arith.constant 0 : index
    %c0_45 = arith.constant 0 : index
    %150 = vector.load %arg7[%c0_43, %c0_44, %c0_45] : memref<14x8x72xf32, #tpu.memory_space<vmem>>, vector<1x8x72xf32>
    %151 = vector.shape_cast %150 : vector<1x8x72xf32> to vector<8x72xf32>
    %c0_46 = arith.constant 0 : index
    %c0_47 = arith.constant 0 : index
    %c0_48 = arith.constant 0 : index
    %152 = vector.load %arg8[%c0_46, %c0_47, %c0_48] : memref<14x8x1xf32, #tpu.memory_space<vmem>>, vector<1x8x1xf32>
    %153 = vector.shape_cast %152 : vector<1x8x1xf32> to vector<8x1xf32>
    %cst_49 = arith.constant dense<0.000000e+00> : vector<8x256xf32>
    %154 = tpu.matmul %151, %149, %cst_49 {dimension_numbers = #tpu.dot_dimension_numbers<[1], [0], [0], [1], [0, 0, 1, 1], [], []>} : vector<8x72xf32>, vector<72x256xf32>, vector<8x256xf32> -> vector<8x256xf32>
    %155 = vector.broadcast %153 : vector<8x1xf32> to vector<8x256xf32>
    %156 = arith.addf %154, %155 : vector<8x256xf32>
    %c0_50 = arith.constant 0 : index
    %c1 = arith.constant 1 : index
    %c0_51 = arith.constant 0 : index
    %c0_52 = arith.constant 0 : index
    %157 = vector.load %arg9[%c0_50, %c1, %c0_51, %c0_52] : memref<1x16x8x3xf32, #tpu.memory_space<vmem>>, vector<1x1x8x3xf32>
    %158 = vector.shape_cast %157 : vector<1x1x8x3xf32> to vector<8x3xf32>
    %159 = vector.extract_strided_slice %158 {offsets = [0, 0], sizes = [8, 1], strides = [1, 1]} : vector<8x3xf32> to vector<8x1xf32>
    %160 = vector.extract_strided_slice %158 {offsets = [0, 1], sizes = [8, 1], strides = [1, 1]} : vector<8x3xf32> to vector<8x1xf32>
    %161 = vector.extract_strided_slice %158 {offsets = [0, 2], sizes = [8, 1], strides = [1, 1]} : vector<8x3xf32> to vector<8x1xf32>
    %cst_53 = arith.constant dense<0.000000e+00> : vector<8xf32>
    %162 = vector.multi_reduction <add>, %156, %cst_53 [1] : vector<8x256xf32> to vector<8xf32>
    %163 = vector.shape_cast %162 : vector<8xf32> to vector<8x1xf32>
    %cst_54 = arith.constant 2.560000e+02 : f32
    %164 = vector.broadcast %cst_54 : f32 to vector<8x1xf32>
    %165 = arith.divf %163, %164 : vector<8x1xf32>
    %166 = vector.broadcast %165 : vector<8x1xf32> to vector<8x256xf32>
    %167 = arith.subf %156, %166 : vector<8x256xf32>
    %168 = arith.mulf %167, %167 : vector<8x256xf32>
    %cst_55 = arith.constant dense<0.000000e+00> : vector<8xf32>
    %169 = vector.multi_reduction <add>, %168, %cst_55 [1] : vector<8x256xf32> to vector<8xf32>
    %170 = vector.shape_cast %169 : vector<8xf32> to vector<8x1xf32>
    %cst_56 = arith.constant 0.00392156886 : f32
    %171 = vector.broadcast %cst_56 : f32 to vector<8x1xf32>
    %172 = arith.mulf %170, %171 : vector<8x1xf32>
    %173 = vector.broadcast %165 : vector<8x1xf32> to vector<8x256xf32>
    %174 = arith.subf %156, %173 : vector<8x256xf32>
    %cst_57 = arith.constant 9.99999974E-6 : f32
    %175 = vector.broadcast %cst_57 : f32 to vector<8x1xf32>
    %176 = arith.addf %172, %175 : vector<8x1xf32>
    %177 = math.rsqrt %176 : vector<8x1xf32>
    %178 = vector.broadcast %177 : vector<8x1xf32> to vector<8x256xf32>
    %179 = arith.mulf %174, %178 : vector<8x256xf32>
    %180 = vector.broadcast %159 : vector<8x1xf32> to vector<8x256xf32>
    %181 = arith.mulf %180, %179 : vector<8x256xf32>
    %182 = vector.broadcast %160 : vector<8x1xf32> to vector<8x256xf32>
    %183 = arith.addf %181, %182 : vector<8x256xf32>
    %cst_58 = arith.constant dense<0.000000e+00> : vector<1xf32>
    %184 = vector.multi_reduction <add>, %165, %cst_58 [0] : vector<8x1xf32> to vector<1xf32>
    %185 = vector.shape_cast %184 : vector<1xf32> to vector<1x1xf32>
    %cst_59 = arith.constant 8.000000e+00 : f32
    %186 = vector.broadcast %cst_59 : f32 to vector<1x1xf32>
    %187 = arith.divf %185, %186 : vector<1x1xf32>
    %188 = vector.broadcast %187 : vector<1x1xf32> to vector<8x1xf32>
    %189 = arith.subf %165, %188 : vector<8x1xf32>
    %190 = arith.mulf %189, %189 : vector<8x1xf32>
    %cst_60 = arith.constant dense<0.000000e+00> : vector<1xf32>
    %191 = vector.multi_reduction <add>, %190, %cst_60 [0] : vector<8x1xf32> to vector<1xf32>
    %192 = vector.shape_cast %191 : vector<1xf32> to vector<1x1xf32>
    %cst_61 = arith.constant 0.142857149 : f32
    %193 = vector.broadcast %cst_61 : f32 to vector<1x1xf32>
    %194 = arith.mulf %192, %193 : vector<1x1xf32>
    %195 = vector.broadcast %187 : vector<1x1xf32> to vector<8x1xf32>
    %196 = arith.subf %165, %195 : vector<8x1xf32>
    %197 = arith.mulf %161, %196 : vector<8x1xf32>
    %cst_62 = arith.constant 9.99999974E-6 : f32
    %198 = vector.broadcast %cst_62 : f32 to vector<1x1xf32>
    %199 = arith.addf %194, %198 : vector<1x1xf32>
    %200 = math.rsqrt %199 : vector<1x1xf32>
    %201 = vector.broadcast %200 : vector<1x1xf32> to vector<8x1xf32>
    %202 = arith.mulf %197, %201 : vector<8x1xf32>
    %203 = vector.broadcast %202 : vector<8x1xf32> to vector<8x256xf32>
    %204 = arith.addf %183, %203 : vector<8x256xf32>
    %cst_63 = arith.constant 0.000000e+00 : f32
    %205 = vector.broadcast %cst_63 : f32 to vector<8x256xf32>
    %206 = arith.cmpf ogt, %204, %205 : vector<8x256xf32>
    %cst_64 = arith.constant 0.000000e+00 : f32
    %207 = vector.broadcast %cst_64 : f32 to vector<8x256xf32>
    %208 = arith.minimumf %204, %207 : vector<8x256xf32>
    %209 = math.exp %208 : vector<8x256xf32>
    %cst_65 = arith.constant 1.000000e+00 : f32
    %210 = vector.broadcast %cst_65 : f32 to vector<8x256xf32>
    %211 = arith.subf %209, %210 : vector<8x256xf32>
    %212 = arith.select %206, %204, %211 : vector<8x256xi1>, vector<8x256xf32>
    %cst_66 = arith.constant 0.000000e+00 : f32
    %213 = vector.broadcast %cst_66 : f32 to vector<8x128xf32>
    %214 = tpu.concatenate %213, %212, %213 in 1 : vector<8x128xf32>, vector<8x256xf32>, vector<8x128xf32> -> vector<8x512xf32>
    %215 = vector.extract_strided_slice %214 {offsets = [0, 111], sizes = [8, 256], strides = [1, 1]} : vector<8x512xf32> to vector<8x256xf32>
    %216 = vector.broadcast %38 : vector<1x256xf32> to vector<8x256xf32>
    %217 = arith.mulf %215, %216 : vector<8x256xf32>
    %218 = vector.extract_strided_slice %214 {offsets = [0, 112], sizes = [8, 256], strides = [1, 1]} : vector<8x512xf32> to vector<8x256xf32>
    %219 = vector.extract_strided_slice %214 {offsets = [0, 113], sizes = [8, 256], strides = [1, 1]} : vector<8x512xf32> to vector<8x256xf32>
    %220 = vector.broadcast %49 : vector<1x256xf32> to vector<8x256xf32>
    %221 = arith.mulf %219, %220 : vector<8x256xf32>
    %222 = vector.extract_strided_slice %214 {offsets = [0, 127], sizes = [8, 256], strides = [1, 1]} : vector<8x512xf32> to vector<8x256xf32>
    %223 = vector.broadcast %38 : vector<1x256xf32> to vector<8x256xf32>
    %224 = arith.mulf %222, %223 : vector<8x256xf32>
    %225 = vector.extract_strided_slice %214 {offsets = [0, 128], sizes = [8, 256], strides = [1, 1]} : vector<8x512xf32> to vector<8x256xf32>
    %226 = vector.extract_strided_slice %214 {offsets = [0, 129], sizes = [8, 256], strides = [1, 1]} : vector<8x512xf32> to vector<8x256xf32>
    %227 = vector.broadcast %49 : vector<1x256xf32> to vector<8x256xf32>
    %228 = arith.mulf %226, %227 : vector<8x256xf32>
    %229 = vector.extract_strided_slice %214 {offsets = [0, 143], sizes = [8, 256], strides = [1, 1]} : vector<8x512xf32> to vector<8x256xf32>
    %230 = vector.broadcast %38 : vector<1x256xf32> to vector<8x256xf32>
    %231 = arith.mulf %229, %230 : vector<8x256xf32>
    %232 = vector.extract_strided_slice %214 {offsets = [0, 144], sizes = [8, 256], strides = [1, 1]} : vector<8x512xf32> to vector<8x256xf32>
    %233 = vector.extract_strided_slice %214 {offsets = [0, 145], sizes = [8, 256], strides = [1, 1]} : vector<8x512xf32> to vector<8x256xf32>
    %234 = vector.broadcast %49 : vector<1x256xf32> to vector<8x256xf32>
    %235 = arith.mulf %233, %234 : vector<8x256xf32>
    %236 = tpu.concatenate %217, %218, %221, %224, %225, %228, %231, %232, %235 in 0 : vector<8x256xf32>, vector<8x256xf32>, vector<8x256xf32>, vector<8x256xf32>, vector<8x256xf32>, vector<8x256xf32>, vector<8x256xf32>, vector<8x256xf32>, vector<8x256xf32> -> vector<72x256xf32>
    %c1_67 = arith.constant 1 : index
    %c0_68 = arith.constant 0 : index
    %c0_69 = arith.constant 0 : index
    %237 = vector.load %arg7[%c1_67, %c0_68, %c0_69] : memref<14x8x72xf32, #tpu.memory_space<vmem>>, vector<1x8x72xf32>
    %238 = vector.shape_cast %237 : vector<1x8x72xf32> to vector<8x72xf32>
    %c1_70 = arith.constant 1 : index
    %c0_71 = arith.constant 0 : index
    %c0_72 = arith.constant 0 : index
    %239 = vector.load %arg8[%c1_70, %c0_71, %c0_72] : memref<14x8x1xf32, #tpu.memory_space<vmem>>, vector<1x8x1xf32>
    %240 = vector.shape_cast %239 : vector<1x8x1xf32> to vector<8x1xf32>
    %cst_73 = arith.constant dense<0.000000e+00> : vector<8x256xf32>
    %241 = tpu.matmul %238, %236, %cst_73 {dimension_numbers = #tpu.dot_dimension_numbers<[1], [0], [0], [1], [0, 0, 1, 1], [], []>} : vector<8x72xf32>, vector<72x256xf32>, vector<8x256xf32> -> vector<8x256xf32>
    %242 = vector.broadcast %240 : vector<8x1xf32> to vector<8x256xf32>
    %243 = arith.addf %241, %242 : vector<8x256xf32>
    %244 = arith.addf %69, %243 : vector<8x256xf32>
    %c0_74 = arith.constant 0 : index
    %c2 = arith.constant 2 : index
    %c0_75 = arith.constant 0 : index
    %c0_76 = arith.constant 0 : index
    %245 = vector.load %arg9[%c0_74, %c2, %c0_75, %c0_76] : memref<1x16x8x3xf32, #tpu.memory_space<vmem>>, vector<1x1x8x3xf32>
    %246 = vector.shape_cast %245 : vector<1x1x8x3xf32> to vector<8x3xf32>
    %247 = vector.extract_strided_slice %246 {offsets = [0, 0], sizes = [8, 1], strides = [1, 1]} : vector<8x3xf32> to vector<8x1xf32>
    %248 = vector.extract_strided_slice %246 {offsets = [0, 1], sizes = [8, 1], strides = [1, 1]} : vector<8x3xf32> to vector<8x1xf32>
    %249 = vector.extract_strided_slice %246 {offsets = [0, 2], sizes = [8, 1], strides = [1, 1]} : vector<8x3xf32> to vector<8x1xf32>
    %cst_77 = arith.constant dense<0.000000e+00> : vector<8xf32>
    %250 = vector.multi_reduction <add>, %244, %cst_77 [1] : vector<8x256xf32> to vector<8xf32>
    %251 = vector.shape_cast %250 : vector<8xf32> to vector<8x1xf32>
    %cst_78 = arith.constant 2.560000e+02 : f32
    %252 = vector.broadcast %cst_78 : f32 to vector<8x1xf32>
    %253 = arith.divf %251, %252 : vector<8x1xf32>
    %254 = vector.broadcast %253 : vector<8x1xf32> to vector<8x256xf32>
    %255 = arith.subf %244, %254 : vector<8x256xf32>
    %256 = arith.mulf %255, %255 : vector<8x256xf32>
    %cst_79 = arith.constant dense<0.000000e+00> : vector<8xf32>
    %257 = vector.multi_reduction <add>, %256, %cst_79 [1] : vector<8x256xf32> to vector<8xf32>
    %258 = vector.shape_cast %257 : vector<8xf32> to vector<8x1xf32>
    %cst_80 = arith.constant 0.00392156886 : f32
    %259 = vector.broadcast %cst_80 : f32 to vector<8x1xf32>
    %260 = arith.mulf %258, %259 : vector<8x1xf32>
    %261 = vector.broadcast %253 : vector<8x1xf32> to vector<8x256xf32>
    %262 = arith.subf %244, %261 : vector<8x256xf32>
    %cst_81 = arith.constant 9.99999974E-6 : f32
    %263 = vector.broadcast %cst_81 : f32 to vector<8x1xf32>
    %264 = arith.addf %260, %263 : vector<8x1xf32>
    %265 = math.rsqrt %264 : vector<8x1xf32>
    %266 = vector.broadcast %265 : vector<8x1xf32> to vector<8x256xf32>
    %267 = arith.mulf %262, %266 : vector<8x256xf32>
    %268 = vector.broadcast %247 : vector<8x1xf32> to vector<8x256xf32>
    %269 = arith.mulf %268, %267 : vector<8x256xf32>
    %270 = vector.broadcast %248 : vector<8x1xf32> to vector<8x256xf32>
    %271 = arith.addf %269, %270 : vector<8x256xf32>
    %cst_82 = arith.constant dense<0.000000e+00> : vector<1xf32>
    %272 = vector.multi_reduction <add>, %253, %cst_82 [0] : vector<8x1xf32> to vector<1xf32>
    %273 = vector.shape_cast %272 : vector<1xf32> to vector<1x1xf32>
    %cst_83 = arith.constant 8.000000e+00 : f32
    %274 = vector.broadcast %cst_83 : f32 to vector<1x1xf32>
    %275 = arith.divf %273, %274 : vector<1x1xf32>
    %276 = vector.broadcast %275 : vector<1x1xf32> to vector<8x1xf32>
    %277 = arith.subf %253, %276 : vector<8x1xf32>
    %278 = arith.mulf %277, %277 : vector<8x1xf32>
    %cst_84 = arith.constant dense<0.000000e+00> : vector<1xf32>
    %279 = vector.multi_reduction <add>, %278, %cst_84 [0] : vector<8x1xf32> to vector<1xf32>
    %280 = vector.shape_cast %279 : vector<1xf32> to vector<1x1xf32>
    %cst_85 = arith.constant 0.142857149 : f32
    %281 = vector.broadcast %cst_85 : f32 to vector<1x1xf32>
    %282 = arith.mulf %280, %281 : vector<1x1xf32>
    %283 = vector.broadcast %275 : vector<1x1xf32> to vector<8x1xf32>
    %284 = arith.subf %253, %283 : vector<8x1xf32>
    %285 = arith.mulf %249, %284 : vector<8x1xf32>
    %cst_86 = arith.constant 9.99999974E-6 : f32
    %286 = vector.broadcast %cst_86 : f32 to vector<1x1xf32>
    %287 = arith.addf %282, %286 : vector<1x1xf32>
    %288 = math.rsqrt %287 : vector<1x1xf32>
    %289 = vector.broadcast %288 : vector<1x1xf32> to vector<8x1xf32>
    %290 = arith.mulf %285, %289 : vector<8x1xf32>
    %291 = vector.broadcast %290 : vector<8x1xf32> to vector<8x256xf32>
    %292 = arith.addf %271, %291 : vector<8x256xf32>
    %cst_87 = arith.constant 0.000000e+00 : f32
    %293 = vector.broadcast %cst_87 : f32 to vector<8x256xf32>
    %294 = arith.cmpf ogt, %292, %293 : vector<8x256xf32>
    %cst_88 = arith.constant 0.000000e+00 : f32
    %295 = vector.broadcast %cst_88 : f32 to vector<8x256xf32>
    %296 = arith.minimumf %292, %295 : vector<8x256xf32>
    %297 = math.exp %296 : vector<8x256xf32>
    %cst_89 = arith.constant 1.000000e+00 : f32
    %298 = vector.broadcast %cst_89 : f32 to vector<8x256xf32>
    %299 = arith.subf %297, %298 : vector<8x256xf32>
    %300 = arith.select %294, %292, %299 : vector<8x256xi1>, vector<8x256xf32>
    %cst_90 = arith.constant 0.000000e+00 : f32
    %301 = vector.broadcast %cst_90 : f32 to vector<8x128xf32>
    %302 = tpu.concatenate %301, %300, %301 in 1 : vector<8x128xf32>, vector<8x256xf32>, vector<8x128xf32> -> vector<8x512xf32>
    %303 = vector.extract_strided_slice %302 {offsets = [0, 111], sizes = [8, 256], strides = [1, 1]} : vector<8x512xf32> to vector<8x256xf32>
    %304 = vector.broadcast %38 : vector<1x256xf32> to vector<8x256xf32>
    %305 = arith.mulf %303, %304 : vector<8x256xf32>
    %306 = vector.extract_strided_slice %302 {offsets = [0, 112], sizes = [8, 256], strides = [1, 1]} : vector<8x512xf32> to vector<8x256xf32>
    %307 = vector.extract_strided_slice %302 {offsets = [0, 113], sizes = [8, 256], strides = [1, 1]} : vector<8x512xf32> to vector<8x256xf32>
    %308 = vector.broadcast %49 : vector<1x256xf32> to vector<8x256xf32>
    %309 = arith.mulf %307, %308 : vector<8x256xf32>
    %310 = vector.extract_strided_slice %302 {offsets = [0, 127], sizes = [8, 256], strides = [1, 1]} : vector<8x512xf32> to vector<8x256xf32>
    %311 = vector.broadcast %38 : vector<1x256xf32> to vector<8x256xf32>
    %312 = arith.mulf %310, %311 : vector<8x256xf32>
    %313 = vector.extract_strided_slice %302 {offsets = [0, 128], sizes = [8, 256], strides = [1, 1]} : vector<8x512xf32> to vector<8x256xf32>
    %314 = vector.extract_strided_slice %302 {offsets = [0, 129], sizes = [8, 256], strides = [1, 1]} : vector<8x512xf32> to vector<8x256xf32>
    %315 = vector.broadcast %49 : vector<1x256xf32> to vector<8x256xf32>
    %316 = arith.mulf %314, %315 : vector<8x256xf32>
    %317 = vector.extract_strided_slice %302 {offsets = [0, 143], sizes = [8, 256], strides = [1, 1]} : vector<8x512xf32> to vector<8x256xf32>
    %318 = vector.broadcast %38 : vector<1x256xf32> to vector<8x256xf32>
    %319 = arith.mulf %317, %318 : vector<8x256xf32>
    %320 = vector.extract_strided_slice %302 {offsets = [0, 144], sizes = [8, 256], strides = [1, 1]} : vector<8x512xf32> to vector<8x256xf32>
    %321 = vector.extract_strided_slice %302 {offsets = [0, 145], sizes = [8, 256], strides = [1, 1]} : vector<8x512xf32> to vector<8x256xf32>
    %322 = vector.broadcast %49 : vector<1x256xf32> to vector<8x256xf32>
    %323 = arith.mulf %321, %322 : vector<8x256xf32>
    %324 = tpu.concatenate %305, %306, %309, %312, %313, %316, %319, %320, %323 in 0 : vector<8x256xf32>, vector<8x256xf32>, vector<8x256xf32>, vector<8x256xf32>, vector<8x256xf32>, vector<8x256xf32>, vector<8x256xf32>, vector<8x256xf32>, vector<8x256xf32> -> vector<72x256xf32>
    %c2_91 = arith.constant 2 : index
    %c0_92 = arith.constant 0 : index
    %c0_93 = arith.constant 0 : index
    %325 = vector.load %arg7[%c2_91, %c0_92, %c0_93] : memref<14x8x72xf32, #tpu.memory_space<vmem>>, vector<1x8x72xf32>
    %326 = vector.shape_cast %325 : vector<1x8x72xf32> to vector<8x72xf32>
    %c2_94 = arith.constant 2 : index
    %c0_95 = arith.constant 0 : index
    %c0_96 = arith.constant 0 : index
    %327 = vector.load %arg8[%c2_94, %c0_95, %c0_96] : memref<14x8x1xf32, #tpu.memory_space<vmem>>, vector<1x8x1xf32>
    %328 = vector.shape_cast %327 : vector<1x8x1xf32> to vector<8x1xf32>
    %cst_97 = arith.constant dense<0.000000e+00> : vector<8x256xf32>
    %329 = tpu.matmul %326, %324, %cst_97 {dimension_numbers = #tpu.dot_dimension_numbers<[1], [0], [0], [1], [0, 0, 1, 1], [], []>} : vector<8x72xf32>, vector<72x256xf32>, vector<8x256xf32> -> vector<8x256xf32>
    %330 = vector.broadcast %328 : vector<8x1xf32> to vector<8x256xf32>
    %331 = arith.addf %329, %330 : vector<8x256xf32>
    %c0_98 = arith.constant 0 : index
    %c3 = arith.constant 3 : index
    %c0_99 = arith.constant 0 : index
    %c0_100 = arith.constant 0 : index
    %332 = vector.load %arg9[%c0_98, %c3, %c0_99, %c0_100] : memref<1x16x8x3xf32, #tpu.memory_space<vmem>>, vector<1x1x8x3xf32>
    %333 = vector.shape_cast %332 : vector<1x1x8x3xf32> to vector<8x3xf32>
    %334 = vector.extract_strided_slice %333 {offsets = [0, 0], sizes = [8, 1], strides = [1, 1]} : vector<8x3xf32> to vector<8x1xf32>
    %335 = vector.extract_strided_slice %333 {offsets = [0, 1], sizes = [8, 1], strides = [1, 1]} : vector<8x3xf32> to vector<8x1xf32>
    %336 = vector.extract_strided_slice %333 {offsets = [0, 2], sizes = [8, 1], strides = [1, 1]} : vector<8x3xf32> to vector<8x1xf32>
    %cst_101 = arith.constant dense<0.000000e+00> : vector<8xf32>
    %337 = vector.multi_reduction <add>, %331, %cst_101 [1] : vector<8x256xf32> to vector<8xf32>
    %338 = vector.shape_cast %337 : vector<8xf32> to vector<8x1xf32>
    %cst_102 = arith.constant 2.560000e+02 : f32
    %339 = vector.broadcast %cst_102 : f32 to vector<8x1xf32>
    %340 = arith.divf %338, %339 : vector<8x1xf32>
    %341 = vector.broadcast %340 : vector<8x1xf32> to vector<8x256xf32>
    %342 = arith.subf %331, %341 : vector<8x256xf32>
    %343 = arith.mulf %342, %342 : vector<8x256xf32>
    %cst_103 = arith.constant dense<0.000000e+00> : vector<8xf32>
    %344 = vector.multi_reduction <add>, %343, %cst_103 [1] : vector<8x256xf32> to vector<8xf32>
    %345 = vector.shape_cast %344 : vector<8xf32> to vector<8x1xf32>
    %cst_104 = arith.constant 0.00392156886 : f32
    %346 = vector.broadcast %cst_104 : f32 to vector<8x1xf32>
    %347 = arith.mulf %345, %346 : vector<8x1xf32>
    %348 = vector.broadcast %340 : vector<8x1xf32> to vector<8x256xf32>
    %349 = arith.subf %331, %348 : vector<8x256xf32>
    %cst_105 = arith.constant 9.99999974E-6 : f32
    %350 = vector.broadcast %cst_105 : f32 to vector<8x1xf32>
    %351 = arith.addf %347, %350 : vector<8x1xf32>
    %352 = math.rsqrt %351 : vector<8x1xf32>
    %353 = vector.broadcast %352 : vector<8x1xf32> to vector<8x256xf32>
    %354 = arith.mulf %349, %353 : vector<8x256xf32>
    %355 = vector.broadcast %334 : vector<8x1xf32> to vector<8x256xf32>
    %356 = arith.mulf %355, %354 : vector<8x256xf32>
    %357 = vector.broadcast %335 : vector<8x1xf32> to vector<8x256xf32>
    %358 = arith.addf %356, %357 : vector<8x256xf32>
    %cst_106 = arith.constant dense<0.000000e+00> : vector<1xf32>
    %359 = vector.multi_reduction <add>, %340, %cst_106 [0] : vector<8x1xf32> to vector<1xf32>
    %360 = vector.shape_cast %359 : vector<1xf32> to vector<1x1xf32>
    %cst_107 = arith.constant 8.000000e+00 : f32
    %361 = vector.broadcast %cst_107 : f32 to vector<1x1xf32>
    %362 = arith.divf %360, %361 : vector<1x1xf32>
    %363 = vector.broadcast %362 : vector<1x1xf32> to vector<8x1xf32>
    %364 = arith.subf %340, %363 : vector<8x1xf32>
    %365 = arith.mulf %364, %364 : vector<8x1xf32>
    %cst_108 = arith.constant dense<0.000000e+00> : vector<1xf32>
    %366 = vector.multi_reduction <add>, %365, %cst_108 [0] : vector<8x1xf32> to vector<1xf32>
    %367 = vector.shape_cast %366 : vector<1xf32> to vector<1x1xf32>
    %cst_109 = arith.constant 0.142857149 : f32
    %368 = vector.broadcast %cst_109 : f32 to vector<1x1xf32>
    %369 = arith.mulf %367, %368 : vector<1x1xf32>
    %370 = vector.broadcast %362 : vector<1x1xf32> to vector<8x1xf32>
    %371 = arith.subf %340, %370 : vector<8x1xf32>
    %372 = arith.mulf %336, %371 : vector<8x1xf32>
    %cst_110 = arith.constant 9.99999974E-6 : f32
    %373 = vector.broadcast %cst_110 : f32 to vector<1x1xf32>
    %374 = arith.addf %369, %373 : vector<1x1xf32>
    %375 = math.rsqrt %374 : vector<1x1xf32>
    %376 = vector.broadcast %375 : vector<1x1xf32> to vector<8x1xf32>
    %377 = arith.mulf %372, %376 : vector<8x1xf32>
    %378 = vector.broadcast %377 : vector<8x1xf32> to vector<8x256xf32>
    %379 = arith.addf %358, %378 : vector<8x256xf32>
    %cst_111 = arith.constant 0.000000e+00 : f32
    %380 = vector.broadcast %cst_111 : f32 to vector<8x256xf32>
    %381 = arith.cmpf ogt, %379, %380 : vector<8x256xf32>
    %cst_112 = arith.constant 0.000000e+00 : f32
    %382 = vector.broadcast %cst_112 : f32 to vector<8x256xf32>
    %383 = arith.minimumf %379, %382 : vector<8x256xf32>
    %384 = math.exp %383 : vector<8x256xf32>
    %cst_113 = arith.constant 1.000000e+00 : f32
    %385 = vector.broadcast %cst_113 : f32 to vector<8x256xf32>
    %386 = arith.subf %384, %385 : vector<8x256xf32>
    %387 = arith.select %381, %379, %386 : vector<8x256xi1>, vector<8x256xf32>
    %cst_114 = arith.constant 0.000000e+00 : f32
    %388 = vector.broadcast %cst_114 : f32 to vector<8x128xf32>
    %389 = tpu.concatenate %388, %387, %388 in 1 : vector<8x128xf32>, vector<8x256xf32>, vector<8x128xf32> -> vector<8x512xf32>
    %390 = vector.extract_strided_slice %389 {offsets = [0, 111], sizes = [8, 256], strides = [1, 1]} : vector<8x512xf32> to vector<8x256xf32>
    %391 = vector.broadcast %38 : vector<1x256xf32> to vector<8x256xf32>
    %392 = arith.mulf %390, %391 : vector<8x256xf32>
    %393 = vector.extract_strided_slice %389 {offsets = [0, 112], sizes = [8, 256], strides = [1, 1]} : vector<8x512xf32> to vector<8x256xf32>
    %394 = vector.extract_strided_slice %389 {offsets = [0, 113], sizes = [8, 256], strides = [1, 1]} : vector<8x512xf32> to vector<8x256xf32>
    %395 = vector.broadcast %49 : vector<1x256xf32> to vector<8x256xf32>
    %396 = arith.mulf %394, %395 : vector<8x256xf32>
    %397 = vector.extract_strided_slice %389 {offsets = [0, 127], sizes = [8, 256], strides = [1, 1]} : vector<8x512xf32> to vector<8x256xf32>
    %398 = vector.broadcast %38 : vector<1x256xf32> to vector<8x256xf32>
    %399 = arith.mulf %397, %398 : vector<8x256xf32>
    %400 = vector.extract_strided_slice %389 {offsets = [0, 128], sizes = [8, 256], strides = [1, 1]} : vector<8x512xf32> to vector<8x256xf32>
    %401 = vector.extract_strided_slice %389 {offsets = [0, 129], sizes = [8, 256], strides = [1, 1]} : vector<8x512xf32> to vector<8x256xf32>
    %402 = vector.broadcast %49 : vector<1x256xf32> to vector<8x256xf32>
    %403 = arith.mulf %401, %402 : vector<8x256xf32>
    %404 = vector.extract_strided_slice %389 {offsets = [0, 143], sizes = [8, 256], strides = [1, 1]} : vector<8x512xf32> to vector<8x256xf32>
    %405 = vector.broadcast %38 : vector<1x256xf32> to vector<8x256xf32>
    %406 = arith.mulf %404, %405 : vector<8x256xf32>
    %407 = vector.extract_strided_slice %389 {offsets = [0, 144], sizes = [8, 256], strides = [1, 1]} : vector<8x512xf32> to vector<8x256xf32>
    %408 = vector.extract_strided_slice %389 {offsets = [0, 145], sizes = [8, 256], strides = [1, 1]} : vector<8x512xf32> to vector<8x256xf32>
    %409 = vector.broadcast %49 : vector<1x256xf32> to vector<8x256xf32>
    %410 = arith.mulf %408, %409 : vector<8x256xf32>
    %411 = tpu.concatenate %392, %393, %396, %399, %400, %403, %406, %407, %410 in 0 : vector<8x256xf32>, vector<8x256xf32>, vector<8x256xf32>, vector<8x256xf32>, vector<8x256xf32>, vector<8x256xf32>, vector<8x256xf32>, vector<8x256xf32>, vector<8x256xf32> -> vector<72x256xf32>
    %c3_115 = arith.constant 3 : index
    %c0_116 = arith.constant 0 : index
    %c0_117 = arith.constant 0 : index
    %412 = vector.load %arg7[%c3_115, %c0_116, %c0_117] : memref<14x8x72xf32, #tpu.memory_space<vmem>>, vector<1x8x72xf32>
    %413 = vector.shape_cast %412 : vector<1x8x72xf32> to vector<8x72xf32>
    %c3_118 = arith.constant 3 : index
    %c0_119 = arith.constant 0 : index
    %c0_120 = arith.constant 0 : index
    %414 = vector.load %arg8[%c3_118, %c0_119, %c0_120] : memref<14x8x1xf32, #tpu.memory_space<vmem>>, vector<1x8x1xf32>
    %415 = vector.shape_cast %414 : vector<1x8x1xf32> to vector<8x1xf32>
    %cst_121 = arith.constant dense<0.000000e+00> : vector<8x256xf32>
    %416 = tpu.matmul %413, %411, %cst_121 {dimension_numbers = #tpu.dot_dimension_numbers<[1], [0], [0], [1], [0, 0, 1, 1], [], []>} : vector<8x72xf32>, vector<72x256xf32>, vector<8x256xf32> -> vector<8x256xf32>
    %417 = vector.broadcast %415 : vector<8x1xf32> to vector<8x256xf32>
    %418 = arith.addf %416, %417 : vector<8x256xf32>
    %419 = arith.addf %244, %418 : vector<8x256xf32>
    %c0_122 = arith.constant 0 : index
    %c0_123 = arith.constant 0 : index
    %420 = vector.load %arg5[%c0_122, %c0_123] : memref<8x6xf32, #tpu.memory_space<vmem>>, vector<8x6xf32>
    %cst_124 = arith.constant dense<0.000000e+00> : vector<8x256xf32>
    %421 = tpu.matmul %420, %64, %cst_124 {dimension_numbers = #tpu.dot_dimension_numbers<[1], [0], [0], [1], [0, 0, 1, 1], [], []>} : vector<8x6xf32>, vector<6x256xf32>, vector<8x256xf32> -> vector<8x256xf32>
    %c0_125 = arith.constant 0 : index
    %c0_126 = arith.constant 0 : index
    %422 = vector.load %arg6[%c0_125, %c0_126] : memref<8x1xf32, #tpu.memory_space<vmem>>, vector<8x1xf32>
    %423 = vector.broadcast %422 : vector<8x1xf32> to vector<8x256xf32>
    %424 = arith.addf %421, %423 : vector<8x256xf32>
    %c0_127 = arith.constant 0 : index
    %c4 = arith.constant 4 : index
    %c0_128 = arith.constant 0 : index
    %c0_129 = arith.constant 0 : index
    %425 = vector.load %arg9[%c0_127, %c4, %c0_128, %c0_129] : memref<1x16x8x3xf32, #tpu.memory_space<vmem>>, vector<1x1x8x3xf32>
    %426 = vector.shape_cast %425 : vector<1x1x8x3xf32> to vector<8x3xf32>
    %427 = vector.extract_strided_slice %426 {offsets = [0, 0], sizes = [8, 1], strides = [1, 1]} : vector<8x3xf32> to vector<8x1xf32>
    %428 = vector.extract_strided_slice %426 {offsets = [0, 1], sizes = [8, 1], strides = [1, 1]} : vector<8x3xf32> to vector<8x1xf32>
    %429 = vector.extract_strided_slice %426 {offsets = [0, 2], sizes = [8, 1], strides = [1, 1]} : vector<8x3xf32> to vector<8x1xf32>
    %cst_130 = arith.constant dense<0.000000e+00> : vector<8xf32>
    %430 = vector.multi_reduction <add>, %424, %cst_130 [1] : vector<8x256xf32> to vector<8xf32>
    %431 = vector.shape_cast %430 : vector<8xf32> to vector<8x1xf32>
    %cst_131 = arith.constant 2.560000e+02 : f32
    %432 = vector.broadcast %cst_131 : f32 to vector<8x1xf32>
    %433 = arith.divf %431, %432 : vector<8x1xf32>
    %434 = vector.broadcast %433 : vector<8x1xf32> to vector<8x256xf32>
    %435 = arith.subf %424, %434 : vector<8x256xf32>
    %436 = arith.mulf %435, %435 : vector<8x256xf32>
    %cst_132 = arith.constant dense<0.000000e+00> : vector<8xf32>
    %437 = vector.multi_reduction <add>, %436, %cst_132 [1] : vector<8x256xf32> to vector<8xf32>
    %438 = vector.shape_cast %437 : vector<8xf32> to vector<8x1xf32>
    %cst_133 = arith.constant 0.00392156886 : f32
    %439 = vector.broadcast %cst_133 : f32 to vector<8x1xf32>
    %440 = arith.mulf %438, %439 : vector<8x1xf32>
    %441 = vector.broadcast %433 : vector<8x1xf32> to vector<8x256xf32>
    %442 = arith.subf %424, %441 : vector<8x256xf32>
    %cst_134 = arith.constant 9.99999974E-6 : f32
    %443 = vector.broadcast %cst_134 : f32 to vector<8x1xf32>
    %444 = arith.addf %440, %443 : vector<8x1xf32>
    %445 = math.rsqrt %444 : vector<8x1xf32>
    %446 = vector.broadcast %445 : vector<8x1xf32> to vector<8x256xf32>
    %447 = arith.mulf %442, %446 : vector<8x256xf32>
    %448 = vector.broadcast %427 : vector<8x1xf32> to vector<8x256xf32>
    %449 = arith.mulf %448, %447 : vector<8x256xf32>
    %450 = vector.broadcast %428 : vector<8x1xf32> to vector<8x256xf32>
    %451 = arith.addf %449, %450 : vector<8x256xf32>
    %cst_135 = arith.constant dense<0.000000e+00> : vector<1xf32>
    %452 = vector.multi_reduction <add>, %433, %cst_135 [0] : vector<8x1xf32> to vector<1xf32>
    %453 = vector.shape_cast %452 : vector<1xf32> to vector<1x1xf32>
    %cst_136 = arith.constant 8.000000e+00 : f32
    %454 = vector.broadcast %cst_136 : f32 to vector<1x1xf32>
    %455 = arith.divf %453, %454 : vector<1x1xf32>
    %456 = vector.broadcast %455 : vector<1x1xf32> to vector<8x1xf32>
    %457 = arith.subf %433, %456 : vector<8x1xf32>
    %458 = arith.mulf %457, %457 : vector<8x1xf32>
    %cst_137 = arith.constant dense<0.000000e+00> : vector<1xf32>
    %459 = vector.multi_reduction <add>, %458, %cst_137 [0] : vector<8x1xf32> to vector<1xf32>
    %460 = vector.shape_cast %459 : vector<1xf32> to vector<1x1xf32>
    %cst_138 = arith.constant 0.142857149 : f32
    %461 = vector.broadcast %cst_138 : f32 to vector<1x1xf32>
    %462 = arith.mulf %460, %461 : vector<1x1xf32>
    %463 = vector.broadcast %455 : vector<1x1xf32> to vector<8x1xf32>
    %464 = arith.subf %433, %463 : vector<8x1xf32>
    %465 = arith.mulf %429, %464 : vector<8x1xf32>
    %cst_139 = arith.constant 9.99999974E-6 : f32
    %466 = vector.broadcast %cst_139 : f32 to vector<1x1xf32>
    %467 = arith.addf %462, %466 : vector<1x1xf32>
    %468 = math.rsqrt %467 : vector<1x1xf32>
    %469 = vector.broadcast %468 : vector<1x1xf32> to vector<8x1xf32>
    %470 = arith.mulf %465, %469 : vector<8x1xf32>
    %471 = vector.broadcast %470 : vector<8x1xf32> to vector<8x256xf32>
    %472 = arith.addf %451, %471 : vector<8x256xf32>
    %cst_140 = arith.constant 0.000000e+00 : f32
    %473 = vector.broadcast %cst_140 : f32 to vector<8x256xf32>
    %474 = arith.cmpf ogt, %472, %473 : vector<8x256xf32>
    %cst_141 = arith.constant 0.000000e+00 : f32
    %475 = vector.broadcast %cst_141 : f32 to vector<8x256xf32>
    %476 = arith.minimumf %472, %475 : vector<8x256xf32>
    %477 = math.exp %476 : vector<8x256xf32>
    %cst_142 = arith.constant 1.000000e+00 : f32
    %478 = vector.broadcast %cst_142 : f32 to vector<8x256xf32>
    %479 = arith.subf %477, %478 : vector<8x256xf32>
    %480 = arith.select %474, %472, %479 : vector<8x256xi1>, vector<8x256xf32>
    %cst_143 = arith.constant 0.000000e+00 : f32
    %481 = vector.broadcast %cst_143 : f32 to vector<8x128xf32>
    %482 = tpu.concatenate %481, %480, %481 in 1 : vector<8x128xf32>, vector<8x256xf32>, vector<8x128xf32> -> vector<8x512xf32>
    %483 = vector.extract_strided_slice %482 {offsets = [0, 111], sizes = [8, 256], strides = [1, 1]} : vector<8x512xf32> to vector<8x256xf32>
    %484 = vector.broadcast %38 : vector<1x256xf32> to vector<8x256xf32>
    %485 = arith.mulf %483, %484 : vector<8x256xf32>
    %486 = vector.extract_strided_slice %482 {offsets = [0, 112], sizes = [8, 256], strides = [1, 1]} : vector<8x512xf32> to vector<8x256xf32>
    %487 = vector.extract_strided_slice %482 {offsets = [0, 113], sizes = [8, 256], strides = [1, 1]} : vector<8x512xf32> to vector<8x256xf32>
    %488 = vector.broadcast %49 : vector<1x256xf32> to vector<8x256xf32>
    %489 = arith.mulf %487, %488 : vector<8x256xf32>
    %490 = vector.extract_strided_slice %482 {offsets = [0, 127], sizes = [8, 256], strides = [1, 1]} : vector<8x512xf32> to vector<8x256xf32>
    %491 = vector.broadcast %38 : vector<1x256xf32> to vector<8x256xf32>
    %492 = arith.mulf %490, %491 : vector<8x256xf32>
    %493 = vector.extract_strided_slice %482 {offsets = [0, 128], sizes = [8, 256], strides = [1, 1]} : vector<8x512xf32> to vector<8x256xf32>
    %494 = vector.extract_strided_slice %482 {offsets = [0, 129], sizes = [8, 256], strides = [1, 1]} : vector<8x512xf32> to vector<8x256xf32>
    %495 = vector.broadcast %49 : vector<1x256xf32> to vector<8x256xf32>
    %496 = arith.mulf %494, %495 : vector<8x256xf32>
    %497 = vector.extract_strided_slice %482 {offsets = [0, 143], sizes = [8, 256], strides = [1, 1]} : vector<8x512xf32> to vector<8x256xf32>
    %498 = vector.broadcast %38 : vector<1x256xf32> to vector<8x256xf32>
    %499 = arith.mulf %497, %498 : vector<8x256xf32>
    %500 = vector.extract_strided_slice %482 {offsets = [0, 144], sizes = [8, 256], strides = [1, 1]} : vector<8x512xf32> to vector<8x256xf32>
    %501 = vector.extract_strided_slice %482 {offsets = [0, 145], sizes = [8, 256], strides = [1, 1]} : vector<8x512xf32> to vector<8x256xf32>
    %502 = vector.broadcast %49 : vector<1x256xf32> to vector<8x256xf32>
    %503 = arith.mulf %501, %502 : vector<8x256xf32>
    %504 = tpu.concatenate %485, %486, %489, %492, %493, %496, %499, %500, %503 in 0 : vector<8x256xf32>, vector<8x256xf32>, vector<8x256xf32>, vector<8x256xf32>, vector<8x256xf32>, vector<8x256xf32>, vector<8x256xf32>, vector<8x256xf32>, vector<8x256xf32> -> vector<72x256xf32>
    %c4_144 = arith.constant 4 : index
    %c0_145 = arith.constant 0 : index
    %c0_146 = arith.constant 0 : index
    %505 = vector.load %arg7[%c4_144, %c0_145, %c0_146] : memref<14x8x72xf32, #tpu.memory_space<vmem>>, vector<1x8x72xf32>
    %506 = vector.shape_cast %505 : vector<1x8x72xf32> to vector<8x72xf32>
    %c4_147 = arith.constant 4 : index
    %c0_148 = arith.constant 0 : index
    %c0_149 = arith.constant 0 : index
    %507 = vector.load %arg8[%c4_147, %c0_148, %c0_149] : memref<14x8x1xf32, #tpu.memory_space<vmem>>, vector<1x8x1xf32>
    %508 = vector.shape_cast %507 : vector<1x8x1xf32> to vector<8x1xf32>
    %cst_150 = arith.constant dense<0.000000e+00> : vector<8x256xf32>
    %509 = tpu.matmul %506, %504, %cst_150 {dimension_numbers = #tpu.dot_dimension_numbers<[1], [0], [0], [1], [0, 0, 1, 1], [], []>} : vector<8x72xf32>, vector<72x256xf32>, vector<8x256xf32> -> vector<8x256xf32>
    %510 = vector.broadcast %508 : vector<8x1xf32> to vector<8x256xf32>
    %511 = arith.addf %509, %510 : vector<8x256xf32>
    %c0_151 = arith.constant 0 : index
    %c5 = arith.constant 5 : index
    %c0_152 = arith.constant 0 : index
    %c0_153 = arith.constant 0 : index
    %512 = vector.load %arg9[%c0_151, %c5, %c0_152, %c0_153] : memref<1x16x8x3xf32, #tpu.memory_space<vmem>>, vector<1x1x8x3xf32>
    %513 = vector.shape_cast %512 : vector<1x1x8x3xf32> to vector<8x3xf32>
    %514 = vector.extract_strided_slice %513 {offsets = [0, 0], sizes = [8, 1], strides = [1, 1]} : vector<8x3xf32> to vector<8x1xf32>
    %515 = vector.extract_strided_slice %513 {offsets = [0, 1], sizes = [8, 1], strides = [1, 1]} : vector<8x3xf32> to vector<8x1xf32>
    %516 = vector.extract_strided_slice %513 {offsets = [0, 2], sizes = [8, 1], strides = [1, 1]} : vector<8x3xf32> to vector<8x1xf32>
    %cst_154 = arith.constant dense<0.000000e+00> : vector<8xf32>
    %517 = vector.multi_reduction <add>, %511, %cst_154 [1] : vector<8x256xf32> to vector<8xf32>
    %518 = vector.shape_cast %517 : vector<8xf32> to vector<8x1xf32>
    %cst_155 = arith.constant 2.560000e+02 : f32
    %519 = vector.broadcast %cst_155 : f32 to vector<8x1xf32>
    %520 = arith.divf %518, %519 : vector<8x1xf32>
    %521 = vector.broadcast %520 : vector<8x1xf32> to vector<8x256xf32>
    %522 = arith.subf %511, %521 : vector<8x256xf32>
    %523 = arith.mulf %522, %522 : vector<8x256xf32>
    %cst_156 = arith.constant dense<0.000000e+00> : vector<8xf32>
    %524 = vector.multi_reduction <add>, %523, %cst_156 [1] : vector<8x256xf32> to vector<8xf32>
    %525 = vector.shape_cast %524 : vector<8xf32> to vector<8x1xf32>
    %cst_157 = arith.constant 0.00392156886 : f32
    %526 = vector.broadcast %cst_157 : f32 to vector<8x1xf32>
    %527 = arith.mulf %525, %526 : vector<8x1xf32>
    %528 = vector.broadcast %520 : vector<8x1xf32> to vector<8x256xf32>
    %529 = arith.subf %511, %528 : vector<8x256xf32>
    %cst_158 = arith.constant 9.99999974E-6 : f32
    %530 = vector.broadcast %cst_158 : f32 to vector<8x1xf32>
    %531 = arith.addf %527, %530 : vector<8x1xf32>
    %532 = math.rsqrt %531 : vector<8x1xf32>
    %533 = vector.broadcast %532 : vector<8x1xf32> to vector<8x256xf32>
    %534 = arith.mulf %529, %533 : vector<8x256xf32>
    %535 = vector.broadcast %514 : vector<8x1xf32> to vector<8x256xf32>
    %536 = arith.mulf %535, %534 : vector<8x256xf32>
    %537 = vector.broadcast %515 : vector<8x1xf32> to vector<8x256xf32>
    %538 = arith.addf %536, %537 : vector<8x256xf32>
    %cst_159 = arith.constant dense<0.000000e+00> : vector<1xf32>
    %539 = vector.multi_reduction <add>, %520, %cst_159 [0] : vector<8x1xf32> to vector<1xf32>
    %540 = vector.shape_cast %539 : vector<1xf32> to vector<1x1xf32>
    %cst_160 = arith.constant 8.000000e+00 : f32
    %541 = vector.broadcast %cst_160 : f32 to vector<1x1xf32>
    %542 = arith.divf %540, %541 : vector<1x1xf32>
    %543 = vector.broadcast %542 : vector<1x1xf32> to vector<8x1xf32>
    %544 = arith.subf %520, %543 : vector<8x1xf32>
    %545 = arith.mulf %544, %544 : vector<8x1xf32>
    %cst_161 = arith.constant dense<0.000000e+00> : vector<1xf32>
    %546 = vector.multi_reduction <add>, %545, %cst_161 [0] : vector<8x1xf32> to vector<1xf32>
    %547 = vector.shape_cast %546 : vector<1xf32> to vector<1x1xf32>
    %cst_162 = arith.constant 0.142857149 : f32
    %548 = vector.broadcast %cst_162 : f32 to vector<1x1xf32>
    %549 = arith.mulf %547, %548 : vector<1x1xf32>
    %550 = vector.broadcast %542 : vector<1x1xf32> to vector<8x1xf32>
    %551 = arith.subf %520, %550 : vector<8x1xf32>
    %552 = arith.mulf %516, %551 : vector<8x1xf32>
    %cst_163 = arith.constant 9.99999974E-6 : f32
    %553 = vector.broadcast %cst_163 : f32 to vector<1x1xf32>
    %554 = arith.addf %549, %553 : vector<1x1xf32>
    %555 = math.rsqrt %554 : vector<1x1xf32>
    %556 = vector.broadcast %555 : vector<1x1xf32> to vector<8x1xf32>
    %557 = arith.mulf %552, %556 : vector<8x1xf32>
    %558 = vector.broadcast %557 : vector<8x1xf32> to vector<8x256xf32>
    %559 = arith.addf %538, %558 : vector<8x256xf32>
    %cst_164 = arith.constant 0.000000e+00 : f32
    %560 = vector.broadcast %cst_164 : f32 to vector<8x256xf32>
    %561 = arith.cmpf ogt, %559, %560 : vector<8x256xf32>
    %cst_165 = arith.constant 0.000000e+00 : f32
    %562 = vector.broadcast %cst_165 : f32 to vector<8x256xf32>
    %563 = arith.minimumf %559, %562 : vector<8x256xf32>
    %564 = math.exp %563 : vector<8x256xf32>
    %cst_166 = arith.constant 1.000000e+00 : f32
    %565 = vector.broadcast %cst_166 : f32 to vector<8x256xf32>
    %566 = arith.subf %564, %565 : vector<8x256xf32>
    %567 = arith.select %561, %559, %566 : vector<8x256xi1>, vector<8x256xf32>
    %cst_167 = arith.constant 0.000000e+00 : f32
    %568 = vector.broadcast %cst_167 : f32 to vector<8x128xf32>
    %569 = tpu.concatenate %568, %567, %568 in 1 : vector<8x128xf32>, vector<8x256xf32>, vector<8x128xf32> -> vector<8x512xf32>
    %570 = vector.extract_strided_slice %569 {offsets = [0, 111], sizes = [8, 256], strides = [1, 1]} : vector<8x512xf32> to vector<8x256xf32>
    %571 = vector.broadcast %38 : vector<1x256xf32> to vector<8x256xf32>
    %572 = arith.mulf %570, %571 : vector<8x256xf32>
    %573 = vector.extract_strided_slice %569 {offsets = [0, 112], sizes = [8, 256], strides = [1, 1]} : vector<8x512xf32> to vector<8x256xf32>
    %574 = vector.extract_strided_slice %569 {offsets = [0, 113], sizes = [8, 256], strides = [1, 1]} : vector<8x512xf32> to vector<8x256xf32>
    %575 = vector.broadcast %49 : vector<1x256xf32> to vector<8x256xf32>
    %576 = arith.mulf %574, %575 : vector<8x256xf32>
    %577 = vector.extract_strided_slice %569 {offsets = [0, 127], sizes = [8, 256], strides = [1, 1]} : vector<8x512xf32> to vector<8x256xf32>
    %578 = vector.broadcast %38 : vector<1x256xf32> to vector<8x256xf32>
    %579 = arith.mulf %577, %578 : vector<8x256xf32>
    %580 = vector.extract_strided_slice %569 {offsets = [0, 128], sizes = [8, 256], strides = [1, 1]} : vector<8x512xf32> to vector<8x256xf32>
    %581 = vector.extract_strided_slice %569 {offsets = [0, 129], sizes = [8, 256], strides = [1, 1]} : vector<8x512xf32> to vector<8x256xf32>
    %582 = vector.broadcast %49 : vector<1x256xf32> to vector<8x256xf32>
    %583 = arith.mulf %581, %582 : vector<8x256xf32>
    %584 = vector.extract_strided_slice %569 {offsets = [0, 143], sizes = [8, 256], strides = [1, 1]} : vector<8x512xf32> to vector<8x256xf32>
    %585 = vector.broadcast %38 : vector<1x256xf32> to vector<8x256xf32>
    %586 = arith.mulf %584, %585 : vector<8x256xf32>
    %587 = vector.extract_strided_slice %569 {offsets = [0, 144], sizes = [8, 256], strides = [1, 1]} : vector<8x512xf32> to vector<8x256xf32>
    %588 = vector.extract_strided_slice %569 {offsets = [0, 145], sizes = [8, 256], strides = [1, 1]} : vector<8x512xf32> to vector<8x256xf32>
    %589 = vector.broadcast %49 : vector<1x256xf32> to vector<8x256xf32>
    %590 = arith.mulf %588, %589 : vector<8x256xf32>
    %591 = tpu.concatenate %572, %573, %576, %579, %580, %583, %586, %587, %590 in 0 : vector<8x256xf32>, vector<8x256xf32>, vector<8x256xf32>, vector<8x256xf32>, vector<8x256xf32>, vector<8x256xf32>, vector<8x256xf32>, vector<8x256xf32>, vector<8x256xf32> -> vector<72x256xf32>
    %c5_168 = arith.constant 5 : index
    %c0_169 = arith.constant 0 : index
    %c0_170 = arith.constant 0 : index
    %592 = vector.load %arg7[%c5_168, %c0_169, %c0_170] : memref<14x8x72xf32, #tpu.memory_space<vmem>>, vector<1x8x72xf32>
    %593 = vector.shape_cast %592 : vector<1x8x72xf32> to vector<8x72xf32>
    %c5_171 = arith.constant 5 : index
    %c0_172 = arith.constant 0 : index
    %c0_173 = arith.constant 0 : index
    %594 = vector.load %arg8[%c5_171, %c0_172, %c0_173] : memref<14x8x1xf32, #tpu.memory_space<vmem>>, vector<1x8x1xf32>
    %595 = vector.shape_cast %594 : vector<1x8x1xf32> to vector<8x1xf32>
    %cst_174 = arith.constant dense<0.000000e+00> : vector<8x256xf32>
    %596 = tpu.matmul %593, %591, %cst_174 {dimension_numbers = #tpu.dot_dimension_numbers<[1], [0], [0], [1], [0, 0, 1, 1], [], []>} : vector<8x72xf32>, vector<72x256xf32>, vector<8x256xf32> -> vector<8x256xf32>
    %597 = vector.broadcast %595 : vector<8x1xf32> to vector<8x256xf32>
    %598 = arith.addf %596, %597 : vector<8x256xf32>
    %599 = arith.addf %424, %598 : vector<8x256xf32>
    %c0_175 = arith.constant 0 : index
    %c6 = arith.constant 6 : index
    %c0_176 = arith.constant 0 : index
    %c0_177 = arith.constant 0 : index
    %600 = vector.load %arg9[%c0_175, %c6, %c0_176, %c0_177] : memref<1x16x8x3xf32, #tpu.memory_space<vmem>>, vector<1x1x8x3xf32>
    %601 = vector.shape_cast %600 : vector<1x1x8x3xf32> to vector<8x3xf32>
    %602 = vector.extract_strided_slice %601 {offsets = [0, 0], sizes = [8, 1], strides = [1, 1]} : vector<8x3xf32> to vector<8x1xf32>
    %603 = vector.extract_strided_slice %601 {offsets = [0, 1], sizes = [8, 1], strides = [1, 1]} : vector<8x3xf32> to vector<8x1xf32>
    %604 = vector.extract_strided_slice %601 {offsets = [0, 2], sizes = [8, 1], strides = [1, 1]} : vector<8x3xf32> to vector<8x1xf32>
    %cst_178 = arith.constant dense<0.000000e+00> : vector<8xf32>
    %605 = vector.multi_reduction <add>, %599, %cst_178 [1] : vector<8x256xf32> to vector<8xf32>
    %606 = vector.shape_cast %605 : vector<8xf32> to vector<8x1xf32>
    %cst_179 = arith.constant 2.560000e+02 : f32
    %607 = vector.broadcast %cst_179 : f32 to vector<8x1xf32>
    %608 = arith.divf %606, %607 : vector<8x1xf32>
    %609 = vector.broadcast %608 : vector<8x1xf32> to vector<8x256xf32>
    %610 = arith.subf %599, %609 : vector<8x256xf32>
    %611 = arith.mulf %610, %610 : vector<8x256xf32>
    %cst_180 = arith.constant dense<0.000000e+00> : vector<8xf32>
    %612 = vector.multi_reduction <add>, %611, %cst_180 [1] : vector<8x256xf32> to vector<8xf32>
    %613 = vector.shape_cast %612 : vector<8xf32> to vector<8x1xf32>
    %cst_181 = arith.constant 0.00392156886 : f32
    %614 = vector.broadcast %cst_181 : f32 to vector<8x1xf32>
    %615 = arith.mulf %613, %614 : vector<8x1xf32>
    %616 = vector.broadcast %608 : vector<8x1xf32> to vector<8x256xf32>
    %617 = arith.subf %599, %616 : vector<8x256xf32>
    %cst_182 = arith.constant 9.99999974E-6 : f32
    %618 = vector.broadcast %cst_182 : f32 to vector<8x1xf32>
    %619 = arith.addf %615, %618 : vector<8x1xf32>
    %620 = math.rsqrt %619 : vector<8x1xf32>
    %621 = vector.broadcast %620 : vector<8x1xf32> to vector<8x256xf32>
    %622 = arith.mulf %617, %621 : vector<8x256xf32>
    %623 = vector.broadcast %602 : vector<8x1xf32> to vector<8x256xf32>
    %624 = arith.mulf %623, %622 : vector<8x256xf32>
    %625 = vector.broadcast %603 : vector<8x1xf32> to vector<8x256xf32>
    %626 = arith.addf %624, %625 : vector<8x256xf32>
    %cst_183 = arith.constant dense<0.000000e+00> : vector<1xf32>
    %627 = vector.multi_reduction <add>, %608, %cst_183 [0] : vector<8x1xf32> to vector<1xf32>
    %628 = vector.shape_cast %627 : vector<1xf32> to vector<1x1xf32>
    %cst_184 = arith.constant 8.000000e+00 : f32
    %629 = vector.broadcast %cst_184 : f32 to vector<1x1xf32>
    %630 = arith.divf %628, %629 : vector<1x1xf32>
    %631 = vector.broadcast %630 : vector<1x1xf32> to vector<8x1xf32>
    %632 = arith.subf %608, %631 : vector<8x1xf32>
    %633 = arith.mulf %632, %632 : vector<8x1xf32>
    %cst_185 = arith.constant dense<0.000000e+00> : vector<1xf32>
    %634 = vector.multi_reduction <add>, %633, %cst_185 [0] : vector<8x1xf32> to vector<1xf32>
    %635 = vector.shape_cast %634 : vector<1xf32> to vector<1x1xf32>
    %cst_186 = arith.constant 0.142857149 : f32
    %636 = vector.broadcast %cst_186 : f32 to vector<1x1xf32>
    %637 = arith.mulf %635, %636 : vector<1x1xf32>
    %638 = vector.broadcast %630 : vector<1x1xf32> to vector<8x1xf32>
    %639 = arith.subf %608, %638 : vector<8x1xf32>
    %640 = arith.mulf %604, %639 : vector<8x1xf32>
    %cst_187 = arith.constant 9.99999974E-6 : f32
    %641 = vector.broadcast %cst_187 : f32 to vector<1x1xf32>
    %642 = arith.addf %637, %641 : vector<1x1xf32>
    %643 = math.rsqrt %642 : vector<1x1xf32>
    %644 = vector.broadcast %643 : vector<1x1xf32> to vector<8x1xf32>
    %645 = arith.mulf %640, %644 : vector<8x1xf32>
    %646 = vector.broadcast %645 : vector<8x1xf32> to vector<8x256xf32>
    %647 = arith.addf %626, %646 : vector<8x256xf32>
    %cst_188 = arith.constant 0.000000e+00 : f32
    %648 = vector.broadcast %cst_188 : f32 to vector<8x256xf32>
    %649 = arith.cmpf ogt, %647, %648 : vector<8x256xf32>
    %cst_189 = arith.constant 0.000000e+00 : f32
    %650 = vector.broadcast %cst_189 : f32 to vector<8x256xf32>
    %651 = arith.minimumf %647, %650 : vector<8x256xf32>
    %652 = math.exp %651 : vector<8x256xf32>
    %cst_190 = arith.constant 1.000000e+00 : f32
    %653 = vector.broadcast %cst_190 : f32 to vector<8x256xf32>
    %654 = arith.subf %652, %653 : vector<8x256xf32>
    %655 = arith.select %649, %647, %654 : vector<8x256xi1>, vector<8x256xf32>
    %cst_191 = arith.constant 0.000000e+00 : f32
    %656 = vector.broadcast %cst_191 : f32 to vector<8x128xf32>
    %657 = tpu.concatenate %656, %655, %656 in 1 : vector<8x128xf32>, vector<8x256xf32>, vector<8x128xf32> -> vector<8x512xf32>
    %658 = vector.extract_strided_slice %657 {offsets = [0, 111], sizes = [8, 256], strides = [1, 1]} : vector<8x512xf32> to vector<8x256xf32>
    %659 = vector.broadcast %38 : vector<1x256xf32> to vector<8x256xf32>
    %660 = arith.mulf %658, %659 : vector<8x256xf32>
    %661 = vector.extract_strided_slice %657 {offsets = [0, 112], sizes = [8, 256], strides = [1, 1]} : vector<8x512xf32> to vector<8x256xf32>
    %662 = vector.extract_strided_slice %657 {offsets = [0, 113], sizes = [8, 256], strides = [1, 1]} : vector<8x512xf32> to vector<8x256xf32>
    %663 = vector.broadcast %49 : vector<1x256xf32> to vector<8x256xf32>
    %664 = arith.mulf %662, %663 : vector<8x256xf32>
    %665 = vector.extract_strided_slice %657 {offsets = [0, 127], sizes = [8, 256], strides = [1, 1]} : vector<8x512xf32> to vector<8x256xf32>
    %666 = vector.broadcast %38 : vector<1x256xf32> to vector<8x256xf32>
    %667 = arith.mulf %665, %666 : vector<8x256xf32>
    %668 = vector.extract_strided_slice %657 {offsets = [0, 128], sizes = [8, 256], strides = [1, 1]} : vector<8x512xf32> to vector<8x256xf32>
    %669 = vector.extract_strided_slice %657 {offsets = [0, 129], sizes = [8, 256], strides = [1, 1]} : vector<8x512xf32> to vector<8x256xf32>
    %670 = vector.broadcast %49 : vector<1x256xf32> to vector<8x256xf32>
    %671 = arith.mulf %669, %670 : vector<8x256xf32>
    %672 = vector.extract_strided_slice %657 {offsets = [0, 143], sizes = [8, 256], strides = [1, 1]} : vector<8x512xf32> to vector<8x256xf32>
    %673 = vector.broadcast %38 : vector<1x256xf32> to vector<8x256xf32>
    %674 = arith.mulf %672, %673 : vector<8x256xf32>
    %675 = vector.extract_strided_slice %657 {offsets = [0, 144], sizes = [8, 256], strides = [1, 1]} : vector<8x512xf32> to vector<8x256xf32>
    %676 = vector.extract_strided_slice %657 {offsets = [0, 145], sizes = [8, 256], strides = [1, 1]} : vector<8x512xf32> to vector<8x256xf32>
    %677 = vector.broadcast %49 : vector<1x256xf32> to vector<8x256xf32>
    %678 = arith.mulf %676, %677 : vector<8x256xf32>
    %679 = tpu.concatenate %660, %661, %664, %667, %668, %671, %674, %675, %678 in 0 : vector<8x256xf32>, vector<8x256xf32>, vector<8x256xf32>, vector<8x256xf32>, vector<8x256xf32>, vector<8x256xf32>, vector<8x256xf32>, vector<8x256xf32>, vector<8x256xf32> -> vector<72x256xf32>
    %c6_192 = arith.constant 6 : index
    %c0_193 = arith.constant 0 : index
    %c0_194 = arith.constant 0 : index
    %680 = vector.load %arg7[%c6_192, %c0_193, %c0_194] : memref<14x8x72xf32, #tpu.memory_space<vmem>>, vector<1x8x72xf32>
    %681 = vector.shape_cast %680 : vector<1x8x72xf32> to vector<8x72xf32>
    %c6_195 = arith.constant 6 : index
    %c0_196 = arith.constant 0 : index
    %c0_197 = arith.constant 0 : index
    %682 = vector.load %arg8[%c6_195, %c0_196, %c0_197] : memref<14x8x1xf32, #tpu.memory_space<vmem>>, vector<1x8x1xf32>
    %683 = vector.shape_cast %682 : vector<1x8x1xf32> to vector<8x1xf32>
    %cst_198 = arith.constant dense<0.000000e+00> : vector<8x256xf32>
    %684 = tpu.matmul %681, %679, %cst_198 {dimension_numbers = #tpu.dot_dimension_numbers<[1], [0], [0], [1], [0, 0, 1, 1], [], []>} : vector<8x72xf32>, vector<72x256xf32>, vector<8x256xf32> -> vector<8x256xf32>
    %685 = vector.broadcast %683 : vector<8x1xf32> to vector<8x256xf32>
    %686 = arith.addf %684, %685 : vector<8x256xf32>
    %c0_199 = arith.constant 0 : index
    %c7 = arith.constant 7 : index
    %c0_200 = arith.constant 0 : index
    %c0_201 = arith.constant 0 : index
    %687 = vector.load %arg9[%c0_199, %c7, %c0_200, %c0_201] : memref<1x16x8x3xf32, #tpu.memory_space<vmem>>, vector<1x1x8x3xf32>
    %688 = vector.shape_cast %687 : vector<1x1x8x3xf32> to vector<8x3xf32>
    %689 = vector.extract_strided_slice %688 {offsets = [0, 0], sizes = [8, 1], strides = [1, 1]} : vector<8x3xf32> to vector<8x1xf32>
    %690 = vector.extract_strided_slice %688 {offsets = [0, 1], sizes = [8, 1], strides = [1, 1]} : vector<8x3xf32> to vector<8x1xf32>
    %691 = vector.extract_strided_slice %688 {offsets = [0, 2], sizes = [8, 1], strides = [1, 1]} : vector<8x3xf32> to vector<8x1xf32>
    %cst_202 = arith.constant dense<0.000000e+00> : vector<8xf32>
    %692 = vector.multi_reduction <add>, %686, %cst_202 [1] : vector<8x256xf32> to vector<8xf32>
    %693 = vector.shape_cast %692 : vector<8xf32> to vector<8x1xf32>
    %cst_203 = arith.constant 2.560000e+02 : f32
    %694 = vector.broadcast %cst_203 : f32 to vector<8x1xf32>
    %695 = arith.divf %693, %694 : vector<8x1xf32>
    %696 = vector.broadcast %695 : vector<8x1xf32> to vector<8x256xf32>
    %697 = arith.subf %686, %696 : vector<8x256xf32>
    %698 = arith.mulf %697, %697 : vector<8x256xf32>
    %cst_204 = arith.constant dense<0.000000e+00> : vector<8xf32>
    %699 = vector.multi_reduction <add>, %698, %cst_204 [1] : vector<8x256xf32> to vector<8xf32>
    %700 = vector.shape_cast %699 : vector<8xf32> to vector<8x1xf32>
    %cst_205 = arith.constant 0.00392156886 : f32
    %701 = vector.broadcast %cst_205 : f32 to vector<8x1xf32>
    %702 = arith.mulf %700, %701 : vector<8x1xf32>
    %703 = vector.broadcast %695 : vector<8x1xf32> to vector<8x256xf32>
    %704 = arith.subf %686, %703 : vector<8x256xf32>
    %cst_206 = arith.constant 9.99999974E-6 : f32
    %705 = vector.broadcast %cst_206 : f32 to vector<8x1xf32>
    %706 = arith.addf %702, %705 : vector<8x1xf32>
    %707 = math.rsqrt %706 : vector<8x1xf32>
    %708 = vector.broadcast %707 : vector<8x1xf32> to vector<8x256xf32>
    %709 = arith.mulf %704, %708 : vector<8x256xf32>
    %710 = vector.broadcast %689 : vector<8x1xf32> to vector<8x256xf32>
    %711 = arith.mulf %710, %709 : vector<8x256xf32>
    %712 = vector.broadcast %690 : vector<8x1xf32> to vector<8x256xf32>
    %713 = arith.addf %711, %712 : vector<8x256xf32>
    %cst_207 = arith.constant dense<0.000000e+00> : vector<1xf32>
    %714 = vector.multi_reduction <add>, %695, %cst_207 [0] : vector<8x1xf32> to vector<1xf32>
    %715 = vector.shape_cast %714 : vector<1xf32> to vector<1x1xf32>
    %cst_208 = arith.constant 8.000000e+00 : f32
    %716 = vector.broadcast %cst_208 : f32 to vector<1x1xf32>
    %717 = arith.divf %715, %716 : vector<1x1xf32>
    %718 = vector.broadcast %717 : vector<1x1xf32> to vector<8x1xf32>
    %719 = arith.subf %695, %718 : vector<8x1xf32>
    %720 = arith.mulf %719, %719 : vector<8x1xf32>
    %cst_209 = arith.constant dense<0.000000e+00> : vector<1xf32>
    %721 = vector.multi_reduction <add>, %720, %cst_209 [0] : vector<8x1xf32> to vector<1xf32>
    %722 = vector.shape_cast %721 : vector<1xf32> to vector<1x1xf32>
    %cst_210 = arith.constant 0.142857149 : f32
    %723 = vector.broadcast %cst_210 : f32 to vector<1x1xf32>
    %724 = arith.mulf %722, %723 : vector<1x1xf32>
    %725 = vector.broadcast %717 : vector<1x1xf32> to vector<8x1xf32>
    %726 = arith.subf %695, %725 : vector<8x1xf32>
    %727 = arith.mulf %691, %726 : vector<8x1xf32>
    %cst_211 = arith.constant 9.99999974E-6 : f32
    %728 = vector.broadcast %cst_211 : f32 to vector<1x1xf32>
    %729 = arith.addf %724, %728 : vector<1x1xf32>
    %730 = math.rsqrt %729 : vector<1x1xf32>
    %731 = vector.broadcast %730 : vector<1x1xf32> to vector<8x1xf32>
    %732 = arith.mulf %727, %731 : vector<8x1xf32>
    %733 = vector.broadcast %732 : vector<8x1xf32> to vector<8x256xf32>
    %734 = arith.addf %713, %733 : vector<8x256xf32>
    %cst_212 = arith.constant 0.000000e+00 : f32
    %735 = vector.broadcast %cst_212 : f32 to vector<8x256xf32>
    %736 = arith.cmpf ogt, %734, %735 : vector<8x256xf32>
    %cst_213 = arith.constant 0.000000e+00 : f32
    %737 = vector.broadcast %cst_213 : f32 to vector<8x256xf32>
    %738 = arith.minimumf %734, %737 : vector<8x256xf32>
    %739 = math.exp %738 : vector<8x256xf32>
    %cst_214 = arith.constant 1.000000e+00 : f32
    %740 = vector.broadcast %cst_214 : f32 to vector<8x256xf32>
    %741 = arith.subf %739, %740 : vector<8x256xf32>
    %742 = arith.select %736, %734, %741 : vector<8x256xi1>, vector<8x256xf32>
    %cst_215 = arith.constant 0.000000e+00 : f32
    %743 = vector.broadcast %cst_215 : f32 to vector<8x128xf32>
    %744 = tpu.concatenate %743, %742, %743 in 1 : vector<8x128xf32>, vector<8x256xf32>, vector<8x128xf32> -> vector<8x512xf32>
    %745 = vector.extract_strided_slice %744 {offsets = [0, 111], sizes = [8, 256], strides = [1, 1]} : vector<8x512xf32> to vector<8x256xf32>
    %746 = vector.broadcast %38 : vector<1x256xf32> to vector<8x256xf32>
    %747 = arith.mulf %745, %746 : vector<8x256xf32>
    %748 = vector.extract_strided_slice %744 {offsets = [0, 112], sizes = [8, 256], strides = [1, 1]} : vector<8x512xf32> to vector<8x256xf32>
    %749 = vector.extract_strided_slice %744 {offsets = [0, 113], sizes = [8, 256], strides = [1, 1]} : vector<8x512xf32> to vector<8x256xf32>
    %750 = vector.broadcast %49 : vector<1x256xf32> to vector<8x256xf32>
    %751 = arith.mulf %749, %750 : vector<8x256xf32>
    %752 = vector.extract_strided_slice %744 {offsets = [0, 127], sizes = [8, 256], strides = [1, 1]} : vector<8x512xf32> to vector<8x256xf32>
    %753 = vector.broadcast %38 : vector<1x256xf32> to vector<8x256xf32>
    %754 = arith.mulf %752, %753 : vector<8x256xf32>
    %755 = vector.extract_strided_slice %744 {offsets = [0, 128], sizes = [8, 256], strides = [1, 1]} : vector<8x512xf32> to vector<8x256xf32>
    %756 = vector.extract_strided_slice %744 {offsets = [0, 129], sizes = [8, 256], strides = [1, 1]} : vector<8x512xf32> to vector<8x256xf32>
    %757 = vector.broadcast %49 : vector<1x256xf32> to vector<8x256xf32>
    %758 = arith.mulf %756, %757 : vector<8x256xf32>
    %759 = vector.extract_strided_slice %744 {offsets = [0, 143], sizes = [8, 256], strides = [1, 1]} : vector<8x512xf32> to vector<8x256xf32>
    %760 = vector.broadcast %38 : vector<1x256xf32> to vector<8x256xf32>
    %761 = arith.mulf %759, %760 : vector<8x256xf32>
    %762 = vector.extract_strided_slice %744 {offsets = [0, 144], sizes = [8, 256], strides = [1, 1]} : vector<8x512xf32> to vector<8x256xf32>
    %763 = vector.extract_strided_slice %744 {offsets = [0, 145], sizes = [8, 256], strides = [1, 1]} : vector<8x512xf32> to vector<8x256xf32>
    %764 = vector.broadcast %49 : vector<1x256xf32> to vector<8x256xf32>
    %765 = arith.mulf %763, %764 : vector<8x256xf32>
    %766 = tpu.concatenate %747, %748, %751, %754, %755, %758, %761, %762, %765 in 0 : vector<8x256xf32>, vector<8x256xf32>, vector<8x256xf32>, vector<8x256xf32>, vector<8x256xf32>, vector<8x256xf32>, vector<8x256xf32>, vector<8x256xf32>, vector<8x256xf32> -> vector<72x256xf32>
    %c7_216 = arith.constant 7 : index
    %c0_217 = arith.constant 0 : index
    %c0_218 = arith.constant 0 : index
    %767 = vector.load %arg7[%c7_216, %c0_217, %c0_218] : memref<14x8x72xf32, #tpu.memory_space<vmem>>, vector<1x8x72xf32>
    %768 = vector.shape_cast %767 : vector<1x8x72xf32> to vector<8x72xf32>
    %c7_219 = arith.constant 7 : index
    %c0_220 = arith.constant 0 : index
    %c0_221 = arith.constant 0 : index
    %769 = vector.load %arg8[%c7_219, %c0_220, %c0_221] : memref<14x8x1xf32, #tpu.memory_space<vmem>>, vector<1x8x1xf32>
    %770 = vector.shape_cast %769 : vector<1x8x1xf32> to vector<8x1xf32>
    %cst_222 = arith.constant dense<0.000000e+00> : vector<8x256xf32>
    %771 = tpu.matmul %768, %766, %cst_222 {dimension_numbers = #tpu.dot_dimension_numbers<[1], [0], [0], [1], [0, 0, 1, 1], [], []>} : vector<8x72xf32>, vector<72x256xf32>, vector<8x256xf32> -> vector<8x256xf32>
    %772 = vector.broadcast %770 : vector<8x1xf32> to vector<8x256xf32>
    %773 = arith.addf %771, %772 : vector<8x256xf32>
    %774 = arith.addf %599, %773 : vector<8x256xf32>
    %c0_223 = arith.constant 0 : index
    %c8 = arith.constant 8 : index
    %c0_224 = arith.constant 0 : index
    %c0_225 = arith.constant 0 : index
    %775 = vector.load %arg9[%c0_223, %c8, %c0_224, %c0_225] : memref<1x16x8x3xf32, #tpu.memory_space<vmem>>, vector<1x1x8x3xf32>
    %776 = vector.shape_cast %775 : vector<1x1x8x3xf32> to vector<8x3xf32>
    %777 = vector.extract_strided_slice %776 {offsets = [0, 0], sizes = [8, 1], strides = [1, 1]} : vector<8x3xf32> to vector<8x1xf32>
    %778 = vector.extract_strided_slice %776 {offsets = [0, 1], sizes = [8, 1], strides = [1, 1]} : vector<8x3xf32> to vector<8x1xf32>
    %779 = vector.extract_strided_slice %776 {offsets = [0, 2], sizes = [8, 1], strides = [1, 1]} : vector<8x3xf32> to vector<8x1xf32>
    %cst_226 = arith.constant dense<0.000000e+00> : vector<8xf32>
    %780 = vector.multi_reduction <add>, %419, %cst_226 [1] : vector<8x256xf32> to vector<8xf32>
    %781 = vector.shape_cast %780 : vector<8xf32> to vector<8x1xf32>
    %cst_227 = arith.constant 2.560000e+02 : f32
    %782 = vector.broadcast %cst_227 : f32 to vector<8x1xf32>
    %783 = arith.divf %781, %782 : vector<8x1xf32>
    %784 = vector.broadcast %783 : vector<8x1xf32> to vector<8x256xf32>
    %785 = arith.subf %419, %784 : vector<8x256xf32>
    %786 = arith.mulf %785, %785 : vector<8x256xf32>
    %cst_228 = arith.constant dense<0.000000e+00> : vector<8xf32>
    %787 = vector.multi_reduction <add>, %786, %cst_228 [1] : vector<8x256xf32> to vector<8xf32>
    %788 = vector.shape_cast %787 : vector<8xf32> to vector<8x1xf32>
    %cst_229 = arith.constant 0.00392156886 : f32
    %789 = vector.broadcast %cst_229 : f32 to vector<8x1xf32>
    %790 = arith.mulf %788, %789 : vector<8x1xf32>
    %791 = vector.broadcast %783 : vector<8x1xf32> to vector<8x256xf32>
    %792 = arith.subf %419, %791 : vector<8x256xf32>
    %cst_230 = arith.constant 9.99999974E-6 : f32
    %793 = vector.broadcast %cst_230 : f32 to vector<8x1xf32>
    %794 = arith.addf %790, %793 : vector<8x1xf32>
    %795 = math.rsqrt %794 : vector<8x1xf32>
    %796 = vector.broadcast %795 : vector<8x1xf32> to vector<8x256xf32>
    %797 = arith.mulf %792, %796 : vector<8x256xf32>
    %798 = vector.broadcast %777 : vector<8x1xf32> to vector<8x256xf32>
    %799 = arith.mulf %798, %797 : vector<8x256xf32>
    %800 = vector.broadcast %778 : vector<8x1xf32> to vector<8x256xf32>
    %801 = arith.addf %799, %800 : vector<8x256xf32>
    %cst_231 = arith.constant dense<0.000000e+00> : vector<1xf32>
    %802 = vector.multi_reduction <add>, %783, %cst_231 [0] : vector<8x1xf32> to vector<1xf32>
    %803 = vector.shape_cast %802 : vector<1xf32> to vector<1x1xf32>
    %cst_232 = arith.constant 8.000000e+00 : f32
    %804 = vector.broadcast %cst_232 : f32 to vector<1x1xf32>
    %805 = arith.divf %803, %804 : vector<1x1xf32>
    %806 = vector.broadcast %805 : vector<1x1xf32> to vector<8x1xf32>
    %807 = arith.subf %783, %806 : vector<8x1xf32>
    %808 = arith.mulf %807, %807 : vector<8x1xf32>
    %cst_233 = arith.constant dense<0.000000e+00> : vector<1xf32>
    %809 = vector.multi_reduction <add>, %808, %cst_233 [0] : vector<8x1xf32> to vector<1xf32>
    %810 = vector.shape_cast %809 : vector<1xf32> to vector<1x1xf32>
    %cst_234 = arith.constant 0.142857149 : f32
    %811 = vector.broadcast %cst_234 : f32 to vector<1x1xf32>
    %812 = arith.mulf %810, %811 : vector<1x1xf32>
    %813 = vector.broadcast %805 : vector<1x1xf32> to vector<8x1xf32>
    %814 = arith.subf %783, %813 : vector<8x1xf32>
    %815 = arith.mulf %779, %814 : vector<8x1xf32>
    %cst_235 = arith.constant 9.99999974E-6 : f32
    %816 = vector.broadcast %cst_235 : f32 to vector<1x1xf32>
    %817 = arith.addf %812, %816 : vector<1x1xf32>
    %818 = math.rsqrt %817 : vector<1x1xf32>
    %819 = vector.broadcast %818 : vector<1x1xf32> to vector<8x1xf32>
    %820 = arith.mulf %815, %819 : vector<8x1xf32>
    %821 = vector.broadcast %820 : vector<8x1xf32> to vector<8x256xf32>
    %822 = arith.addf %801, %821 : vector<8x256xf32>
    %cst_236 = arith.constant 0.000000e+00 : f32
    %823 = vector.broadcast %cst_236 : f32 to vector<8x128xf32>
    %824 = tpu.concatenate %823, %822, %823 in 1 : vector<8x128xf32>, vector<8x256xf32>, vector<8x128xf32> -> vector<8x512xf32>
    %825 = vector.extract_strided_slice %824 {offsets = [0, 111], sizes = [8, 256], strides = [1, 1]} : vector<8x512xf32> to vector<8x256xf32>
    %826 = vector.broadcast %38 : vector<1x256xf32> to vector<8x256xf32>
    %827 = arith.mulf %825, %826 : vector<8x256xf32>
    %828 = vector.extract_strided_slice %824 {offsets = [0, 112], sizes = [8, 256], strides = [1, 1]} : vector<8x512xf32> to vector<8x256xf32>
    %829 = vector.extract_strided_slice %824 {offsets = [0, 113], sizes = [8, 256], strides = [1, 1]} : vector<8x512xf32> to vector<8x256xf32>
    %830 = vector.broadcast %49 : vector<1x256xf32> to vector<8x256xf32>
    %831 = arith.mulf %829, %830 : vector<8x256xf32>
    %832 = vector.extract_strided_slice %824 {offsets = [0, 127], sizes = [8, 256], strides = [1, 1]} : vector<8x512xf32> to vector<8x256xf32>
    %833 = vector.broadcast %38 : vector<1x256xf32> to vector<8x256xf32>
    %834 = arith.mulf %832, %833 : vector<8x256xf32>
    %835 = vector.extract_strided_slice %824 {offsets = [0, 128], sizes = [8, 256], strides = [1, 1]} : vector<8x512xf32> to vector<8x256xf32>
    %836 = vector.extract_strided_slice %824 {offsets = [0, 129], sizes = [8, 256], strides = [1, 1]} : vector<8x512xf32> to vector<8x256xf32>
    %837 = vector.broadcast %49 : vector<1x256xf32> to vector<8x256xf32>
    %838 = arith.mulf %836, %837 : vector<8x256xf32>
    %839 = vector.extract_strided_slice %824 {offsets = [0, 143], sizes = [8, 256], strides = [1, 1]} : vector<8x512xf32> to vector<8x256xf32>
    %840 = vector.broadcast %38 : vector<1x256xf32> to vector<8x256xf32>
    %841 = arith.mulf %839, %840 : vector<8x256xf32>
    %842 = vector.extract_strided_slice %824 {offsets = [0, 144], sizes = [8, 256], strides = [1, 1]} : vector<8x512xf32> to vector<8x256xf32>
    %843 = vector.extract_strided_slice %824 {offsets = [0, 145], sizes = [8, 256], strides = [1, 1]} : vector<8x512xf32> to vector<8x256xf32>
    %844 = vector.broadcast %49 : vector<1x256xf32> to vector<8x256xf32>
    %845 = arith.mulf %843, %844 : vector<8x256xf32>
    %846 = tpu.concatenate %827, %828, %831, %834, %835, %838, %841, %842, %845 in 0 : vector<8x256xf32>, vector<8x256xf32>, vector<8x256xf32>, vector<8x256xf32>, vector<8x256xf32>, vector<8x256xf32>, vector<8x256xf32>, vector<8x256xf32>, vector<8x256xf32> -> vector<72x256xf32>
    %c8_237 = arith.constant 8 : index
    %c0_238 = arith.constant 0 : index
    %c0_239 = arith.constant 0 : index
    %847 = vector.load %arg7[%c8_237, %c0_238, %c0_239] : memref<14x8x72xf32, #tpu.memory_space<vmem>>, vector<1x8x72xf32>
    %848 = vector.shape_cast %847 : vector<1x8x72xf32> to vector<8x72xf32>
    %c8_240 = arith.constant 8 : index
    %c0_241 = arith.constant 0 : index
    %c0_242 = arith.constant 0 : index
    %849 = vector.load %arg8[%c8_240, %c0_241, %c0_242] : memref<14x8x1xf32, #tpu.memory_space<vmem>>, vector<1x8x1xf32>
    %850 = vector.shape_cast %849 : vector<1x8x1xf32> to vector<8x1xf32>
    %cst_243 = arith.constant dense<0.000000e+00> : vector<8x256xf32>
    %851 = tpu.matmul %848, %846, %cst_243 {dimension_numbers = #tpu.dot_dimension_numbers<[1], [0], [0], [1], [0, 0, 1, 1], [], []>} : vector<8x72xf32>, vector<72x256xf32>, vector<8x256xf32> -> vector<8x256xf32>
    %852 = vector.broadcast %850 : vector<8x1xf32> to vector<8x256xf32>
    %853 = arith.addf %851, %852 : vector<8x256xf32>
    %c0_244 = arith.constant 0 : index
    %c9 = arith.constant 9 : index
    %c0_245 = arith.constant 0 : index
    %c0_246 = arith.constant 0 : index
    %854 = vector.load %arg9[%c0_244, %c9, %c0_245, %c0_246] : memref<1x16x8x3xf32, #tpu.memory_space<vmem>>, vector<1x1x8x3xf32>
    %855 = vector.shape_cast %854 : vector<1x1x8x3xf32> to vector<8x3xf32>
    %856 = vector.extract_strided_slice %855 {offsets = [0, 0], sizes = [8, 1], strides = [1, 1]} : vector<8x3xf32> to vector<8x1xf32>
    %857 = vector.extract_strided_slice %855 {offsets = [0, 1], sizes = [8, 1], strides = [1, 1]} : vector<8x3xf32> to vector<8x1xf32>
    %858 = vector.extract_strided_slice %855 {offsets = [0, 2], sizes = [8, 1], strides = [1, 1]} : vector<8x3xf32> to vector<8x1xf32>
    %cst_247 = arith.constant dense<0.000000e+00> : vector<8xf32>
    %859 = vector.multi_reduction <add>, %774, %cst_247 [1] : vector<8x256xf32> to vector<8xf32>
    %860 = vector.shape_cast %859 : vector<8xf32> to vector<8x1xf32>
    %cst_248 = arith.constant 2.560000e+02 : f32
    %861 = vector.broadcast %cst_248 : f32 to vector<8x1xf32>
    %862 = arith.divf %860, %861 : vector<8x1xf32>
    %863 = vector.broadcast %862 : vector<8x1xf32> to vector<8x256xf32>
    %864 = arith.subf %774, %863 : vector<8x256xf32>
    %865 = arith.mulf %864, %864 : vector<8x256xf32>
    %cst_249 = arith.constant dense<0.000000e+00> : vector<8xf32>
    %866 = vector.multi_reduction <add>, %865, %cst_249 [1] : vector<8x256xf32> to vector<8xf32>
    %867 = vector.shape_cast %866 : vector<8xf32> to vector<8x1xf32>
    %cst_250 = arith.constant 0.00392156886 : f32
    %868 = vector.broadcast %cst_250 : f32 to vector<8x1xf32>
    %869 = arith.mulf %867, %868 : vector<8x1xf32>
    %870 = vector.broadcast %862 : vector<8x1xf32> to vector<8x256xf32>
    %871 = arith.subf %774, %870 : vector<8x256xf32>
    %cst_251 = arith.constant 9.99999974E-6 : f32
    %872 = vector.broadcast %cst_251 : f32 to vector<8x1xf32>
    %873 = arith.addf %869, %872 : vector<8x1xf32>
    %874 = math.rsqrt %873 : vector<8x1xf32>
    %875 = vector.broadcast %874 : vector<8x1xf32> to vector<8x256xf32>
    %876 = arith.mulf %871, %875 : vector<8x256xf32>
    %877 = vector.broadcast %856 : vector<8x1xf32> to vector<8x256xf32>
    %878 = arith.mulf %877, %876 : vector<8x256xf32>
    %879 = vector.broadcast %857 : vector<8x1xf32> to vector<8x256xf32>
    %880 = arith.addf %878, %879 : vector<8x256xf32>
    %cst_252 = arith.constant dense<0.000000e+00> : vector<1xf32>
    %881 = vector.multi_reduction <add>, %862, %cst_252 [0] : vector<8x1xf32> to vector<1xf32>
    %882 = vector.shape_cast %881 : vector<1xf32> to vector<1x1xf32>
    %cst_253 = arith.constant 8.000000e+00 : f32
    %883 = vector.broadcast %cst_253 : f32 to vector<1x1xf32>
    %884 = arith.divf %882, %883 : vector<1x1xf32>
    %885 = vector.broadcast %884 : vector<1x1xf32> to vector<8x1xf32>
    %886 = arith.subf %862, %885 : vector<8x1xf32>
    %887 = arith.mulf %886, %886 : vector<8x1xf32>
    %cst_254 = arith.constant dense<0.000000e+00> : vector<1xf32>
    %888 = vector.multi_reduction <add>, %887, %cst_254 [0] : vector<8x1xf32> to vector<1xf32>
    %889 = vector.shape_cast %888 : vector<1xf32> to vector<1x1xf32>
    %cst_255 = arith.constant 0.142857149 : f32
    %890 = vector.broadcast %cst_255 : f32 to vector<1x1xf32>
    %891 = arith.mulf %889, %890 : vector<1x1xf32>
    %892 = vector.broadcast %884 : vector<1x1xf32> to vector<8x1xf32>
    %893 = arith.subf %862, %892 : vector<8x1xf32>
    %894 = arith.mulf %858, %893 : vector<8x1xf32>
    %cst_256 = arith.constant 9.99999974E-6 : f32
    %895 = vector.broadcast %cst_256 : f32 to vector<1x1xf32>
    %896 = arith.addf %891, %895 : vector<1x1xf32>
    %897 = math.rsqrt %896 : vector<1x1xf32>
    %898 = vector.broadcast %897 : vector<1x1xf32> to vector<8x1xf32>
    %899 = arith.mulf %894, %898 : vector<8x1xf32>
    %900 = vector.broadcast %899 : vector<8x1xf32> to vector<8x256xf32>
    %901 = arith.addf %880, %900 : vector<8x256xf32>
    %cst_257 = arith.constant 0.000000e+00 : f32
    %902 = vector.broadcast %cst_257 : f32 to vector<8x128xf32>
    %903 = tpu.concatenate %902, %901, %902 in 1 : vector<8x128xf32>, vector<8x256xf32>, vector<8x128xf32> -> vector<8x512xf32>
    %904 = vector.extract_strided_slice %903 {offsets = [0, 111], sizes = [8, 256], strides = [1, 1]} : vector<8x512xf32> to vector<8x256xf32>
    %905 = vector.broadcast %38 : vector<1x256xf32> to vector<8x256xf32>
    %906 = arith.mulf %904, %905 : vector<8x256xf32>
    %907 = vector.extract_strided_slice %903 {offsets = [0, 112], sizes = [8, 256], strides = [1, 1]} : vector<8x512xf32> to vector<8x256xf32>
    %908 = vector.extract_strided_slice %903 {offsets = [0, 113], sizes = [8, 256], strides = [1, 1]} : vector<8x512xf32> to vector<8x256xf32>
    %909 = vector.broadcast %49 : vector<1x256xf32> to vector<8x256xf32>
    %910 = arith.mulf %908, %909 : vector<8x256xf32>
    %911 = vector.extract_strided_slice %903 {offsets = [0, 127], sizes = [8, 256], strides = [1, 1]} : vector<8x512xf32> to vector<8x256xf32>
    %912 = vector.broadcast %38 : vector<1x256xf32> to vector<8x256xf32>
    %913 = arith.mulf %911, %912 : vector<8x256xf32>
    %914 = vector.extract_strided_slice %903 {offsets = [0, 128], sizes = [8, 256], strides = [1, 1]} : vector<8x512xf32> to vector<8x256xf32>
    %915 = vector.extract_strided_slice %903 {offsets = [0, 129], sizes = [8, 256], strides = [1, 1]} : vector<8x512xf32> to vector<8x256xf32>
    %916 = vector.broadcast %49 : vector<1x256xf32> to vector<8x256xf32>
    %917 = arith.mulf %915, %916 : vector<8x256xf32>
    %918 = vector.extract_strided_slice %903 {offsets = [0, 143], sizes = [8, 256], strides = [1, 1]} : vector<8x512xf32> to vector<8x256xf32>
    %919 = vector.broadcast %38 : vector<1x256xf32> to vector<8x256xf32>
    %920 = arith.mulf %918, %919 : vector<8x256xf32>
    %921 = vector.extract_strided_slice %903 {offsets = [0, 144], sizes = [8, 256], strides = [1, 1]} : vector<8x512xf32> to vector<8x256xf32>
    %922 = vector.extract_strided_slice %903 {offsets = [0, 145], sizes = [8, 256], strides = [1, 1]} : vector<8x512xf32> to vector<8x256xf32>
    %923 = vector.broadcast %49 : vector<1x256xf32> to vector<8x256xf32>
    %924 = arith.mulf %922, %923 : vector<8x256xf32>
    %925 = tpu.concatenate %906, %907, %910, %913, %914, %917, %920, %921, %924 in 0 : vector<8x256xf32>, vector<8x256xf32>, vector<8x256xf32>, vector<8x256xf32>, vector<8x256xf32>, vector<8x256xf32>, vector<8x256xf32>, vector<8x256xf32>, vector<8x256xf32> -> vector<72x256xf32>
    %c9_258 = arith.constant 9 : index
    %c0_259 = arith.constant 0 : index
    %c0_260 = arith.constant 0 : index
    %926 = vector.load %arg7[%c9_258, %c0_259, %c0_260] : memref<14x8x72xf32, #tpu.memory_space<vmem>>, vector<1x8x72xf32>
    %927 = vector.shape_cast %926 : vector<1x8x72xf32> to vector<8x72xf32>
    %c9_261 = arith.constant 9 : index
    %c0_262 = arith.constant 0 : index
    %c0_263 = arith.constant 0 : index
    %928 = vector.load %arg8[%c9_261, %c0_262, %c0_263] : memref<14x8x1xf32, #tpu.memory_space<vmem>>, vector<1x8x1xf32>
    %929 = vector.shape_cast %928 : vector<1x8x1xf32> to vector<8x1xf32>
    %cst_264 = arith.constant dense<0.000000e+00> : vector<8x256xf32>
    %930 = tpu.matmul %927, %925, %cst_264 {dimension_numbers = #tpu.dot_dimension_numbers<[1], [0], [0], [1], [0, 0, 1, 1], [], []>} : vector<8x72xf32>, vector<72x256xf32>, vector<8x256xf32> -> vector<8x256xf32>
    %931 = vector.broadcast %929 : vector<8x1xf32> to vector<8x256xf32>
    %932 = arith.addf %930, %931 : vector<8x256xf32>
    %933 = arith.addf %853, %932 : vector<8x256xf32>
    %cst_265 = arith.constant 0.000000e+00 : f32
    %934 = vector.broadcast %cst_265 : f32 to vector<8x256xf32>
    %935 = arith.cmpf ogt, %933, %934 : vector<8x256xf32>
    %cst_266 = arith.constant 0.000000e+00 : f32
    %936 = vector.broadcast %cst_266 : f32 to vector<8x256xf32>
    %937 = arith.minimumf %933, %936 : vector<8x256xf32>
    %938 = math.exp %937 : vector<8x256xf32>
    %cst_267 = arith.constant 1.000000e+00 : f32
    %939 = vector.broadcast %cst_267 : f32 to vector<8x256xf32>
    %940 = arith.subf %938, %939 : vector<8x256xf32>
    %941 = arith.select %935, %933, %940 : vector<8x256xi1>, vector<8x256xf32>
    %c0_268 = arith.constant 0 : index
    %c10 = arith.constant 10 : index
    %c0_269 = arith.constant 0 : index
    %c0_270 = arith.constant 0 : index
    %942 = vector.load %arg9[%c0_268, %c10, %c0_269, %c0_270] : memref<1x16x8x3xf32, #tpu.memory_space<vmem>>, vector<1x1x8x3xf32>
    %943 = vector.shape_cast %942 : vector<1x1x8x3xf32> to vector<8x3xf32>
    %944 = vector.extract_strided_slice %943 {offsets = [0, 0], sizes = [8, 1], strides = [1, 1]} : vector<8x3xf32> to vector<8x1xf32>
    %945 = vector.extract_strided_slice %943 {offsets = [0, 1], sizes = [8, 1], strides = [1, 1]} : vector<8x3xf32> to vector<8x1xf32>
    %946 = vector.extract_strided_slice %943 {offsets = [0, 2], sizes = [8, 1], strides = [1, 1]} : vector<8x3xf32> to vector<8x1xf32>
    %cst_271 = arith.constant dense<0.000000e+00> : vector<8xf32>
    %947 = vector.multi_reduction <add>, %941, %cst_271 [1] : vector<8x256xf32> to vector<8xf32>
    %948 = vector.shape_cast %947 : vector<8xf32> to vector<8x1xf32>
    %cst_272 = arith.constant 2.560000e+02 : f32
    %949 = vector.broadcast %cst_272 : f32 to vector<8x1xf32>
    %950 = arith.divf %948, %949 : vector<8x1xf32>
    %951 = vector.broadcast %950 : vector<8x1xf32> to vector<8x256xf32>
    %952 = arith.subf %941, %951 : vector<8x256xf32>
    %953 = arith.mulf %952, %952 : vector<8x256xf32>
    %cst_273 = arith.constant dense<0.000000e+00> : vector<8xf32>
    %954 = vector.multi_reduction <add>, %953, %cst_273 [1] : vector<8x256xf32> to vector<8xf32>
    %955 = vector.shape_cast %954 : vector<8xf32> to vector<8x1xf32>
    %cst_274 = arith.constant 0.00392156886 : f32
    %956 = vector.broadcast %cst_274 : f32 to vector<8x1xf32>
    %957 = arith.mulf %955, %956 : vector<8x1xf32>
    %958 = vector.broadcast %950 : vector<8x1xf32> to vector<8x256xf32>
    %959 = arith.subf %941, %958 : vector<8x256xf32>
    %cst_275 = arith.constant 9.99999974E-6 : f32
    %960 = vector.broadcast %cst_275 : f32 to vector<8x1xf32>
    %961 = arith.addf %957, %960 : vector<8x1xf32>
    %962 = math.rsqrt %961 : vector<8x1xf32>
    %963 = vector.broadcast %962 : vector<8x1xf32> to vector<8x256xf32>
    %964 = arith.mulf %959, %963 : vector<8x256xf32>
    %965 = vector.broadcast %944 : vector<8x1xf32> to vector<8x256xf32>
    %966 = arith.mulf %965, %964 : vector<8x256xf32>
    %967 = vector.broadcast %945 : vector<8x1xf32> to vector<8x256xf32>
    %968 = arith.addf %966, %967 : vector<8x256xf32>
    %cst_276 = arith.constant dense<0.000000e+00> : vector<1xf32>
    %969 = vector.multi_reduction <add>, %950, %cst_276 [0] : vector<8x1xf32> to vector<1xf32>
    %970 = vector.shape_cast %969 : vector<1xf32> to vector<1x1xf32>
    %cst_277 = arith.constant 8.000000e+00 : f32
    %971 = vector.broadcast %cst_277 : f32 to vector<1x1xf32>
    %972 = arith.divf %970, %971 : vector<1x1xf32>
    %973 = vector.broadcast %972 : vector<1x1xf32> to vector<8x1xf32>
    %974 = arith.subf %950, %973 : vector<8x1xf32>
    %975 = arith.mulf %974, %974 : vector<8x1xf32>
    %cst_278 = arith.constant dense<0.000000e+00> : vector<1xf32>
    %976 = vector.multi_reduction <add>, %975, %cst_278 [0] : vector<8x1xf32> to vector<1xf32>
    %977 = vector.shape_cast %976 : vector<1xf32> to vector<1x1xf32>
    %cst_279 = arith.constant 0.142857149 : f32
    %978 = vector.broadcast %cst_279 : f32 to vector<1x1xf32>
    %979 = arith.mulf %977, %978 : vector<1x1xf32>
    %980 = vector.broadcast %972 : vector<1x1xf32> to vector<8x1xf32>
    %981 = arith.subf %950, %980 : vector<8x1xf32>
    %982 = arith.mulf %946, %981 : vector<8x1xf32>
    %cst_280 = arith.constant 9.99999974E-6 : f32
    %983 = vector.broadcast %cst_280 : f32 to vector<1x1xf32>
    %984 = arith.addf %979, %983 : vector<1x1xf32>
    %985 = math.rsqrt %984 : vector<1x1xf32>
    %986 = vector.broadcast %985 : vector<1x1xf32> to vector<8x1xf32>
    %987 = arith.mulf %982, %986 : vector<8x1xf32>
    %988 = vector.broadcast %987 : vector<8x1xf32> to vector<8x256xf32>
    %989 = arith.addf %968, %988 : vector<8x256xf32>
    %cst_281 = arith.constant 0.000000e+00 : f32
    %990 = vector.broadcast %cst_281 : f32 to vector<8x128xf32>
    %991 = tpu.concatenate %990, %989, %990 in 1 : vector<8x128xf32>, vector<8x256xf32>, vector<8x128xf32> -> vector<8x512xf32>
    %992 = vector.extract_strided_slice %991 {offsets = [0, 126], sizes = [8, 256], strides = [1, 1]} : vector<8x512xf32> to vector<8x256xf32>
    %993 = vector.broadcast %27 : vector<1x256xf32> to vector<8x256xf32>
    %994 = arith.mulf %992, %993 : vector<8x256xf32>
    %995 = arith.addf %989, %994 : vector<8x256xf32>
    %996 = vector.extract_strided_slice %991 {offsets = [0, 127], sizes = [8, 256], strides = [1, 1]} : vector<8x512xf32> to vector<8x256xf32>
    %997 = vector.broadcast %38 : vector<1x256xf32> to vector<8x256xf32>
    %998 = arith.mulf %996, %997 : vector<8x256xf32>
    %999 = arith.addf %995, %998 : vector<8x256xf32>
    %1000 = vector.extract_strided_slice %991 {offsets = [0, 129], sizes = [8, 256], strides = [1, 1]} : vector<8x512xf32> to vector<8x256xf32>
    %1001 = vector.broadcast %49 : vector<1x256xf32> to vector<8x256xf32>
    %1002 = arith.mulf %1000, %1001 : vector<8x256xf32>
    %1003 = arith.addf %999, %1002 : vector<8x256xf32>
    %1004 = vector.extract_strided_slice %991 {offsets = [0, 130], sizes = [8, 256], strides = [1, 1]} : vector<8x512xf32> to vector<8x256xf32>
    %1005 = vector.broadcast %60 : vector<1x256xf32> to vector<8x256xf32>
    %1006 = arith.mulf %1004, %1005 : vector<8x256xf32>
    %1007 = arith.addf %1003, %1006 : vector<8x256xf32>
    %cst_282 = arith.constant 0.000000e+00 : f32
    %1008 = vector.broadcast %cst_282 : f32 to vector<8x128xf32>
    %1009 = tpu.concatenate %1008, %1007, %1008 in 1 : vector<8x128xf32>, vector<8x256xf32>, vector<8x128xf32> -> vector<8x512xf32>
    %1010 = vector.extract_strided_slice %1009 {offsets = [0, 96], sizes = [8, 256], strides = [1, 1]} : vector<8x512xf32> to vector<8x256xf32>
    %1011 = arith.addf %1007, %1010 : vector<8x256xf32>
    %1012 = vector.extract_strided_slice %1009 {offsets = [0, 112], sizes = [8, 256], strides = [1, 1]} : vector<8x512xf32> to vector<8x256xf32>
    %1013 = arith.addf %1011, %1012 : vector<8x256xf32>
    %1014 = vector.extract_strided_slice %1009 {offsets = [0, 144], sizes = [8, 256], strides = [1, 1]} : vector<8x512xf32> to vector<8x256xf32>
    %1015 = arith.addf %1013, %1014 : vector<8x256xf32>
    %1016 = vector.extract_strided_slice %1009 {offsets = [0, 160], sizes = [8, 256], strides = [1, 1]} : vector<8x512xf32> to vector<8x256xf32>
    %1017 = arith.addf %1015, %1016 : vector<8x256xf32>
    %cst_283 = arith.constant 4.000000e-02 : f32
    %1018 = vector.broadcast %cst_283 : f32 to vector<8x256xf32>
    %1019 = arith.mulf %1017, %1018 : vector<8x256xf32>
    %c0_284 = arith.constant 0 : index
    %c11 = arith.constant 11 : index
    %c0_285 = arith.constant 0 : index
    %c0_286 = arith.constant 0 : index
    %1020 = vector.load %arg9[%c0_284, %c11, %c0_285, %c0_286] : memref<1x16x8x3xf32, #tpu.memory_space<vmem>>, vector<1x1x8x3xf32>
    %1021 = vector.shape_cast %1020 : vector<1x1x8x3xf32> to vector<8x3xf32>
    %1022 = vector.extract_strided_slice %1021 {offsets = [0, 0], sizes = [8, 1], strides = [1, 1]} : vector<8x3xf32> to vector<8x1xf32>
    %1023 = vector.extract_strided_slice %1021 {offsets = [0, 1], sizes = [8, 1], strides = [1, 1]} : vector<8x3xf32> to vector<8x1xf32>
    %1024 = vector.extract_strided_slice %1021 {offsets = [0, 2], sizes = [8, 1], strides = [1, 1]} : vector<8x3xf32> to vector<8x1xf32>
    %cst_287 = arith.constant dense<0.000000e+00> : vector<8xf32>
    %1025 = vector.multi_reduction <add>, %1019, %cst_287 [1] : vector<8x256xf32> to vector<8xf32>
    %1026 = vector.shape_cast %1025 : vector<8xf32> to vector<8x1xf32>
    %cst_288 = arith.constant 2.560000e+02 : f32
    %1027 = vector.broadcast %cst_288 : f32 to vector<8x1xf32>
    %1028 = arith.divf %1026, %1027 : vector<8x1xf32>
    %1029 = vector.broadcast %1028 : vector<8x1xf32> to vector<8x256xf32>
    %1030 = arith.subf %1019, %1029 : vector<8x256xf32>
    %1031 = arith.mulf %1030, %1030 : vector<8x256xf32>
    %cst_289 = arith.constant dense<0.000000e+00> : vector<8xf32>
    %1032 = vector.multi_reduction <add>, %1031, %cst_289 [1] : vector<8x256xf32> to vector<8xf32>
    %1033 = vector.shape_cast %1032 : vector<8xf32> to vector<8x1xf32>
    %cst_290 = arith.constant 0.00392156886 : f32
    %1034 = vector.broadcast %cst_290 : f32 to vector<8x1xf32>
    %1035 = arith.mulf %1033, %1034 : vector<8x1xf32>
    %1036 = vector.broadcast %1028 : vector<8x1xf32> to vector<8x256xf32>
    %1037 = arith.subf %1019, %1036 : vector<8x256xf32>
    %cst_291 = arith.constant 9.99999974E-6 : f32
    %1038 = vector.broadcast %cst_291 : f32 to vector<8x1xf32>
    %1039 = arith.addf %1035, %1038 : vector<8x1xf32>
    %1040 = math.rsqrt %1039 : vector<8x1xf32>
    %1041 = vector.broadcast %1040 : vector<8x1xf32> to vector<8x256xf32>
    %1042 = arith.mulf %1037, %1041 : vector<8x256xf32>
    %1043 = vector.broadcast %1022 : vector<8x1xf32> to vector<8x256xf32>
    %1044 = arith.mulf %1043, %1042 : vector<8x256xf32>
    %1045 = vector.broadcast %1023 : vector<8x1xf32> to vector<8x256xf32>
    %1046 = arith.addf %1044, %1045 : vector<8x256xf32>
    %cst_292 = arith.constant dense<0.000000e+00> : vector<1xf32>
    %1047 = vector.multi_reduction <add>, %1028, %cst_292 [0] : vector<8x1xf32> to vector<1xf32>
    %1048 = vector.shape_cast %1047 : vector<1xf32> to vector<1x1xf32>
    %cst_293 = arith.constant 8.000000e+00 : f32
    %1049 = vector.broadcast %cst_293 : f32 to vector<1x1xf32>
    %1050 = arith.divf %1048, %1049 : vector<1x1xf32>
    %1051 = vector.broadcast %1050 : vector<1x1xf32> to vector<8x1xf32>
    %1052 = arith.subf %1028, %1051 : vector<8x1xf32>
    %1053 = arith.mulf %1052, %1052 : vector<8x1xf32>
    %cst_294 = arith.constant dense<0.000000e+00> : vector<1xf32>
    %1054 = vector.multi_reduction <add>, %1053, %cst_294 [0] : vector<8x1xf32> to vector<1xf32>
    %1055 = vector.shape_cast %1054 : vector<1xf32> to vector<1x1xf32>
    %cst_295 = arith.constant 0.142857149 : f32
    %1056 = vector.broadcast %cst_295 : f32 to vector<1x1xf32>
    %1057 = arith.mulf %1055, %1056 : vector<1x1xf32>
    %1058 = vector.broadcast %1050 : vector<1x1xf32> to vector<8x1xf32>
    %1059 = arith.subf %1028, %1058 : vector<8x1xf32>
    %1060 = arith.mulf %1024, %1059 : vector<8x1xf32>
    %cst_296 = arith.constant 9.99999974E-6 : f32
    %1061 = vector.broadcast %cst_296 : f32 to vector<1x1xf32>
    %1062 = arith.addf %1057, %1061 : vector<1x1xf32>
    %1063 = math.rsqrt %1062 : vector<1x1xf32>
    %1064 = vector.broadcast %1063 : vector<1x1xf32> to vector<8x1xf32>
    %1065 = arith.mulf %1060, %1064 : vector<8x1xf32>
    %1066 = vector.broadcast %1065 : vector<8x1xf32> to vector<8x256xf32>
    %1067 = arith.addf %1046, %1066 : vector<8x256xf32>
    %cst_297 = arith.constant 0.000000e+00 : f32
    %1068 = vector.broadcast %cst_297 : f32 to vector<8x128xf32>
    %1069 = tpu.concatenate %1068, %1067, %1068 in 1 : vector<8x128xf32>, vector<8x256xf32>, vector<8x128xf32> -> vector<8x512xf32>
    %1070 = vector.extract_strided_slice %1069 {offsets = [0, 111], sizes = [8, 256], strides = [1, 1]} : vector<8x512xf32> to vector<8x256xf32>
    %1071 = vector.broadcast %38 : vector<1x256xf32> to vector<8x256xf32>
    %1072 = arith.mulf %1070, %1071 : vector<8x256xf32>
    %1073 = vector.extract_strided_slice %1069 {offsets = [0, 112], sizes = [8, 256], strides = [1, 1]} : vector<8x512xf32> to vector<8x256xf32>
    %1074 = vector.extract_strided_slice %1069 {offsets = [0, 113], sizes = [8, 256], strides = [1, 1]} : vector<8x512xf32> to vector<8x256xf32>
    %1075 = vector.broadcast %49 : vector<1x256xf32> to vector<8x256xf32>
    %1076 = arith.mulf %1074, %1075 : vector<8x256xf32>
    %1077 = vector.extract_strided_slice %1069 {offsets = [0, 127], sizes = [8, 256], strides = [1, 1]} : vector<8x512xf32> to vector<8x256xf32>
    %1078 = vector.broadcast %38 : vector<1x256xf32> to vector<8x256xf32>
    %1079 = arith.mulf %1077, %1078 : vector<8x256xf32>
    %1080 = vector.extract_strided_slice %1069 {offsets = [0, 128], sizes = [8, 256], strides = [1, 1]} : vector<8x512xf32> to vector<8x256xf32>
    %1081 = vector.extract_strided_slice %1069 {offsets = [0, 129], sizes = [8, 256], strides = [1, 1]} : vector<8x512xf32> to vector<8x256xf32>
    %1082 = vector.broadcast %49 : vector<1x256xf32> to vector<8x256xf32>
    %1083 = arith.mulf %1081, %1082 : vector<8x256xf32>
    %1084 = vector.extract_strided_slice %1069 {offsets = [0, 143], sizes = [8, 256], strides = [1, 1]} : vector<8x512xf32> to vector<8x256xf32>
    %1085 = vector.broadcast %38 : vector<1x256xf32> to vector<8x256xf32>
    %1086 = arith.mulf %1084, %1085 : vector<8x256xf32>
    %1087 = vector.extract_strided_slice %1069 {offsets = [0, 144], sizes = [8, 256], strides = [1, 1]} : vector<8x512xf32> to vector<8x256xf32>
    %1088 = vector.extract_strided_slice %1069 {offsets = [0, 145], sizes = [8, 256], strides = [1, 1]} : vector<8x512xf32> to vector<8x256xf32>
    %1089 = vector.broadcast %49 : vector<1x256xf32> to vector<8x256xf32>
    %1090 = arith.mulf %1088, %1089 : vector<8x256xf32>
    %1091 = tpu.concatenate %1072, %1073, %1076, %1079, %1080, %1083, %1086, %1087, %1090 in 0 : vector<8x256xf32>, vector<8x256xf32>, vector<8x256xf32>, vector<8x256xf32>, vector<8x256xf32>, vector<8x256xf32>, vector<8x256xf32>, vector<8x256xf32>, vector<8x256xf32> -> vector<72x256xf32>
    %c10_298 = arith.constant 10 : index
    %c0_299 = arith.constant 0 : index
    %c0_300 = arith.constant 0 : index
    %1092 = vector.load %arg7[%c10_298, %c0_299, %c0_300] : memref<14x8x72xf32, #tpu.memory_space<vmem>>, vector<1x8x72xf32>
    %1093 = vector.shape_cast %1092 : vector<1x8x72xf32> to vector<8x72xf32>
    %c10_301 = arith.constant 10 : index
    %c0_302 = arith.constant 0 : index
    %c0_303 = arith.constant 0 : index
    %1094 = vector.load %arg8[%c10_301, %c0_302, %c0_303] : memref<14x8x1xf32, #tpu.memory_space<vmem>>, vector<1x8x1xf32>
    %1095 = vector.shape_cast %1094 : vector<1x8x1xf32> to vector<8x1xf32>
    %cst_304 = arith.constant dense<0.000000e+00> : vector<8x256xf32>
    %1096 = tpu.matmul %1093, %1091, %cst_304 {dimension_numbers = #tpu.dot_dimension_numbers<[1], [0], [0], [1], [0, 0, 1, 1], [], []>} : vector<8x72xf32>, vector<72x256xf32>, vector<8x256xf32> -> vector<8x256xf32>
    %1097 = vector.broadcast %1095 : vector<8x1xf32> to vector<8x256xf32>
    %1098 = arith.addf %1096, %1097 : vector<8x256xf32>
    %1099 = arith.addf %941, %1098 : vector<8x256xf32>
    %c0_305 = arith.constant 0 : index
    %c12 = arith.constant 12 : index
    %c0_306 = arith.constant 0 : index
    %c0_307 = arith.constant 0 : index
    %1100 = vector.load %arg9[%c0_305, %c12, %c0_306, %c0_307] : memref<1x16x8x3xf32, #tpu.memory_space<vmem>>, vector<1x1x8x3xf32>
    %1101 = vector.shape_cast %1100 : vector<1x1x8x3xf32> to vector<8x3xf32>
    %1102 = vector.extract_strided_slice %1101 {offsets = [0, 0], sizes = [8, 1], strides = [1, 1]} : vector<8x3xf32> to vector<8x1xf32>
    %1103 = vector.extract_strided_slice %1101 {offsets = [0, 1], sizes = [8, 1], strides = [1, 1]} : vector<8x3xf32> to vector<8x1xf32>
    %1104 = vector.extract_strided_slice %1101 {offsets = [0, 2], sizes = [8, 1], strides = [1, 1]} : vector<8x3xf32> to vector<8x1xf32>
    %cst_308 = arith.constant dense<0.000000e+00> : vector<8xf32>
    %1105 = vector.multi_reduction <add>, %1098, %cst_308 [1] : vector<8x256xf32> to vector<8xf32>
    %1106 = vector.shape_cast %1105 : vector<8xf32> to vector<8x1xf32>
    %cst_309 = arith.constant 2.560000e+02 : f32
    %1107 = vector.broadcast %cst_309 : f32 to vector<8x1xf32>
    %1108 = arith.divf %1106, %1107 : vector<8x1xf32>
    %1109 = vector.broadcast %1108 : vector<8x1xf32> to vector<8x256xf32>
    %1110 = arith.subf %1098, %1109 : vector<8x256xf32>
    %1111 = arith.mulf %1110, %1110 : vector<8x256xf32>
    %cst_310 = arith.constant dense<0.000000e+00> : vector<8xf32>
    %1112 = vector.multi_reduction <add>, %1111, %cst_310 [1] : vector<8x256xf32> to vector<8xf32>
    %1113 = vector.shape_cast %1112 : vector<8xf32> to vector<8x1xf32>
    %cst_311 = arith.constant 0.00392156886 : f32
    %1114 = vector.broadcast %cst_311 : f32 to vector<8x1xf32>
    %1115 = arith.mulf %1113, %1114 : vector<8x1xf32>
    %1116 = vector.broadcast %1108 : vector<8x1xf32> to vector<8x256xf32>
    %1117 = arith.subf %1098, %1116 : vector<8x256xf32>
    %cst_312 = arith.constant 9.99999974E-6 : f32
    %1118 = vector.broadcast %cst_312 : f32 to vector<8x1xf32>
    %1119 = arith.addf %1115, %1118 : vector<8x1xf32>
    %1120 = math.rsqrt %1119 : vector<8x1xf32>
    %1121 = vector.broadcast %1120 : vector<8x1xf32> to vector<8x256xf32>
    %1122 = arith.mulf %1117, %1121 : vector<8x256xf32>
    %1123 = vector.broadcast %1102 : vector<8x1xf32> to vector<8x256xf32>
    %1124 = arith.mulf %1123, %1122 : vector<8x256xf32>
    %1125 = vector.broadcast %1103 : vector<8x1xf32> to vector<8x256xf32>
    %1126 = arith.addf %1124, %1125 : vector<8x256xf32>
    %cst_313 = arith.constant dense<0.000000e+00> : vector<1xf32>
    %1127 = vector.multi_reduction <add>, %1108, %cst_313 [0] : vector<8x1xf32> to vector<1xf32>
    %1128 = vector.shape_cast %1127 : vector<1xf32> to vector<1x1xf32>
    %cst_314 = arith.constant 8.000000e+00 : f32
    %1129 = vector.broadcast %cst_314 : f32 to vector<1x1xf32>
    %1130 = arith.divf %1128, %1129 : vector<1x1xf32>
    %1131 = vector.broadcast %1130 : vector<1x1xf32> to vector<8x1xf32>
    %1132 = arith.subf %1108, %1131 : vector<8x1xf32>
    %1133 = arith.mulf %1132, %1132 : vector<8x1xf32>
    %cst_315 = arith.constant dense<0.000000e+00> : vector<1xf32>
    %1134 = vector.multi_reduction <add>, %1133, %cst_315 [0] : vector<8x1xf32> to vector<1xf32>
    %1135 = vector.shape_cast %1134 : vector<1xf32> to vector<1x1xf32>
    %cst_316 = arith.constant 0.142857149 : f32
    %1136 = vector.broadcast %cst_316 : f32 to vector<1x1xf32>
    %1137 = arith.mulf %1135, %1136 : vector<1x1xf32>
    %1138 = vector.broadcast %1130 : vector<1x1xf32> to vector<8x1xf32>
    %1139 = arith.subf %1108, %1138 : vector<8x1xf32>
    %1140 = arith.mulf %1104, %1139 : vector<8x1xf32>
    %cst_317 = arith.constant 9.99999974E-6 : f32
    %1141 = vector.broadcast %cst_317 : f32 to vector<1x1xf32>
    %1142 = arith.addf %1137, %1141 : vector<1x1xf32>
    %1143 = math.rsqrt %1142 : vector<1x1xf32>
    %1144 = vector.broadcast %1143 : vector<1x1xf32> to vector<8x1xf32>
    %1145 = arith.mulf %1140, %1144 : vector<8x1xf32>
    %1146 = vector.broadcast %1145 : vector<8x1xf32> to vector<8x256xf32>
    %1147 = arith.addf %1126, %1146 : vector<8x256xf32>
    %cst_318 = arith.constant 0.000000e+00 : f32
    %1148 = vector.broadcast %cst_318 : f32 to vector<8x128xf32>
    %1149 = tpu.concatenate %1148, %1147, %1148 in 1 : vector<8x128xf32>, vector<8x256xf32>, vector<8x128xf32> -> vector<8x512xf32>
    %1150 = vector.extract_strided_slice %1149 {offsets = [0, 126], sizes = [8, 256], strides = [1, 1]} : vector<8x512xf32> to vector<8x256xf32>
    %1151 = vector.broadcast %27 : vector<1x256xf32> to vector<8x256xf32>
    %1152 = arith.mulf %1150, %1151 : vector<8x256xf32>
    %1153 = arith.addf %1147, %1152 : vector<8x256xf32>
    %1154 = vector.extract_strided_slice %1149 {offsets = [0, 127], sizes = [8, 256], strides = [1, 1]} : vector<8x512xf32> to vector<8x256xf32>
    %1155 = vector.broadcast %38 : vector<1x256xf32> to vector<8x256xf32>
    %1156 = arith.mulf %1154, %1155 : vector<8x256xf32>
    %1157 = arith.addf %1153, %1156 : vector<8x256xf32>
    %1158 = vector.extract_strided_slice %1149 {offsets = [0, 129], sizes = [8, 256], strides = [1, 1]} : vector<8x512xf32> to vector<8x256xf32>
    %1159 = vector.broadcast %49 : vector<1x256xf32> to vector<8x256xf32>
    %1160 = arith.mulf %1158, %1159 : vector<8x256xf32>
    %1161 = arith.addf %1157, %1160 : vector<8x256xf32>
    %1162 = vector.extract_strided_slice %1149 {offsets = [0, 130], sizes = [8, 256], strides = [1, 1]} : vector<8x512xf32> to vector<8x256xf32>
    %1163 = vector.broadcast %60 : vector<1x256xf32> to vector<8x256xf32>
    %1164 = arith.mulf %1162, %1163 : vector<8x256xf32>
    %1165 = arith.addf %1161, %1164 : vector<8x256xf32>
    %cst_319 = arith.constant 0.000000e+00 : f32
    %1166 = vector.broadcast %cst_319 : f32 to vector<8x128xf32>
    %1167 = tpu.concatenate %1166, %1165, %1166 in 1 : vector<8x128xf32>, vector<8x256xf32>, vector<8x128xf32> -> vector<8x512xf32>
    %1168 = vector.extract_strided_slice %1167 {offsets = [0, 96], sizes = [8, 256], strides = [1, 1]} : vector<8x512xf32> to vector<8x256xf32>
    %1169 = arith.addf %1165, %1168 : vector<8x256xf32>
    %1170 = vector.extract_strided_slice %1167 {offsets = [0, 112], sizes = [8, 256], strides = [1, 1]} : vector<8x512xf32> to vector<8x256xf32>
    %1171 = arith.addf %1169, %1170 : vector<8x256xf32>
    %1172 = vector.extract_strided_slice %1167 {offsets = [0, 144], sizes = [8, 256], strides = [1, 1]} : vector<8x512xf32> to vector<8x256xf32>
    %1173 = arith.addf %1171, %1172 : vector<8x256xf32>
    %1174 = vector.extract_strided_slice %1167 {offsets = [0, 160], sizes = [8, 256], strides = [1, 1]} : vector<8x512xf32> to vector<8x256xf32>
    %1175 = arith.addf %1173, %1174 : vector<8x256xf32>
    %cst_320 = arith.constant 4.000000e-02 : f32
    %1176 = vector.broadcast %cst_320 : f32 to vector<8x256xf32>
    %1177 = arith.mulf %1175, %1176 : vector<8x256xf32>
    %c0_321 = arith.constant 0 : index
    %c13 = arith.constant 13 : index
    %c0_322 = arith.constant 0 : index
    %c0_323 = arith.constant 0 : index
    %1178 = vector.load %arg9[%c0_321, %c13, %c0_322, %c0_323] : memref<1x16x8x3xf32, #tpu.memory_space<vmem>>, vector<1x1x8x3xf32>
    %1179 = vector.shape_cast %1178 : vector<1x1x8x3xf32> to vector<8x3xf32>
    %1180 = vector.extract_strided_slice %1179 {offsets = [0, 0], sizes = [8, 1], strides = [1, 1]} : vector<8x3xf32> to vector<8x1xf32>
    %1181 = vector.extract_strided_slice %1179 {offsets = [0, 1], sizes = [8, 1], strides = [1, 1]} : vector<8x3xf32> to vector<8x1xf32>
    %1182 = vector.extract_strided_slice %1179 {offsets = [0, 2], sizes = [8, 1], strides = [1, 1]} : vector<8x3xf32> to vector<8x1xf32>
    %cst_324 = arith.constant dense<0.000000e+00> : vector<8xf32>
    %1183 = vector.multi_reduction <add>, %1177, %cst_324 [1] : vector<8x256xf32> to vector<8xf32>
    %1184 = vector.shape_cast %1183 : vector<8xf32> to vector<8x1xf32>
    %cst_325 = arith.constant 2.560000e+02 : f32
    %1185 = vector.broadcast %cst_325 : f32 to vector<8x1xf32>
    %1186 = arith.divf %1184, %1185 : vector<8x1xf32>
    %1187 = vector.broadcast %1186 : vector<8x1xf32> to vector<8x256xf32>
    %1188 = arith.subf %1177, %1187 : vector<8x256xf32>
    %1189 = arith.mulf %1188, %1188 : vector<8x256xf32>
    %cst_326 = arith.constant dense<0.000000e+00> : vector<8xf32>
    %1190 = vector.multi_reduction <add>, %1189, %cst_326 [1] : vector<8x256xf32> to vector<8xf32>
    %1191 = vector.shape_cast %1190 : vector<8xf32> to vector<8x1xf32>
    %cst_327 = arith.constant 0.00392156886 : f32
    %1192 = vector.broadcast %cst_327 : f32 to vector<8x1xf32>
    %1193 = arith.mulf %1191, %1192 : vector<8x1xf32>
    %1194 = vector.broadcast %1186 : vector<8x1xf32> to vector<8x256xf32>
    %1195 = arith.subf %1177, %1194 : vector<8x256xf32>
    %cst_328 = arith.constant 9.99999974E-6 : f32
    %1196 = vector.broadcast %cst_328 : f32 to vector<8x1xf32>
    %1197 = arith.addf %1193, %1196 : vector<8x1xf32>
    %1198 = math.rsqrt %1197 : vector<8x1xf32>
    %1199 = vector.broadcast %1198 : vector<8x1xf32> to vector<8x256xf32>
    %1200 = arith.mulf %1195, %1199 : vector<8x256xf32>
    %1201 = vector.broadcast %1180 : vector<8x1xf32> to vector<8x256xf32>
    %1202 = arith.mulf %1201, %1200 : vector<8x256xf32>
    %1203 = vector.broadcast %1181 : vector<8x1xf32> to vector<8x256xf32>
    %1204 = arith.addf %1202, %1203 : vector<8x256xf32>
    %cst_329 = arith.constant dense<0.000000e+00> : vector<1xf32>
    %1205 = vector.multi_reduction <add>, %1186, %cst_329 [0] : vector<8x1xf32> to vector<1xf32>
    %1206 = vector.shape_cast %1205 : vector<1xf32> to vector<1x1xf32>
    %cst_330 = arith.constant 8.000000e+00 : f32
    %1207 = vector.broadcast %cst_330 : f32 to vector<1x1xf32>
    %1208 = arith.divf %1206, %1207 : vector<1x1xf32>
    %1209 = vector.broadcast %1208 : vector<1x1xf32> to vector<8x1xf32>
    %1210 = arith.subf %1186, %1209 : vector<8x1xf32>
    %1211 = arith.mulf %1210, %1210 : vector<8x1xf32>
    %cst_331 = arith.constant dense<0.000000e+00> : vector<1xf32>
    %1212 = vector.multi_reduction <add>, %1211, %cst_331 [0] : vector<8x1xf32> to vector<1xf32>
    %1213 = vector.shape_cast %1212 : vector<1xf32> to vector<1x1xf32>
    %cst_332 = arith.constant 0.142857149 : f32
    %1214 = vector.broadcast %cst_332 : f32 to vector<1x1xf32>
    %1215 = arith.mulf %1213, %1214 : vector<1x1xf32>
    %1216 = vector.broadcast %1208 : vector<1x1xf32> to vector<8x1xf32>
    %1217 = arith.subf %1186, %1216 : vector<8x1xf32>
    %1218 = arith.mulf %1182, %1217 : vector<8x1xf32>
    %cst_333 = arith.constant 9.99999974E-6 : f32
    %1219 = vector.broadcast %cst_333 : f32 to vector<1x1xf32>
    %1220 = arith.addf %1215, %1219 : vector<1x1xf32>
    %1221 = math.rsqrt %1220 : vector<1x1xf32>
    %1222 = vector.broadcast %1221 : vector<1x1xf32> to vector<8x1xf32>
    %1223 = arith.mulf %1218, %1222 : vector<8x1xf32>
    %1224 = vector.broadcast %1223 : vector<8x1xf32> to vector<8x256xf32>
    %1225 = arith.addf %1204, %1224 : vector<8x256xf32>
    %cst_334 = arith.constant 0.000000e+00 : f32
    %1226 = vector.broadcast %cst_334 : f32 to vector<8x128xf32>
    %1227 = tpu.concatenate %1226, %1225, %1226 in 1 : vector<8x128xf32>, vector<8x256xf32>, vector<8x128xf32> -> vector<8x512xf32>
    %1228 = vector.extract_strided_slice %1227 {offsets = [0, 111], sizes = [8, 256], strides = [1, 1]} : vector<8x512xf32> to vector<8x256xf32>
    %1229 = vector.broadcast %38 : vector<1x256xf32> to vector<8x256xf32>
    %1230 = arith.mulf %1228, %1229 : vector<8x256xf32>
    %1231 = vector.extract_strided_slice %1227 {offsets = [0, 112], sizes = [8, 256], strides = [1, 1]} : vector<8x512xf32> to vector<8x256xf32>
    %1232 = vector.extract_strided_slice %1227 {offsets = [0, 113], sizes = [8, 256], strides = [1, 1]} : vector<8x512xf32> to vector<8x256xf32>
    %1233 = vector.broadcast %49 : vector<1x256xf32> to vector<8x256xf32>
    %1234 = arith.mulf %1232, %1233 : vector<8x256xf32>
    %1235 = vector.extract_strided_slice %1227 {offsets = [0, 127], sizes = [8, 256], strides = [1, 1]} : vector<8x512xf32> to vector<8x256xf32>
    %1236 = vector.broadcast %38 : vector<1x256xf32> to vector<8x256xf32>
    %1237 = arith.mulf %1235, %1236 : vector<8x256xf32>
    %1238 = vector.extract_strided_slice %1227 {offsets = [0, 128], sizes = [8, 256], strides = [1, 1]} : vector<8x512xf32> to vector<8x256xf32>
    %1239 = vector.extract_strided_slice %1227 {offsets = [0, 129], sizes = [8, 256], strides = [1, 1]} : vector<8x512xf32> to vector<8x256xf32>
    %1240 = vector.broadcast %49 : vector<1x256xf32> to vector<8x256xf32>
    %1241 = arith.mulf %1239, %1240 : vector<8x256xf32>
    %1242 = vector.extract_strided_slice %1227 {offsets = [0, 143], sizes = [8, 256], strides = [1, 1]} : vector<8x512xf32> to vector<8x256xf32>
    %1243 = vector.broadcast %38 : vector<1x256xf32> to vector<8x256xf32>
    %1244 = arith.mulf %1242, %1243 : vector<8x256xf32>
    %1245 = vector.extract_strided_slice %1227 {offsets = [0, 144], sizes = [8, 256], strides = [1, 1]} : vector<8x512xf32> to vector<8x256xf32>
    %1246 = vector.extract_strided_slice %1227 {offsets = [0, 145], sizes = [8, 256], strides = [1, 1]} : vector<8x512xf32> to vector<8x256xf32>
    %1247 = vector.broadcast %49 : vector<1x256xf32> to vector<8x256xf32>
    %1248 = arith.mulf %1246, %1247 : vector<8x256xf32>
    %1249 = tpu.concatenate %1230, %1231, %1234, %1237, %1238, %1241, %1244, %1245, %1248 in 0 : vector<8x256xf32>, vector<8x256xf32>, vector<8x256xf32>, vector<8x256xf32>, vector<8x256xf32>, vector<8x256xf32>, vector<8x256xf32>, vector<8x256xf32>, vector<8x256xf32> -> vector<72x256xf32>
    %c11_335 = arith.constant 11 : index
    %c0_336 = arith.constant 0 : index
    %c0_337 = arith.constant 0 : index
    %1250 = vector.load %arg7[%c11_335, %c0_336, %c0_337] : memref<14x8x72xf32, #tpu.memory_space<vmem>>, vector<1x8x72xf32>
    %1251 = vector.shape_cast %1250 : vector<1x8x72xf32> to vector<8x72xf32>
    %c11_338 = arith.constant 11 : index
    %c0_339 = arith.constant 0 : index
    %c0_340 = arith.constant 0 : index
    %1252 = vector.load %arg8[%c11_338, %c0_339, %c0_340] : memref<14x8x1xf32, #tpu.memory_space<vmem>>, vector<1x8x1xf32>
    %1253 = vector.shape_cast %1252 : vector<1x8x1xf32> to vector<8x1xf32>
    %cst_341 = arith.constant dense<0.000000e+00> : vector<8x256xf32>
    %1254 = tpu.matmul %1251, %1249, %cst_341 {dimension_numbers = #tpu.dot_dimension_numbers<[1], [0], [0], [1], [0, 0, 1, 1], [], []>} : vector<8x72xf32>, vector<72x256xf32>, vector<8x256xf32> -> vector<8x256xf32>
    %1255 = vector.broadcast %1253 : vector<8x1xf32> to vector<8x256xf32>
    %1256 = arith.addf %1254, %1255 : vector<8x256xf32>
    %1257 = arith.addf %1099, %1256 : vector<8x256xf32>
    %c0_342 = arith.constant 0 : index
    %c14 = arith.constant 14 : index
    %c0_343 = arith.constant 0 : index
    %c0_344 = arith.constant 0 : index
    %1258 = vector.load %arg9[%c0_342, %c14, %c0_343, %c0_344] : memref<1x16x8x3xf32, #tpu.memory_space<vmem>>, vector<1x1x8x3xf32>
    %1259 = vector.shape_cast %1258 : vector<1x1x8x3xf32> to vector<8x3xf32>
    %1260 = vector.extract_strided_slice %1259 {offsets = [0, 0], sizes = [8, 1], strides = [1, 1]} : vector<8x3xf32> to vector<8x1xf32>
    %1261 = vector.extract_strided_slice %1259 {offsets = [0, 1], sizes = [8, 1], strides = [1, 1]} : vector<8x3xf32> to vector<8x1xf32>
    %1262 = vector.extract_strided_slice %1259 {offsets = [0, 2], sizes = [8, 1], strides = [1, 1]} : vector<8x3xf32> to vector<8x1xf32>
    %cst_345 = arith.constant dense<0.000000e+00> : vector<8xf32>
    %1263 = vector.multi_reduction <add>, %1257, %cst_345 [1] : vector<8x256xf32> to vector<8xf32>
    %1264 = vector.shape_cast %1263 : vector<8xf32> to vector<8x1xf32>
    %cst_346 = arith.constant 2.560000e+02 : f32
    %1265 = vector.broadcast %cst_346 : f32 to vector<8x1xf32>
    %1266 = arith.divf %1264, %1265 : vector<8x1xf32>
    %1267 = vector.broadcast %1266 : vector<8x1xf32> to vector<8x256xf32>
    %1268 = arith.subf %1257, %1267 : vector<8x256xf32>
    %1269 = arith.mulf %1268, %1268 : vector<8x256xf32>
    %cst_347 = arith.constant dense<0.000000e+00> : vector<8xf32>
    %1270 = vector.multi_reduction <add>, %1269, %cst_347 [1] : vector<8x256xf32> to vector<8xf32>
    %1271 = vector.shape_cast %1270 : vector<8xf32> to vector<8x1xf32>
    %cst_348 = arith.constant 0.00392156886 : f32
    %1272 = vector.broadcast %cst_348 : f32 to vector<8x1xf32>
    %1273 = arith.mulf %1271, %1272 : vector<8x1xf32>
    %1274 = vector.broadcast %1266 : vector<8x1xf32> to vector<8x256xf32>
    %1275 = arith.subf %1257, %1274 : vector<8x256xf32>
    %cst_349 = arith.constant 9.99999974E-6 : f32
    %1276 = vector.broadcast %cst_349 : f32 to vector<8x1xf32>
    %1277 = arith.addf %1273, %1276 : vector<8x1xf32>
    %1278 = math.rsqrt %1277 : vector<8x1xf32>
    %1279 = vector.broadcast %1278 : vector<8x1xf32> to vector<8x256xf32>
    %1280 = arith.mulf %1275, %1279 : vector<8x256xf32>
    %1281 = vector.broadcast %1260 : vector<8x1xf32> to vector<8x256xf32>
    %1282 = arith.mulf %1281, %1280 : vector<8x256xf32>
    %1283 = vector.broadcast %1261 : vector<8x1xf32> to vector<8x256xf32>
    %1284 = arith.addf %1282, %1283 : vector<8x256xf32>
    %cst_350 = arith.constant dense<0.000000e+00> : vector<1xf32>
    %1285 = vector.multi_reduction <add>, %1266, %cst_350 [0] : vector<8x1xf32> to vector<1xf32>
    %1286 = vector.shape_cast %1285 : vector<1xf32> to vector<1x1xf32>
    %cst_351 = arith.constant 8.000000e+00 : f32
    %1287 = vector.broadcast %cst_351 : f32 to vector<1x1xf32>
    %1288 = arith.divf %1286, %1287 : vector<1x1xf32>
    %1289 = vector.broadcast %1288 : vector<1x1xf32> to vector<8x1xf32>
    %1290 = arith.subf %1266, %1289 : vector<8x1xf32>
    %1291 = arith.mulf %1290, %1290 : vector<8x1xf32>
    %cst_352 = arith.constant dense<0.000000e+00> : vector<1xf32>
    %1292 = vector.multi_reduction <add>, %1291, %cst_352 [0] : vector<8x1xf32> to vector<1xf32>
    %1293 = vector.shape_cast %1292 : vector<1xf32> to vector<1x1xf32>
    %cst_353 = arith.constant 0.142857149 : f32
    %1294 = vector.broadcast %cst_353 : f32 to vector<1x1xf32>
    %1295 = arith.mulf %1293, %1294 : vector<1x1xf32>
    %1296 = vector.broadcast %1288 : vector<1x1xf32> to vector<8x1xf32>
    %1297 = arith.subf %1266, %1296 : vector<8x1xf32>
    %1298 = arith.mulf %1262, %1297 : vector<8x1xf32>
    %cst_354 = arith.constant 9.99999974E-6 : f32
    %1299 = vector.broadcast %cst_354 : f32 to vector<1x1xf32>
    %1300 = arith.addf %1295, %1299 : vector<1x1xf32>
    %1301 = math.rsqrt %1300 : vector<1x1xf32>
    %1302 = vector.broadcast %1301 : vector<1x1xf32> to vector<8x1xf32>
    %1303 = arith.mulf %1298, %1302 : vector<8x1xf32>
    %1304 = vector.broadcast %1303 : vector<8x1xf32> to vector<8x256xf32>
    %1305 = arith.addf %1284, %1304 : vector<8x256xf32>
    %cst_355 = arith.constant 0.000000e+00 : f32
    %1306 = vector.broadcast %cst_355 : f32 to vector<8x256xf32>
    %1307 = arith.cmpf ogt, %1305, %1306 : vector<8x256xf32>
    %cst_356 = arith.constant 0.000000e+00 : f32
    %1308 = vector.broadcast %cst_356 : f32 to vector<8x256xf32>
    %1309 = arith.minimumf %1305, %1308 : vector<8x256xf32>
    %1310 = math.exp %1309 : vector<8x256xf32>
    %cst_357 = arith.constant 1.000000e+00 : f32
    %1311 = vector.broadcast %cst_357 : f32 to vector<8x256xf32>
    %1312 = arith.subf %1310, %1311 : vector<8x256xf32>
    %1313 = arith.select %1307, %1305, %1312 : vector<8x256xi1>, vector<8x256xf32>
    %cst_358 = arith.constant 0.000000e+00 : f32
    %1314 = vector.broadcast %cst_358 : f32 to vector<8x128xf32>
    %1315 = tpu.concatenate %1314, %1313, %1314 in 1 : vector<8x128xf32>, vector<8x256xf32>, vector<8x128xf32> -> vector<8x512xf32>
    %1316 = vector.extract_strided_slice %1315 {offsets = [0, 111], sizes = [8, 256], strides = [1, 1]} : vector<8x512xf32> to vector<8x256xf32>
    %1317 = vector.broadcast %38 : vector<1x256xf32> to vector<8x256xf32>
    %1318 = arith.mulf %1316, %1317 : vector<8x256xf32>
    %1319 = vector.extract_strided_slice %1315 {offsets = [0, 112], sizes = [8, 256], strides = [1, 1]} : vector<8x512xf32> to vector<8x256xf32>
    %1320 = vector.extract_strided_slice %1315 {offsets = [0, 113], sizes = [8, 256], strides = [1, 1]} : vector<8x512xf32> to vector<8x256xf32>
    %1321 = vector.broadcast %49 : vector<1x256xf32> to vector<8x256xf32>
    %1322 = arith.mulf %1320, %1321 : vector<8x256xf32>
    %1323 = vector.extract_strided_slice %1315 {offsets = [0, 127], sizes = [8, 256], strides = [1, 1]} : vector<8x512xf32> to vector<8x256xf32>
    %1324 = vector.broadcast %38 : vector<1x256xf32> to vector<8x256xf32>
    %1325 = arith.mulf %1323, %1324 : vector<8x256xf32>
    %1326 = vector.extract_strided_slice %1315 {offsets = [0, 128], sizes = [8, 256], strides = [1, 1]} : vector<8x512xf32> to vector<8x256xf32>
    %1327 = vector.extract_strided_slice %1315 {offsets = [0, 129], sizes = [8, 256], strides = [1, 1]} : vector<8x512xf32> to vector<8x256xf32>
    %1328 = vector.broadcast %49 : vector<1x256xf32> to vector<8x256xf32>
    %1329 = arith.mulf %1327, %1328 : vector<8x256xf32>
    %1330 = vector.extract_strided_slice %1315 {offsets = [0, 143], sizes = [8, 256], strides = [1, 1]} : vector<8x512xf32> to vector<8x256xf32>
    %1331 = vector.broadcast %38 : vector<1x256xf32> to vector<8x256xf32>
    %1332 = arith.mulf %1330, %1331 : vector<8x256xf32>
    %1333 = vector.extract_strided_slice %1315 {offsets = [0, 144], sizes = [8, 256], strides = [1, 1]} : vector<8x512xf32> to vector<8x256xf32>
    %1334 = vector.extract_strided_slice %1315 {offsets = [0, 145], sizes = [8, 256], strides = [1, 1]} : vector<8x512xf32> to vector<8x256xf32>
    %1335 = vector.broadcast %49 : vector<1x256xf32> to vector<8x256xf32>
    %1336 = arith.mulf %1334, %1335 : vector<8x256xf32>
    %1337 = tpu.concatenate %1318, %1319, %1322, %1325, %1326, %1329, %1332, %1333, %1336 in 0 : vector<8x256xf32>, vector<8x256xf32>, vector<8x256xf32>, vector<8x256xf32>, vector<8x256xf32>, vector<8x256xf32>, vector<8x256xf32>, vector<8x256xf32>, vector<8x256xf32> -> vector<72x256xf32>
    %c12_359 = arith.constant 12 : index
    %c0_360 = arith.constant 0 : index
    %c0_361 = arith.constant 0 : index
    %1338 = vector.load %arg7[%c12_359, %c0_360, %c0_361] : memref<14x8x72xf32, #tpu.memory_space<vmem>>, vector<1x8x72xf32>
    %1339 = vector.shape_cast %1338 : vector<1x8x72xf32> to vector<8x72xf32>
    %c12_362 = arith.constant 12 : index
    %c0_363 = arith.constant 0 : index
    %c0_364 = arith.constant 0 : index
    %1340 = vector.load %arg8[%c12_362, %c0_363, %c0_364] : memref<14x8x1xf32, #tpu.memory_space<vmem>>, vector<1x8x1xf32>
    %1341 = vector.shape_cast %1340 : vector<1x8x1xf32> to vector<8x1xf32>
    %cst_365 = arith.constant dense<0.000000e+00> : vector<8x256xf32>
    %1342 = tpu.matmul %1339, %1337, %cst_365 {dimension_numbers = #tpu.dot_dimension_numbers<[1], [0], [0], [1], [0, 0, 1, 1], [], []>} : vector<8x72xf32>, vector<72x256xf32>, vector<8x256xf32> -> vector<8x256xf32>
    %1343 = vector.broadcast %1341 : vector<8x1xf32> to vector<8x256xf32>
    %1344 = arith.addf %1342, %1343 : vector<8x256xf32>
    %c0_366 = arith.constant 0 : index
    %c15 = arith.constant 15 : index
    %c0_367 = arith.constant 0 : index
    %c0_368 = arith.constant 0 : index
    %1345 = vector.load %arg9[%c0_366, %c15, %c0_367, %c0_368] : memref<1x16x8x3xf32, #tpu.memory_space<vmem>>, vector<1x1x8x3xf32>
    %1346 = vector.shape_cast %1345 : vector<1x1x8x3xf32> to vector<8x3xf32>
    %1347 = vector.extract_strided_slice %1346 {offsets = [0, 0], sizes = [8, 1], strides = [1, 1]} : vector<8x3xf32> to vector<8x1xf32>
    %1348 = vector.extract_strided_slice %1346 {offsets = [0, 1], sizes = [8, 1], strides = [1, 1]} : vector<8x3xf32> to vector<8x1xf32>
    %1349 = vector.extract_strided_slice %1346 {offsets = [0, 2], sizes = [8, 1], strides = [1, 1]} : vector<8x3xf32> to vector<8x1xf32>
    %cst_369 = arith.constant dense<0.000000e+00> : vector<8xf32>
    %1350 = vector.multi_reduction <add>, %1344, %cst_369 [1] : vector<8x256xf32> to vector<8xf32>
    %1351 = vector.shape_cast %1350 : vector<8xf32> to vector<8x1xf32>
    %cst_370 = arith.constant 2.560000e+02 : f32
    %1352 = vector.broadcast %cst_370 : f32 to vector<8x1xf32>
    %1353 = arith.divf %1351, %1352 : vector<8x1xf32>
    %1354 = vector.broadcast %1353 : vector<8x1xf32> to vector<8x256xf32>
    %1355 = arith.subf %1344, %1354 : vector<8x256xf32>
    %1356 = arith.mulf %1355, %1355 : vector<8x256xf32>
    %cst_371 = arith.constant dense<0.000000e+00> : vector<8xf32>
    %1357 = vector.multi_reduction <add>, %1356, %cst_371 [1] : vector<8x256xf32> to vector<8xf32>
    %1358 = vector.shape_cast %1357 : vector<8xf32> to vector<8x1xf32>
    %cst_372 = arith.constant 0.00392156886 : f32
    %1359 = vector.broadcast %cst_372 : f32 to vector<8x1xf32>
    %1360 = arith.mulf %1358, %1359 : vector<8x1xf32>
    %1361 = vector.broadcast %1353 : vector<8x1xf32> to vector<8x256xf32>
    %1362 = arith.subf %1344, %1361 : vector<8x256xf32>
    %cst_373 = arith.constant 9.99999974E-6 : f32
    %1363 = vector.broadcast %cst_373 : f32 to vector<8x1xf32>
    %1364 = arith.addf %1360, %1363 : vector<8x1xf32>
    %1365 = math.rsqrt %1364 : vector<8x1xf32>
    %1366 = vector.broadcast %1365 : vector<8x1xf32> to vector<8x256xf32>
    %1367 = arith.mulf %1362, %1366 : vector<8x256xf32>
    %1368 = vector.broadcast %1347 : vector<8x1xf32> to vector<8x256xf32>
    %1369 = arith.mulf %1368, %1367 : vector<8x256xf32>
    %1370 = vector.broadcast %1348 : vector<8x1xf32> to vector<8x256xf32>
    %1371 = arith.addf %1369, %1370 : vector<8x256xf32>
    %cst_374 = arith.constant dense<0.000000e+00> : vector<1xf32>
    %1372 = vector.multi_reduction <add>, %1353, %cst_374 [0] : vector<8x1xf32> to vector<1xf32>
    %1373 = vector.shape_cast %1372 : vector<1xf32> to vector<1x1xf32>
    %cst_375 = arith.constant 8.000000e+00 : f32
    %1374 = vector.broadcast %cst_375 : f32 to vector<1x1xf32>
    %1375 = arith.divf %1373, %1374 : vector<1x1xf32>
    %1376 = vector.broadcast %1375 : vector<1x1xf32> to vector<8x1xf32>
    %1377 = arith.subf %1353, %1376 : vector<8x1xf32>
    %1378 = arith.mulf %1377, %1377 : vector<8x1xf32>
    %cst_376 = arith.constant dense<0.000000e+00> : vector<1xf32>
    %1379 = vector.multi_reduction <add>, %1378, %cst_376 [0] : vector<8x1xf32> to vector<1xf32>
    %1380 = vector.shape_cast %1379 : vector<1xf32> to vector<1x1xf32>
    %cst_377 = arith.constant 0.142857149 : f32
    %1381 = vector.broadcast %cst_377 : f32 to vector<1x1xf32>
    %1382 = arith.mulf %1380, %1381 : vector<1x1xf32>
    %1383 = vector.broadcast %1375 : vector<1x1xf32> to vector<8x1xf32>
    %1384 = arith.subf %1353, %1383 : vector<8x1xf32>
    %1385 = arith.mulf %1349, %1384 : vector<8x1xf32>
    %cst_378 = arith.constant 9.99999974E-6 : f32
    %1386 = vector.broadcast %cst_378 : f32 to vector<1x1xf32>
    %1387 = arith.addf %1382, %1386 : vector<1x1xf32>
    %1388 = math.rsqrt %1387 : vector<1x1xf32>
    %1389 = vector.broadcast %1388 : vector<1x1xf32> to vector<8x1xf32>
    %1390 = arith.mulf %1385, %1389 : vector<8x1xf32>
    %1391 = vector.broadcast %1390 : vector<8x1xf32> to vector<8x256xf32>
    %1392 = arith.addf %1371, %1391 : vector<8x256xf32>
    %cst_379 = arith.constant 0.000000e+00 : f32
    %1393 = vector.broadcast %cst_379 : f32 to vector<8x256xf32>
    %1394 = arith.cmpf ogt, %1392, %1393 : vector<8x256xf32>
    %cst_380 = arith.constant 0.000000e+00 : f32
    %1395 = vector.broadcast %cst_380 : f32 to vector<8x256xf32>
    %1396 = arith.minimumf %1392, %1395 : vector<8x256xf32>
    %1397 = math.exp %1396 : vector<8x256xf32>
    %cst_381 = arith.constant 1.000000e+00 : f32
    %1398 = vector.broadcast %cst_381 : f32 to vector<8x256xf32>
    %1399 = arith.subf %1397, %1398 : vector<8x256xf32>
    %1400 = arith.select %1394, %1392, %1399 : vector<8x256xi1>, vector<8x256xf32>
    %cst_382 = arith.constant 0.000000e+00 : f32
    %1401 = vector.broadcast %cst_382 : f32 to vector<8x128xf32>
    %1402 = tpu.concatenate %1401, %1400, %1401 in 1 : vector<8x128xf32>, vector<8x256xf32>, vector<8x128xf32> -> vector<8x512xf32>
    %1403 = vector.extract_strided_slice %1402 {offsets = [0, 111], sizes = [8, 256], strides = [1, 1]} : vector<8x512xf32> to vector<8x256xf32>
    %1404 = vector.broadcast %38 : vector<1x256xf32> to vector<8x256xf32>
    %1405 = arith.mulf %1403, %1404 : vector<8x256xf32>
    %1406 = vector.extract_strided_slice %1402 {offsets = [0, 112], sizes = [8, 256], strides = [1, 1]} : vector<8x512xf32> to vector<8x256xf32>
    %1407 = vector.extract_strided_slice %1402 {offsets = [0, 113], sizes = [8, 256], strides = [1, 1]} : vector<8x512xf32> to vector<8x256xf32>
    %1408 = vector.broadcast %49 : vector<1x256xf32> to vector<8x256xf32>
    %1409 = arith.mulf %1407, %1408 : vector<8x256xf32>
    %1410 = vector.extract_strided_slice %1402 {offsets = [0, 127], sizes = [8, 256], strides = [1, 1]} : vector<8x512xf32> to vector<8x256xf32>
    %1411 = vector.broadcast %38 : vector<1x256xf32> to vector<8x256xf32>
    %1412 = arith.mulf %1410, %1411 : vector<8x256xf32>
    %1413 = vector.extract_strided_slice %1402 {offsets = [0, 128], sizes = [8, 256], strides = [1, 1]} : vector<8x512xf32> to vector<8x256xf32>
    %1414 = vector.extract_strided_slice %1402 {offsets = [0, 129], sizes = [8, 256], strides = [1, 1]} : vector<8x512xf32> to vector<8x256xf32>
    %1415 = vector.broadcast %49 : vector<1x256xf32> to vector<8x256xf32>
    %1416 = arith.mulf %1414, %1415 : vector<8x256xf32>
    %1417 = vector.extract_strided_slice %1402 {offsets = [0, 143], sizes = [8, 256], strides = [1, 1]} : vector<8x512xf32> to vector<8x256xf32>
    %1418 = vector.broadcast %38 : vector<1x256xf32> to vector<8x256xf32>
    %1419 = arith.mulf %1417, %1418 : vector<8x256xf32>
    %1420 = vector.extract_strided_slice %1402 {offsets = [0, 144], sizes = [8, 256], strides = [1, 1]} : vector<8x512xf32> to vector<8x256xf32>
    %1421 = vector.extract_strided_slice %1402 {offsets = [0, 145], sizes = [8, 256], strides = [1, 1]} : vector<8x512xf32> to vector<8x256xf32>
    %1422 = vector.broadcast %49 : vector<1x256xf32> to vector<8x256xf32>
    %1423 = arith.mulf %1421, %1422 : vector<8x256xf32>
    %1424 = tpu.concatenate %1405, %1406, %1409, %1412, %1413, %1416, %1419, %1420, %1423 in 0 : vector<8x256xf32>, vector<8x256xf32>, vector<8x256xf32>, vector<8x256xf32>, vector<8x256xf32>, vector<8x256xf32>, vector<8x256xf32>, vector<8x256xf32>, vector<8x256xf32> -> vector<72x256xf32>
    %c13_383 = arith.constant 13 : index
    %c0_384 = arith.constant 0 : index
    %c0_385 = arith.constant 0 : index
    %1425 = vector.load %arg7[%c13_383, %c0_384, %c0_385] : memref<14x8x72xf32, #tpu.memory_space<vmem>>, vector<1x8x72xf32>
    %1426 = vector.shape_cast %1425 : vector<1x8x72xf32> to vector<8x72xf32>
    %c13_386 = arith.constant 13 : index
    %c0_387 = arith.constant 0 : index
    %c0_388 = arith.constant 0 : index
    %1427 = vector.load %arg8[%c13_386, %c0_387, %c0_388] : memref<14x8x1xf32, #tpu.memory_space<vmem>>, vector<1x8x1xf32>
    %1428 = vector.shape_cast %1427 : vector<1x8x1xf32> to vector<8x1xf32>
    %cst_389 = arith.constant dense<0.000000e+00> : vector<8x256xf32>
    %1429 = tpu.matmul %1426, %1424, %cst_389 {dimension_numbers = #tpu.dot_dimension_numbers<[1], [0], [0], [1], [0, 0, 1, 1], [], []>} : vector<8x72xf32>, vector<72x256xf32>, vector<8x256xf32> -> vector<8x256xf32>
    %1430 = vector.broadcast %1428 : vector<8x1xf32> to vector<8x256xf32>
    %1431 = arith.addf %1429, %1430 : vector<8x256xf32>
    %1432 = arith.addf %1257, %1431 : vector<8x256xf32>
    %c0_390 = arith.constant 0 : index
    %c0_391 = arith.constant 0 : index
    %c0_392 = arith.constant 0 : index
    %1433 = vector.load %arg10[%c0_390, %c0_391, %c0_392] : memref<1x8x256xf32, #tpu.memory_space<vmem>>, vector<1x8x256xf32>
    %1434 = vector.shape_cast %1433 : vector<1x8x256xf32> to vector<8x256xf32>
    %1435 = vector.shape_cast %1432 : vector<8x256xf32> to vector<1x8x256xf32>
    tpu.vector_store %arg10[%c0_390, %c0_391, %c0_392], %1435 {strides = array<i32>} : memref<1x8x256xf32, #tpu.memory_space<vmem>>, vector<1x8x256xf32>,
    return
  }
  func.func @transform_0(%arg0: i32) -> (i32, i32, i32) {
    %c0_i32 = arith.constant 0 : i32
    %c0_i32_0 = arith.constant 0 : i32
    %c0_i32_1 = arith.constant 0 : i32
    return %arg0, %c0_i32, %c0_i32_0 : i32, i32, i32
  }
  func.func @transform_1(%arg0: i32) -> (i32, i32, i32) {
    %c0_i32 = arith.constant 0 : i32
    %c0_i32_0 = arith.constant 0 : i32
    %c0_i32_1 = arith.constant 0 : i32
    return %arg0, %c0_i32, %c0_i32_0 : i32, i32, i32
  }
  func.func @transform_2(%arg0: i32) -> (i32, i32) {
    %c0_i32 = arith.constant 0 : i32
    %c0_i32_0 = arith.constant 0 : i32
    %c0_i32_1 = arith.constant 0 : i32
    return %c0_i32, %c0_i32_0 : i32, i32
  }
  func.func @transform_3(%arg0: i32) -> (i32, i32) {
    %c0_i32 = arith.constant 0 : i32
    %c0_i32_0 = arith.constant 0 : i32
    %c0_i32_1 = arith.constant 0 : i32
    return %c0_i32, %c0_i32_0 : i32, i32
  }
  func.func @transform_4(%arg0: i32) -> (i32, i32) {
    %c0_i32 = arith.constant 0 : i32
    %c0_i32_0 = arith.constant 0 : i32
    %c0_i32_1 = arith.constant 0 : i32
    return %c0_i32, %c0_i32_0 : i32, i32
  }
  func.func @transform_5(%arg0: i32) -> (i32, i32) {
    %c0_i32 = arith.constant 0 : i32
    %c0_i32_0 = arith.constant 0 : i32
    %c0_i32_1 = arith.constant 0 : i32
    return %c0_i32, %c0_i32_0 : i32, i32
  }
  func.func @transform_6(%arg0: i32) -> (i32, i32, i32) {
    %c0_i32 = arith.constant 0 : i32
    %c0_i32_0 = arith.constant 0 : i32
    %c0_i32_1 = arith.constant 0 : i32
    %c0_i32_2 = arith.constant 0 : i32
    return %c0_i32, %c0_i32_0, %c0_i32_1 : i32, i32, i32
  }
  func.func @transform_7(%arg0: i32) -> (i32, i32, i32) {
    %c0_i32 = arith.constant 0 : i32
    %c0_i32_0 = arith.constant 0 : i32
    %c0_i32_1 = arith.constant 0 : i32
    %c0_i32_2 = arith.constant 0 : i32
    return %c0_i32, %c0_i32_0, %c0_i32_1 : i32, i32, i32
  }
  func.func @transform_8(%arg0: i32) -> (i32, i32, i32, i32) {
    %c0_i32 = arith.constant 0 : i32
    %c0_i32_0 = arith.constant 0 : i32
    %c0_i32_1 = arith.constant 0 : i32
    %c0_i32_2 = arith.constant 0 : i32
    return %arg0, %c0_i32, %c0_i32_0, %c0_i32_1 : i32, i32, i32, i32
  }
  func.func @transform_9(%arg0: i32) -> (i32, i32, i32) {
    %c0_i32 = arith.constant 0 : i32
    %c0_i32_0 = arith.constant 0 : i32
    %c0_i32_1 = arith.constant 0 : i32
    return %arg0, %c0_i32, %c0_i32_0 : i32, i32, i32
  }
}

</mosaic_0001>

<llo_original>
// kernel: refinenet_apply.1
$region0: #{refinenet_apply.1}
  #allocation0 [shape = 'u32[]', space=smem, size = 0x4, offset = 0x4, fixed_abs, tag = 'smem constant byte address 0x4 - core index']
  #allocation1 [shape = 'u32[144,128]{1,0:T(1,128)}', space=vmem, size = 0x12000, scoped, tag = 'internal scratch']
  %s0 = inlined_call_operand.vmem [shape: f32[2,4,256], index: 0, kind: input, shape index: {}]
  %s1 = inlined_call_operand.vmem [shape: f32[2,6,256], index: 1, kind: input, shape index: {}]
  %s2 = inlined_call_operand.vmem [shape: f32[8,4], index: 2, kind: input, shape index: {}]
  %s3 = inlined_call_operand.vmem [shape: f32[8,1], index: 3, kind: input, shape index: {}]
  %s4 = inlined_call_operand.vmem [shape: f32[8,6], index: 4, kind: input, shape index: {}]
  %s5 = inlined_call_operand.vmem [shape: f32[8,1], index: 5, kind: input, shape index: {}]
  %s6 = inlined_call_operand.vmem [shape: f32[14,8,72], index: 6, kind: input, shape index: {}]
  %s7 = inlined_call_operand.vmem [shape: f32[14,8,1], index: 7, kind: input, shape index: {}]
  %s8 = inlined_call_operand.vmem [shape: f32[2,16,8,3], index: 8, kind: input, shape index: {}]
  %s9 = inlined_call_operand.vmem [shape: f32[2,8,256], index: 9, kind: output, shape index: {}]
  %s10 = sld [smem:[#allocation0]]
  $region69: #{refinenet_apply.1} parent=0
    _
  %s12 = ssub.s32 1, %s10
  %s13 = scalar_select 0, %s12, %s10
  loop: start=0, step=1, limit=4
  $region2: #{refinenet_apply.1} parent=0 // loop_pre_header
    _
  $region3: #{refinenet_apply.1} parent=0 // loop_header
    %s15 = sphi 0, %s19
    %p16 = scmp.ge.s32.totalorder %s15, 4
    %s25 = sphi 0, %s27
    %s28 = sphi 0, %s25
    %s29 = sphi 0, %s28
    %s45 = sphi 0, %s29
    %s51 = sphi 0, %s53
    %s54 = sphi 0, %s51
    %s55 = sphi 0, %s54
    %s71 = sphi 0, %s55
    %s75 = sphi 0, %s75
    %s77 = sphi 0, %s75
    %s78 = sphi 0, %s77
    %s92 = sphi 0, %s78
    %s96 = sphi 0, %s96
    %s98 = sphi 0, %s96
    %s99 = sphi 0, %s98
    %s113 = sphi 0, %s99
    %s117 = sphi 0, %s117
    %s119 = sphi 0, %s117
    %s120 = sphi 0, %s119
    %s134 = sphi 0, %s120
    %s138 = sphi 0, %s138
    %s140 = sphi 0, %s138
    %s141 = sphi 0, %s140
    %s155 = sphi 0, %s141
    %s159 = sphi 0, %s159
    %s161 = sphi 0, %s159
    %s162 = sphi 0, %s161
    %s176 = sphi 0, %s162
    %s180 = sphi 0, %s180
    %s182 = sphi 0, %s180
    %s183 = sphi 0, %s182
    %s197 = sphi 0, %s183
    %s203 = sphi 0, %s205
    %s206 = sphi 0, %s203
    %s207 = sphi 0, %s206
    %s223 = sphi 0, %s207
    %s229 = sphi 0, %s231
    %s232 = sphi 0, %s229
    %s233 = sphi 0, %s232
    %s249 = sphi 0, %s233
  $region4: #{refinenet_apply.1} parent=0 // loop_header_branch
    %18 = sbr.rel (%p16) target = $region8
  $region5: #{refinenet_apply.1} parent=0 // loop_body
    %s20 = ssub.s32 %s15, 1
    %s21 = ssub.s32 %s15, 2
    %s22 = sadd.s32 %s15, 1
    %s23 = ssub.s32 %s15, %s22
    %p24 = scmp.eq.s32.totalorder %s23, 0
    %s26 = sadd.s32 %s25, 1
    %s27 = scalar_select %p24, %s25, %s26
    %p30 = pneg %p24
    %p31 = scmp.eq.s32.totalorder %s15, 1
    %p32 = por %p30, %p31
    %p33 = scmp.ne.s32.totalorder %s25, %s28
    %p34 = scmp.eq.s32.totalorder %s15, 0
    %p35 = por %p33, %p34
    %p36 = scmp.ne.s32.totalorder %s25, %s28
    %p37 = scmp.eq.s32.totalorder %s20, 1
    %p38 = por %p36, %p37
    %p39 = scmp.ne.s32.totalorder %s28, %s29
    %p40 = scmp.eq.s32.totalorder %s20, 0
    %p41 = por %p39, %p40
    %p42 = scmp.ne.s32.totalorder %s28, %s29
    %p43 = scmp.eq.s32.totalorder %s21, 1
    %p44 = por %p42, %p43
    %p46 = scmp.ne.s32.totalorder %s29, %s45
    %p47 = scmp.eq.s32.totalorder %s21, 0
    %p48 = por %p46, %p47
    %s49 = ssub.s32 %s15, %s22
    %p50 = scmp.eq.s32.totalorder %s49, 0
    %s52 = sadd.s32 %s51, 1
    %s53 = scalar_select %p50, %s51, %s52
    %p56 = pneg %p50
    %p57 = scmp.eq.s32.totalorder %s15, 1
    %p58 = por %p56, %p57
    %p59 = scmp.ne.s32.totalorder %s51, %s54
    %p60 = scmp.eq.s32.totalorder %s15, 0
    %p61 = por %p59, %p60
    %p62 = scmp.ne.s32.totalorder %s51, %s54
    %p63 = scmp.eq.s32.totalorder %s20, 1
    %p64 = por %p62, %p63
    %p65 = scmp.ne.s32.totalorder %s54, %s55
    %p66 = scmp.eq.s32.totalorder %s20, 0
    %p67 = por %p65, %p66
    %p68 = scmp.ne.s32.totalorder %s54, %s55
    %p69 = scmp.eq.s32.totalorder %s21, 1
    %p70 = por %p68, %p69
    %p72 = scmp.ne.s32.totalorder %s55, %s71
    %p73 = scmp.eq.s32.totalorder %s21, 0
    %p74 = por %p72, %p73
    %s76 = sadd.s32 %s75, 1
    %p79 = scmp.eq.s32.totalorder %s15, 1
    %p80 = scmp.ne.s32.totalorder %s75, %s77
    %p81 = scmp.eq.s32.totalorder %s15, 0
    %p82 = por %p80, %p81
    %p83 = scmp.ne.s32.totalorder %s75, %s77
    %p84 = scmp.eq.s32.totalorder %s20, 1
    %p85 = por %p83, %p84
    %p86 = scmp.ne.s32.totalorder %s77, %s78
    %p87 = scmp.eq.s32.totalorder %s20, 0
    %p88 = por %p86, %p87
    %p89 = scmp.ne.s32.totalorder %s77, %s78
    %p90 = scmp.eq.s32.totalorder %s21, 1
    %p91 = por %p89, %p90
    %p93 = scmp.ne.s32.totalorder %s78, %s92
    %p94 = scmp.eq.s32.totalorder %s21, 0
    %p95 = por %p93, %p94
    %s97 = sadd.s32 %s96, 1
    %p100 = scmp.eq.s32.totalorder %s15, 1
    %p101 = scmp.ne.s32.totalorder %s96, %s98
    %p102 = scmp.eq.s32.totalorder %s15, 0
    %p103 = por %p101, %p102
    %p104 = scmp.ne.s32.totalorder %s96, %s98
    %p105 = scmp.eq.s32.totalorder %s20, 1
    %p106 = por %p104, %p105
    %p107 = scmp.ne.s32.totalorder %s98, %s99
    %p108 = scmp.eq.s32.totalorder %s20, 0
    %p109 = por %p107, %p108
    %p110 = scmp.ne.s32.totalorder %s98, %s99
    %p111 = scmp.eq.s32.totalorder %s21, 1
    %p112 = por %p110, %p111
    %p114 = scmp.ne.s32.totalorder %s99, %s113
    %p115 = scmp.eq.s32.totalorder %s21, 0
    %p116 = por %p114, %p115
    %s118 = sadd.s32 %s117, 1
    %p121 = scmp.eq.s32.totalorder %s15, 1
    %p122 = scmp.ne.s32.totalorder %s117, %s119
    %p123 = scmp.eq.s32.totalorder %s15, 0
    %p124 = por %p122, %p123
    %p125 = scmp.ne.s32.totalorder %s117, %s119
    %p126 = scmp.eq.s32.totalorder %s20, 1
    %p127 = por %p125, %p126
    %p128 = scmp.ne.s32.totalorder %s119, %s120
    %p129 = scmp.eq.s32.totalorder %s20, 0
    %p130 = por %p128, %p129
    %p131 = scmp.ne.s32.totalorder %s119, %s120
    %p132 = scmp.eq.s32.totalorder %s21, 1
    %p133 = por %p131, %p132
    %p135 = scmp.ne.s32.totalorder %s120, %s134
    %p136 = scmp.eq.s32.totalorder %s21, 0
    %p137 = por %p135, %p136
    %s139 = sadd.s32 %s138, 1
    %p142 = scmp.eq.s32.totalorder %s15, 1
    %p143 = scmp.ne.s32.totalorder %s138, %s140
    %p144 = scmp.eq.s32.totalorder %s15, 0
    %p145 = por %p143, %p144
    %p146 = scmp.ne.s32.totalorder %s138, %s140
    %p147 = scmp.eq.s32.totalorder %s20, 1
    %p148 = por %p146, %p147
    %p149 = scmp.ne.s32.totalorder %s140, %s141
    %p150 = scmp.eq.s32.totalorder %s20, 0
    %p151 = por %p149, %p150
    %p152 = scmp.ne.s32.totalorder %s140, %s141
    %p153 = scmp.eq.s32.totalorder %s21, 1
    %p154 = por %p152, %p153
    %p156 = scmp.ne.s32.totalorder %s141, %s155
    %p157 = scmp.eq.s32.totalorder %s21, 0
    %p158 = por %p156, %p157
    %s160 = sadd.s32 %s159, 1
    %p163 = scmp.eq.s32.totalorder %s15, 1
    %p164 = scmp.ne.s32.totalorder %s159, %s161
    %p165 = scmp.eq.s32.totalorder %s15, 0
    %p166 = por %p164, %p165
    %p167 = scmp.ne.s32.totalorder %s159, %s161
    %p168 = scmp.eq.s32.totalorder %s20, 1
    %p169 = por %p167, %p168
    %p170 = scmp.ne.s32.totalorder %s161, %s162
    %p171 = scmp.eq.s32.totalorder %s20, 0
    %p172 = por %p170, %p171
    %p173 = scmp.ne.s32.totalorder %s161, %s162
    %p174 = scmp.eq.s32.totalorder %s21, 1
    %p175 = por %p173, %p174
    %p177 = scmp.ne.s32.totalorder %s162, %s176
    %p178 = scmp.eq.s32.totalorder %s21, 0
    %p179 = por %p177, %p178
    %s181 = sadd.s32 %s180, 1
    %p184 = scmp.eq.s32.totalorder %s15, 1
    %p185 = scmp.ne.s32.totalorder %s180, %s182
    %p186 = scmp.eq.s32.totalorder %s15, 0
    %p187 = por %p185, %p186
    %p188 = scmp.ne.s32.totalorder %s180, %s182
    %p189 = scmp.eq.s32.totalorder %s20, 1
    %p190 = por %p188, %p189
    %p191 = scmp.ne.s32.totalorder %s182, %s183
    %p192 = scmp.eq.s32.totalorder %s20, 0
    %p193 = por %p191, %p192
    %p194 = scmp.ne.s32.totalorder %s182, %s183
    %p195 = scmp.eq.s32.totalorder %s21, 1
    %p196 = por %p194, %p195
    %p198 = scmp.ne.s32.totalorder %s183, %s197
    %p199 = scmp.eq.s32.totalorder %s21, 0
    %p200 = por %p198, %p199
    %s201 = ssub.s32 %s15, %s22
    %p202 = scmp.eq.s32.totalorder %s201, 0
    %s204 = sadd.s32 %s203, 1
    %s205 = scalar_select %p202, %s203, %s204
    %p208 = pneg %p202
    %p209 = scmp.eq.s32.totalorder %s15, 1
    %p210 = por %p208, %p209
    %p211 = scmp.ne.s32.totalorder %s203, %s206
    %p212 = scmp.eq.s32.totalorder %s15, 0
    %p213 = por %p211, %p212
    %p214 = scmp.ne.s32.totalorder %s203, %s206
    %p215 = scmp.eq.s32.totalorder %s20, 1
    %p216 = por %p214, %p215
    %p217 = scmp.ne.s32.totalorder %s206, %s207
    %p218 = scmp.eq.s32.totalorder %s20, 0
    %p219 = por %p217, %p218
    %p220 = scmp.ne.s32.totalorder %s206, %s207
    %p221 = scmp.eq.s32.totalorder %s21, 1
    %p222 = por %p220, %p221
    %p224 = scmp.ne.s32.totalorder %s207, %s223
    %p225 = scmp.eq.s32.totalorder %s21, 0
    %p226 = por %p224, %p225
    %s227 = ssub.s32 %s15, %s22
    %p228 = scmp.eq.s32.totalorder %s227, 0
    %s230 = sadd.s32 %s229, 1
    %s231 = scalar_select %p228, %s229, %s230
    %p234 = pneg %p228
    %p235 = scmp.eq.s32.totalorder %s15, 1
    %p236 = por %p234, %p235
    %p237 = scmp.ne.s32.totalorder %s229, %s232
    %p238 = scmp.eq.s32.totalorder %s15, 0
    %p239 = por %p237, %p238
    %p240 = scmp.ne.s32.totalorder %s229, %s232
    %p241 = scmp.eq.s32.totalorder %s20, 1
    %p242 = por %p240, %p241
    %p243 = scmp.ne.s32.totalorder %s232, %s233
    %p244 = scmp.eq.s32.totalorder %s20, 0
    %p245 = por %p243, %p244
    %p246 = scmp.ne.s32.totalorder %s232, %s233
    %p247 = scmp.eq.s32.totalorder %s21, 1
    %p248 = por %p246, %p247
    %p250 = scmp.ne.s32.totalorder %s233, %s249
    %p251 = scmp.eq.s32.totalorder %s21, 0
    %p252 = por %p250, %p251
    %p253 = scmp.le.s32.totalorder 1, %s15
    %p254 = scmp.lt.s32.totalorder %s15, 3
    %p255 = pnand %p253, %p254
    %p256 = pneg %p255
    // Predicated region
    $region9: #{refinenet_apply.1} parent=5 // pred_check
      _
    $region10: #{refinenet_apply.1} parent=5 // pred_check_branch
      %258 = sbr.rel (%p255) target = $region12
    $region11: #{refinenet_apply.1} parent=5 // pred_region
      %s259 = ssub.s32 %s15, 1
      // Predicated region
      $region13: #{refinenet_apply.1} parent=11 // pred_check
        %p260 = pneg %p88
      $region14: #{refinenet_apply.1} parent=11 // pred_check_branch
        %262 = sbr.rel (%p260) target = $region16
      $region15: #{refinenet_apply.1} parent=11 // pred_region
        _
      $region16: #{refinenet_apply.1} parent=11 // pred_fallthru
        _
      // Predicated region
      $region17: #{refinenet_apply.1} parent=11 // pred_check
        %p263 = pneg %p109
      $region18: #{refinenet_apply.1} parent=11 // pred_check_branch
        %265 = sbr.rel (%p263) target = $region20
      $region19: #{refinenet_apply.1} parent=11 // pred_region
        _
      $region20: #{refinenet_apply.1} parent=11 // pred_fallthru
        _
      // Predicated region
      $region21: #{refinenet_apply.1} parent=11 // pred_check
        %p266 = pneg %p130
      $region22: #{refinenet_apply.1} parent=11 // pred_check_branch
        %268 = sbr.rel (%p266) target = $region24
      $region23: #{refinenet_apply.1} parent=11 // pred_region
        _
      $region24: #{refinenet_apply.1} parent=11 // pred_fallthru
        _
      // Predicated region
      $region25: #{refinenet_apply.1} parent=11 // pred_check
        %p269 = pneg %p151
      $region26: #{refinenet_apply.1} parent=11 // pred_check_branch
        %271 = sbr.rel (%p269) target = $region28
      $region27: #{refinenet_apply.1} parent=11 // pred_region
        _
      $region28: #{refinenet_apply.1} parent=11 // pred_fallthru
        _
      // Predicated region
      $region29: #{refinenet_apply.1} parent=11 // pred_check
        %p272 = pneg %p172
      $region30: #{refinenet_apply.1} parent=11 // pred_check_branch
        %274 = sbr.rel (%p272) target = $region32
      $region31: #{refinenet_apply.1} parent=11 // pred_region
        _
      $region32: #{refinenet_apply.1} parent=11 // pred_fallthru
        _
      // Predicated region
      $region33: #{refinenet_apply.1} parent=11 // pred_check
        %p275 = pneg %p193
      $region34: #{refinenet_apply.1} parent=11 // pred_check_branch
        %277 = sbr.rel (%p275) target = $region36
      $region35: #{refinenet_apply.1} parent=11 // pred_region
        _
      $region36: #{refinenet_apply.1} parent=11 // pred_fallthru
        _
    $region12: #{refinenet_apply.1} parent=5 // pred_fallthru
      _
    %p278 = scmp.lt.s32.totalorder %s15, 2
    // Predicated region
    $region37: #{refinenet_apply.1} parent=5 // pred_check
      %p279 = pneg %p278
    $region38: #{refinenet_apply.1} parent=5 // pred_check_branch
      %281 = sbr.rel (%p279) target = $region40
    $region39: #{refinenet_apply.1} parent=5 // pred_region
      // Predicated region
      $region41: #{refinenet_apply.1} parent=39 // pred_check
        %p282 = pneg %p35
      $region42: #{refinenet_apply.1} parent=39 // pred_check_branch
        %284 = sbr.rel (%p282) target = $region44
      $region43: #{refinenet_apply.1} parent=39 // pred_region
        %p285 = scmp.lt.s32.totalorder %s15, 1
        %s286 = scalar_select %p285, %s15, 1
        %s287 = smul.addr %s286, 2
        %s288 = smul.addr %s287, 4
        %s289 = scalar_lea.vmem %s0, %s288
      $region44: #{refinenet_apply.1} parent=39 // pred_fallthru
        _
      // Predicated region
      $region45: #{refinenet_apply.1} parent=39 // pred_check
        %p290 = pneg %p61
      $region46: #{refinenet_apply.1} parent=39 // pred_check_branch
        %292 = sbr.rel (%p290) target = $region48
      $region47: #{refinenet_apply.1} parent=39 // pred_region
        %p293 = scmp.lt.s32.totalorder %s15, 1
        %s294 = scalar_select %p293, %s15, 1
        %s295 = smul.addr %s294, 2
        %s296 = smul.addr %s295, 8
        %s297 = scalar_lea.vmem %s1, %s296
      $region48: #{refinenet_apply.1} parent=39 // pred_fallthru
        _
      // Predicated region
      $region49: #{refinenet_apply.1} parent=39 // pred_check
        %p298 = pneg %p213
      $region50: #{refinenet_apply.1} parent=39 // pred_check_branch
        %300 = sbr.rel (%p298) target = $region52
      $region51: #{refinenet_apply.1} parent=39 // pred_region
        %p301 = scmp.lt.s32.totalorder %s15, 1
        %s302 = scalar_select %p301, %s15, 1
        %s303 = smul.addr %s302, 16
        %s304 = smul.addr %s303, 8
        %s305 = scalar_lea.vmem %s8, %s304
      $region52: #{refinenet_apply.1} parent=39 // pred_fallthru
        _
    $region40: #{refinenet_apply.1} parent=5 // pred_fallthru
      _
    %p306 = scmp.le.s32.totalorder 1, %s15
    %p307 = scmp.lt.s32.totalorder %s15, 3
    %p308 = pnand %p306, %p307
    %p309 = pneg %p308
    // Predicated region
    $region53: #{refinenet_apply.1} parent=5 // pred_check
      _
    $region54: #{refinenet_apply.1} parent=5 // pred_check_branch
      %311 = sbr.rel (%p308) target = $region56
    $region55: #{refinenet_apply.1} parent=5 // pred_region
      %s312 = ssub.s32 %s15, 1
      %p313 = scmp.lt.s32.totalorder %s20, 1
      %s314 = scalar_select %p313, %s20, 1
      %s315 = smul.addr %s314, 2
      %s316 = smul.addr %s315, 4
      %s317 = scalar_lea.vmem %s0, %s316
      %p318 = pneg %p41
      %p319 = pneg %p38
      %p320 = scmp.lt.s32.totalorder %s20, 1
      %s321 = scalar_select %p320, %s20, 1
      %s322 = smul.addr %s321, 2
      %s323 = smul.addr %s322, 8
      %s324 = scalar_lea.vmem %s1, %s323
      %p325 = pneg %p67
      %p326 = pneg %p64
      %p327 = pneg %p88
      %p328 = pneg %p85
      %p329 = pneg %p109
      %p330 = pneg %p106
      %p331 = pneg %p130
      %p332 = pneg %p127
      %p333 = pneg %p151
      %p334 = pneg %p148
      %p335 = pneg %p172
      %p336 = pneg %p169
      %p337 = pneg %p193
      %p338 = pneg %p190
      %p339 = scmp.lt.s32.totalorder %s20, 1
      %s340 = scalar_select %p339, %s20, 1
      %s341 = smul.addr %s340, 16
      %s342 = smul.addr %s341, 8
      %s343 = scalar_lea.vmem %s8, %s342
      %p344 = pneg %p219
      %p345 = pneg %p216
      %p346 = pneg %p245
      %p347 = pneg %p242
      %p348 = scmp.lt.s32.totalorder %s20, 1
      %s349 = scalar_select %p348, %s20, 1
      %s350 = smul.addr %s349, 2
      %s351 = smul.addr %s350, 8
      %s352 = scalar_lea.vmem %s9, %s351
      %p353 = scmp.lt.s32.totalorder %s20, 1
      %s354 = scalar_select %p353, %s20, 1
      %s355 = smul.addr %s354, 2
      %s356 = smul.addr %s355, 4
      %s357 = scalar_lea.vmem %s0, %s356
      %p358 = scmp.lt.s32.totalorder %s20, 1
      %s359 = scalar_select %p358, %s20, 1
      %s360 = smul.addr %s359, 2
      %s361 = smul.addr %s360, 8
      %s362 = scalar_lea.vmem %s1, %s361
      %p363 = scmp.lt.s32.totalorder %s20, 1
      %s364 = scalar_select %p363, %s20, 1
      %s365 = smul.addr %s364, 16
      %s366 = smul.addr %s365, 8
      %s367 = scalar_lea.vmem %s8, %s366
      %p368 = scmp.lt.s32.totalorder %s20, 1
      %s369 = scalar_select %p368, %s20, 1
      %s370 = smul.addr %s369, 2
      %s371 = smul.addr %s370, 8
      %s372 = scalar_lea.vmem %s9, %s371
      %v373 = vlaneseq
      %v374 = vand.u32 %v373, 127
      %v375 = vadd.s32 %v374, 128
      %vm376 = vcmp.lt.s32.totalorder %v374, 0
      %v377 = vsub.s32 0, %v374
      %v378 = vsel %vm376, %v377, %v374
      %v379 = vshrl.u32 %v378, 4
      %v380 = vand.u32 %v378, 15
      %v381 = vsub.s32 0, %v380
      %v382 = vsel %vm376, %v381, %v380
      %vm383 = vcmp.lt.s32.totalorder %v375, 0
      %v384 = vsub.s32 0, %v375
      %v385 = vsel %vm383, %v384, %v375
      %v386 = vshrl.u32 %v385, 4
      %v387 = vand.u32 %v385, 15
      %v388 = vsub.s32 0, %v387
      %v389 = vsel %vm383, %v388, %v387
      %vm390 = vcmp.ne.s32.totalorder %v382, 0
      %vm391 = vcmp.ne.s32.totalorder %v389, 0
      %vm392 = vcmp.lt.s32.totalorder %v382, 0
      %vm393 = vcmp.lt.s32.totalorder %v389, 0
      %vm394 = vmand %vm392, %vm390
      %vm395 = vmand %vm393, %vm391
      %v396 = vadd.s32 %v382, 16
      %v397 = vadd.s32 %v389, 16
      %v398 = vsel %vm394, %v396, %v382
      %v399 = vsel %vm395, %v397, %v389
      %v400 = vadd.s32 %v398, 4294967294
      %v401 = vadd.s32 %v399, 4294967294
      %vm402 = vcmp.ge.s32.totalorder %v400, 0
      %vm403 = vcmp.ge.s32.totalorder %v401, 0
      %vm404 = vcmp.lt.s32.totalorder %v400, 16
      %vm405 = vcmp.lt.s32.totalorder %v401, 16
      %vm406 = vmand %vm402, %vm404
      %vm407 = vmand %vm403, %vm405
      %v408 = vsel %vm406, 1, 0
      %v409 = vsel %vm407, 1, 0
      %v410 = vcvt.s32.f32 %v408
      %v411 = vcvt.s32.f32 %v409
      %v412 = vadd.s32 %v398, 4294967295
      %v413 = vadd.s32 %v399, 4294967295
      %vm414 = vcmp.ge.s32.totalorder %v412, 0
      %vm415 = vcmp.ge.s32.totalorder %v413, 0
      %vm416 = vcmp.lt.s32.totalorder %v412, 16
      %vm417 = vcmp.lt.s32.totalorder %v413, 16
      %vm418 = vmand %vm414, %vm416
      %vm419 = vmand %vm415, %vm417
      %v420 = vsel %vm418, 1, 0
      %v421 = vsel %vm419, 1, 0
      %v422 = vcvt.s32.f32 %v420
      %v423 = vcvt.s32.f32 %v421
      %v424 = vadd.s32 %v398, 1
      %v425 = vadd.s32 %v399, 1
      %vm426 = vcmp.ge.s32.totalorder %v424, 0
      %vm427 = vcmp.ge.s32.totalorder %v425, 0
      %vm428 = vcmp.lt.s32.totalorder %v424, 16
      %vm429 = vcmp.lt.s32.totalorder %v425, 16
      %vm430 = vmand %vm426, %vm428
      %vm431 = vmand %vm427, %vm429
      %v432 = vsel %vm430, 1, 0
      %v433 = vsel %vm431, 1, 0
      %v434 = vcvt.s32.f32 %v432
      %v435 = vcvt.s32.f32 %v433
      %v436 = vadd.s32 %v398, 2
      %v437 = vadd.s32 %v399, 2
      %vm438 = vcmp.ge.s32.totalorder %v436, 0
      %vm439 = vcmp.ge.s32.totalorder %v437, 0
      %vm440 = vcmp.lt.s32.totalorder %v436, 16
      %vm441 = vcmp.lt.s32.totalorder %v437, 16
      %vm442 = vmand %vm438, %vm440
      %vm443 = vmand %vm439, %vm441
      %v444 = vsel %vm442, 1, 0
      %v445 = vsel %vm443, 1, 0
      %v446 = vcvt.s32.f32 %v444
      %v447 = vcvt.s32.f32 %v445
      %v448 = vld [vmem:[%s357] sm:$0xff]
      %v449 = vld [vmem:[%s362] sm:$0x3f]
      %v450 = vld [vmem:[%s362 + $0x8] sm:$0x3f]
      %v451 = vld [vmem:[%s2] sm:$0xff]
      %v452 = vld [vmem:[%s3] sm:$0xff]
      %454 = vset.pattern.permute.xlu0 0
      %455 = vperm.xlu0 %454, %v452
      %v456 = vpop.permute.xlu0 %455
      %v459 = vcombine.high %v448, %v448
      %vm460 = vcmask 31744
      %v462 = vsel %vm460, %v451, 0
      %vm464 = vcmask 1043456
      %v465 = vsel %vm464, %v448, 0
      %v467 = vsel %vm464, %v459, 0
      %469 = vmatprep.subr.mxu0 %v467
      %470 = vmatpush1.msra.mxu0 %v465
      %471 = vmatprep.subr.mxu0 0.0
      %472 = vmatpush1.msra.mxu0 0.0
      %473 = vmatprep.subr.mxu0 0.0
      %474 = vmatpush1.msra.mxu0 0.0
      %475 = vmatprep.subr.mxu0 0.0
      %476 = vmatpush1.msra.mxu0 0.0
      %477 = vmatprep.subr.mxu0 0.0
      %478 = vmatpush1.msra.mxu0 0.0
      %479 = vmatprep.subr.mxu0 0.0
      %480 = vmatpush1.msra.mxu0 0.0
      %481 = vmatprep.subr.mxu0 0.0
      %482 = vmatpush1.msra.mxu0 0.0
      %483 = vmatprep.subr.mxu0 0.0
      %484 = vmatpush1.msra.mxu0 0.0
      %485 = vmatprep.subr.mxu0 0.0
      %486 = vmatpush1.msra.mxu0 0.0
      %487 = vmatprep.subr.mxu0 0.0
      %488 = vmatpush1.msra.mxu0 0.0
      %489 = vmatprep.subr.mxu0 0.0
      %490 = vmatpush1.msra.mxu0 0.0
      %491 = vmatprep.subr.mxu0 0.0
      %492 = vmatpush1.msra.mxu0 0.0
      %493 = vmatprep.subr.mxu0 0.0
      %494 = vmatpush1.msra.mxu0 0.0
      %495 = vmatprep.subr.mxu0 0.0
      %496 = vmatpush1.msra.mxu0 0.0
      %497 = vmatprep.subr.mxu0 0.0
      %498 = vmatpush1.msra.mxu0 0.0
      %499 = vmatprep.subr.mxu0 0.0
      %500 = vmatpush1.msra.mxu0 0.0
      %501 = vmatprep.subr.mxu0 0.0
      %502 = vmatpush1.msra.mxu0 0.0
      %503 = vmatprep.subr.mxu0 0.0
      %504 = vmatpush1.msra.mxu0 0.0
      %505 = vmatprep.subr.mxu0 0.0
      %506 = vmatpush1.msra.mxu0 0.0
      %507 = vmatprep.subr.mxu0 0.0
      %508 = vmatpush1.msra.mxu0 0.0
      %509 = vmatprep.subr.mxu0 0.0
      %510 = vmatpush1.msra.mxu0 0.0
      %511 = vmatprep.subr.mxu0 0.0
      %512 = vmatpush1.msra.mxu0 0.0
      %513 = vmatprep.subr.mxu0 0.0
      %514 = vmatpush1.msra.mxu0 0.0
      %515 = vmatprep.subr.mxu0 0.0
      %516 = vmatpush1.msra.mxu0 0.0
      %517 = vmatprep.subr.mxu0 0.0
      %518 = vmatpush1.msra.mxu0 0.0
      %519 = vmatprep.subr.mxu0 0.0
      %520 = vmatpush1.msra.mxu0 0.0
      %521 = vmatprep.subr.mxu0 0.0
      %522 = vmatpush1.msra.mxu0 0.0
      %523 = vmatprep.subr.mxu0 0.0
      %524 = vmatpush1.msra.mxu0 0.0
      %525 = vmatprep.subr.mxu0 0.0
      %526 = vmatpush1.msra.mxu0 0.0
      %527 = vmatprep.subr.mxu0 0.0
      %528 = vmatpush1.msra.mxu0 0.0
      %529 = vmatprep.subr.mxu0 0.0
      %530 = vmatpush1.msra.mxu0 0.0
      %531 = vmatprep.subr.mxu0 0.0
      %532 = vmatpush1.msra.mxu0 0.0
      %533 = vmatprep.mubr.f32.mxu0 0.0
      %534 = vmatmul.mubr.f32.gmra.mrb[0].mxu0 %v462
      %v535 = vpop.f32.mrb[0].mxu0
      %v536 = vadd.f32 %v456, %v535
      %v537 = vpop.f32.mrb[0].mxu0
      %v538 = vadd.f32 %v456, %v537
      %539 = vdwg.mxu0
      %v540 = vld [vmem:[%s367] sm:$0xff]
      %v541 = vadd.f32 %v536, %v538
      %542 = vadd.xlane.f32.xlu0 %v541
      %v543 = vpop.xlane.xlu0 %542
      %v544 = vrcp.pop 256.0
      %v545 = vmul.f32 %v543, %v544
      %v546 = vsub.f32 %v536, %v545
      %v547 = vsub.f32 %v538, %v545
      %v548 = vmul.f32 %v546, %v546
      %v549 = vmul.f32 %v547, %v547
      %v550 = vadd.f32 %v548, %v549
      %551 = vadd.xlane.f32.xlu0 %v550
      %v552 = vpop.xlane.xlu0 %551
      %v553 = vmul.f32 %v552, 0.003921569
      %v554 = vadd.f32 %v553, 1e-05
      %v555 = vrsqrt.pop %v554
      %v556 = vmul.f32 %v546, %v555
      %v557 = vmul.f32 %v547, %v555
      %559 = vset.pattern.permute.xlu0 0
      %560 = vperm.xlu0 %559, %v540
      %v561 = vpop.permute.xlu0 %560
      %v563 = vmul.f32 %v561, %v556
      %v564 = vmul.f32 %v561, %v557
      %565 = vset.pattern.permute.xlu0 1
      %566 = vperm.xlu0 %565, %v540
      %v567 = vpop.permute.xlu0 %566
      %v569 = vadd.f32 %v563, %v567
      %v570 = vadd.f32 %v564, %v567
      %v571 = vrot.slane %v545, 4
      %v572 = vadd.f32 %v545, %v571
      %v573 = vrot.slane %v572, 2
      %v574 = vadd.f32 %v572, %v573
      %v575 = vrot.slane %v574, 1
      %v576 = vadd.f32 %v574, %v575
      %v577 = vrcp.pop 8.0
      %v578 = vmul.f32 %v576, %v577
      %v579 = vsub.f32 %v545, %v578
      %v580 = vmul.f32 %v579, %v579
      %v581 = vrot.slane %v580, 4
      %v582 = vadd.f32 %v580, %v581
      %v583 = vrot.slane %v582, 2
      %v584 = vadd.f32 %v582, %v583
      %v585 = vrot.slane %v584, 1
      %v586 = vadd.f32 %v584, %v585
      %v587 = vmul.f32 %v586, 0.14285715
      %v588 = vmul.f32 %v540, %v579
      %v589 = vadd.f32 %v587, 1e-05
      %v590 = vrsqrt.pop %v589
      %v591 = vmul.f32 %v588, %v590
      %593 = vset.pattern.permute.xlu0 2
      %594 = vperm.xlu0 %593, %v591
      %v595 = vpop.permute.xlu0 %594
      %v597 = vadd.f32 %v569, %v595
      %v598 = vadd.f32 %v570, %v595
      %vm599 = vcmp.gt.f32.partialorder %v597, 0.0
      %vm600 = vcmp.gt.f32.partialorder %v598, 0.0
      %v601 = vmin.f32 %v597, 0.0
      %v602 = vmin.f32 %v598, 0.0
      %v603 = vmul.f32 %v601, 1.442695
      %v604 = vpow.pop %v603
      %v605 = vmul.f32 %v602, 1.442695
      %v606 = vpow.pop %v605
      %v607 = vsub.f32 %v604, 1.0
      %v608 = vsub.f32 %v606, 1.0
      %v609 = vsel %vm599, %v597, %v607
      %v610 = vsel %vm600, %v598, %v608
      %613 = vrot.lane.b32.xlu0 %v422, 111
      %v614 = vpop.permute.xlu0 %613
      %615 = vrot.lane.b32.xlu0 %v423, 111
      %v616 = vpop.permute.xlu0 %615
      %vm617 = vcmask 908288
      %v618 = vsel %vm617, %v614, %v616
      %v622 = vmul.f32 %v614, 0.0
      %v623 = vmul.f32 %v609, %v618
      %v624 = vmul.f32 %v610, %v616
      %627 = vrot.lane.b32.xlu0 %v434, 113
      %v628 = vpop.permute.xlu0 %627
      %629 = vrot.lane.b32.xlu0 %v435, 113
      %v630 = vpop.permute.xlu0 %629
      %vm631 = vcmask 924672
      %v632 = vsel %vm631, %v628, %v630
      %v636 = vmul.f32 %v628, 0.0
      %v637 = vmul.f32 %v609, %v632
      %v638 = vmul.f32 %v610, %v630
      %639 = vrot.lane.b32.xlu0 %v422, 127
      %v640 = vpop.permute.xlu0 %639
      %641 = vrot.lane.b32.xlu0 %v423, 127
      %v642 = vpop.permute.xlu0 %641
      %vm643 = vcmask 1039360
      %v644 = vsel %vm643, %v640, %v642
      %v648 = vmul.f32 %v640, 0.0
      %v649 = vmul.f32 %v609, %v644
      %v650 = vmul.f32 %v610, %v642
      %651 = vrot.lane.b32.xlu0 %v434, 1
      %v652 = vpop.permute.xlu0 %651
      %653 = vrot.lane.b32.xlu0 %v435, 1
      %v654 = vpop.permute.xlu0 %653
      %vm655 = vcmask 7168
      %v656 = vsel %vm655, %v652, %v654
      %v660 = vmul.f32 %v609, %v652
      %v661 = vmul.f32 %v610, %v656
      %v662 = vmul.f32 %v654, 0.0
      %663 = vrot.lane.b32.xlu0 %v422, 15
      %v664 = vpop.permute.xlu0 %663
      %665 = vrot.lane.b32.xlu0 %v423, 15
      %v666 = vpop.permute.xlu0 %665
      %vm667 = vcmask 121856
      %v668 = vsel %vm667, %v664, %v666
      %v672 = vmul.f32 %v609, %v664
      %v673 = vmul.f32 %v610, %v668
      %v674 = vmul.f32 %v666, 0.0
      %675 = vrot.lane.b32.xlu0 %v434, 17
      %v676 = vpop.permute.xlu0 %675
      %677 = vrot.lane.b32.xlu0 %v435, 17
      %v678 = vpop.permute.xlu0 %677
      %vm679 = vcmask 138240
      %v680 = vsel %vm679, %v676, %v678
      %v684 = vmul.f32 %v609, %v676
      %v685 = vmul.f32 %v610, %v680
      %v686 = vmul.f32 %v678, 0.0
      %690 = vrot.lane.b32.xlu0 0.0, 127
      %v691 = vpop.permute.xlu0 %690
      %692 = vrot.lane.b32.xlu0 %v609, 127
      %v693 = vpop.permute.xlu0 %692
      %694 = vrot.lane.b32.xlu0 %v610, 127
      %v695 = vpop.permute.xlu0 %694
      %v696 = vsel %vm643, %v691, %v693
      %v697 = vsel %vm643, %v693, %v695
      %701 = vrot.lane.b32.xlu0 %v636, 126
      %v702 = vpop.permute.xlu0 %701
      %703 = vrot.lane.b32.xlu0 %v637, 126
      %v704 = vpop.permute.xlu0 %703
      %705 = vrot.lane.b32.xlu0 %v638, 126
      %v706 = vpop.permute.xlu0 %705
      %vm707 = vcmask 1031168
      %v708 = vsel %vm707, %v702, %v704
      %v709 = vsel %vm707, %v704, %v706
      %713 = vrot.lane.b32.xlu0 %v648, 112
      %v714 = vpop.permute.xlu0 %713
      %715 = vrot.lane.b32.xlu0 %v649, 112
      %v716 = vpop.permute.xlu0 %715
      %717 = vrot.lane.b32.xlu0 %v650, 112
      %v718 = vpop.permute.xlu0 %717
      %vm719 = vcmask 916480
      %v720 = vsel %vm719, %v714, %v716
      %v721 = vsel %vm719, %v716, %v718
      %722 = vrot.lane.b32.xlu0 %v609, 111
      %v723 = vpop.permute.xlu0 %722
      %724 = vrot.lane.b32.xlu0 %v610, 111
      %v725 = vpop.permute.xlu0 %724
      %v726 = vsel %vm617, %v723, %v725
      %730 = vrot.lane.b32.xlu0 %v660, 110
      %v731 = vpop.permute.xlu0 %730
      %732 = vrot.lane.b32.xlu0 %v661, 110
      %v733 = vpop.permute.xlu0 %732
      %734 = vrot.lane.b32.xlu0 %v662, 110
      %v735 = vpop.permute.xlu0 %734
      %vm736 = vcmask 900096
      %v737 = vsel %vm736, %v731, %v733
      %v738 = vsel %vm736, %v733, %v735
      %742 = vrot.lane.b32.xlu0 %v672, 96
      %v743 = vpop.permute.xlu0 %742
      %744 = vrot.lane.b32.xlu0 %v673, 96
      %v745 = vpop.permute.xlu0 %744
      %746 = vrot.lane.b32.xlu0 %v674, 96
      %v747 = vpop.permute.xlu0 %746
      %vm748 = vcmask 785408
      %v749 = vsel %vm748, %v743, %v745
      %v750 = vsel %vm748, %v745, %v747
      %751 = vrot.lane.b32.xlu0 %v609, 95
      %v752 = vpop.permute.xlu0 %751
      %753 = vrot.lane.b32.xlu0 %v610, 95
      %v754 = vpop.permute.xlu0 %753
      %755 = vrot.lane.b32.xlu0 0.0, 95
      %v756 = vpop.permute.xlu0 %755
      %vm757 = vcmask 777216
      %v758 = vsel %vm757, %v752, %v754
      %v759 = vsel %vm757, %v754, %v756
      %763 = vrot.lane.b32.xlu0 %v684, 94
      %v764 = vpop.permute.xlu0 %763
      %765 = vrot.lane.b32.xlu0 %v685, 94
      %v766 = vpop.permute.xlu0 %765
      %767 = vrot.lane.b32.xlu0 %v686, 94
      %v768 = vpop.permute.xlu0 %767
      %vm769 = vcmask 769024
      %v770 = vsel %vm769, %v764, %v766
      %v771 = vsel %vm769, %v766, %v768
      %v772 = vld [vmem:[%s6] sm:$0xff]
      %v773 = vld [vmem:[%s7] sm:$0xff]
      %775 = vset.pattern.permute.xlu0 0
      %776 = vperm.xlu0 %775, %v773
      %v777 = vpop.permute.xlu0 %776
      %782 = vrot.lane.b32.xlu0 %v622, 17
      %v783 = vpop.permute.xlu0 %782
      %784 = vrot.lane.b32.xlu0 %v623, 17
      %v785 = vpop.permute.xlu0 %784
      %786 = vrot.lane.b32.xlu0 %v624, 17
      %v787 = vpop.permute.xlu0 %786
      %788 = vrot.lane.b32.xlu0 %v696, 17
      %v789 = vpop.permute.xlu0 %788
      %790 = vrot.lane.b32.xlu0 %v697, 17
      %v791 = vpop.permute.xlu0 %790
      %792 = vrot.lane.b32.xlu0 %v695, 17
      %v793 = vpop.permute.xlu0 %792
      %794 = vrot.lane.b32.xlu0 %v708, 17
      %v795 = vpop.permute.xlu0 %794
      %796 = vrot.lane.b32.xlu0 %v709, 17
      %v797 = vpop.permute.xlu0 %796
      %798 = vrot.lane.b32.xlu0 %v706, 17
      %v799 = vpop.permute.xlu0 %798
      %800 = vrot.lane.b32.xlu0 %v720, 17
      %v801 = vpop.permute.xlu0 %800
      %802 = vrot.lane.b32.xlu0 %v721, 17
      %v803 = vpop.permute.xlu0 %802
      %804 = vrot.lane.b32.xlu0 %v718, 17
      %v805 = vpop.permute.xlu0 %804
      %806 = vrot.lane.b32.xlu0 %v723, 17
      %v807 = vpop.permute.xlu0 %806
      %808 = vrot.lane.b32.xlu0 %v726, 17
      %v809 = vpop.permute.xlu0 %808
      %810 = vrot.lane.b32.xlu0 %v725, 17
      %v811 = vpop.permute.xlu0 %810
      %812 = vrot.lane.b32.xlu0 %v731, 17
      %v813 = vpop.permute.xlu0 %812
      %814 = vrot.lane.b32.xlu0 %v737, 17
      %v815 = vpop.permute.xlu0 %814
      %816 = vrot.lane.b32.xlu0 %v738, 17
      %v817 = vpop.permute.xlu0 %816
      %818 = vrot.lane.b32.xlu0 %v743, 17
      %v819 = vpop.permute.xlu0 %818
      %820 = vrot.lane.b32.xlu0 %v749, 17
      %v821 = vpop.permute.xlu0 %820
      %822 = vrot.lane.b32.xlu0 %v750, 17
      %v823 = vpop.permute.xlu0 %822
      %824 = vrot.lane.b32.xlu0 %v752, 17
      %v825 = vpop.permute.xlu0 %824
      %826 = vrot.lane.b32.xlu0 %v758, 17
      %v827 = vpop.permute.xlu0 %826
      %828 = vrot.lane.b32.xlu0 %v759, 17
      %v829 = vpop.permute.xlu0 %828
      %830 = vrot.lane.b32.xlu0 %v764, 17
      %v831 = vpop.permute.xlu0 %830
      %832 = vrot.lane.b32.xlu0 %v770, 17
      %v833 = vpop.permute.xlu0 %832
      %834 = vrot.lane.b32.xlu0 %v771, 17
      %v835 = vpop.permute.xlu0 %834
      %v836 = vsel %vm679, %v783, %v785
      %v837 = vsel %vm679, %v785, %v787
      %v838 = vsel %vm679, %v789, %v791
      %v839 = vsel %vm679, %v791, %v793
      %v840 = vsel %vm679, %v795, %v797
      %v841 = vsel %vm679, %v797, %v799
      %v842 = vsel %vm679, %v801, %v803
      %v843 = vsel %vm679, %v803, %v805
      %v844 = vsel %vm679, %v807, %v809
      %v845 = vsel %vm679, %v809, %v811
      %v846 = vsel %vm679, %v813, %v815
      %v847 = vsel %vm679, %v815, %v817
      %v848 = vsel %vm679, %v819, %v821
      %v849 = vsel %vm679, %v821, %v823
      %v850 = vsel %vm679, %v825, %v827
      %v851 = vsel %vm679, %v827, %v829
      %v852 = vsel %vm679, %v831, %v833
      %v853 = vsel %vm679, %v833, %v835
      %vm872 = vcmask 588800
      %v874 = vsel %vm872, %v772, 0
      %876 = vmatprep.subr.mxu0 %v837
      %877 = vmatpush1.msra.mxu0 %v836
      %878 = vmatprep.subr.mxu0 %v839
      %879 = vmatpush1.msra.mxu0 %v838
      %880 = vmatprep.subr.mxu0 %v841
      %881 = vmatpush1.msra.mxu0 %v840
      %882 = vmatprep.subr.mxu0 %v843
      %883 = vmatpush1.msra.mxu0 %v842
      %884 = vmatprep.subr.mxu0 %v845
      %885 = vmatpush1.msra.mxu0 %v844
      %886 = vmatprep.subr.mxu0 %v847
      %887 = vmatpush1.msra.mxu0 %v846
      %888 = vmatprep.subr.mxu0 %v849
      %889 = vmatpush1.msra.mxu0 %v848
      %890 = vmatprep.subr.mxu0 %v851
      %891 = vmatpush1.msra.mxu0 %v850
      %892 = vmatprep.subr.mxu0 %v853
      %893 = vmatpush1.msra.mxu0 %v852
      %894 = vmatprep.subr.mxu0 0.0
      %895 = vmatpush1.msra.mxu0 0.0
      %896 = vmatprep.subr.mxu0 0.0
      %897 = vmatpush1.msra.mxu0 0.0
      %898 = vmatprep.subr.mxu0 0.0
      %899 = vmatpush1.msra.mxu0 0.0
      %900 = vmatprep.subr.mxu0 0.0
      %901 = vmatpush1.msra.mxu0 0.0
      %902 = vmatprep.subr.mxu0 0.0
      %903 = vmatpush1.msra.mxu0 0.0
      %904 = vmatprep.subr.mxu0 0.0
      %905 = vmatpush1.msra.mxu0 0.0
      %906 = vmatprep.subr.mxu0 0.0
      %907 = vmatpush1.msra.mxu0 0.0
      %908 = vmatprep.subr.mxu0 0.0
      %909 = vmatpush1.msra.mxu0 0.0
      %910 = vmatprep.subr.mxu0 0.0
      %911 = vmatpush1.msra.mxu0 0.0
      %912 = vmatprep.subr.mxu0 0.0
      %913 = vmatpush1.msra.mxu0 0.0
      %914 = vmatprep.subr.mxu0 0.0
      %915 = vmatpush1.msra.mxu0 0.0
      %916 = vmatprep.subr.mxu0 0.0
      %917 = vmatpush1.msra.mxu0 0.0
      %918 = vmatprep.subr.mxu0 0.0
      %919 = vmatpush1.msra.mxu0 0.0
      %920 = vmatprep.subr.mxu0 0.0
      %921 = vmatpush1.msra.mxu0 0.0
      %922 = vmatprep.subr.mxu0 0.0
      %923 = vmatpush1.msra.mxu0 0.0
      %924 = vmatprep.subr.mxu0 0.0
      %925 = vmatpush1.msra.mxu0 0.0
      %926 = vmatprep.subr.mxu0 0.0
      %927 = vmatpush1.msra.mxu0 0.0
      %928 = vmatprep.subr.mxu0 0.0
      %929 = vmatpush1.msra.mxu0 0.0
      %930 = vmatprep.subr.mxu0 0.0
      %931 = vmatpush1.msra.mxu0 0.0
      %932 = vmatprep.subr.mxu0 0.0
      %933 = vmatpush1.msra.mxu0 0.0
      %934 = vmatprep.subr.mxu0 0.0
      %935 = vmatpush1.msra.mxu0 0.0
      %936 = vmatprep.subr.mxu0 0.0
      %937 = vmatpush1.msra.mxu0 0.0
      %938 = vmatprep.subr.mxu0 0.0
      %939 = vmatpush1.msra.mxu0 0.0
      %940 = vmatprep.mubr.f32.mxu0 0.0
      %941 = vmatmul.mubr.f32.gmra.mrb[0].mxu0 %v874
      %v942 = vpop.f32.mrb[0].mxu0
      %v943 = vadd.f32 %v777, %v942
      %v944 = vpop.f32.mrb[0].mxu0
      %v945 = vadd.f32 %v777, %v944
      %946 = vdwg.mxu0
      %s947 = scalar_lea.vmem %s367, 8
      %v948 = vld [vmem:[%s947] sm:$0xff]
      %v949 = vadd.f32 %v943, %v945
      %950 = vadd.xlane.f32.xlu0 %v949
      %v951 = vpop.xlane.xlu0 %950
      %v952 = vmul.f32 %v951, %v544
      %v953 = vsub.f32 %v943, %v952
      %v954 = vsub.f32 %v945, %v952
      %v955 = vmul.f32 %v953, %v953
      %v956 = vmul.f32 %v954, %v954
      %v957 = vadd.f32 %v955, %v956
      %958 = vadd.xlane.f32.xlu0 %v957
      %v959 = vpop.xlane.xlu0 %958
      %v960 = vmul.f32 %v959, 0.003921569
      %v961 = vadd.f32 %v960, 1e-05
      %v962 = vrsqrt.pop %v961
      %v963 = vmul.f32 %v953, %v962
      %v964 = vmul.f32 %v954, %v962
      %966 = vset.pattern.permute.xlu0 0
      %967 = vperm.xlu0 %966, %v948
      %v968 = vpop.permute.xlu0 %967
      %v970 = vmul.f32 %v968, %v963
      %v971 = vmul.f32 %v968, %v964
      %972 = vset.pattern.permute.xlu0 1
      %973 = vperm.xlu0 %972, %v948
      %v974 = vpop.permute.xlu0 %973
      %v976 = vadd.f32 %v970, %v974
      %v977 = vadd.f32 %v971, %v974
      %v978 = vrot.slane %v952, 4
      %v979 = vadd.f32 %v952, %v978
      %v980 = vrot.slane %v979, 2
      %v981 = vadd.f32 %v979, %v980
      %v982 = vrot.slane %v981, 1
      %v983 = vadd.f32 %v981, %v982
      %v984 = vmul.f32 %v983, %v577
      %v985 = vsub.f32 %v952, %v984
      %v986 = vmul.f32 %v985, %v985
      %v987 = vrot.slane %v986, 4
      %v988 = vadd.f32 %v986, %v987
      %v989 = vrot.slane %v988, 2
      %v990 = vadd.f32 %v988, %v989
      %v991 = vrot.slane %v990, 1
      %v992 = vadd.f32 %v990, %v991
      %v993 = vmul.f32 %v992, 0.14285715
      %v994 = vmul.f32 %v948, %v985
      %v995 = vadd.f32 %v993, 1e-05
      %v996 = vrsqrt.pop %v995
      %v997 = vmul.f32 %v994, %v996
      %999 = vset.pattern.permute.xlu0 2
      %1000 = vperm.xlu0 %999, %v997
      %v1001 = vpop.permute.xlu0 %1000
      %v1003 = vadd.f32 %v976, %v1001
      %v1004 = vadd.f32 %v977, %v1001
      %vm1005 = vcmp.gt.f32.partialorder %v1003, 0.0
      %vm1006 = vcmp.gt.f32.partialorder %v1004, 0.0
      %v1007 = vmin.f32 %v1003, 0.0
      %v1008 = vmin.f32 %v1004, 0.0
      %v1009 = vmul.f32 %v1007, 1.442695
      %v1010 = vpow.pop %v1009
      %v1011 = vmul.f32 %v1008, 1.442695
      %v1012 = vpow.pop %v1011
      %v1013 = vsub.f32 %v1010, 1.0
      %v1014 = vsub.f32 %v1012, 1.0
      %v1015 = vsel %vm1005, %v1003, %v1013
      %v1016 = vsel %vm1006, %v1004, %v1014
      %v1017 = vmul.f32 %v1015, %v618
      %v1018 = vmul.f32 %v1016, %v616
      %v1019 = vmul.f32 %v1015, %v632
      %v1020 = vmul.f32 %v1016, %v630
      %v1021 = vmul.f32 %v1015, %v644
      %v1022 = vmul.f32 %v1016, %v642
      %v1023 = vmul.f32 %v1015, %v652
      %v1024 = vmul.f32 %v1016, %v656
      %v1025 = vmul.f32 %v1015, %v664
      %v1026 = vmul.f32 %v1016, %v668
      %v1027 = vmul.f32 %v1015, %v676
      %v1028 = vmul.f32 %v1016, %v680
      %1031 = vrot.lane.b32.xlu0 %v1015, 127
      %v1032 = vpop.permute.xlu0 %1031
      %1033 = vrot.lane.b32.xlu0 %v1016, 127
      %v1034 = vpop.permute.xlu0 %1033
      %v1035 = vsel %vm643, %v691, %v1032
      %v1036 = vsel %vm643, %v1032, %v1034
      %1039 = vrot.lane.b32.xlu0 %v1019, 126
      %v1040 = vpop.permute.xlu0 %1039
      %1041 = vrot.lane.b32.xlu0 %v1020, 126
      %v1042 = vpop.permute.xlu0 %1041
      %v1043 = vsel %vm707, %v702, %v1040
      %v1044 = vsel %vm707, %v1040, %v1042
      %1047 = vrot.lane.b32.xlu0 %v1021, 112
      %v1048 = vpop.permute.xlu0 %1047
      %1049 = vrot.lane.b32.xlu0 %v1022, 112
      %v1050 = vpop.permute.xlu0 %1049
      %v1051 = vsel %vm719, %v714, %v1048
      %v1052 = vsel %vm719, %v1048, %v1050
      %1053 = vrot.lane.b32.xlu0 %v1015, 111
      %v1054 = vpop.permute.xlu0 %1053
      %1055 = vrot.lane.b32.xlu0 %v1016, 111
      %v1056 = vpop.permute.xlu0 %1055
      %v1057 = vsel %vm617, %v1054, %v1056
      %1060 = vrot.lane.b32.xlu0 %v1023, 110
      %v1061 = vpop.permute.xlu0 %1060
      %1062 = vrot.lane.b32.xlu0 %v1024, 110
      %v1063 = vpop.permute.xlu0 %1062
      %v1064 = vsel %vm736, %v1061, %v1063
      %v1065 = vsel %vm736, %v1063, %v735
      %1068 = vrot.lane.b32.xlu0 %v1025, 96
      %v1069 = vpop.permute.xlu0 %1068
      %1070 = vrot.lane.b32.xlu0 %v1026, 96
      %v1071 = vpop.permute.xlu0 %1070
      %v1072 = vsel %vm748, %v1069, %v1071
      %v1073 = vsel %vm748, %v1071, %v747
      %1074 = vrot.lane.b32.xlu0 %v1015, 95
      %v1075 = vpop.permute.xlu0 %1074
      %1076 = vrot.lane.b32.xlu0 %v1016, 95
      %v1077 = vpop.permute.xlu0 %1076
      %v1078 = vsel %vm757, %v1075, %v1077
      %v1079 = vsel %vm757, %v1077, %v756
      %1082 = vrot.lane.b32.xlu0 %v1027, 94
      %v1083 = vpop.permute.xlu0 %1082
      %1084 = vrot.lane.b32.xlu0 %v1028, 94
      %v1085 = vpop.permute.xlu0 %1084
      %v1086 = vsel %vm769, %v1083, %v1085
      %v1087 = vsel %vm769, %v1085, %v768
      %s1088 = scalar_lea.vmem %s6, 8
      %v1089 = vld [vmem:[%s1088] sm:$0xff]
      %s1090 = scalar_lea.vmem %s7, 8
      %v1091 = vld [vmem:[%s1090] sm:$0xff]
      %1093 = vset.pattern.permute.xlu0 0
      %1094 = vperm.xlu0 %1093, %v1091
      %v1095 = vpop.permute.xlu0 %1094
      %1099 = vrot.lane.b32.xlu0 %v1017, 17
      %v1100 = vpop.permute.xlu0 %1099
      %1101 = vrot.lane.b32.xlu0 %v1018, 17
      %v1102 = vpop.permute.xlu0 %1101
      %1103 = vrot.lane.b32.xlu0 %v1035, 17
      %v1104 = vpop.permute.xlu0 %1103
      %1105 = vrot.lane.b32.xlu0 %v1036, 17
      %v1106 = vpop.permute.xlu0 %1105
      %1107 = vrot.lane.b32.xlu0 %v1034, 17
      %v1108 = vpop.permute.xlu0 %1107
      %1109 = vrot.lane.b32.xlu0 %v1043, 17
      %v1110 = vpop.permute.xlu0 %1109
      %1111 = vrot.lane.b32.xlu0 %v1044, 17
      %v1112 = vpop.permute.xlu0 %1111
      %1113 = vrot.lane.b32.xlu0 %v1042, 17
      %v1114 = vpop.permute.xlu0 %1113
      %1115 = vrot.lane.b32.xlu0 %v1051, 17
      %v1116 = vpop.permute.xlu0 %1115
      %1117 = vrot.lane.b32.xlu0 %v1052, 17
      %v1118 = vpop.permute.xlu0 %1117
      %1119 = vrot.lane.b32.xlu0 %v1050, 17
      %v1120 = vpop.permute.xlu0 %1119
      %1121 = vrot.lane.b32.xlu0 %v1054, 17
      %v1122 = vpop.permute.xlu0 %1121
      %1123 = vrot.lane.b32.xlu0 %v1057, 17
      %v1124 = vpop.permute.xlu0 %1123
      %1125 = vrot.lane.b32.xlu0 %v1056, 17
      %v1126 = vpop.permute.xlu0 %1125
      %1127 = vrot.lane.b32.xlu0 %v1061, 17
      %v1128 = vpop.permute.xlu0 %1127
      %1129 = vrot.lane.b32.xlu0 %v1064, 17
      %v1130 = vpop.permute.xlu0 %1129
      %1131 = vrot.lane.b32.xlu0 %v1065, 17
      %v1132 = vpop.permute.xlu0 %1131
      %1133 = vrot.lane.b32.xlu0 %v1069, 17
      %v1134 = vpop.permute.xlu0 %1133
      %1135 = vrot.lane.b32.xlu0 %v1072, 17
      %v1136 = vpop.permute.xlu0 %1135
      %1137 = vrot.lane.b32.xlu0 %v1073, 17
      %v1138 = vpop.permute.xlu0 %1137
      %1139 = vrot.lane.b32.xlu0 %v1075, 17
      %v1140 = vpop.permute.xlu0 %1139
      %1141 = vrot.lane.b32.xlu0 %v1078, 17
      %v1142 = vpop.permute.xlu0 %1141
      %1143 = vrot.lane.b32.xlu0 %v1079, 17
      %v1144 = vpop.permute.xlu0 %1143
      %1145 = vrot.lane.b32.xlu0 %v1083, 17
      %v1146 = vpop.permute.xlu0 %1145
      %1147 = vrot.lane.b32.xlu0 %v1086, 17
      %v1148 = vpop.permute.xlu0 %1147
      %1149 = vrot.lane.b32.xlu0 %v1087, 17
      %v1150 = vpop.permute.xlu0 %1149
      %v1151 = vsel %vm679, %v783, %v1100
      %v1152 = vsel %vm679, %v1100, %v1102
      %v1153 = vsel %vm679, %v1104, %v1106
      %v1154 = vsel %vm679, %v1106, %v1108
      %v1155 = vsel %vm679, %v1110, %v1112
      %v1156 = vsel %vm679, %v1112, %v1114
      %v1157 = vsel %vm679, %v1116, %v1118
      %v1158 = vsel %vm679, %v1118, %v1120
      %v1159 = vsel %vm679, %v1122, %v1124
      %v1160 = vsel %vm679, %v1124, %v1126
      %v1161 = vsel %vm679, %v1128, %v1130
      %v1162 = vsel %vm679, %v1130, %v1132
      %v1163 = vsel %vm679, %v1134, %v1136
      %v1164 = vsel %vm679, %v1136, %v1138
      %v1165 = vsel %vm679, %v1140, %v1142
      %v1166 = vsel %vm679, %v1142, %v1144
      %v1167 = vsel %vm679, %v1146, %v1148
      %v1168 = vsel %vm679, %v1148, %v1150
      %v1188 = vsel %vm872, %v1089, 0
      %1190 = vmatprep.subr.mxu0 %v1152
      %1191 = vmatpush1.msra.mxu0 %v1151
      %1192 = vmatprep.subr.mxu0 %v1154
      %1193 = vmatpush1.msra.mxu0 %v1153
      %1194 = vmatprep.subr.mxu0 %v1156
      %1195 = vmatpush1.msra.mxu0 %v1155
      %1196 = vmatprep.subr.mxu0 %v1158
      %1197 = vmatpush1.msra.mxu0 %v1157
      %1198 = vmatprep.subr.mxu0 %v1160
      %1199 = vmatpush1.msra.mxu0 %v1159
      %1200 = vmatprep.subr.mxu0 %v1162
      %1201 = vmatpush1.msra.mxu0 %v1161
      %1202 = vmatprep.subr.mxu0 %v1164
      %1203 = vmatpush1.msra.mxu0 %v1163
      %1204 = vmatprep.subr.mxu0 %v1166
      %1205 = vmatpush1.msra.mxu0 %v1165
      %1206 = vmatprep.subr.mxu0 %v1168
      %1207 = vmatpush1.msra.mxu0 %v1167
      %1208 = vmatprep.subr.mxu0 0.0
      %1209 = vmatpush1.msra.mxu0 0.0
      %1210 = vmatprep.subr.mxu0 0.0
      %1211 = vmatpush1.msra.mxu0 0.0
      %1212 = vmatprep.subr.mxu0 0.0
      %1213 = vmatpush1.msra.mxu0 0.0
      %1214 = vmatprep.subr.mxu0 0.0
      %1215 = vmatpush1.msra.mxu0 0.0
      %1216 = vmatprep.subr.mxu0 0.0
      %1217 = vmatpush1.msra.mxu0 0.0
      %1218 = vmatprep.subr.mxu0 0.0
      %1219 = vmatpush1.msra.mxu0 0.0
      %1220 = vmatprep.subr.mxu0 0.0
      %1221 = vmatpush1.msra.mxu0 0.0
      %1222 = vmatprep.subr.mxu0 0.0
      %1223 = vmatpush1.msra.mxu0 0.0
      %1224 = vmatprep.subr.mxu0 0.0
      %1225 = vmatpush1.msra.mxu0 0.0
      %1226 = vmatprep.subr.mxu0 0.0
      %1227 = vmatpush1.msra.mxu0 0.0
      %1228 = vmatprep.subr.mxu0 0.0
      %1229 = vmatpush1.msra.mxu0 0.0
      %1230 = vmatprep.subr.mxu0 0.0
      %1231 = vmatpush1.msra.mxu0 0.0
      %1232 = vmatprep.subr.mxu0 0.0
      %1233 = vmatpush1.msra.mxu0 0.0
      %1234 = vmatprep.subr.mxu0 0.0
      %1235 = vmatpush1.msra.mxu0 0.0
      %1236 = vmatprep.subr.mxu0 0.0
      %1237 = vmatpush1.msra.mxu0 0.0
      %1238 = vmatprep.subr.mxu0 0.0
      %1239 = vmatpush1.msra.mxu0 0.0
      %1240 = vmatprep.subr.mxu0 0.0
      %1241 = vmatpush1.msra.mxu0 0.0
      %1242 = vmatprep.subr.mxu0 0.0
      %1243 = vmatpush1.msra.mxu0 0.0
      %1244 = vmatprep.subr.mxu0 0.0
      %1245 = vmatpush1.msra.mxu0 0.0
      %1246 = vmatprep.subr.mxu0 0.0
      %1247 = vmatpush1.msra.mxu0 0.0
      %1248 = vmatprep.subr.mxu0 0.0
      %1249 = vmatpush1.msra.mxu0 0.0
      %1250 = vmatprep.subr.mxu0 0.0
      %1251 = vmatpush1.msra.mxu0 0.0
      %1252 = vmatprep.subr.mxu0 0.0
      %1253 = vmatpush1.msra.mxu0 0.0
      %1254 = vmatprep.mubr.f32.mxu0 0.0
      %1255 = vmatmul.mubr.f32.gmra.mrb[0].mxu0 %v1188
      %v1256 = vpop.f32.mrb[0].mxu0
      %v1257 = vadd.f32 %v1095, %v1256
      %v1258 = vpop.f32.mrb[0].mxu0
      %v1259 = vadd.f32 %v1095, %v1258
      %1260 = vdwg.mxu0
      %v1261 = vadd.f32 %v536, %v1257
      %v1262 = vadd.f32 %v538, %v1259
      %s1263 = scalar_lea.vmem %s367, 16
      %v1264 = vld [vmem:[%s1263] sm:$0xff]
      %v1265 = vadd.f32 %v1261, %v1262
      %1266 = vadd.xlane.f32.xlu0 %v1265
      %v1267 = vpop.xlane.xlu0 %1266
      %v1268 = vmul.f32 %v1267, %v544
      %v1269 = vsub.f32 %v1261, %v1268
      %v1270 = vsub.f32 %v1262, %v1268
      %v1271 = vmul.f32 %v1269, %v1269
      %v1272 = vmul.f32 %v1270, %v1270
      %v1273 = vadd.f32 %v1271, %v1272
      %1274 = vadd.xlane.f32.xlu0 %v1273
      %v1275 = vpop.xlane.xlu0 %1274
      %v1276 = vmul.f32 %v1275, 0.003921569
      %v1277 = vadd.f32 %v1276, 1e-05
      %v1278 = vrsqrt.pop %v1277
      %v1279 = vmul.f32 %v1269, %v1278
      %v1280 = vmul.f32 %v1270, %v1278
      %1282 = vset.pattern.permute.xlu0 0
      %1283 = vperm.xlu0 %1282, %v1264
      %v1284 = vpop.permute.xlu0 %1283
      %v1286 = vmul.f32 %v1284, %v1279
      %v1287 = vmul.f32 %v1284, %v1280
      %1288 = vset.pattern.permute.xlu0 1
      %1289 = vperm.xlu0 %1288, %v1264
      %v1290 = vpop.permute.xlu0 %1289
      %v1292 = vadd.f32 %v1286, %v1290
      %v1293 = vadd.f32 %v1287, %v1290
      %v1294 = vrot.slane %v1268, 4
      %v1295 = vadd.f32 %v1268, %v1294
      %v1296 = vrot.slane %v1295, 2
      %v1297 = vadd.f32 %v1295, %v1296
      %v1298 = vrot.slane %v1297, 1
      %v1299 = vadd.f32 %v1297, %v1298
      %v1300 = vmul.f32 %v1299, %v577
      %v1301 = vsub.f32 %v1268, %v1300
      %v1302 = vmul.f32 %v1301, %v1301
      %v1303 = vrot.slane %v1302, 4
      %v1304 = vadd.f32 %v1302, %v1303
      %v1305 = vrot.slane %v1304, 2
      %v1306 = vadd.f32 %v1304, %v1305
      %v1307 = vrot.slane %v1306, 1
      %v1308 = vadd.f32 %v1306, %v1307
      %v1309 = vmul.f32 %v1308, 0.14285715
      %v1310 = vmul.f32 %v1264, %v1301
      %v1311 = vadd.f32 %v1309, 1e-05
      %v1312 = vrsqrt.pop %v1311
      %v1313 = vmul.f32 %v1310, %v1312
      %1315 = vset.pattern.permute.xlu0 2
      %1316 = vperm.xlu0 %1315, %v1313
      %v1317 = vpop.permute.xlu0 %1316
      %v1319 = vadd.f32 %v1292, %v1317
      %v1320 = vadd.f32 %v1293, %v1317
      %vm1321 = vcmp.gt.f32.partialorder %v1319, 0.0
      %vm1322 = vcmp.gt.f32.partialorder %v1320, 0.0
      %v1323 = vmin.f32 %v1319, 0.0
      %v1324 = vmin.f32 %v1320, 0.0
      %v1325 = vmul.f32 %v1323, 1.442695
      %v1326 = vpow.pop %v1325
      %v1327 = vmul.f32 %v1324, 1.442695
      %v1328 = vpow.pop %v1327
      %v1329 = vsub.f32 %v1326, 1.0
      %v1330 = vsub.f32 %v1328, 1.0
      %v1331 = vsel %vm1321, %v1319, %v1329
      %v1332 = vsel %vm1322, %v1320, %v1330
      %v1333 = vmul.f32 %v1331, %v618
      %v1334 = vmul.f32 %v1332, %v616
      %v1335 = vmul.f32 %v1331, %v632
      %v1336 = vmul.f32 %v1332, %v630
      %v1337 = vmul.f32 %v1331, %v644
      %v1338 = vmul.f32 %v1332, %v642
      %v1339 = vmul.f32 %v1331, %v652
      %v1340 = vmul.f32 %v1332, %v656
      %v1341 = vmul.f32 %v1331, %v664
      %v1342 = vmul.f32 %v1332, %v668
      %v1343 = vmul.f32 %v1331, %v676
      %v1344 = vmul.f32 %v1332, %v680
      %1347 = vrot.lane.b32.xlu0 %v1331, 127
      %v1348 = vpop.permute.xlu0 %1347
      %1349 = vrot.lane.b32.xlu0 %v1332, 127
      %v1350 = vpop.permute.xlu0 %1349
      %v1351 = vsel %vm643, %v691, %v1348
      %v1352 = vsel %vm643, %v1348, %v1350
      %1355 = vrot.lane.b32.xlu0 %v1335, 126
      %v1356 = vpop.permute.xlu0 %1355
      %1357 = vrot.lane.b32.xlu0 %v1336, 126
      %v1358 = vpop.permute.xlu0 %1357
      %v1359 = vsel %vm707, %v702, %v1356
      %v1360 = vsel %vm707, %v1356, %v1358
      %1363 = vrot.lane.b32.xlu0 %v1337, 112
      %v1364 = vpop.permute.xlu0 %1363
      %1365 = vrot.lane.b32.xlu0 %v1338, 112
      %v1366 = vpop.permute.xlu0 %1365
      %v1367 = vsel %vm719, %v714, %v1364
      %v1368 = vsel %vm719, %v1364, %v1366
      %1369 = vrot.lane.b32.xlu0 %v1331, 111
      %v1370 = vpop.permute.xlu0 %1369
      %1371 = vrot.lane.b32.xlu0 %v1332, 111
      %v1372 = vpop.permute.xlu0 %1371
      %v1373 = vsel %vm617, %v1370, %v1372
      %1376 = vrot.lane.b32.xlu0 %v1339, 110
      %v1377 = vpop.permute.xlu0 %1376
      %1378 = vrot.lane.b32.xlu0 %v1340, 110
      %v1379 = vpop.permute.xlu0 %1378
      %v1380 = vsel %vm736, %v1377, %v1379
      %v1381 = vsel %vm736, %v1379, %v735
      %1384 = vrot.lane.b32.xlu0 %v1341, 96
      %v1385 = vpop.permute.xlu0 %1384
      %1386 = vrot.lane.b32.xlu0 %v1342, 96
      %v1387 = vpop.permute.xlu0 %1386
      %v1388 = vsel %vm748, %v1385, %v1387
      %v1389 = vsel %vm748, %v1387, %v747
      %1390 = vrot.lane.b32.xlu0 %v1331, 95
      %v1391 = vpop.permute.xlu0 %1390
      %1392 = vrot.lane.b32.xlu0 %v1332, 95
      %v1393 = vpop.permute.xlu0 %1392
      %v1394 = vsel %vm757, %v1391, %v1393
      %v1395 = vsel %vm757, %v1393, %v756
      %1398 = vrot.lane.b32.xlu0 %v1343, 94
      %v1399 = vpop.permute.xlu0 %1398
      %1400 = vrot.lane.b32.xlu0 %v1344, 94
      %v1401 = vpop.permute.xlu0 %1400
      %v1402 = vsel %vm769, %v1399, %v1401
      %v1403 = vsel %vm769, %v1401, %v768
      %s1404 = scalar_lea.vmem %s6, 16
      %v1405 = vld [vmem:[%s1404] sm:$0xff]
      %s1406 = scalar_lea.vmem %s7, 16
      %v1407 = vld [vmem:[%s1406] sm:$0xff]
      %1409 = vset.pattern.permute.xlu0 0
      %1410 = vperm.xlu0 %1409, %v1407
      %v1411 = vpop.permute.xlu0 %1410
      %1415 = vrot.lane.b32.xlu0 %v1333, 17
      %v1416 = vpop.permute.xlu0 %1415
      %1417 = vrot.lane.b32.xlu0 %v1334, 17
      %v1418 = vpop.permute.xlu0 %1417
      %1419 = vrot.lane.b32.xlu0 %v1351, 17
      %v1420 = vpop.permute.xlu0 %1419
      %1421 = vrot.lane.b32.xlu0 %v1352, 17
      %v1422 = vpop.permute.xlu0 %1421
      %1423 = vrot.lane.b32.xlu0 %v1350, 17
      %v1424 = vpop.permute.xlu0 %1423
      %1425 = vrot.lane.b32.xlu0 %v1359, 17
      %v1426 = vpop.permute.xlu0 %1425
      %1427 = vrot.lane.b32.xlu0 %v1360, 17
      %v1428 = vpop.permute.xlu0 %1427
      %1429 = vrot.lane.b32.xlu0 %v1358, 17
      %v1430 = vpop.permute.xlu0 %1429
      %1431 = vrot.lane.b32.xlu0 %v1367, 17
      %v1432 = vpop.permute.xlu0 %1431
      %1433 = vrot.lane.b32.xlu0 %v1368, 17
      %v1434 = vpop.permute.xlu0 %1433
      %1435 = vrot.lane.b32.xlu0 %v1366, 17
      %v1436 = vpop.permute.xlu0 %1435
      %1437 = vrot.lane.b32.xlu0 %v1370, 17
      %v1438 = vpop.permute.xlu0 %1437
      %1439 = vrot.lane.b32.xlu0 %v1373, 17
      %v1440 = vpop.permute.xlu0 %1439
      %1441 = vrot.lane.b32.xlu0 %v1372, 17
      %v1442 = vpop.permute.xlu0 %1441
      %1443 = vrot.lane.b32.xlu0 %v1377, 17
      %v1444 = vpop.permute.xlu0 %1443
      %1445 = vrot.lane.b32.xlu0 %v1380, 17
      %v1446 = vpop.permute.xlu0 %1445
      %1447 = vrot.lane.b32.xlu0 %v1381, 17
      %v1448 = vpop.permute.xlu0 %1447
      %1449 = vrot.lane.b32.xlu0 %v1385, 17
      %v1450 = vpop.permute.xlu0 %1449
      %1451 = vrot.lane.b32.xlu0 %v1388, 17
      %v1452 = vpop.permute.xlu0 %1451
      %1453 = vrot.lane.b32.xlu0 %v1389, 17
      %v1454 = vpop.permute.xlu0 %1453
      %1455 = vrot.lane.b32.xlu0 %v1391, 17
      %v1456 = vpop.permute.xlu0 %1455
      %1457 = vrot.lane.b32.xlu0 %v1394, 17
      %v1458 = vpop.permute.xlu0 %1457
      %1459 = vrot.lane.b32.xlu0 %v1395, 17
      %v1460 = vpop.permute.xlu0 %1459
      %1461 = vrot.lane.b32.xlu0 %v1399, 17
      %v1462 = vpop.permute.xlu0 %1461
      %1463 = vrot.lane.b32.xlu0 %v1402, 17
      %v1464 = vpop.permute.xlu0 %1463
      %1465 = vrot.lane.b32.xlu0 %v1403, 17
      %v1466 = vpop.permute.xlu0 %1465
      %v1467 = vsel %vm679, %v783, %v1416
      %v1468 = vsel %vm679, %v1416, %v1418
      %v1469 = vsel %vm679, %v1420, %v1422
      %v1470 = vsel %vm679, %v1422, %v1424
      %v1471 = vsel %vm679, %v1426, %v1428
      %v1472 = vsel %vm679, %v1428, %v1430
      %v1473 = vsel %vm679, %v1432, %v1434
      %v1474 = vsel %vm679, %v1434, %v1436
      %v1475 = vsel %vm679, %v1438, %v1440
      %v1476 = vsel %vm679, %v1440, %v1442
      %v1477 = vsel %vm679, %v1444, %v1446
      %v1478 = vsel %vm679, %v1446, %v1448
      %v1479 = vsel %vm679, %v1450, %v1452
      %v1480 = vsel %vm679, %v1452, %v1454
      %v1481 = vsel %vm679, %v1456, %v1458
      %v1482 = vsel %vm679, %v1458, %v1460
      %v1483 = vsel %vm679, %v1462, %v1464
      %v1484 = vsel %vm679, %v1464, %v1466
      %v1504 = vsel %vm872, %v1405, 0
      %1506 = vmatprep.subr.mxu0 %v1468
      %1507 = vmatpush1.msra.mxu0 %v1467
      %1508 = vmatprep.subr.mxu0 %v1470
      %1509 = vmatpush1.msra.mxu0 %v1469
      %1510 = vmatprep.subr.mxu0 %v1472
      %1511 = vmatpush1.msra.mxu0 %v1471
      %1512 = vmatprep.subr.mxu0 %v1474
      %1513 = vmatpush1.msra.mxu0 %v1473
      %1514 = vmatprep.subr.mxu0 %v1476
      %1515 = vmatpush1.msra.mxu0 %v1475
      %1516 = vmatprep.subr.mxu0 %v1478
      %1517 = vmatpush1.msra.mxu0 %v1477
      %1518 = vmatprep.subr.mxu0 %v1480
      %1519 = vmatpush1.msra.mxu0 %v1479
      %1520 = vmatprep.subr.mxu0 %v1482
      %1521 = vmatpush1.msra.mxu0 %v1481
      %1522 = vmatprep.subr.mxu0 %v1484
      %1523 = vmatpush1.msra.mxu0 %v1483
      %1524 = vmatprep.subr.mxu0 0.0
      %1525 = vmatpush1.msra.mxu0 0.0
      %1526 = vmatprep.subr.mxu0 0.0
      %1527 = vmatpush1.msra.mxu0 0.0
      %1528 = vmatprep.subr.mxu0 0.0
      %1529 = vmatpush1.msra.mxu0 0.0
      %1530 = vmatprep.subr.mxu0 0.0
      %1531 = vmatpush1.msra.mxu0 0.0
      %1532 = vmatprep.subr.mxu0 0.0
      %1533 = vmatpush1.msra.mxu0 0.0
      %1534 = vmatprep.subr.mxu0 0.0
      %1535 = vmatpush1.msra.mxu0 0.0
      %1536 = vmatprep.subr.mxu0 0.0
      %1537 = vmatpush1.msra.mxu0 0.0
      %1538 = vmatprep.subr.mxu0 0.0
      %1539 = vmatpush1.msra.mxu0 0.0
      %1540 = vmatprep.subr.mxu0 0.0
      %1541 = vmatpush1.msra.mxu0 0.0
      %1542 = vmatprep.subr.mxu0 0.0
      %1543 = vmatpush1.msra.mxu0 0.0
      %1544 = vmatprep.subr.mxu0 0.0
      %1545 = vmatpush1.msra.mxu0 0.0
      %1546 = vmatprep.subr.mxu0 0.0
      %1547 = vmatpush1.msra.mxu0 0.0
      %1548 = vmatprep.subr.mxu0 0.0
      %1549 = vmatpush1.msra.mxu0 0.0
      %1550 = vmatprep.subr.mxu0 0.0
      %1551 = vmatpush1.msra.mxu0 0.0
      %1552 = vmatprep.subr.mxu0 0.0
      %1553 = vmatpush1.msra.mxu0 0.0
      %1554 = vmatprep.subr.mxu0 0.0
      %1555 = vmatpush1.msra.mxu0 0.0
      %1556 = vmatprep.subr.mxu0 0.0
      %1557 = vmatpush1.msra.mxu0 0.0
      %1558 = vmatprep.subr.mxu0 0.0
      %1559 = vmatpush1.msra.mxu0 0.0
      %1560 = vmatprep.subr.mxu0 0.0
      %1561 = vmatpush1.msra.mxu0 0.0
      %1562 = vmatprep.subr.mxu0 0.0
      %1563 = vmatpush1.msra.mxu0 0.0
      %1564 = vmatprep.subr.mxu0 0.0
      %1565 = vmatpush1.msra.mxu0 0.0
      %1566 = vmatprep.subr.mxu0 0.0
      %1567 = vmatpush1.msra.mxu0 0.0
      %1568 = vmatprep.subr.mxu0 0.0
      %1569 = vmatpush1.msra.mxu0 0.0
      %1570 = vmatprep.mubr.f32.mxu0 0.0
      %1571 = vmatmul.mubr.f32.gmra.mrb[0].mxu0 %v1504
      %v1572 = vpop.f32.mrb[0].mxu0
      %v1573 = vadd.f32 %v1411, %v1572
      %v1574 = vpop.f32.mrb[0].mxu0
      %v1575 = vadd.f32 %v1411, %v1574
      %1576 = vdwg.mxu0
      %s1577 = scalar_lea.vmem %s367, 24
      %v1578 = vld [vmem:[%s1577] sm:$0xff]
      %v1579 = vadd.f32 %v1573, %v1575
      %1580 = vadd.xlane.f32.xlu0 %v1579
      %v1581 = vpop.xlane.xlu0 %1580
      %v1582 = vmul.f32 %v1581, %v544
      %v1583 = vsub.f32 %v1573, %v1582
      %v1584 = vsub.f32 %v1575, %v1582
      %v1585 = vmul.f32 %v1583, %v1583
      %v1586 = vmul.f32 %v1584, %v1584
      %v1587 = vadd.f32 %v1585, %v1586
      %1588 = vadd.xlane.f32.xlu0 %v1587
      %v1589 = vpop.xlane.xlu0 %1588
      %v1590 = vmul.f32 %v1589, 0.003921569
      %v1591 = vadd.f32 %v1590, 1e-05
      %v1592 = vrsqrt.pop %v1591
      %v1593 = vmul.f32 %v1583, %v1592
      %v1594 = vmul.f32 %v1584, %v1592
      %1596 = vset.pattern.permute.xlu0 0
      %1597 = vperm.xlu0 %1596, %v1578
      %v1598 = vpop.permute.xlu0 %1597
      %v1600 = vmul.f32 %v1598, %v1593
      %v1601 = vmul.f32 %v1598, %v1594
      %1602 = vset.pattern.permute.xlu0 1
      %1603 = vperm.xlu0 %1602, %v1578
      %v1604 = vpop.permute.xlu0 %1603
      %v1606 = vadd.f32 %v1600, %v1604
      %v1607 = vadd.f32 %v1601, %v1604
      %v1608 = vrot.slane %v1582, 4
      %v1609 = vadd.f32 %v1582, %v1608
      %v1610 = vrot.slane %v1609, 2
      %v1611 = vadd.f32 %v1609, %v1610
      %v1612 = vrot.slane %v1611, 1
      %v1613 = vadd.f32 %v1611, %v1612
      %v1614 = vmul.f32 %v1613, %v577
      %v1615 = vsub.f32 %v1582, %v1614
      %v1616 = vmul.f32 %v1615, %v1615
      %v1617 = vrot.slane %v1616, 4
      %v1618 = vadd.f32 %v1616, %v1617
      %v1619 = vrot.slane %v1618, 2
      %v1620 = vadd.f32 %v1618, %v1619
      %v1621 = vrot.slane %v1620, 1
      %v1622 = vadd.f32 %v1620, %v1621
      %v1623 = vmul.f32 %v1622, 0.14285715
      %v1624 = vmul.f32 %v1578, %v1615
      %v1625 = vadd.f32 %v1623, 1e-05
      %v1626 = vrsqrt.pop %v1625
      %v1627 = vmul.f32 %v1624, %v1626
      %1629 = vset.pattern.permute.xlu0 2
      %1630 = vperm.xlu0 %1629, %v1627
      %v1631 = vpop.permute.xlu0 %1630
      %v1633 = vadd.f32 %v1606, %v1631
      %v1634 = vadd.f32 %v1607, %v1631
      %vm1635 = vcmp.gt.f32.partialorder %v1633, 0.0
      %vm1636 = vcmp.gt.f32.partialorder %v1634, 0.0
      %v1637 = vmin.f32 %v1633, 0.0
      %v1638 = vmin.f32 %v1634, 0.0
      %v1639 = vmul.f32 %v1637, 1.442695
      %v1640 = vpow.pop %v1639
      %v1641 = vmul.f32 %v1638, 1.442695
      %v1642 = vpow.pop %v1641
      %v1643 = vsub.f32 %v1640, 1.0
      %v1644 = vsub.f32 %v1642, 1.0
      %v1645 = vsel %vm1635, %v1633, %v1643
      %v1646 = vsel %vm1636, %v1634, %v1644
      %v1647 = vmul.f32 %v1645, %v618
      %v1648 = vmul.f32 %v1646, %v616
      %v1649 = vmul.f32 %v1645, %v632
      %v1650 = vmul.f32 %v1646, %v630
      %v1651 = vmul.f32 %v1645, %v644
      %v1652 = vmul.f32 %v1646, %v642
      %v1653 = vmul.f32 %v1645, %v652
      %v1654 = vmul.f32 %v1646, %v656
      %v1655 = vmul.f32 %v1645, %v664
      %v1656 = vmul.f32 %v1646, %v668
      %v1657 = vmul.f32 %v1645, %v676
      %v1658 = vmul.f32 %v1646, %v680
      %1661 = vrot.lane.b32.xlu0 %v1645, 127
      %v1662 = vpop.permute.xlu0 %1661
      %1663 = vrot.lane.b32.xlu0 %v1646, 127
      %v1664 = vpop.permute.xlu0 %1663
      %v1665 = vsel %vm643, %v691, %v1662
      %v1666 = vsel %vm643, %v1662, %v1664
      %1669 = vrot.lane.b32.xlu0 %v1649, 126
      %v1670 = vpop.permute.xlu0 %1669
      %1671 = vrot.lane.b32.xlu0 %v1650, 126
      %v1672 = vpop.permute.xlu0 %1671
      %v1673 = vsel %vm707, %v702, %v1670
      %v1674 = vsel %vm707, %v1670, %v1672
      %1677 = vrot.lane.b32.xlu0 %v1651, 112
      %v1678 = vpop.permute.xlu0 %1677
      %1679 = vrot.lane.b32.xlu0 %v1652, 112
      %v1680 = vpop.permute.xlu0 %1679
      %v1681 = vsel %vm719, %v714, %v1678
      %v1682 = vsel %vm719, %v1678, %v1680
      %1683 = vrot.lane.b32.xlu0 %v1645, 111
      %v1684 = vpop.permute.xlu0 %1683
      %1685 = vrot.lane.b32.xlu0 %v1646, 111
      %v1686 = vpop.permute.xlu0 %1685
      %v1687 = vsel %vm617, %v1684, %v1686
      %1690 = vrot.lane.b32.xlu0 %v1653, 110
      %v1691 = vpop.permute.xlu0 %1690
      %1692 = vrot.lane.b32.xlu0 %v1654, 110
      %v1693 = vpop.permute.xlu0 %1692
      %v1694 = vsel %vm736, %v1691, %v1693
      %v1695 = vsel %vm736, %v1693, %v735
      %1698 = vrot.lane.b32.xlu0 %v1655, 96
      %v1699 = vpop.permute.xlu0 %1698
      %1700 = vrot.lane.b32.xlu0 %v1656, 96
      %v1701 = vpop.permute.xlu0 %1700
      %v1702 = vsel %vm748, %v1699, %v1701
      %v1703 = vsel %vm748, %v1701, %v747
      %1704 = vrot.lane.b32.xlu0 %v1645, 95
      %v1705 = vpop.permute.xlu0 %1704
      %1706 = vrot.lane.b32.xlu0 %v1646, 95
      %v1707 = vpop.permute.xlu0 %1706
      %v1708 = vsel %vm757, %v1705, %v1707
      %v1709 = vsel %vm757, %v1707, %v756
      %1712 = vrot.lane.b32.xlu0 %v1657, 94
      %v1713 = vpop.permute.xlu0 %1712
      %1714 = vrot.lane.b32.xlu0 %v1658, 94
      %v1715 = vpop.permute.xlu0 %1714
      %v1716 = vsel %vm769, %v1713, %v1715
      %v1717 = vsel %vm769, %v1715, %v768
      %s1718 = scalar_lea.vmem %s6, 24
      %v1719 = vld [vmem:[%s1718] sm:$0xff]
      %s1720 = scalar_lea.vmem %s7, 24
      %v1721 = vld [vmem:[%s1720] sm:$0xff]
      %1723 = vset.pattern.permute.xlu0 0
      %1724 = vperm.xlu0 %1723, %v1721
      %v1725 = vpop.permute.xlu0 %1724
      %1729 = vrot.lane.b32.xlu0 %v1647, 17
      %v1730 = vpop.permute.xlu0 %1729
      %1731 = vrot.lane.b32.xlu0 %v1648, 17
      %v1732 = vpop.permute.xlu0 %1731
      %1733 = vrot.lane.b32.xlu0 %v1665, 17
      %v1734 = vpop.permute.xlu0 %1733
      %1735 = vrot.lane.b32.xlu0 %v1666, 17
      %v1736 = vpop.permute.xlu0 %1735
      %1737 = vrot.lane.b32.xlu0 %v1664, 17
      %v1738 = vpop.permute.xlu0 %1737
      %1739 = vrot.lane.b32.xlu0 %v1673, 17
      %v1740 = vpop.permute.xlu0 %1739
      %1741 = vrot.lane.b32.xlu0 %v1674, 17
      %v1742 = vpop.permute.xlu0 %1741
      %1743 = vrot.lane.b32.xlu0 %v1672, 17
      %v1744 = vpop.permute.xlu0 %1743
      %1745 = vrot.lane.b32.xlu0 %v1681, 17
      %v1746 = vpop.permute.xlu0 %1745
      %1747 = vrot.lane.b32.xlu0 %v1682, 17
      %v1748 = vpop.permute.xlu0 %1747
      %1749 = vrot.lane.b32.xlu0 %v1680, 17
      %v1750 = vpop.permute.xlu0 %1749
      %1751 = vrot.lane.b32.xlu0 %v1684, 17
      %v1752 = vpop.permute.xlu0 %1751
      %1753 = vrot.lane.b32.xlu0 %v1687, 17
      %v1754 = vpop.permute.xlu0 %1753
      %1755 = vrot.lane.b32.xlu0 %v1686, 17
      %v1756 = vpop.permute.xlu0 %1755
      %1757 = vrot.lane.b32.xlu0 %v1691, 17
      %v1758 = vpop.permute.xlu0 %1757
      %1759 = vrot.lane.b32.xlu0 %v1694, 17
      %v1760 = vpop.permute.xlu0 %1759
      %1761 = vrot.lane.b32.xlu0 %v1695, 17
      %v1762 = vpop.permute.xlu0 %1761
      %1763 = vrot.lane.b32.xlu0 %v1699, 17
      %v1764 = vpop.permute.xlu0 %1763
      %1765 = vrot.lane.b32.xlu0 %v1702, 17
      %v1766 = vpop.permute.xlu0 %1765
      %1767 = vrot.lane.b32.xlu0 %v1703, 17
      %v1768 = vpop.permute.xlu0 %1767
      %1769 = vrot.lane.b32.xlu0 %v1705, 17
      %v1770 = vpop.permute.xlu0 %1769
      %1771 = vrot.lane.b32.xlu0 %v1708, 17
      %v1772 = vpop.permute.xlu0 %1771
      %1773 = vrot.lane.b32.xlu0 %v1709, 17
      %v1774 = vpop.permute.xlu0 %1773
      %1775 = vrot.lane.b32.xlu0 %v1713, 17
      %v1776 = vpop.permute.xlu0 %1775
      %1777 = vrot.lane.b32.xlu0 %v1716, 17
      %v1778 = vpop.permute.xlu0 %1777
      %1779 = vrot.lane.b32.xlu0 %v1717, 17
      %v1780 = vpop.permute.xlu0 %1779
      %v1781 = vsel %vm679, %v783, %v1730
      %v1782 = vsel %vm679, %v1730, %v1732
      %v1783 = vsel %vm679, %v1734, %v1736
      %v1784 = vsel %vm679, %v1736, %v1738
      %v1785 = vsel %vm679, %v1740, %v1742
      %v1786 = vsel %vm679, %v1742, %v1744
      %v1787 = vsel %vm679, %v1746, %v1748
      %v1788 = vsel %vm679, %v1748, %v1750
      %v1789 = vsel %vm679, %v1752, %v1754
      %v1790 = vsel %vm679, %v1754, %v1756
      %v1791 = vsel %vm679, %v1758, %v1760
      %v1792 = vsel %vm679, %v1760, %v1762
      %v1793 = vsel %vm679, %v1764, %v1766
      %v1794 = vsel %vm679, %v1766, %v1768
      %v1795 = vsel %vm679, %v1770, %v1772
      %v1796 = vsel %vm679, %v1772, %v1774
      %v1797 = vsel %vm679, %v1776, %v1778
      %v1798 = vsel %vm679, %v1778, %v1780
      %v1818 = vsel %vm872, %v1719, 0
      %1820 = vmatprep.subr.mxu0 %v1782
      %1821 = vmatpush1.msra.mxu0 %v1781
      %1822 = vmatprep.subr.mxu0 %v1784
      %1823 = vmatpush1.msra.mxu0 %v1783
      %1824 = vmatprep.subr.mxu0 %v1786
      %1825 = vmatpush1.msra.mxu0 %v1785
      %1826 = vmatprep.subr.mxu0 %v1788
      %1827 = vmatpush1.msra.mxu0 %v1787
      %1828 = vmatprep.subr.mxu0 %v1790
      %1829 = vmatpush1.msra.mxu0 %v1789
      %1830 = vmatprep.subr.mxu0 %v1792
      %1831 = vmatpush1.msra.mxu0 %v1791
      %1832 = vmatprep.subr.mxu0 %v1794
      %1833 = vmatpush1.msra.mxu0 %v1793
      %1834 = vmatprep.subr.mxu0 %v1796
      %1835 = vmatpush1.msra.mxu0 %v1795
      %1836 = vmatprep.subr.mxu0 %v1798
      %1837 = vmatpush1.msra.mxu0 %v1797
      %1838 = vmatprep.subr.mxu0 0.0
      %1839 = vmatpush1.msra.mxu0 0.0
      %1840 = vmatprep.subr.mxu0 0.0
      %1841 = vmatpush1.msra.mxu0 0.0
      %1842 = vmatprep.subr.mxu0 0.0
      %1843 = vmatpush1.msra.mxu0 0.0
      %1844 = vmatprep.subr.mxu0 0.0
      %1845 = vmatpush1.msra.mxu0 0.0
      %1846 = vmatprep.subr.mxu0 0.0
      %1847 = vmatpush1.msra.mxu0 0.0
      %1848 = vmatprep.subr.mxu0 0.0
      %1849 = vmatpush1.msra.mxu0 0.0
      %1850 = vmatprep.subr.mxu0 0.0
      %1851 = vmatpush1.msra.mxu0 0.0
      %1852 = vmatprep.subr.mxu0 0.0
      %1853 = vmatpush1.msra.mxu0 0.0
      %1854 = vmatprep.subr.mxu0 0.0
      %1855 = vmatpush1.msra.mxu0 0.0
      %1856 = vmatprep.subr.mxu0 0.0
      %1857 = vmatpush1.msra.mxu0 0.0
      %1858 = vmatprep.subr.mxu0 0.0
      %1859 = vmatpush1.msra.mxu0 0.0
      %1860 = vmatprep.subr.mxu0 0.0
      %1861 = vmatpush1.msra.mxu0 0.0
      %1862 = vmatprep.subr.mxu0 0.0
      %1863 = vmatpush1.msra.mxu0 0.0
      %1864 = vmatprep.subr.mxu0 0.0
      %1865 = vmatpush1.msra.mxu0 0.0
      %1866 = vmatprep.subr.mxu0 0.0
      %1867 = vmatpush1.msra.mxu0 0.0
      %1868 = vmatprep.subr.mxu0 0.0
      %1869 = vmatpush1.msra.mxu0 0.0
      %1870 = vmatprep.subr.mxu0 0.0
      %1871 = vmatpush1.msra.mxu0 0.0
      %1872 = vmatprep.subr.mxu0 0.0
      %1873 = vmatpush1.msra.mxu0 0.0
      %1874 = vmatprep.subr.mxu0 0.0
      %1875 = vmatpush1.msra.mxu0 0.0
      %1876 = vmatprep.subr.mxu0 0.0
      %1877 = vmatpush1.msra.mxu0 0.0
      %1878 = vmatprep.subr.mxu0 0.0
      %1879 = vmatpush1.msra.mxu0 0.0
      %1880 = vmatprep.subr.mxu0 0.0
      %1881 = vmatpush1.msra.mxu0 0.0
      %1882 = vmatprep.subr.mxu0 0.0
      %1883 = vmatpush1.msra.mxu0 0.0
      %1884 = vmatprep.mubr.f32.mxu0 0.0
      %1885 = vmatmul.mubr.f32.gmra.mrb[0].mxu0 %v1818
      %v1886 = vpop.f32.mrb[0].mxu0
      %v1887 = vadd.f32 %v1725, %v1886
      %v1888 = vpop.f32.mrb[0].mxu0
      %v1889 = vadd.f32 %v1725, %v1888
      %1890 = vdwg.mxu0
      %v1891 = vadd.f32 %v1261, %v1887
      %v1892 = vadd.f32 %v1262, %v1889
      %v1893 = vld [vmem:[%s4] sm:$0xff]
      %v1894 = vld [vmem:[%s5] sm:$0xff]
      %1896 = vset.pattern.permute.xlu0 0
      %1897 = vperm.xlu0 %1896, %v1894
      %v1898 = vpop.permute.xlu0 %1897
      %vm1900 = vcmask 48128
      %v1902 = vsel %vm1900, %v1893, 0
      %vm1904 = vcmask 1045504
      %v1906 = vsel %vm1904, %v449, 0
      %v1909 = vsel %vm1904, %v450, 0
      %1911 = vmatprep.subr.mxu0 %v1909
      %1912 = vmatpush1.msra.mxu0 %v1906
      %1913 = vmatprep.subr.mxu0 0.0
      %1914 = vmatpush1.msra.mxu0 0.0
      %1915 = vmatprep.subr.mxu0 0.0
      %1916 = vmatpush1.msra.mxu0 0.0
      %1917 = vmatprep.subr.mxu0 0.0
      %1918 = vmatpush1.msra.mxu0 0.0
      %1919 = vmatprep.subr.mxu0 0.0
      %1920 = vmatpush1.msra.mxu0 0.0
      %1921 = vmatprep.subr.mxu0 0.0
      %1922 = vmatpush1.msra.mxu0 0.0
      %1923 = vmatprep.subr.mxu0 0.0
      %1924 = vmatpush1.msra.mxu0 0.0
      %1925 = vmatprep.subr.mxu0 0.0
      %1926 = vmatpush1.msra.mxu0 0.0
      %1927 = vmatprep.subr.mxu0 0.0
      %1928 = vmatpush1.msra.mxu0 0.0
      %1929 = vmatprep.subr.mxu0 0.0
      %1930 = vmatpush1.msra.mxu0 0.0
      %1931 = vmatprep.subr.mxu0 0.0
      %1932 = vmatpush1.msra.mxu0 0.0
      %1933 = vmatprep.subr.mxu0 0.0
      %1934 = vmatpush1.msra.mxu0 0.0
      %1935 = vmatprep.subr.mxu0 0.0
      %1936 = vmatpush1.msra.mxu0 0.0
      %1937 = vmatprep.subr.mxu0 0.0
      %1938 = vmatpush1.msra.mxu0 0.0
      %1939 = vmatprep.subr.mxu0 0.0
      %1940 = vmatpush1.msra.mxu0 0.0
      %1941 = vmatprep.subr.mxu0 0.0
      %1942 = vmatpush1.msra.mxu0 0.0
      %1943 = vmatprep.subr.mxu0 0.0
      %1944 = vmatpush1.msra.mxu0 0.0
      %1945 = vmatprep.subr.mxu0 0.0
      %1946 = vmatpush1.msra.mxu0 0.0
      %1947 = vmatprep.subr.mxu0 0.0
      %1948 = vmatpush1.msra.mxu0 0.0
      %1949 = vmatprep.subr.mxu0 0.0
      %1950 = vmatpush1.msra.mxu0 0.0
      %1951 = vmatprep.subr.mxu0 0.0
      %1952 = vmatpush1.msra.mxu0 0.0
      %1953 = vmatprep.subr.mxu0 0.0
      %1954 = vmatpush1.msra.mxu0 0.0
      %1955 = vmatprep.subr.mxu0 0.0
      %1956 = vmatpush1.msra.mxu0 0.0
      %1957 = vmatprep.subr.mxu0 0.0
      %1958 = vmatpush1.msra.mxu0 0.0
      %1959 = vmatprep.subr.mxu0 0.0
      %1960 = vmatpush1.msra.mxu0 0.0
      %1961 = vmatprep.subr.mxu0 0.0
      %1962 = vmatpush1.msra.mxu0 0.0
      %1963 = vmatprep.subr.mxu0 0.0
      %1964 = vmatpush1.msra.mxu0 0.0
      %1965 = vmatprep.subr.mxu0 0.0
      %1966 = vmatpush1.msra.mxu0 0.0
      %1967 = vmatprep.subr.mxu0 0.0
      %1968 = vmatpush1.msra.mxu0 0.0
      %1969 = vmatprep.subr.mxu0 0.0
      %1970 = vmatpush1.msra.mxu0 0.0
      %1971 = vmatprep.subr.mxu0 0.0
      %1972 = vmatpush1.msra.mxu0 0.0
      %1973 = vmatprep.subr.mxu0 0.0
      %1974 = vmatpush1.msra.mxu0 0.0
      %1975 = vmatprep.mubr.f32.mxu0 0.0
      %1976 = vmatmul.mubr.f32.gmra.mrb[0].mxu0 %v1902
      %v1977 = vpop.f32.mrb[0].mxu0
      %v1978 = vadd.f32 %v1898, %v1977
      %v1979 = vpop.f32.mrb[0].mxu0
      %v1980 = vadd.f32 %v1898, %v1979
      %1981 = vdwg.mxu0
      %s1982 = scalar_lea.vmem %s367, 32
      %v1983 = vld [vmem:[%s1982] sm:$0xff]
      %v1984 = vadd.f32 %v1978, %v1980
      %1985 = vadd.xlane.f32.xlu0 %v1984
      %v1986 = vpop.xlane.xlu0 %1985
      %v1987 = vmul.f32 %v1986, %v544
      %v1988 = vsub.f32 %v1978, %v1987
      %v1989 = vsub.f32 %v1980, %v1987
      %v1990 = vmul.f32 %v1988, %v1988
      %v1991 = vmul.f32 %v1989, %v1989
      %v1992 = vadd.f32 %v1990, %v1991
      %1993 = vadd.xlane.f32.xlu0 %v1992
      %v1994 = vpop.xlane.xlu0 %1993
      %v1995 = vmul.f32 %v1994, 0.003921569
      %v1996 = vadd.f32 %v1995, 1e-05
      %v1997 = vrsqrt.pop %v1996
      %v1998 = vmul.f32 %v1988, %v1997
      %v1999 = vmul.f32 %v1989, %v1997
      %2001 = vset.pattern.permute.xlu0 0
      %2002 = vperm.xlu0 %2001, %v1983
      %v2003 = vpop.permute.xlu0 %2002
      %v2005 = vmul.f32 %v2003, %v1998
      %v2006 = vmul.f32 %v2003, %v1999
      %2007 = vset.pattern.permute.xlu0 1
      %2008 = vperm.xlu0 %2007, %v1983
      %v2009 = vpop.permute.xlu0 %2008
      %v2011 = vadd.f32 %v2005, %v2009
      %v2012 = vadd.f32 %v2006, %v2009
      %v2013 = vrot.slane %v1987, 4
      %v2014 = vadd.f32 %v1987, %v2013
      %v2015 = vrot.slane %v2014, 2
      %v2016 = vadd.f32 %v2014, %v2015
      %v2017 = vrot.slane %v2016, 1
      %v2018 = vadd.f32 %v2016, %v2017
      %v2019 = vmul.f32 %v2018, %v577
      %v2020 = vsub.f32 %v1987, %v2019
      %v2021 = vmul.f32 %v2020, %v2020
      %v2022 = vrot.slane %v2021, 4
      %v2023 = vadd.f32 %v2021, %v2022
      %v2024 = vrot.slane %v2023, 2
      %v2025 = vadd.f32 %v2023, %v2024
      %v2026 = vrot.slane %v2025, 1
      %v2027 = vadd.f32 %v2025, %v2026
      %v2028 = vmul.f32 %v2027, 0.14285715
      %v2029 = vmul.f32 %v1983, %v2020
      %v2030 = vadd.f32 %v2028, 1e-05
      %v2031 = vrsqrt.pop %v2030
      %v2032 = vmul.f32 %v2029, %v2031
      %2034 = vset.pattern.permute.xlu0 2
      %2035 = vperm.xlu0 %2034, %v2032
      %v2036 = vpop.permute.xlu0 %2035
      %v2038 = vadd.f32 %v2011, %v2036
      %v2039 = vadd.f32 %v2012, %v2036
      %vm2040 = vcmp.gt.f32.partialorder %v2038, 0.0
      %vm2041 = vcmp.gt.f32.partialorder %v2039, 0.0
      %v2042 = vmin.f32 %v2038, 0.0
      %v2043 = vmin.f32 %v2039, 0.0
      %v2044 = vmul.f32 %v2042, 1.442695
      %v2045 = vpow.pop %v2044
      %v2046 = vmul.f32 %v2043, 1.442695
      %v2047 = vpow.pop %v2046
      %v2048 = vsub.f32 %v2045, 1.0
      %v2049 = vsub.f32 %v2047, 1.0
      %v2050 = vsel %vm2040, %v2038, %v2048
      %v2051 = vsel %vm2041, %v2039, %v2049
      %v2052 = vmul.f32 %v2050, %v618
      %v2053 = vmul.f32 %v2051, %v616
      %v2054 = vmul.f32 %v2050, %v632
      %v2055 = vmul.f32 %v2051, %v630
      %v2056 = vmul.f32 %v2050, %v644
      %v2057 = vmul.f32 %v2051, %v642
      %v2058 = vmul.f32 %v2050, %v652
      %v2059 = vmul.f32 %v2051, %v656
      %v2060 = vmul.f32 %v2050, %v664
      %v2061 = vmul.f32 %v2051, %v668
      %v2062 = vmul.f32 %v2050, %v676
      %v2063 = vmul.f32 %v2051, %v680
      %2066 = vrot.lane.b32.xlu0 %v2050, 127
      %v2067 = vpop.permute.xlu0 %2066
      %2068 = vrot.lane.b32.xlu0 %v2051, 127
      %v2069 = vpop.permute.xlu0 %2068
      %v2070 = vsel %vm643, %v691, %v2067
      %v2071 = vsel %vm643, %v2067, %v2069
      %2074 = vrot.lane.b32.xlu0 %v2054, 126
      %v2075 = vpop.permute.xlu0 %2074
      %2076 = vrot.lane.b32.xlu0 %v2055, 126
      %v2077 = vpop.permute.xlu0 %2076
      %v2078 = vsel %vm707, %v702, %v2075
      %v2079 = vsel %vm707, %v2075, %v2077
      %2082 = vrot.lane.b32.xlu0 %v2056, 112
      %v2083 = vpop.permute.xlu0 %2082
      %2084 = vrot.lane.b32.xlu0 %v2057, 112
      %v2085 = vpop.permute.xlu0 %2084
      %v2086 = vsel %vm719, %v714, %v2083
      %v2087 = vsel %vm719, %v2083, %v2085
      %2088 = vrot.lane.b32.xlu0 %v2050, 111
      %v2089 = vpop.permute.xlu0 %2088
      %2090 = vrot.lane.b32.xlu0 %v2051, 111
      %v2091 = vpop.permute.xlu0 %2090
      %v2092 = vsel %vm617, %v2089, %v2091
      %2095 = vrot.lane.b32.xlu0 %v2058, 110
      %v2096 = vpop.permute.xlu0 %2095
      %2097 = vrot.lane.b32.xlu0 %v2059, 110
      %v2098 = vpop.permute.xlu0 %2097
      %v2099 = vsel %vm736, %v2096, %v2098
      %v2100 = vsel %vm736, %v2098, %v735
      %2103 = vrot.lane.b32.xlu0 %v2060, 96
      %v2104 = vpop.permute.xlu0 %2103
      %2105 = vrot.lane.b32.xlu0 %v2061, 96
      %v2106 = vpop.permute.xlu0 %2105
      %v2107 = vsel %vm748, %v2104, %v2106
      %v2108 = vsel %vm748, %v2106, %v747
      %2109 = vrot.lane.b32.xlu0 %v2050, 95
      %v2110 = vpop.permute.xlu0 %2109
      %2111 = vrot.lane.b32.xlu0 %v2051, 95
      %v2112 = vpop.permute.xlu0 %2111
      %v2113 = vsel %vm757, %v2110, %v2112
      %v2114 = vsel %vm757, %v2112, %v756
      %2117 = vrot.lane.b32.xlu0 %v2062, 94
      %v2118 = vpop.permute.xlu0 %2117
      %2119 = vrot.lane.b32.xlu0 %v2063, 94
      %v2120 = vpop.permute.xlu0 %2119
      %v2121 = vsel %vm769, %v2118, %v2120
      %v2122 = vsel %vm769, %v2120, %v768
      %s2123 = scalar_lea.vmem %s6, 32
      %v2124 = vld [vmem:[%s2123] sm:$0xff]
      %s2125 = scalar_lea.vmem %s7, 32
      %v2126 = vld [vmem:[%s2125] sm:$0xff]
      %2128 = vset.pattern.permute.xlu0 0
      %2129 = vperm.xlu0 %2128, %v2126
      %v2130 = vpop.permute.xlu0 %2129
      %2134 = vrot.lane.b32.xlu0 %v2052, 17
      %v2135 = vpop.permute.xlu0 %2134
      %2136 = vrot.lane.b32.xlu0 %v2053, 17
      %v2137 = vpop.permute.xlu0 %2136
      %2138 = vrot.lane.b32.xlu0 %v2070, 17
      %v2139 = vpop.permute.xlu0 %2138
      %2140 = vrot.lane.b32.xlu0 %v2071, 17
      %v2141 = vpop.permute.xlu0 %2140
      %2142 = vrot.lane.b32.xlu0 %v2069, 17
      %v2143 = vpop.permute.xlu0 %2142
      %2144 = vrot.lane.b32.xlu0 %v2078, 17
      %v2145 = vpop.permute.xlu0 %2144
      %2146 = vrot.lane.b32.xlu0 %v2079, 17
      %v2147 = vpop.permute.xlu0 %2146
      %2148 = vrot.lane.b32.xlu0 %v2077, 17
      %v2149 = vpop.permute.xlu0 %2148
      %2150 = vrot.lane.b32.xlu0 %v2086, 17
      %v2151 = vpop.permute.xlu0 %2150
      %2152 = vrot.lane.b32.xlu0 %v2087, 17
      %v2153 = vpop.permute.xlu0 %2152
      %2154 = vrot.lane.b32.xlu0 %v2085, 17
      %v2155 = vpop.permute.xlu0 %2154
      %2156 = vrot.lane.b32.xlu0 %v2089, 17
      %v2157 = vpop.permute.xlu0 %2156
      %2158 = vrot.lane.b32.xlu0 %v2092, 17
      %v2159 = vpop.permute.xlu0 %2158
      %2160 = vrot.lane.b32.xlu0 %v2091, 17
      %v2161 = vpop.permute.xlu0 %2160
      %2162 = vrot.lane.b32.xlu0 %v2096, 17
      %v2163 = vpop.permute.xlu0 %2162
      %2164 = vrot.lane.b32.xlu0 %v2099, 17
      %v2165 = vpop.permute.xlu0 %2164
      %2166 = vrot.lane.b32.xlu0 %v2100, 17
      %v2167 = vpop.permute.xlu0 %2166
      %2168 = vrot.lane.b32.xlu0 %v2104, 17
      %v2169 = vpop.permute.xlu0 %2168
      %2170 = vrot.lane.b32.xlu0 %v2107, 17
      %v2171 = vpop.permute.xlu0 %2170
      %2172 = vrot.lane.b32.xlu0 %v2108, 17
      %v2173 = vpop.permute.xlu0 %2172
      %2174 = vrot.lane.b32.xlu0 %v2110, 17
      %v2175 = vpop.permute.xlu0 %2174
      %2176 = vrot.lane.b32.xlu0 %v2113, 17
      %v2177 = vpop.permute.xlu0 %2176
      %2178 = vrot.lane.b32.xlu0 %v2114, 17
      %v2179 = vpop.permute.xlu0 %2178
      %2180 = vrot.lane.b32.xlu0 %v2118, 17
      %v2181 = vpop.permute.xlu0 %2180
      %2182 = vrot.lane.b32.xlu0 %v2121, 17
      %v2183 = vpop.permute.xlu0 %2182
      %2184 = vrot.lane.b32.xlu0 %v2122, 17
      %v2185 = vpop.permute.xlu0 %2184
      %v2186 = vsel %vm679, %v783, %v2135
      %v2187 = vsel %vm679, %v2135, %v2137
      %v2188 = vsel %vm679, %v2139, %v2141
      %v2189 = vsel %vm679, %v2141, %v2143
      %v2190 = vsel %vm679, %v2145, %v2147
      %v2191 = vsel %vm679, %v2147, %v2149
      %v2192 = vsel %vm679, %v2151, %v2153
      %v2193 = vsel %vm679, %v2153, %v2155
      %v2194 = vsel %vm679, %v2157, %v2159
      %v2195 = vsel %vm679, %v2159, %v2161
      %v2196 = vsel %vm679, %v2163, %v2165
      %v2197 = vsel %vm679, %v2165, %v2167
      %v2198 = vsel %vm679, %v2169, %v2171
      %v2199 = vsel %vm679, %v2171, %v2173
      %v2200 = vsel %vm679, %v2175, %v2177
      %v2201 = vsel %vm679, %v2177, %v2179
      %v2202 = vsel %vm679, %v2181, %v2183
      %v2203 = vsel %vm679, %v2183, %v2185
      %v2223 = vsel %vm872, %v2124, 0
      %2225 = vmatprep.subr.mxu0 %v2187
      %2226 = vmatpush1.msra.mxu0 %v2186
      %2227 = vmatprep.subr.mxu0 %v2189
      %2228 = vmatpush1.msra.mxu0 %v2188
      %2229 = vmatprep.subr.mxu0 %v2191
      %2230 = vmatpush1.msra.mxu0 %v2190
      %2231 = vmatprep.subr.mxu0 %v2193
      %2232 = vmatpush1.msra.mxu0 %v2192
      %2233 = vmatprep.subr.mxu0 %v2195
      %2234 = vmatpush1.msra.mxu0 %v2194
      %2235 = vmatprep.subr.mxu0 %v2197
      %2236 = vmatpush1.msra.mxu0 %v2196
      %2237 = vmatprep.subr.mxu0 %v2199
      %2238 = vmatpush1.msra.mxu0 %v2198
      %2239 = vmatprep.subr.mxu0 %v2201
      %2240 = vmatpush1.msra.mxu0 %v2200
      %2241 = vmatprep.subr.mxu0 %v2203
      %2242 = vmatpush1.msra.mxu0 %v2202
      %2243 = vmatprep.subr.mxu0 0.0
      %2244 = vmatpush1.msra.mxu0 0.0
      %2245 = vmatprep.subr.mxu0 0.0
      %2246 = vmatpush1.msra.mxu0 0.0
      %2247 = vmatprep.subr.mxu0 0.0
      %2248 = vmatpush1.msra.mxu0 0.0
      %2249 = vmatprep.subr.mxu0 0.0
      %2250 = vmatpush1.msra.mxu0 0.0
      %2251 = vmatprep.subr.mxu0 0.0
      %2252 = vmatpush1.msra.mxu0 0.0
      %2253 = vmatprep.subr.mxu0 0.0
      %2254 = vmatpush1.msra.mxu0 0.0
      %2255 = vmatprep.subr.mxu0 0.0
      %2256 = vmatpush1.msra.mxu0 0.0
      %2257 = vmatprep.subr.mxu0 0.0
      %2258 = vmatpush1.msra.mxu0 0.0
      %2259 = vmatprep.subr.mxu0 0.0
      %2260 = vmatpush1.msra.mxu0 0.0
      %2261 = vmatprep.subr.mxu0 0.0
      %2262 = vmatpush1.msra.mxu0 0.0
      %2263 = vmatprep.subr.mxu0 0.0
      %2264 = vmatpush1.msra.mxu0 0.0
      %2265 = vmatprep.subr.mxu0 0.0
      %2266 = vmatpush1.msra.mxu0 0.0
      %2267 = vmatprep.subr.mxu0 0.0
      %2268 = vmatpush1.msra.mxu0 0.0
      %2269 = vmatprep.subr.mxu0 0.0
      %2270 = vmatpush1.msra.mxu0 0.0
      %2271 = vmatprep.subr.mxu0 0.0
      %2272 = vmatpush1.msra.mxu0 0.0
      %2273 = vmatprep.subr.mxu0 0.0
      %2274 = vmatpush1.msra.mxu0 0.0
      %2275 = vmatprep.subr.mxu0 0.0
      %2276 = vmatpush1.msra.mxu0 0.0
      %2277 = vmatprep.subr.mxu0 0.0
      %2278 = vmatpush1.msra.mxu0 0.0
      %2279 = vmatprep.subr.mxu0 0.0
      %2280 = vmatpush1.msra.mxu0 0.0
      %2281 = vmatprep.subr.mxu0 0.0
      %2282 = vmatpush1.msra.mxu0 0.0
      %2283 = vmatprep.subr.mxu0 0.0
      %2284 = vmatpush1.msra.mxu0 0.0
      %2285 = vmatprep.subr.mxu0 0.0
      %2286 = vmatpush1.msra.mxu0 0.0
      %2287 = vmatprep.subr.mxu0 0.0
      %2288 = vmatpush1.msra.mxu0 0.0
      %2289 = vmatprep.mubr.f32.mxu0 0.0
      %2290 = vmatmul.mubr.f32.gmra.mrb[0].mxu0 %v2223
      %v2291 = vpop.f32.mrb[0].mxu0
      %v2292 = vadd.f32 %v2130, %v2291
      %v2293 = vpop.f32.mrb[0].mxu0
      %v2294 = vadd.f32 %v2130, %v2293
      %2295 = vdwg.mxu0
      %s2296 = scalar_lea.vmem %s367, 40
      %v2297 = vld [vmem:[%s2296] sm:$0xff]
      %v2298 = vadd.f32 %v2292, %v2294
      %2299 = vadd.xlane.f32.xlu0 %v2298
      %v2300 = vpop.xlane.xlu0 %2299
      %v2301 = vmul.f32 %v2300, %v544
      %v2302 = vsub.f32 %v2292, %v2301
      %v2303 = vsub.f32 %v2294, %v2301
      %v2304 = vmul.f32 %v2302, %v2302
      %v2305 = vmul.f32 %v2303, %v2303
      %v2306 = vadd.f32 %v2304, %v2305
      %2307 = vadd.xlane.f32.xlu0 %v2306
      %v2308 = vpop.xlane.xlu0 %2307
      %v2309 = vmul.f32 %v2308, 0.003921569
      %v2310 = vadd.f32 %v2309, 1e-05
      %v2311 = vrsqrt.pop %v2310
      %v2312 = vmul.f32 %v2302, %v2311
      %v2313 = vmul.f32 %v2303, %v2311
      %2315 = vset.pattern.permute.xlu0 0
      %2316 = vperm.xlu0 %2315, %v2297
      %v2317 = vpop.permute.xlu0 %2316
      %v2319 = vmul.f32 %v2317, %v2312
      %v2320 = vmul.f32 %v2317, %v2313
      %2321 = vset.pattern.permute.xlu0 1
      %2322 = vperm.xlu0 %2321, %v2297
      %v2323 = vpop.permute.xlu0 %2322
      %v2325 = vadd.f32 %v2319, %v2323
      %v2326 = vadd.f32 %v2320, %v2323
      %v2327 = vrot.slane %v2301, 4
      %v2328 = vadd.f32 %v2301, %v2327
      %v2329 = vrot.slane %v2328, 2
      %v2330 = vadd.f32 %v2328, %v2329
      %v2331 = vrot.slane %v2330, 1
      %v2332 = vadd.f32 %v2330, %v2331
      %v2333 = vmul.f32 %v2332, %v577
      %v2334 = vsub.f32 %v2301, %v2333
      %v2335 = vmul.f32 %v2334, %v2334
      %v2336 = vrot.slane %v2335, 4
      %v2337 = vadd.f32 %v2335, %v2336
      %v2338 = vrot.slane %v2337, 2
      %v2339 = vadd.f32 %v2337, %v2338
      %v2340 = vrot.slane %v2339, 1
      %v2341 = vadd.f32 %v2339, %v2340
      %v2342 = vmul.f32 %v2341, 0.14285715
      %v2343 = vmul.f32 %v2297, %v2334
      %v2344 = vadd.f32 %v2342, 1e-05
      %v2345 = vrsqrt.pop %v2344
      %v2346 = vmul.f32 %v2343, %v2345
      %2348 = vset.pattern.permute.xlu0 2
      %2349 = vperm.xlu0 %2348, %v2346
      %v2350 = vpop.permute.xlu0 %2349
      %v2352 = vadd.f32 %v2325, %v2350
      %v2353 = vadd.f32 %v2326, %v2350
      %vm2354 = vcmp.gt.f32.partialorder %v2352, 0.0
      %vm2355 = vcmp.gt.f32.partialorder %v2353, 0.0
      %v2356 = vmin.f32 %v2352, 0.0
      %v2357 = vmin.f32 %v2353, 0.0
      %v2358 = vmul.f32 %v2356, 1.442695
      %v2359 = vpow.pop %v2358
      %v2360 = vmul.f32 %v2357, 1.442695
      %v2361 = vpow.pop %v2360
      %v2362 = vsub.f32 %v2359, 1.0
      %v2363 = vsub.f32 %v2361, 1.0
      %v2364 = vsel %vm2354, %v2352, %v2362
      %v2365 = vsel %vm2355, %v2353, %v2363
      %v2366 = vmul.f32 %v2364, %v618
      %v2367 = vmul.f32 %v2365, %v616
      %v2368 = vmul.f32 %v2364, %v632
      %v2369 = vmul.f32 %v2365, %v630
      %v2370 = vmul.f32 %v2364, %v644
      %v2371 = vmul.f32 %v2365, %v642
      %v2372 = vmul.f32 %v2364, %v652
      %v2373 = vmul.f32 %v2365, %v656
      %v2374 = vmul.f32 %v2364, %v664
      %v2375 = vmul.f32 %v2365, %v668
      %v2376 = vmul.f32 %v2364, %v676
      %v2377 = vmul.f32 %v2365, %v680
      %2380 = vrot.lane.b32.xlu0 %v2364, 127
      %v2381 = vpop.permute.xlu0 %2380
      %2382 = vrot.lane.b32.xlu0 %v2365, 127
      %v2383 = vpop.permute.xlu0 %2382
      %v2384 = vsel %vm643, %v691, %v2381
      %v2385 = vsel %vm643, %v2381, %v2383
      %2388 = vrot.lane.b32.xlu0 %v2368, 126
      %v2389 = vpop.permute.xlu0 %2388
      %2390 = vrot.lane.b32.xlu0 %v2369, 126
      %v2391 = vpop.permute.xlu0 %2390
      %v2392 = vsel %vm707, %v702, %v2389
      %v2393 = vsel %vm707, %v2389, %v2391
      %2396 = vrot.lane.b32.xlu0 %v2370, 112
      %v2397 = vpop.permute.xlu0 %2396
      %2398 = vrot.lane.b32.xlu0 %v2371, 112
      %v2399 = vpop.permute.xlu0 %2398
      %v2400 = vsel %vm719, %v714, %v2397
      %v2401 = vsel %vm719, %v2397, %v2399
      %2402 = vrot.lane.b32.xlu0 %v2364, 111
      %v2403 = vpop.permute.xlu0 %2402
      %2404 = vrot.lane.b32.xlu0 %v2365, 111
      %v2405 = vpop.permute.xlu0 %2404
      %v2406 = vsel %vm617, %v2403, %v2405
      %2409 = vrot.lane.b32.xlu0 %v2372, 110
      %v2410 = vpop.permute.xlu0 %2409
      %2411 = vrot.lane.b32.xlu0 %v2373, 110
      %v2412 = vpop.permute.xlu0 %2411
      %v2413 = vsel %vm736, %v2410, %v2412
      %v2414 = vsel %vm736, %v2412, %v735
      %2417 = vrot.lane.b32.xlu0 %v2374, 96
      %v2418 = vpop.permute.xlu0 %2417
      %2419 = vrot.lane.b32.xlu0 %v2375, 96
      %v2420 = vpop.permute.xlu0 %2419
      %v2421 = vsel %vm748, %v2418, %v2420
      %v2422 = vsel %vm748, %v2420, %v747
      %2423 = vrot.lane.b32.xlu0 %v2364, 95
      %v2424 = vpop.permute.xlu0 %2423
      %2425 = vrot.lane.b32.xlu0 %v2365, 95
      %v2426 = vpop.permute.xlu0 %2425
      %v2427 = vsel %vm757, %v2424, %v2426
      %v2428 = vsel %vm757, %v2426, %v756
      %2431 = vrot.lane.b32.xlu0 %v2376, 94
      %v2432 = vpop.permute.xlu0 %2431
      %2433 = vrot.lane.b32.xlu0 %v2377, 94
      %v2434 = vpop.permute.xlu0 %2433
      %v2435 = vsel %vm769, %v2432, %v2434
      %v2436 = vsel %vm769, %v2434, %v768
      %s2437 = scalar_lea.vmem %s6, 40
      %v2438 = vld [vmem:[%s2437] sm:$0xff]
      %s2439 = scalar_lea.vmem %s7, 40
      %v2440 = vld [vmem:[%s2439] sm:$0xff]
      %2442 = vset.pattern.permute.xlu0 0
      %2443 = vperm.xlu0 %2442, %v2440
      %v2444 = vpop.permute.xlu0 %2443
      %2448 = vrot.lane.b32.xlu0 %v2366, 17
      %v2449 = vpop.permute.xlu0 %2448
      %2450 = vrot.lane.b32.xlu0 %v2367, 17
      %v2451 = vpop.permute.xlu0 %2450
      %2452 = vrot.lane.b32.xlu0 %v2384, 17
      %v2453 = vpop.permute.xlu0 %2452
      %2454 = vrot.lane.b32.xlu0 %v2385, 17
      %v2455 = vpop.permute.xlu0 %2454
      %2456 = vrot.lane.b32.xlu0 %v2383, 17
      %v2457 = vpop.permute.xlu0 %2456
      %2458 = vrot.lane.b32.xlu0 %v2392, 17
      %v2459 = vpop.permute.xlu0 %2458
      %2460 = vrot.lane.b32.xlu0 %v2393, 17
      %v2461 = vpop.permute.xlu0 %2460
      %2462 = vrot.lane.b32.xlu0 %v2391, 17
      %v2463 = vpop.permute.xlu0 %2462
      %2464 = vrot.lane.b32.xlu0 %v2400, 17
      %v2465 = vpop.permute.xlu0 %2464
      %2466 = vrot.lane.b32.xlu0 %v2401, 17
      %v2467 = vpop.permute.xlu0 %2466
      %2468 = vrot.lane.b32.xlu0 %v2399, 17
      %v2469 = vpop.permute.xlu0 %2468
      %2470 = vrot.lane.b32.xlu0 %v2403, 17
      %v2471 = vpop.permute.xlu0 %2470
      %2472 = vrot.lane.b32.xlu0 %v2406, 17
      %v2473 = vpop.permute.xlu0 %2472
      %2474 = vrot.lane.b32.xlu0 %v2405, 17
      %v2475 = vpop.permute.xlu0 %2474
      %2476 = vrot.lane.b32.xlu0 %v2410, 17
      %v2477 = vpop.permute.xlu0 %2476
      %2478 = vrot.lane.b32.xlu0 %v2413, 17
      %v2479 = vpop.permute.xlu0 %2478
      %2480 = vrot.lane.b32.xlu0 %v2414, 17
      %v2481 = vpop.permute.xlu0 %2480
      %2482 = vrot.lane.b32.xlu0 %v2418, 17
      %v2483 = vpop.permute.xlu0 %2482
      %2484 = vrot.lane.b32.xlu0 %v2421, 17
      %v2485 = vpop.permute.xlu0 %2484
      %2486 = vrot.lane.b32.xlu0 %v2422, 17
      %v2487 = vpop.permute.xlu0 %2486
      %2488 = vrot.lane.b32.xlu0 %v2424, 17
      %v2489 = vpop.permute.xlu0 %2488
      %2490 = vrot.lane.b32.xlu0 %v2427, 17
      %v2491 = vpop.permute.xlu0 %2490
      %2492 = vrot.lane.b32.xlu0 %v2428, 17
      %v2493 = vpop.permute.xlu0 %2492
      %2494 = vrot.lane.b32.xlu0 %v2432, 17
      %v2495 = vpop.permute.xlu0 %2494
      %2496 = vrot.lane.b32.xlu0 %v2435, 17
      %v2497 = vpop.permute.xlu0 %2496
      %2498 = vrot.lane.b32.xlu0 %v2436, 17
      %v2499 = vpop.permute.xlu0 %2498
      %v2500 = vsel %vm679, %v783, %v2449
      %v2501 = vsel %vm679, %v2449, %v2451
      %v2502 = vsel %vm679, %v2453, %v2455
      %v2503 = vsel %vm679, %v2455, %v2457
      %v2504 = vsel %vm679, %v2459, %v2461
      %v2505 = vsel %vm679, %v2461, %v2463
      %v2506 = vsel %vm679, %v2465, %v2467
      %v2507 = vsel %vm679, %v2467, %v2469
      %v2508 = vsel %vm679, %v2471, %v2473
      %v2509 = vsel %vm679, %v2473, %v2475
      %v2510 = vsel %vm679, %v2477, %v2479
      %v2511 = vsel %vm679, %v2479, %v2481
      %v2512 = vsel %vm679, %v2483, %v2485
      %v2513 = vsel %vm679, %v2485, %v2487
      %v2514 = vsel %vm679, %v2489, %v2491
      %v2515 = vsel %vm679, %v2491, %v2493
      %v2516 = vsel %vm679, %v2495, %v2497
      %v2517 = vsel %vm679, %v2497, %v2499
      %v2537 = vsel %vm872, %v2438, 0
      %2539 = vmatprep.subr.mxu0 %v2501
      %2540 = vmatpush1.msra.mxu0 %v2500
      %2541 = vmatprep.subr.mxu0 %v2503
      %2542 = vmatpush1.msra.mxu0 %v2502
      %2543 = vmatprep.subr.mxu0 %v2505
      %2544 = vmatpush1.msra.mxu0 %v2504
      %2545 = vmatprep.subr.mxu0 %v2507
      %2546 = vmatpush1.msra.mxu0 %v2506
      %2547 = vmatprep.subr.mxu0 %v2509
      %2548 = vmatpush1.msra.mxu0 %v2508
      %2549 = vmatprep.subr.mxu0 %v2511
      %2550 = vmatpush1.msra.mxu0 %v2510
      %2551 = vmatprep.subr.mxu0 %v2513
      %2552 = vmatpush1.msra.mxu0 %v2512
      %2553 = vmatprep.subr.mxu0 %v2515
      %2554 = vmatpush1.msra.mxu0 %v2514
      %2555 = vmatprep.subr.mxu0 %v2517
      %2556 = vmatpush1.msra.mxu0 %v2516
      %2557 = vmatprep.subr.mxu0 0.0
      %2558 = vmatpush1.msra.mxu0 0.0
      %2559 = vmatprep.subr.mxu0 0.0
      %2560 = vmatpush1.msra.mxu0 0.0
      %2561 = vmatprep.subr.mxu0 0.0
      %2562 = vmatpush1.msra.mxu0 0.0
      %2563 = vmatprep.subr.mxu0 0.0
      %2564 = vmatpush1.msra.mxu0 0.0
      %2565 = vmatprep.subr.mxu0 0.0
      %2566 = vmatpush1.msra.mxu0 0.0
      %2567 = vmatprep.subr.mxu0 0.0
      %2568 = vmatpush1.msra.mxu0 0.0
      %2569 = vmatprep.subr.mxu0 0.0
      %2570 = vmatpush1.msra.mxu0 0.0
      %2571 = vmatprep.subr.mxu0 0.0
      %2572 = vmatpush1.msra.mxu0 0.0
      %2573 = vmatprep.subr.mxu0 0.0
      %2574 = vmatpush1.msra.mxu0 0.0
      %2575 = vmatprep.subr.mxu0 0.0
      %2576 = vmatpush1.msra.mxu0 0.0
      %2577 = vmatprep.subr.mxu0 0.0
      %2578 = vmatpush1.msra.mxu0 0.0
      %2579 = vmatprep.subr.mxu0 0.0
      %2580 = vmatpush1.msra.mxu0 0.0
      %2581 = vmatprep.subr.mxu0 0.0
      %2582 = vmatpush1.msra.mxu0 0.0
      %2583 = vmatprep.subr.mxu0 0.0
      %2584 = vmatpush1.msra.mxu0 0.0
      %2585 = vmatprep.subr.mxu0 0.0
      %2586 = vmatpush1.msra.mxu0 0.0
      %2587 = vmatprep.subr.mxu0 0.0
      %2588 = vmatpush1.msra.mxu0 0.0
      %2589 = vmatprep.subr.mxu0 0.0
      %2590 = vmatpush1.msra.mxu0 0.0
      %2591 = vmatprep.subr.mxu0 0.0
      %2592 = vmatpush1.msra.mxu0 0.0
      %2593 = vmatprep.subr.mxu0 0.0
      %2594 = vmatpush1.msra.mxu0 0.0
      %2595 = vmatprep.subr.mxu0 0.0
      %2596 = vmatpush1.msra.mxu0 0.0
      %2597 = vmatprep.subr.mxu0 0.0
      %2598 = vmatpush1.msra.mxu0 0.0
      %2599 = vmatprep.subr.mxu0 0.0
      %2600 = vmatpush1.msra.mxu0 0.0
      %2601 = vmatprep.subr.mxu0 0.0
      %2602 = vmatpush1.msra.mxu0 0.0
      %2603 = vmatprep.mubr.f32.mxu0 0.0
      %2604 = vmatmul.mubr.f32.gmra.mrb[0].mxu0 %v2537
      %v2605 = vpop.f32.mrb[0].mxu0
      %v2606 = vadd.f32 %v2444, %v2605
      %v2607 = vpop.f32.mrb[0].mxu0
      %v2608 = vadd.f32 %v2444, %v2607
      %2609 = vdwg.mxu0
      %v2610 = vadd.f32 %v1978, %v2606
      %v2611 = vadd.f32 %v1980, %v2608
      %s2612 = scalar_lea.vmem %s367, 48
      %v2613 = vld [vmem:[%s2612] sm:$0xff]
      %v2614 = vadd.f32 %v2610, %v2611
      %2615 = vadd.xlane.f32.xlu0 %v2614
      %v2616 = vpop.xlane.xlu0 %2615
      %v2617 = vmul.f32 %v2616, %v544
      %v2618 = vsub.f32 %v2610, %v2617
      %v2619 = vsub.f32 %v2611, %v2617
      %v2620 = vmul.f32 %v2618, %v2618
      %v2621 = vmul.f32 %v2619, %v2619
      %v2622 = vadd.f32 %v2620, %v2621
      %2623 = vadd.xlane.f32.xlu0 %v2622
      %v2624 = vpop.xlane.xlu0 %2623
      %v2625 = vmul.f32 %v2624, 0.003921569
      %v2626 = vadd.f32 %v2625, 1e-05
      %v2627 = vrsqrt.pop %v2626
      %v2628 = vmul.f32 %v2618, %v2627
      %v2629 = vmul.f32 %v2619, %v2627
      %2631 = vset.pattern.permute.xlu0 0
      %2632 = vperm.xlu0 %2631, %v2613
      %v2633 = vpop.permute.xlu0 %2632
      %v2635 = vmul.f32 %v2633, %v2628
      %v2636 = vmul.f32 %v2633, %v2629
      %2637 = vset.pattern.permute.xlu0 1
      %2638 = vperm.xlu0 %2637, %v2613
      %v2639 = vpop.permute.xlu0 %2638
      %v2641 = vadd.f32 %v2635, %v2639
      %v2642 = vadd.f32 %v2636, %v2639
      %v2643 = vrot.slane %v2617, 4
      %v2644 = vadd.f32 %v2617, %v2643
      %v2645 = vrot.slane %v2644, 2
      %v2646 = vadd.f32 %v2644, %v2645
      %v2647 = vrot.slane %v2646, 1
      %v2648 = vadd.f32 %v2646, %v2647
      %v2649 = vmul.f32 %v2648, %v577
      %v2650 = vsub.f32 %v2617, %v2649
      %v2651 = vmul.f32 %v2650, %v2650
      %v2652 = vrot.slane %v2651, 4
      %v2653 = vadd.f32 %v2651, %v2652
      %v2654 = vrot.slane %v2653, 2
      %v2655 = vadd.f32 %v2653, %v2654
      %v2656 = vrot.slane %v2655, 1
      %v2657 = vadd.f32 %v2655, %v2656
      %v2658 = vmul.f32 %v2657, 0.14285715
      %v2659 = vmul.f32 %v2613, %v2650
      %v2660 = vadd.f32 %v2658, 1e-05
      %v2661 = vrsqrt.pop %v2660
      %v2662 = vmul.f32 %v2659, %v2661
      %2664 = vset.pattern.permute.xlu0 2
      %2665 = vperm.xlu0 %2664, %v2662
      %v2666 = vpop.permute.xlu0 %2665
      %v2668 = vadd.f32 %v2641, %v2666
      %v2669 = vadd.f32 %v2642, %v2666
      %vm2670 = vcmp.gt.f32.partialorder %v2668, 0.0
      %vm2671 = vcmp.gt.f32.partialorder %v2669, 0.0
      %v2672 = vmin.f32 %v2668, 0.0
      %v2673 = vmin.f32 %v2669, 0.0
      %v2674 = vmul.f32 %v2672, 1.442695
      %v2675 = vpow.pop %v2674
      %v2676 = vmul.f32 %v2673, 1.442695
      %v2677 = vpow.pop %v2676
      %v2678 = vsub.f32 %v2675, 1.0
      %v2679 = vsub.f32 %v2677, 1.0
      %v2680 = vsel %vm2670, %v2668, %v2678
      %v2681 = vsel %vm2671, %v2669, %v2679
      %v2682 = vmul.f32 %v2680, %v618
      %v2683 = vmul.f32 %v2681, %v616
      %v2684 = vmul.f32 %v2680, %v632
      %v2685 = vmul.f32 %v2681, %v630
      %v2686 = vmul.f32 %v2680, %v644
      %v2687 = vmul.f32 %v2681, %v642
      %v2688 = vmul.f32 %v2680, %v652
      %v2689 = vmul.f32 %v2681, %v656
      %v2690 = vmul.f32 %v2680, %v664
      %v2691 = vmul.f32 %v2681, %v668
      %v2692 = vmul.f32 %v2680, %v676
      %v2693 = vmul.f32 %v2681, %v680
      %2696 = vrot.lane.b32.xlu0 %v2680, 127
      %v2697 = vpop.permute.xlu0 %2696
      %2698 = vrot.lane.b32.xlu0 %v2681, 127
      %v2699 = vpop.permute.xlu0 %2698
      %v2700 = vsel %vm643, %v691, %v2697
      %v2701 = vsel %vm643, %v2697, %v2699
      %2704 = vrot.lane.b32.xlu0 %v2684, 126
      %v2705 = vpop.permute.xlu0 %2704
      %2706 = vrot.lane.b32.xlu0 %v2685, 126
      %v2707 = vpop.permute.xlu0 %2706
      %v2708 = vsel %vm707, %v702, %v2705
      %v2709 = vsel %vm707, %v2705, %v2707
      %2712 = vrot.lane.b32.xlu0 %v2686, 112
      %v2713 = vpop.permute.xlu0 %2712
      %2714 = vrot.lane.b32.xlu0 %v2687, 112
      %v2715 = vpop.permute.xlu0 %2714
      %v2716 = vsel %vm719, %v714, %v2713
      %v2717 = vsel %vm719, %v2713, %v2715
      %2718 = vrot.lane.b32.xlu0 %v2680, 111
      %v2719 = vpop.permute.xlu0 %2718
      %2720 = vrot.lane.b32.xlu0 %v2681, 111
      %v2721 = vpop.permute.xlu0 %2720
      %v2722 = vsel %vm617, %v2719, %v2721
      %2725 = vrot.lane.b32.xlu0 %v2688, 110
      %v2726 = vpop.permute.xlu0 %2725
      %2727 = vrot.lane.b32.xlu0 %v2689, 110
      %v2728 = vpop.permute.xlu0 %2727
      %v2729 = vsel %vm736, %v2726, %v2728
      %v2730 = vsel %vm736, %v2728, %v735
      %2733 = vrot.lane.b32.xlu0 %v2690, 96
      %v2734 = vpop.permute.xlu0 %2733
      %2735 = vrot.lane.b32.xlu0 %v2691, 96
      %v2736 = vpop.permute.xlu0 %2735
      %v2737 = vsel %vm748, %v2734, %v2736
      %v2738 = vsel %vm748, %v2736, %v747
      %2739 = vrot.lane.b32.xlu0 %v2680, 95
      %v2740 = vpop.permute.xlu0 %2739
      %2741 = vrot.lane.b32.xlu0 %v2681, 95
      %v2742 = vpop.permute.xlu0 %2741
      %v2743 = vsel %vm757, %v2740, %v2742
      %v2744 = vsel %vm757, %v2742, %v756
      %2747 = vrot.lane.b32.xlu0 %v2692, 94
      %v2748 = vpop.permute.xlu0 %2747
      %2749 = vrot.lane.b32.xlu0 %v2693, 94
      %v2750 = vpop.permute.xlu0 %2749
      %v2751 = vsel %vm769, %v2748, %v2750
      %v2752 = vsel %vm769, %v2750, %v768
      %s2753 = scalar_lea.vmem %s6, 48
      %v2754 = vld [vmem:[%s2753] sm:$0xff]
      %s2755 = scalar_lea.vmem %s7, 48
      %v2756 = vld [vmem:[%s2755] sm:$0xff]
      %2758 = vset.pattern.permute.xlu0 0
      %2759 = vperm.xlu0 %2758, %v2756
      %v2760 = vpop.permute.xlu0 %2759
      %2764 = vrot.lane.b32.xlu0 %v2682, 17
      %v2765 = vpop.permute.xlu0 %2764
      %2766 = vrot.lane.b32.xlu0 %v2683, 17
      %v2767 = vpop.permute.xlu0 %2766
      %2768 = vrot.lane.b32.xlu0 %v2700, 17
      %v2769 = vpop.permute.xlu0 %2768
      %2770 = vrot.lane.b32.xlu0 %v2701, 17
      %v2771 = vpop.permute.xlu0 %2770
      %2772 = vrot.lane.b32.xlu0 %v2699, 17
      %v2773 = vpop.permute.xlu0 %2772
      %2774 = vrot.lane.b32.xlu0 %v2708, 17
      %v2775 = vpop.permute.xlu0 %2774
      %2776 = vrot.lane.b32.xlu0 %v2709, 17
      %v2777 = vpop.permute.xlu0 %2776
      %2778 = vrot.lane.b32.xlu0 %v2707, 17
      %v2779 = vpop.permute.xlu0 %2778
      %2780 = vrot.lane.b32.xlu0 %v2716, 17
      %v2781 = vpop.permute.xlu0 %2780
      %2782 = vrot.lane.b32.xlu0 %v2717, 17
      %v2783 = vpop.permute.xlu0 %2782
      %2784 = vrot.lane.b32.xlu0 %v2715, 17
      %v2785 = vpop.permute.xlu0 %2784
      %2786 = vrot.lane.b32.xlu0 %v2719, 17
      %v2787 = vpop.permute.xlu0 %2786
      %2788 = vrot.lane.b32.xlu0 %v2722, 17
      %v2789 = vpop.permute.xlu0 %2788
      %2790 = vrot.lane.b32.xlu0 %v2721, 17
      %v2791 = vpop.permute.xlu0 %2790
      %2792 = vrot.lane.b32.xlu0 %v2726, 17
      %v2793 = vpop.permute.xlu0 %2792
      %2794 = vrot.lane.b32.xlu0 %v2729, 17
      %v2795 = vpop.permute.xlu0 %2794
      %2796 = vrot.lane.b32.xlu0 %v2730, 17
      %v2797 = vpop.permute.xlu0 %2796
      %2798 = vrot.lane.b32.xlu0 %v2734, 17
      %v2799 = vpop.permute.xlu0 %2798
      %2800 = vrot.lane.b32.xlu0 %v2737, 17
      %v2801 = vpop.permute.xlu0 %2800
      %2802 = vrot.lane.b32.xlu0 %v2738, 17
      %v2803 = vpop.permute.xlu0 %2802
      %2804 = vrot.lane.b32.xlu0 %v2740, 17
      %v2805 = vpop.permute.xlu0 %2804
      %2806 = vrot.lane.b32.xlu0 %v2743, 17
      %v2807 = vpop.permute.xlu0 %2806
      %2808 = vrot.lane.b32.xlu0 %v2744, 17
      %v2809 = vpop.permute.xlu0 %2808
      %2810 = vrot.lane.b32.xlu0 %v2748, 17
      %v2811 = vpop.permute.xlu0 %2810
      %2812 = vrot.lane.b32.xlu0 %v2751, 17
      %v2813 = vpop.permute.xlu0 %2812
      %2814 = vrot.lane.b32.xlu0 %v2752, 17
      %v2815 = vpop.permute.xlu0 %2814
      %v2816 = vsel %vm679, %v783, %v2765
      %v2817 = vsel %vm679, %v2765, %v2767
      %v2818 = vsel %vm679, %v2769, %v2771
      %v2819 = vsel %vm679, %v2771, %v2773
      %v2820 = vsel %vm679, %v2775, %v2777
      %v2821 = vsel %vm679, %v2777, %v2779
      %v2822 = vsel %vm679, %v2781, %v2783
      %v2823 = vsel %vm679, %v2783, %v2785
      %v2824 = vsel %vm679, %v2787, %v2789
      %v2825 = vsel %vm679, %v2789, %v2791
      %v2826 = vsel %vm679, %v2793, %v2795
      %v2827 = vsel %vm679, %v2795, %v2797
      %v2828 = vsel %vm679, %v2799, %v2801
      %v2829 = vsel %vm679, %v2801, %v2803
      %v2830 = vsel %vm679, %v2805, %v2807
      %v2831 = vsel %vm679, %v2807, %v2809
      %v2832 = vsel %vm679, %v2811, %v2813
      %v2833 = vsel %vm679, %v2813, %v2815
      %v2853 = vsel %vm872, %v2754, 0
      %2855 = vmatprep.subr.mxu0 %v2817
      %2856 = vmatpush1.msra.mxu0 %v2816
      %2857 = vmatprep.subr.mxu0 %v2819
      %2858 = vmatpush1.msra.mxu0 %v2818
      %2859 = vmatprep.subr.mxu0 %v2821
      %2860 = vmatpush1.msra.mxu0 %v2820
      %2861 = vmatprep.subr.mxu0 %v2823
      %2862 = vmatpush1.msra.mxu0 %v2822
      %2863 = vmatprep.subr.mxu0 %v2825
      %2864 = vmatpush1.msra.mxu0 %v2824
      %2865 = vmatprep.subr.mxu0 %v2827
      %2866 = vmatpush1.msra.mxu0 %v2826
      %2867 = vmatprep.subr.mxu0 %v2829
      %2868 = vmatpush1.msra.mxu0 %v2828
      %2869 = vmatprep.subr.mxu0 %v2831
      %2870 = vmatpush1.msra.mxu0 %v2830
      %2871 = vmatprep.subr.mxu0 %v2833
      %2872 = vmatpush1.msra.mxu0 %v2832
      %2873 = vmatprep.subr.mxu0 0.0
      %2874 = vmatpush1.msra.mxu0 0.0
      %2875 = vmatprep.subr.mxu0 0.0
      %2876 = vmatpush1.msra.mxu0 0.0
      %2877 = vmatprep.subr.mxu0 0.0
      %2878 = vmatpush1.msra.mxu0 0.0
      %2879 = vmatprep.subr.mxu0 0.0
      %2880 = vmatpush1.msra.mxu0 0.0
      %2881 = vmatprep.subr.mxu0 0.0
      %2882 = vmatpush1.msra.mxu0 0.0
      %2883 = vmatprep.subr.mxu0 0.0
      %2884 = vmatpush1.msra.mxu0 0.0
      %2885 = vmatprep.subr.mxu0 0.0
      %2886 = vmatpush1.msra.mxu0 0.0
      %2887 = vmatprep.subr.mxu0 0.0
      %2888 = vmatpush1.msra.mxu0 0.0
      %2889 = vmatprep.subr.mxu0 0.0
      %2890 = vmatpush1.msra.mxu0 0.0
      %2891 = vmatprep.subr.mxu0 0.0
      %2892 = vmatpush1.msra.mxu0 0.0
      %2893 = vmatprep.subr.mxu0 0.0
      %2894 = vmatpush1.msra.mxu0 0.0
      %2895 = vmatprep.subr.mxu0 0.0
      %2896 = vmatpush1.msra.mxu0 0.0
      %2897 = vmatprep.subr.mxu0 0.0
      %2898 = vmatpush1.msra.mxu0 0.0
      %2899 = vmatprep.subr.mxu0 0.0
      %2900 = vmatpush1.msra.mxu0 0.0
      %2901 = vmatprep.subr.mxu0 0.0
      %2902 = vmatpush1.msra.mxu0 0.0
      %2903 = vmatprep.subr.mxu0 0.0
      %2904 = vmatpush1.msra.mxu0 0.0
      %2905 = vmatprep.subr.mxu0 0.0
      %2906 = vmatpush1.msra.mxu0 0.0
      %2907 = vmatprep.subr.mxu0 0.0
      %2908 = vmatpush1.msra.mxu0 0.0
      %2909 = vmatprep.subr.mxu0 0.0
      %2910 = vmatpush1.msra.mxu0 0.0
      %2911 = vmatprep.subr.mxu0 0.0
      %2912 = vmatpush1.msra.mxu0 0.0
      %2913 = vmatprep.subr.mxu0 0.0
      %2914 = vmatpush1.msra.mxu0 0.0
      %2915 = vmatprep.subr.mxu0 0.0
      %2916 = vmatpush1.msra.mxu0 0.0
      %2917 = vmatprep.subr.mxu0 0.0
      %2918 = vmatpush1.msra.mxu0 0.0
      %2919 = vmatprep.mubr.f32.mxu0 0.0
      %2920 = vmatmul.mubr.f32.gmra.mrb[0].mxu0 %v2853
      %v2921 = vpop.f32.mrb[0].mxu0
      %v2922 = vadd.f32 %v2760, %v2921
      %v2923 = vpop.f32.mrb[0].mxu0
      %v2924 = vadd.f32 %v2760, %v2923
      %2925 = vdwg.mxu0
      %s2926 = scalar_lea.vmem %s367, 56
      %v2927 = vld [vmem:[%s2926] sm:$0xff]
      %v2928 = vadd.f32 %v2922, %v2924
      %2929 = vadd.xlane.f32.xlu0 %v2928
      %v2930 = vpop.xlane.xlu0 %2929
      %v2931 = vmul.f32 %v2930, %v544
      %v2932 = vsub.f32 %v2922, %v2931
      %v2933 = vsub.f32 %v2924, %v2931
      %v2934 = vmul.f32 %v2932, %v2932
      %v2935 = vmul.f32 %v2933, %v2933
      %v2936 = vadd.f32 %v2934, %v2935
      %2937 = vadd.xlane.f32.xlu0 %v2936
      %v2938 = vpop.xlane.xlu0 %2937
      %v2939 = vmul.f32 %v2938, 0.003921569
      %v2940 = vadd.f32 %v2939, 1e-05
      %v2941 = vrsqrt.pop %v2940
      %v2942 = vmul.f32 %v2932, %v2941
      %v2943 = vmul.f32 %v2933, %v2941
      %2945 = vset.pattern.permute.xlu0 0
      %2946 = vperm.xlu0 %2945, %v2927
      %v2947 = vpop.permute.xlu0 %2946
      %v2949 = vmul.f32 %v2947, %v2942
      %v2950 = vmul.f32 %v2947, %v2943
      %2951 = vset.pattern.permute.xlu0 1
      %2952 = vperm.xlu0 %2951, %v2927
      %v2953 = vpop.permute.xlu0 %2952
      %v2955 = vadd.f32 %v2949, %v2953
      %v2956 = vadd.f32 %v2950, %v2953
      %v2957 = vrot.slane %v2931, 4
      %v2958 = vadd.f32 %v2931, %v2957
      %v2959 = vrot.slane %v2958, 2
      %v2960 = vadd.f32 %v2958, %v2959
      %v2961 = vrot.slane %v2960, 1
      %v2962 = vadd.f32 %v2960, %v2961
      %v2963 = vmul.f32 %v2962, %v577
      %v2964 = vsub.f32 %v2931, %v2963
      %v2965 = vmul.f32 %v2964, %v2964
      %v2966 = vrot.slane %v2965, 4
      %v2967 = vadd.f32 %v2965, %v2966
      %v2968 = vrot.slane %v2967, 2
      %v2969 = vadd.f32 %v2967, %v2968
      %v2970 = vrot.slane %v2969, 1
      %v2971 = vadd.f32 %v2969, %v2970
      %v2972 = vmul.f32 %v2971, 0.14285715
      %v2973 = vmul.f32 %v2927, %v2964
      %v2974 = vadd.f32 %v2972, 1e-05
      %v2975 = vrsqrt.pop %v2974
      %v2976 = vmul.f32 %v2973, %v2975
      %2978 = vset.pattern.permute.xlu0 2
      %2979 = vperm.xlu0 %2978, %v2976
      %v2980 = vpop.permute.xlu0 %2979
      %v2982 = vadd.f32 %v2955, %v2980
      %v2983 = vadd.f32 %v2956, %v2980
      %vm2984 = vcmp.gt.f32.partialorder %v2982, 0.0
      %vm2985 = vcmp.gt.f32.partialorder %v2983, 0.0
      %v2986 = vmin.f32 %v2982, 0.0
      %v2987 = vmin.f32 %v2983, 0.0
      %v2988 = vmul.f32 %v2986, 1.442695
      %v2989 = vpow.pop %v2988
      %v2990 = vmul.f32 %v2987, 1.442695
      %v2991 = vpow.pop %v2990
      %v2992 = vsub.f32 %v2989, 1.0
      %v2993 = vsub.f32 %v2991, 1.0
      %v2994 = vsel %vm2984, %v2982, %v2992
      %v2995 = vsel %vm2985, %v2983, %v2993
      %v2996 = vmul.f32 %v2994, %v618
      %v2997 = vmul.f32 %v2995, %v616
      %v2998 = vmul.f32 %v2994, %v632
      %v2999 = vmul.f32 %v2995, %v630
      %v3000 = vmul.f32 %v2994, %v644
      %v3001 = vmul.f32 %v2995, %v642
      %v3002 = vmul.f32 %v2994, %v652
      %v3003 = vmul.f32 %v2995, %v656
      %v3004 = vmul.f32 %v2994, %v664
      %v3005 = vmul.f32 %v2995, %v668
      %v3006 = vmul.f32 %v2994, %v676
      %v3007 = vmul.f32 %v2995, %v680
      %3010 = vrot.lane.b32.xlu0 %v2994, 127
      %v3011 = vpop.permute.xlu0 %3010
      %3012 = vrot.lane.b32.xlu0 %v2995, 127
      %v3013 = vpop.permute.xlu0 %3012
      %v3014 = vsel %vm643, %v691, %v3011
      %v3015 = vsel %vm643, %v3011, %v3013
      %3018 = vrot.lane.b32.xlu0 %v2998, 126
      %v3019 = vpop.permute.xlu0 %3018
      %3020 = vrot.lane.b32.xlu0 %v2999, 126
      %v3021 = vpop.permute.xlu0 %3020
      %v3022 = vsel %vm707, %v702, %v3019
      %v3023 = vsel %vm707, %v3019, %v3021
      %3026 = vrot.lane.b32.xlu0 %v3000, 112
      %v3027 = vpop.permute.xlu0 %3026
      %3028 = vrot.lane.b32.xlu0 %v3001, 112
      %v3029 = vpop.permute.xlu0 %3028
      %v3030 = vsel %vm719, %v714, %v3027
      %v3031 = vsel %vm719, %v3027, %v3029
      %3032 = vrot.lane.b32.xlu0 %v2994, 111
      %v3033 = vpop.permute.xlu0 %3032
      %3034 = vrot.lane.b32.xlu0 %v2995, 111
      %v3035 = vpop.permute.xlu0 %3034
      %v3036 = vsel %vm617, %v3033, %v3035
      %3039 = vrot.lane.b32.xlu0 %v3002, 110
      %v3040 = vpop.permute.xlu0 %3039
      %3041 = vrot.lane.b32.xlu0 %v3003, 110
      %v3042 = vpop.permute.xlu0 %3041
      %v3043 = vsel %vm736, %v3040, %v3042
      %v3044 = vsel %vm736, %v3042, %v735
      %3047 = vrot.lane.b32.xlu0 %v3004, 96
      %v3048 = vpop.permute.xlu0 %3047
      %3049 = vrot.lane.b32.xlu0 %v3005, 96
      %v3050 = vpop.permute.xlu0 %3049
      %v3051 = vsel %vm748, %v3048, %v3050
      %v3052 = vsel %vm748, %v3050, %v747
      %3053 = vrot.lane.b32.xlu0 %v2994, 95
      %v3054 = vpop.permute.xlu0 %3053
      %3055 = vrot.lane.b32.xlu0 %v2995, 95
      %v3056 = vpop.permute.xlu0 %3055
      %v3057 = vsel %vm757, %v3054, %v3056
      %v3058 = vsel %vm757, %v3056, %v756
      %3061 = vrot.lane.b32.xlu0 %v3006, 94
      %v3062 = vpop.permute.xlu0 %3061
      %3063 = vrot.lane.b32.xlu0 %v3007, 94
      %v3064 = vpop.permute.xlu0 %3063
      %v3065 = vsel %vm769, %v3062, %v3064
      %v3066 = vsel %vm769, %v3064, %v768
      %s3067 = scalar_lea.vmem %s6, 56
      %v3068 = vld [vmem:[%s3067] sm:$0xff]
      %s3069 = scalar_lea.vmem %s7, 56
      %v3070 = vld [vmem:[%s3069] sm:$0xff]
      %3072 = vset.pattern.permute.xlu0 0
      %3073 = vperm.xlu0 %3072, %v3070
      %v3074 = vpop.permute.xlu0 %3073
      %3078 = vrot.lane.b32.xlu0 %v2996, 17
      %v3079 = vpop.permute.xlu0 %3078
      %3080 = vrot.lane.b32.xlu0 %v2997, 17
      %v3081 = vpop.permute.xlu0 %3080
      %3082 = vrot.lane.b32.xlu0 %v3014, 17
      %v3083 = vpop.permute.xlu0 %3082
      %3084 = vrot.lane.b32.xlu0 %v3015, 17
      %v3085 = vpop.permute.xlu0 %3084
      %3086 = vrot.lane.b32.xlu0 %v3013, 17
      %v3087 = vpop.permute.xlu0 %3086
      %3088 = vrot.lane.b32.xlu0 %v3022, 17
      %v3089 = vpop.permute.xlu0 %3088
      %3090 = vrot.lane.b32.xlu0 %v3023, 17
      %v3091 = vpop.permute.xlu0 %3090
      %3092 = vrot.lane.b32.xlu0 %v3021, 17
      %v3093 = vpop.permute.xlu0 %3092
      %3094 = vrot.lane.b32.xlu0 %v3030, 17
      %v3095 = vpop.permute.xlu0 %3094
      %3096 = vrot.lane.b32.xlu0 %v3031, 17
      %v3097 = vpop.permute.xlu0 %3096
      %3098 = vrot.lane.b32.xlu0 %v3029, 17
      %v3099 = vpop.permute.xlu0 %3098
      %3100 = vrot.lane.b32.xlu0 %v3033, 17
      %v3101 = vpop.permute.xlu0 %3100
      %3102 = vrot.lane.b32.xlu0 %v3036, 17
      %v3103 = vpop.permute.xlu0 %3102
      %3104 = vrot.lane.b32.xlu0 %v3035, 17
      %v3105 = vpop.permute.xlu0 %3104
      %3106 = vrot.lane.b32.xlu0 %v3040, 17
      %v3107 = vpop.permute.xlu0 %3106
      %3108 = vrot.lane.b32.xlu0 %v3043, 17
      %v3109 = vpop.permute.xlu0 %3108
      %3110 = vrot.lane.b32.xlu0 %v3044, 17
      %v3111 = vpop.permute.xlu0 %3110
      %3112 = vrot.lane.b32.xlu0 %v3048, 17
      %v3113 = vpop.permute.xlu0 %3112
      %3114 = vrot.lane.b32.xlu0 %v3051, 17
      %v3115 = vpop.permute.xlu0 %3114
      %3116 = vrot.lane.b32.xlu0 %v3052, 17
      %v3117 = vpop.permute.xlu0 %3116
      %3118 = vrot.lane.b32.xlu0 %v3054, 17
      %v3119 = vpop.permute.xlu0 %3118
      %3120 = vrot.lane.b32.xlu0 %v3057, 17
      %v3121 = vpop.permute.xlu0 %3120
      %3122 = vrot.lane.b32.xlu0 %v3058, 17
      %v3123 = vpop.permute.xlu0 %3122
      %3124 = vrot.lane.b32.xlu0 %v3062, 17
      %v3125 = vpop.permute.xlu0 %3124
      %3126 = vrot.lane.b32.xlu0 %v3065, 17
      %v3127 = vpop.permute.xlu0 %3126
      %3128 = vrot.lane.b32.xlu0 %v3066, 17
      %v3129 = vpop.permute.xlu0 %3128
      %v3130 = vsel %vm679, %v783, %v3079
      %v3131 = vsel %vm679, %v3079, %v3081
      %v3132 = vsel %vm679, %v3083, %v3085
      %v3133 = vsel %vm679, %v3085, %v3087
      %v3134 = vsel %vm679, %v3089, %v3091
      %v3135 = vsel %vm679, %v3091, %v3093
      %v3136 = vsel %vm679, %v3095, %v3097
      %v3137 = vsel %vm679, %v3097, %v3099
      %v3138 = vsel %vm679, %v3101, %v3103
      %v3139 = vsel %vm679, %v3103, %v3105
      %v3140 = vsel %vm679, %v3107, %v3109
      %v3141 = vsel %vm679, %v3109, %v3111
      %v3142 = vsel %vm679, %v3113, %v3115
      %v3143 = vsel %vm679, %v3115, %v3117
      %v3144 = vsel %vm679, %v3119, %v3121
      %v3145 = vsel %vm679, %v3121, %v3123
      %v3146 = vsel %vm679, %v3125, %v3127
      %v3147 = vsel %vm679, %v3127, %v3129
      %v3167 = vsel %vm872, %v3068, 0
      %3169 = vmatprep.subr.mxu0 %v3131
      %3170 = vmatpush1.msra.mxu0 %v3130
      %3171 = vmatprep.subr.mxu0 %v3133
      %3172 = vmatpush1.msra.mxu0 %v3132
      %3173 = vmatprep.subr.mxu0 %v3135
      %3174 = vmatpush1.msra.mxu0 %v3134
      %3175 = vmatprep.subr.mxu0 %v3137
      %3176 = vmatpush1.msra.mxu0 %v3136
      %3177 = vmatprep.subr.mxu0 %v3139
      %3178 = vmatpush1.msra.mxu0 %v3138
      %3179 = vmatprep.subr.mxu0 %v3141
      %3180 = vmatpush1.msra.mxu0 %v3140
      %3181 = vmatprep.subr.mxu0 %v3143
      %3182 = vmatpush1.msra.mxu0 %v3142
      %3183 = vmatprep.subr.mxu0 %v3145
      %3184 = vmatpush1.msra.mxu0 %v3144
      %3185 = vmatprep.subr.mxu0 %v3147
      %3186 = vmatpush1.msra.mxu0 %v3146
      %3187 = vmatprep.subr.mxu0 0.0
      %3188 = vmatpush1.msra.mxu0 0.0
      %3189 = vmatprep.subr.mxu0 0.0
      %3190 = vmatpush1.msra.mxu0 0.0
      %3191 = vmatprep.subr.mxu0 0.0
      %3192 = vmatpush1.msra.mxu0 0.0
      %3193 = vmatprep.subr.mxu0 0.0
      %3194 = vmatpush1.msra.mxu0 0.0
      %3195 = vmatprep.subr.mxu0 0.0
      %3196 = vmatpush1.msra.mxu0 0.0
      %3197 = vmatprep.subr.mxu0 0.0
      %3198 = vmatpush1.msra.mxu0 0.0
      %3199 = vmatprep.subr.mxu0 0.0
      %3200 = vmatpush1.msra.mxu0 0.0
      %3201 = vmatprep.subr.mxu0 0.0
      %3202 = vmatpush1.msra.mxu0 0.0
      %3203 = vmatprep.subr.mxu0 0.0
      %3204 = vmatpush1.msra.mxu0 0.0
      %3205 = vmatprep.subr.mxu0 0.0
      %3206 = vmatpush1.msra.mxu0 0.0
      %3207 = vmatprep.subr.mxu0 0.0
      %3208 = vmatpush1.msra.mxu0 0.0
      %3209 = vmatprep.subr.mxu0 0.0
      %3210 = vmatpush1.msra.mxu0 0.0
      %3211 = vmatprep.subr.mxu0 0.0
      %3212 = vmatpush1.msra.mxu0 0.0
      %3213 = vmatprep.subr.mxu0 0.0
      %3214 = vmatpush1.msra.mxu0 0.0
      %3215 = vmatprep.subr.mxu0 0.0
      %3216 = vmatpush1.msra.mxu0 0.0
      %3217 = vmatprep.subr.mxu0 0.0
      %3218 = vmatpush1.msra.mxu0 0.0
      %3219 = vmatprep.subr.mxu0 0.0
      %3220 = vmatpush1.msra.mxu0 0.0
      %3221 = vmatprep.subr.mxu0 0.0
      %3222 = vmatpush1.msra.mxu0 0.0
      %3223 = vmatprep.subr.mxu0 0.0
      %3224 = vmatpush1.msra.mxu0 0.0
      %3225 = vmatprep.subr.mxu0 0.0
      %3226 = vmatpush1.msra.mxu0 0.0
      %3227 = vmatprep.subr.mxu0 0.0
      %3228 = vmatpush1.msra.mxu0 0.0
      %3229 = vmatprep.subr.mxu0 0.0
      %3230 = vmatpush1.msra.mxu0 0.0
      %3231 = vmatprep.subr.mxu0 0.0
      %3232 = vmatpush1.msra.mxu0 0.0
      %3233 = vmatprep.mubr.f32.mxu0 0.0
      %3234 = vmatmul.mubr.f32.gmra.mrb[0].mxu0 %v3167
      %v3235 = vpop.f32.mrb[0].mxu0
      %v3236 = vadd.f32 %v3074, %v3235
      %v3237 = vpop.f32.mrb[0].mxu0
      %v3238 = vadd.f32 %v3074, %v3237
      %3239 = vdwg.mxu0
      %v3240 = vadd.f32 %v2610, %v3236
      %v3241 = vadd.f32 %v2611, %v3238
      %s3242 = scalar_lea.vmem %s367, 64
      %v3243 = vld [vmem:[%s3242] sm:$0xff]
      %v3244 = vadd.f32 %v1891, %v1892
      %3245 = vadd.xlane.f32.xlu0 %v3244
      %v3246 = vpop.xlane.xlu0 %3245
      %v3247 = vmul.f32 %v3246, %v544
      %v3248 = vsub.f32 %v1891, %v3247
      %v3249 = vsub.f32 %v1892, %v3247
      %v3250 = vmul.f32 %v3248, %v3248
      %v3251 = vmul.f32 %v3249, %v3249
      %v3252 = vadd.f32 %v3250, %v3251
      %3253 = vadd.xlane.f32.xlu0 %v3252
      %v3254 = vpop.xlane.xlu0 %3253
      %v3255 = vmul.f32 %v3254, 0.003921569
      %v3256 = vadd.f32 %v3255, 1e-05
      %v3257 = vrsqrt.pop %v3256
      %v3258 = vmul.f32 %v3248, %v3257
      %v3259 = vmul.f32 %v3249, %v3257
      %3261 = vset.pattern.permute.xlu0 0
      %3262 = vperm.xlu0 %3261, %v3243
      %v3263 = vpop.permute.xlu0 %3262
      %v3265 = vmul.f32 %v3263, %v3258
      %v3266 = vmul.f32 %v3263, %v3259
      %3267 = vset.pattern.permute.xlu0 1
      %3268 = vperm.xlu0 %3267, %v3243
      %v3269 = vpop.permute.xlu0 %3268
      %v3271 = vadd.f32 %v3265, %v3269
      %v3272 = vadd.f32 %v3266, %v3269
      %v3273 = vrot.slane %v3247, 4
      %v3274 = vadd.f32 %v3247, %v3273
      %v3275 = vrot.slane %v3274, 2
      %v3276 = vadd.f32 %v3274, %v3275
      %v3277 = vrot.slane %v3276, 1
      %v3278 = vadd.f32 %v3276, %v3277
      %v3279 = vmul.f32 %v3278, %v577
      %v3280 = vsub.f32 %v3247, %v3279
      %v3281 = vmul.f32 %v3280, %v3280
      %v3282 = vrot.slane %v3281, 4
      %v3283 = vadd.f32 %v3281, %v3282
      %v3284 = vrot.slane %v3283, 2
      %v3285 = vadd.f32 %v3283, %v3284
      %v3286 = vrot.slane %v3285, 1
      %v3287 = vadd.f32 %v3285, %v3286
      %v3288 = vmul.f32 %v3287, 0.14285715
      %v3289 = vmul.f32 %v3243, %v3280
      %v3290 = vadd.f32 %v3288, 1e-05
      %v3291 = vrsqrt.pop %v3290
      %v3292 = vmul.f32 %v3289, %v3291
      %3294 = vset.pattern.permute.xlu0 2
      %3295 = vperm.xlu0 %3294, %v3292
      %v3296 = vpop.permute.xlu0 %3295
      %v3298 = vadd.f32 %v3271, %v3296
      %v3299 = vadd.f32 %v3272, %v3296
      %v3300 = vmul.f32 %v3298, %v618
      %v3301 = vmul.f32 %v3299, %v616
      %v3302 = vmul.f32 %v3298, %v632
      %v3303 = vmul.f32 %v3299, %v630
      %v3304 = vmul.f32 %v3298, %v644
      %v3305 = vmul.f32 %v3299, %v642
      %v3306 = vmul.f32 %v3298, %v652
      %v3307 = vmul.f32 %v3299, %v656
      %v3308 = vmul.f32 %v3298, %v664
      %v3309 = vmul.f32 %v3299, %v668
      %v3310 = vmul.f32 %v3298, %v676
      %v3311 = vmul.f32 %v3299, %v680
      %3314 = vrot.lane.b32.xlu0 %v3298, 127
      %v3315 = vpop.permute.xlu0 %3314
      %3316 = vrot.lane.b32.xlu0 %v3299, 127
      %v3317 = vpop.permute.xlu0 %3316
      %v3318 = vsel %vm643, %v691, %v3315
      %v3319 = vsel %vm643, %v3315, %v3317
      %3322 = vrot.lane.b32.xlu0 %v3302, 126
      %v3323 = vpop.permute.xlu0 %3322
      %3324 = vrot.lane.b32.xlu0 %v3303, 126
      %v3325 = vpop.permute.xlu0 %3324
      %v3326 = vsel %vm707, %v702, %v3323
      %v3327 = vsel %vm707, %v3323, %v3325
      %3330 = vrot.lane.b32.xlu0 %v3304, 112
      %v3331 = vpop.permute.xlu0 %3330
      %3332 = vrot.lane.b32.xlu0 %v3305, 112
      %v3333 = vpop.permute.xlu0 %3332
      %v3334 = vsel %vm719, %v714, %v3331
      %v3335 = vsel %vm719, %v3331, %v3333
      %3336 = vrot.lane.b32.xlu0 %v3298, 111
      %v3337 = vpop.permute.xlu0 %3336
      %3338 = vrot.lane.b32.xlu0 %v3299, 111
      %v3339 = vpop.permute.xlu0 %3338
      %v3340 = vsel %vm617, %v3337, %v3339
      %3343 = vrot.lane.b32.xlu0 %v3306, 110
      %v3344 = vpop.permute.xlu0 %3343
      %3345 = vrot.lane.b32.xlu0 %v3307, 110
      %v3346 = vpop.permute.xlu0 %3345
      %v3347 = vsel %vm736, %v3344, %v3346
      %v3348 = vsel %vm736, %v3346, %v735
      %3351 = vrot.lane.b32.xlu0 %v3308, 96
      %v3352 = vpop.permute.xlu0 %3351
      %3353 = vrot.lane.b32.xlu0 %v3309, 96
      %v3354 = vpop.permute.xlu0 %3353
      %v3355 = vsel %vm748, %v3352, %v3354
      %v3356 = vsel %vm748, %v3354, %v747
      %3357 = vrot.lane.b32.xlu0 %v3298, 95
      %v3358 = vpop.permute.xlu0 %3357
      %3359 = vrot.lane.b32.xlu0 %v3299, 95
      %v3360 = vpop.permute.xlu0 %3359
      %v3361 = vsel %vm757, %v3358, %v3360
      %v3362 = vsel %vm757, %v3360, %v756
      %3365 = vrot.lane.b32.xlu0 %v3310, 94
      %v3366 = vpop.permute.xlu0 %3365
      %3367 = vrot.lane.b32.xlu0 %v3311, 94
      %v3368 = vpop.permute.xlu0 %3367
      %v3369 = vsel %vm769, %v3366, %v3368
      %v3370 = vsel %vm769, %v3368, %v768
      %s3371 = scalar_lea.vmem %s6, 64
      %v3372 = vld [vmem:[%s3371] sm:$0xff]
      %s3373 = scalar_lea.vmem %s7, 64
      %v3374 = vld [vmem:[%s3373] sm:$0xff]
      %3376 = vset.pattern.permute.xlu0 0
      %3377 = vperm.xlu0 %3376, %v3374
      %v3378 = vpop.permute.xlu0 %3377
      %3382 = vrot.lane.b32.xlu0 %v3300, 17
      %v3383 = vpop.permute.xlu0 %3382
      %3384 = vrot.lane.b32.xlu0 %v3301, 17
      %v3385 = vpop.permute.xlu0 %3384
      %3386 = vrot.lane.b32.xlu0 %v3318, 17
      %v3387 = vpop.permute.xlu0 %3386
      %3388 = vrot.lane.b32.xlu0 %v3319, 17
      %v3389 = vpop.permute.xlu0 %3388
      %3390 = vrot.lane.b32.xlu0 %v3317, 17
      %v3391 = vpop.permute.xlu0 %3390
      %3392 = vrot.lane.b32.xlu0 %v3326, 17
      %v3393 = vpop.permute.xlu0 %3392
      %3394 = vrot.lane.b32.xlu0 %v3327, 17
      %v3395 = vpop.permute.xlu0 %3394
      %3396 = vrot.lane.b32.xlu0 %v3325, 17
      %v3397 = vpop.permute.xlu0 %3396
      %3398 = vrot.lane.b32.xlu0 %v3334, 17
      %v3399 = vpop.permute.xlu0 %3398
      %3400 = vrot.lane.b32.xlu0 %v3335, 17
      %v3401 = vpop.permute.xlu0 %3400
      %3402 = vrot.lane.b32.xlu0 %v3333, 17
      %v3403 = vpop.permute.xlu0 %3402
      %3404 = vrot.lane.b32.xlu0 %v3337, 17
      %v3405 = vpop.permute.xlu0 %3404
      %3406 = vrot.lane.b32.xlu0 %v3340, 17
      %v3407 = vpop.permute.xlu0 %3406
      %3408 = vrot.lane.b32.xlu0 %v3339, 17
      %v3409 = vpop.permute.xlu0 %3408
      %3410 = vrot.lane.b32.xlu0 %v3344, 17
      %v3411 = vpop.permute.xlu0 %3410
      %3412 = vrot.lane.b32.xlu0 %v3347, 17
      %v3413 = vpop.permute.xlu0 %3412
      %3414 = vrot.lane.b32.xlu0 %v3348, 17
      %v3415 = vpop.permute.xlu0 %3414
      %3416 = vrot.lane.b32.xlu0 %v3352, 17
      %v3417 = vpop.permute.xlu0 %3416
      %3418 = vrot.lane.b32.xlu0 %v3355, 17
      %v3419 = vpop.permute.xlu0 %3418
      %3420 = vrot.lane.b32.xlu0 %v3356, 17
      %v3421 = vpop.permute.xlu0 %3420
      %3422 = vrot.lane.b32.xlu0 %v3358, 17
      %v3423 = vpop.permute.xlu0 %3422
      %3424 = vrot.lane.b32.xlu0 %v3361, 17
      %v3425 = vpop.permute.xlu0 %3424
      %3426 = vrot.lane.b32.xlu0 %v3362, 17
      %v3427 = vpop.permute.xlu0 %3426
      %3428 = vrot.lane.b32.xlu0 %v3366, 17
      %v3429 = vpop.permute.xlu0 %3428
      %3430 = vrot.lane.b32.xlu0 %v3369, 17
      %v3431 = vpop.permute.xlu0 %3430
      %3432 = vrot.lane.b32.xlu0 %v3370, 17
      %v3433 = vpop.permute.xlu0 %3432
      %v3434 = vsel %vm679, %v783, %v3383
      %v3435 = vsel %vm679, %v3383, %v3385
      %v3436 = vsel %vm679, %v3387, %v3389
      %v3437 = vsel %vm679, %v3389, %v3391
      %v3438 = vsel %vm679, %v3393, %v3395
      %v3439 = vsel %vm679, %v3395, %v3397
      %v3440 = vsel %vm679, %v3399, %v3401
      %v3441 = vsel %vm679, %v3401, %v3403
      %v3442 = vsel %vm679, %v3405, %v3407
      %v3443 = vsel %vm679, %v3407, %v3409
      %v3444 = vsel %vm679, %v3411, %v3413
      %v3445 = vsel %vm679, %v3413, %v3415
      %v3446 = vsel %vm679, %v3417, %v3419
      %v3447 = vsel %vm679, %v3419, %v3421
      %v3448 = vsel %vm679, %v3423, %v3425
      %v3449 = vsel %vm679, %v3425, %v3427
      %v3450 = vsel %vm679, %v3429, %v3431
      %v3451 = vsel %vm679, %v3431, %v3433
      %v3471 = vsel %vm872, %v3372, 0
      %3473 = vmatprep.subr.mxu0 %v3435
      %3474 = vmatpush1.msra.mxu0 %v3434
      %3475 = vmatprep.subr.mxu0 %v3437
      %3476 = vmatpush1.msra.mxu0 %v3436
      %3477 = vmatprep.subr.mxu0 %v3439
      %3478 = vmatpush1.msra.mxu0 %v3438
      %3479 = vmatprep.subr.mxu0 %v3441
      %3480 = vmatpush1.msra.mxu0 %v3440
      %3481 = vmatprep.subr.mxu0 %v3443
      %3482 = vmatpush1.msra.mxu0 %v3442
      %3483 = vmatprep.subr.mxu0 %v3445
      %3484 = vmatpush1.msra.mxu0 %v3444
      %3485 = vmatprep.subr.mxu0 %v3447
      %3486 = vmatpush1.msra.mxu0 %v3446
      %3487 = vmatprep.subr.mxu0 %v3449
      %3488 = vmatpush1.msra.mxu0 %v3448
      %3489 = vmatprep.subr.mxu0 %v3451
      %3490 = vmatpush1.msra.mxu0 %v3450
      %3491 = vmatprep.subr.mxu0 0.0
      %3492 = vmatpush1.msra.mxu0 0.0
      %3493 = vmatprep.subr.mxu0 0.0
      %3494 = vmatpush1.msra.mxu0 0.0
      %3495 = vmatprep.subr.mxu0 0.0
      %3496 = vmatpush1.msra.mxu0 0.0
      %3497 = vmatprep.subr.mxu0 0.0
      %3498 = vmatpush1.msra.mxu0 0.0
      %3499 = vmatprep.subr.mxu0 0.0
      %3500 = vmatpush1.msra.mxu0 0.0
      %3501 = vmatprep.subr.mxu0 0.0
      %3502 = vmatpush1.msra.mxu0 0.0
      %3503 = vmatprep.subr.mxu0 0.0
      %3504 = vmatpush1.msra.mxu0 0.0
      %3505 = vmatprep.subr.mxu0 0.0
      %3506 = vmatpush1.msra.mxu0 0.0
      %3507 = vmatprep.subr.mxu0 0.0
      %3508 = vmatpush1.msra.mxu0 0.0
      %3509 = vmatprep.subr.mxu0 0.0
      %3510 = vmatpush1.msra.mxu0 0.0
      %3511 = vmatprep.subr.mxu0 0.0
      %3512 = vmatpush1.msra.mxu0 0.0
      %3513 = vmatprep.subr.mxu0 0.0
      %3514 = vmatpush1.msra.mxu0 0.0
      %3515 = vmatprep.subr.mxu0 0.0
      %3516 = vmatpush1.msra.mxu0 0.0
      %3517 = vmatprep.subr.mxu0 0.0
      %3518 = vmatpush1.msra.mxu0 0.0
      %3519 = vmatprep.subr.mxu0 0.0
      %3520 = vmatpush1.msra.mxu0 0.0
      %3521 = vmatprep.subr.mxu0 0.0
      %3522 = vmatpush1.msra.mxu0 0.0
      %3523 = vmatprep.subr.mxu0 0.0
      %3524 = vmatpush1.msra.mxu0 0.0
      %3525 = vmatprep.subr.mxu0 0.0
      %3526 = vmatpush1.msra.mxu0 0.0
      %3527 = vmatprep.subr.mxu0 0.0
      %3528 = vmatpush1.msra.mxu0 0.0
      %3529 = vmatprep.subr.mxu0 0.0
      %3530 = vmatpush1.msra.mxu0 0.0
      %3531 = vmatprep.subr.mxu0 0.0
      %3532 = vmatpush1.msra.mxu0 0.0
      %3533 = vmatprep.subr.mxu0 0.0
      %3534 = vmatpush1.msra.mxu0 0.0
      %3535 = vmatprep.subr.mxu0 0.0
      %3536 = vmatpush1.msra.mxu0 0.0
      %3537 = vmatprep.mubr.f32.mxu0 0.0
      %3538 = vmatmul.mubr.f32.gmra.mrb[0].mxu0 %v3471
      %v3539 = vpop.f32.mrb[0].mxu0
      %v3540 = vadd.f32 %v3378, %v3539
      %v3541 = vpop.f32.mrb[0].mxu0
      %v3542 = vadd.f32 %v3378, %v3541
      %3543 = vdwg.mxu0
      %s3544 = scalar_lea.vmem %s367, 72
      %v3545 = vld [vmem:[%s3544] sm:$0xff]
      %v3546 = vadd.f32 %v3240, %v3241
      %3547 = vadd.xlane.f32.xlu0 %v3546
      %v3548 = vpop.xlane.xlu0 %3547
      %v3549 = vmul.f32 %v3548, %v544
      %v3550 = vsub.f32 %v3240, %v3549
      %v3551 = vsub.f32 %v3241, %v3549
      %v3552 = vmul.f32 %v3550, %v3550
      %v3553 = vmul.f32 %v3551, %v3551
      %v3554 = vadd.f32 %v3552, %v3553
      %3555 = vadd.xlane.f32.xlu0 %v3554
      %v3556 = vpop.xlane.xlu0 %3555
      %v3557 = vmul.f32 %v3556, 0.003921569
      %v3558 = vadd.f32 %v3557, 1e-05
      %v3559 = vrsqrt.pop %v3558
      %v3560 = vmul.f32 %v3550, %v3559
      %v3561 = vmul.f32 %v3551, %v3559
      %3563 = vset.pattern.permute.xlu0 0
      %3564 = vperm.xlu0 %3563, %v3545
      %v3565 = vpop.permute.xlu0 %3564
      %v3567 = vmul.f32 %v3565, %v3560
      %v3568 = vmul.f32 %v3565, %v3561
      %3569 = vset.pattern.permute.xlu0 1
      %3570 = vperm.xlu0 %3569, %v3545
      %v3571 = vpop.permute.xlu0 %3570
      %v3573 = vadd.f32 %v3567, %v3571
      %v3574 = vadd.f32 %v3568, %v3571
      %v3575 = vrot.slane %v3549, 4
      %v3576 = vadd.f32 %v3549, %v3575
      %v3577 = vrot.slane %v3576, 2
      %v3578 = vadd.f32 %v3576, %v3577
      %v3579 = vrot.slane %v3578, 1
      %v3580 = vadd.f32 %v3578, %v3579
      %v3581 = vmul.f32 %v3580, %v577
      %v3582 = vsub.f32 %v3549, %v3581
      %v3583 = vmul.f32 %v3582, %v3582
      %v3584 = vrot.slane %v3583, 4
      %v3585 = vadd.f32 %v3583, %v3584
      %v3586 = vrot.slane %v3585, 2
      %v3587 = vadd.f32 %v3585, %v3586
      %v3588 = vrot.slane %v3587, 1
      %v3589 = vadd.f32 %v3587, %v3588
      %v3590 = vmul.f32 %v3589, 0.14285715
      %v3591 = vmul.f32 %v3545, %v3582
      %v3592 = vadd.f32 %v3590, 1e-05
      %v3593 = vrsqrt.pop %v3592
      %v3594 = vmul.f32 %v3591, %v3593
      %3596 = vset.pattern.permute.xlu0 2
      %3597 = vperm.xlu0 %3596, %v3594
      %v3598 = vpop.permute.xlu0 %3597
      %v3600 = vadd.f32 %v3573, %v3598
      %v3601 = vadd.f32 %v3574, %v3598
      %v3602 = vmul.f32 %v3600, %v618
      %v3603 = vmul.f32 %v3601, %v616
      %v3604 = vmul.f32 %v3600, %v632
      %v3605 = vmul.f32 %v3601, %v630
      %v3606 = vmul.f32 %v3600, %v644
      %v3607 = vmul.f32 %v3601, %v642
      %v3608 = vmul.f32 %v3600, %v652
      %v3609 = vmul.f32 %v3601, %v656
      %v3610 = vmul.f32 %v3600, %v664
      %v3611 = vmul.f32 %v3601, %v668
      %v3612 = vmul.f32 %v3600, %v676
      %v3613 = vmul.f32 %v3601, %v680
      %3616 = vrot.lane.b32.xlu0 %v3600, 127
      %v3617 = vpop.permute.xlu0 %3616
      %3618 = vrot.lane.b32.xlu0 %v3601, 127
      %v3619 = vpop.permute.xlu0 %3618
      %v3620 = vsel %vm643, %v691, %v3617
      %v3621 = vsel %vm643, %v3617, %v3619
      %3624 = vrot.lane.b32.xlu0 %v3604, 126
      %v3625 = vpop.permute.xlu0 %3624
      %3626 = vrot.lane.b32.xlu0 %v3605, 126
      %v3627 = vpop.permute.xlu0 %3626
      %v3628 = vsel %vm707, %v702, %v3625
      %v3629 = vsel %vm707, %v3625, %v3627
      %3632 = vrot.lane.b32.xlu0 %v3606, 112
      %v3633 = vpop.permute.xlu0 %3632
      %3634 = vrot.lane.b32.xlu0 %v3607, 112
      %v3635 = vpop.permute.xlu0 %3634
      %v3636 = vsel %vm719, %v714, %v3633
      %v3637 = vsel %vm719, %v3633, %v3635
      %3638 = vrot.lane.b32.xlu0 %v3600, 111
      %v3639 = vpop.permute.xlu0 %3638
      %3640 = vrot.lane.b32.xlu0 %v3601, 111
      %v3641 = vpop.permute.xlu0 %3640
      %v3642 = vsel %vm617, %v3639, %v3641
      %3645 = vrot.lane.b32.xlu0 %v3608, 110
      %v3646 = vpop.permute.xlu0 %3645
      %3647 = vrot.lane.b32.xlu0 %v3609, 110
      %v3648 = vpop.permute.xlu0 %3647
      %v3649 = vsel %vm736, %v3646, %v3648
      %v3650 = vsel %vm736, %v3648, %v735
      %3653 = vrot.lane.b32.xlu0 %v3610, 96
      %v3654 = vpop.permute.xlu0 %3653
      %3655 = vrot.lane.b32.xlu0 %v3611, 96
      %v3656 = vpop.permute.xlu0 %3655
      %v3657 = vsel %vm748, %v3654, %v3656
      %v3658 = vsel %vm748, %v3656, %v747
      %3659 = vrot.lane.b32.xlu0 %v3600, 95
      %v3660 = vpop.permute.xlu0 %3659
      %3661 = vrot.lane.b32.xlu0 %v3601, 95
      %v3662 = vpop.permute.xlu0 %3661
      %v3663 = vsel %vm757, %v3660, %v3662
      %v3664 = vsel %vm757, %v3662, %v756
      %3667 = vrot.lane.b32.xlu0 %v3612, 94
      %v3668 = vpop.permute.xlu0 %3667
      %3669 = vrot.lane.b32.xlu0 %v3613, 94
      %v3670 = vpop.permute.xlu0 %3669
      %v3671 = vsel %vm769, %v3668, %v3670
      %v3672 = vsel %vm769, %v3670, %v768
      %s3673 = scalar_lea.vmem %s6, 72
      %v3674 = vld [vmem:[%s3673] sm:$0xff]
      %s3675 = scalar_lea.vmem %s7, 72
      %v3676 = vld [vmem:[%s3675] sm:$0xff]
      %3678 = vset.pattern.permute.xlu0 0
      %3679 = vperm.xlu0 %3678, %v3676
      %v3680 = vpop.permute.xlu0 %3679
      %3684 = vrot.lane.b32.xlu0 %v3602, 17
      %v3685 = vpop.permute.xlu0 %3684
      %3686 = vrot.lane.b32.xlu0 %v3603, 17
      %v3687 = vpop.permute.xlu0 %3686
      %3688 = vrot.lane.b32.xlu0 %v3620, 17
      %v3689 = vpop.permute.xlu0 %3688
      %3690 = vrot.lane.b32.xlu0 %v3621, 17
      %v3691 = vpop.permute.xlu0 %3690
      %3692 = vrot.lane.b32.xlu0 %v3619, 17
      %v3693 = vpop.permute.xlu0 %3692
      %3694 = vrot.lane.b32.xlu0 %v3628, 17
      %v3695 = vpop.permute.xlu0 %3694
      %3696 = vrot.lane.b32.xlu0 %v3629, 17
      %v3697 = vpop.permute.xlu0 %3696
      %3698 = vrot.lane.b32.xlu0 %v3627, 17
      %v3699 = vpop.permute.xlu0 %3698
      %3700 = vrot.lane.b32.xlu0 %v3636, 17
      %v3701 = vpop.permute.xlu0 %3700
      %3702 = vrot.lane.b32.xlu0 %v3637, 17
      %v3703 = vpop.permute.xlu0 %3702
      %3704 = vrot.lane.b32.xlu0 %v3635, 17
      %v3705 = vpop.permute.xlu0 %3704
      %3706 = vrot.lane.b32.xlu0 %v3639, 17
      %v3707 = vpop.permute.xlu0 %3706
      %3708 = vrot.lane.b32.xlu0 %v3642, 17
      %v3709 = vpop.permute.xlu0 %3708
      %3710 = vrot.lane.b32.xlu0 %v3641, 17
      %v3711 = vpop.permute.xlu0 %3710
      %3712 = vrot.lane.b32.xlu0 %v3646, 17
      %v3713 = vpop.permute.xlu0 %3712
      %3714 = vrot.lane.b32.xlu0 %v3649, 17
      %v3715 = vpop.permute.xlu0 %3714
      %3716 = vrot.lane.b32.xlu0 %v3650, 17
      %v3717 = vpop.permute.xlu0 %3716
      %3718 = vrot.lane.b32.xlu0 %v3654, 17
      %v3719 = vpop.permute.xlu0 %3718
      %3720 = vrot.lane.b32.xlu0 %v3657, 17
      %v3721 = vpop.permute.xlu0 %3720
      %3722 = vrot.lane.b32.xlu0 %v3658, 17
      %v3723 = vpop.permute.xlu0 %3722
      %3724 = vrot.lane.b32.xlu0 %v3660, 17
      %v3725 = vpop.permute.xlu0 %3724
      %3726 = vrot.lane.b32.xlu0 %v3663, 17
      %v3727 = vpop.permute.xlu0 %3726
      %3728 = vrot.lane.b32.xlu0 %v3664, 17
      %v3729 = vpop.permute.xlu0 %3728
      %3730 = vrot.lane.b32.xlu0 %v3668, 17
      %v3731 = vpop.permute.xlu0 %3730
      %3732 = vrot.lane.b32.xlu0 %v3671, 17
      %v3733 = vpop.permute.xlu0 %3732
      %3734 = vrot.lane.b32.xlu0 %v3672, 17
      %v3735 = vpop.permute.xlu0 %3734
      %v3736 = vsel %vm679, %v783, %v3685
      %v3737 = vsel %vm679, %v3685, %v3687
      %v3738 = vsel %vm679, %v3689, %v3691
      %v3739 = vsel %vm679, %v3691, %v3693
      %v3740 = vsel %vm679, %v3695, %v3697
      %v3741 = vsel %vm679, %v3697, %v3699
      %v3742 = vsel %vm679, %v3701, %v3703
      %v3743 = vsel %vm679, %v3703, %v3705
      %v3744 = vsel %vm679, %v3707, %v3709
      %v3745 = vsel %vm679, %v3709, %v3711
      %v3746 = vsel %vm679, %v3713, %v3715
      %v3747 = vsel %vm679, %v3715, %v3717
      %v3748 = vsel %vm679, %v3719, %v3721
      %v3749 = vsel %vm679, %v3721, %v3723
      %v3750 = vsel %vm679, %v3725, %v3727
      %v3751 = vsel %vm679, %v3727, %v3729
      %v3752 = vsel %vm679, %v3731, %v3733
      %v3753 = vsel %vm679, %v3733, %v3735
      %v3773 = vsel %vm872, %v3674, 0
      %3775 = vmatprep.subr.mxu0 %v3737
      %3776 = vmatpush1.msra.mxu0 %v3736
      %3777 = vmatprep.subr.mxu0 %v3739
      %3778 = vmatpush1.msra.mxu0 %v3738
      %3779 = vmatprep.subr.mxu0 %v3741
      %3780 = vmatpush1.msra.mxu0 %v3740
      %3781 = vmatprep.subr.mxu0 %v3743
      %3782 = vmatpush1.msra.mxu0 %v3742
      %3783 = vmatprep.subr.mxu0 %v3745
      %3784 = vmatpush1.msra.mxu0 %v3744
      %3785 = vmatprep.subr.mxu0 %v3747
      %3786 = vmatpush1.msra.mxu0 %v3746
      %3787 = vmatprep.subr.mxu0 %v3749
      %3788 = vmatpush1.msra.mxu0 %v3748
      %3789 = vmatprep.subr.mxu0 %v3751
      %3790 = vmatpush1.msra.mxu0 %v3750
      %3791 = vmatprep.subr.mxu0 %v3753
      %3792 = vmatpush1.msra.mxu0 %v3752
      %3793 = vmatprep.subr.mxu0 0.0
      %3794 = vmatpush1.msra.mxu0 0.0
      %3795 = vmatprep.subr.mxu0 0.0
      %3796 = vmatpush1.msra.mxu0 0.0
      %3797 = vmatprep.subr.mxu0 0.0
      %3798 = vmatpush1.msra.mxu0 0.0
      %3799 = vmatprep.subr.mxu0 0.0
      %3800 = vmatpush1.msra.mxu0 0.0
      %3801 = vmatprep.subr.mxu0 0.0
      %3802 = vmatpush1.msra.mxu0 0.0
      %3803 = vmatprep.subr.mxu0 0.0
      %3804 = vmatpush1.msra.mxu0 0.0
      %3805 = vmatprep.subr.mxu0 0.0
      %3806 = vmatpush1.msra.mxu0 0.0
      %3807 = vmatprep.subr.mxu0 0.0
      %3808 = vmatpush1.msra.mxu0 0.0
      %3809 = vmatprep.subr.mxu0 0.0
      %3810 = vmatpush1.msra.mxu0 0.0
      %3811 = vmatprep.subr.mxu0 0.0
      %3812 = vmatpush1.msra.mxu0 0.0
      %3813 = vmatprep.subr.mxu0 0.0
      %3814 = vmatpush1.msra.mxu0 0.0
      %3815 = vmatprep.subr.mxu0 0.0
      %3816 = vmatpush1.msra.mxu0 0.0
      %3817 = vmatprep.subr.mxu0 0.0
      %3818 = vmatpush1.msra.mxu0 0.0
      %3819 = vmatprep.subr.mxu0 0.0
      %3820 = vmatpush1.msra.mxu0 0.0
      %3821 = vmatprep.subr.mxu0 0.0
      %3822 = vmatpush1.msra.mxu0 0.0
      %3823 = vmatprep.subr.mxu0 0.0
      %3824 = vmatpush1.msra.mxu0 0.0
      %3825 = vmatprep.subr.mxu0 0.0
      %3826 = vmatpush1.msra.mxu0 0.0
      %3827 = vmatprep.subr.mxu0 0.0
      %3828 = vmatpush1.msra.mxu0 0.0
      %3829 = vmatprep.subr.mxu0 0.0
      %3830 = vmatpush1.msra.mxu0 0.0
      %3831 = vmatprep.subr.mxu0 0.0
      %3832 = vmatpush1.msra.mxu0 0.0
      %3833 = vmatprep.subr.mxu0 0.0
      %3834 = vmatpush1.msra.mxu0 0.0
      %3835 = vmatprep.subr.mxu0 0.0
      %3836 = vmatpush1.msra.mxu0 0.0
      %3837 = vmatprep.subr.mxu0 0.0
      %3838 = vmatpush1.msra.mxu0 0.0
      %3839 = vmatprep.mubr.f32.mxu0 0.0
      %3840 = vmatmul.mubr.f32.gmra.mrb[0].mxu0 %v3773
      %v3841 = vpop.f32.mrb[0].mxu0
      %v3842 = vadd.f32 %v3680, %v3841
      %v3843 = vpop.f32.mrb[0].mxu0
      %v3844 = vadd.f32 %v3680, %v3843
      %3845 = vdwg.mxu0
      %v3846 = vadd.f32 %v3540, %v3842
      %v3847 = vadd.f32 %v3542, %v3844
      %vm3848 = vcmp.gt.f32.partialorder %v3846, 0.0
      %vm3849 = vcmp.gt.f32.partialorder %v3847, 0.0
      %v3850 = vmin.f32 %v3846, 0.0
      %v3851 = vmin.f32 %v3847, 0.0
      %v3852 = vmul.f32 %v3850, 1.442695
      %v3853 = vpow.pop %v3852
      %v3854 = vmul.f32 %v3851, 1.442695
      %v3855 = vpow.pop %v3854
      %v3856 = vsub.f32 %v3853, 1.0
      %v3857 = vsub.f32 %v3855, 1.0
      %v3858 = vsel %vm3848, %v3846, %v3856
      %v3859 = vsel %vm3849, %v3847, %v3857
      %s3860 = scalar_lea.vmem %s367, 80
      %v3861 = vld [vmem:[%s3860] sm:$0xff]
      %v3862 = vadd.f32 %v3858, %v3859
      %3863 = vadd.xlane.f32.xlu0 %v3862
      %v3864 = vpop.xlane.xlu0 %3863
      %v3865 = vmul.f32 %v3864, %v544
      %v3866 = vsub.f32 %v3858, %v3865
      %v3867 = vsub.f32 %v3859, %v3865
      %v3868 = vmul.f32 %v3866, %v3866
      %v3869 = vmul.f32 %v3867, %v3867
      %v3870 = vadd.f32 %v3868, %v3869
      %3871 = vadd.xlane.f32.xlu0 %v3870
      %v3872 = vpop.xlane.xlu0 %3871
      %v3873 = vmul.f32 %v3872, 0.003921569
      %v3874 = vadd.f32 %v3873, 1e-05
      %v3875 = vrsqrt.pop %v3874
      %v3876 = vmul.f32 %v3866, %v3875
      %v3877 = vmul.f32 %v3867, %v3875
      %3879 = vset.pattern.permute.xlu0 0
      %3880 = vperm.xlu0 %3879, %v3861
      %v3881 = vpop.permute.xlu0 %3880
      %v3883 = vmul.f32 %v3881, %v3876
      %v3884 = vmul.f32 %v3881, %v3877
      %3885 = vset.pattern.permute.xlu0 1
      %3886 = vperm.xlu0 %3885, %v3861
      %v3887 = vpop.permute.xlu0 %3886
      %v3889 = vadd.f32 %v3883, %v3887
      %v3890 = vadd.f32 %v3884, %v3887
      %v3891 = vrot.slane %v3865, 4
      %v3892 = vadd.f32 %v3865, %v3891
      %v3893 = vrot.slane %v3892, 2
      %v3894 = vadd.f32 %v3892, %v3893
      %v3895 = vrot.slane %v3894, 1
      %v3896 = vadd.f32 %v3894, %v3895
      %v3897 = vmul.f32 %v3896, %v577
      %v3898 = vsub.f32 %v3865, %v3897
      %v3899 = vmul.f32 %v3898, %v3898
      %v3900 = vrot.slane %v3899, 4
      %v3901 = vadd.f32 %v3899, %v3900
      %v3902 = vrot.slane %v3901, 2
      %v3903 = vadd.f32 %v3901, %v3902
      %v3904 = vrot.slane %v3903, 1
      %v3905 = vadd.f32 %v3903, %v3904
      %v3906 = vmul.f32 %v3905, 0.14285715
      %v3907 = vmul.f32 %v3861, %v3898
      %v3908 = vadd.f32 %v3906, 1e-05
      %v3909 = vrsqrt.pop %v3908
      %v3910 = vmul.f32 %v3907, %v3909
      %3912 = vset.pattern.permute.xlu0 2
      %3913 = vperm.xlu0 %3912, %v3910
      %v3914 = vpop.permute.xlu0 %3913
      %v3916 = vadd.f32 %v3889, %v3914
      %v3917 = vadd.f32 %v3890, %v3914
      %3920 = vrot.lane.b32.xlu0 %v410, 126
      %v3921 = vpop.permute.xlu0 %3920
      %3922 = vrot.lane.b32.xlu0 %v411, 126
      %v3923 = vpop.permute.xlu0 %3922
      %v3924 = vsel %vm707, %v3921, %v3923
      %v3928 = vmul.f32 %v3921, 0.0
      %v3929 = vmul.f32 %v3916, %v3924
      %v3930 = vmul.f32 %v3917, %v3923
      %3934 = vrot.lane.b32.xlu0 %v3928, 2
      %v3935 = vpop.permute.xlu0 %3934
      %3936 = vrot.lane.b32.xlu0 %v3929, 2
      %v3937 = vpop.permute.xlu0 %3936
      %3938 = vrot.lane.b32.xlu0 %v3930, 2
      %v3939 = vpop.permute.xlu0 %3938
      %vm3940 = vcmask 15360
      %v3941 = vsel %vm3940, %v3935, %v3937
      %v3942 = vsel %vm3940, %v3937, %v3939
      %v3945 = vadd.f32 %v3916, %v3941
      %v3946 = vadd.f32 %v3917, %v3942
      %v3947 = vmul.f32 %v3916, %v644
      %v3948 = vmul.f32 %v3917, %v642
      %3951 = vrot.lane.b32.xlu0 %v648, 1
      %v3952 = vpop.permute.xlu0 %3951
      %3953 = vrot.lane.b32.xlu0 %v3947, 1
      %v3954 = vpop.permute.xlu0 %3953
      %3955 = vrot.lane.b32.xlu0 %v3948, 1
      %v3956 = vpop.permute.xlu0 %3955
      %v3957 = vsel %vm655, %v3952, %v3954
      %v3958 = vsel %vm655, %v3954, %v3956
      %v3961 = vadd.f32 %v3945, %v3957
      %v3962 = vadd.f32 %v3946, %v3958
      %v3963 = vmul.f32 %v3916, %v652
      %v3964 = vmul.f32 %v3917, %v656
      %3967 = vrot.lane.b32.xlu0 %v3963, 127
      %v3968 = vpop.permute.xlu0 %3967
      %3969 = vrot.lane.b32.xlu0 %v3964, 127
      %v3970 = vpop.permute.xlu0 %3969
      %3971 = vrot.lane.b32.xlu0 %v662, 127
      %v3972 = vpop.permute.xlu0 %3971
      %v3973 = vsel %vm643, %v3968, %v3970
      %v3974 = vsel %vm643, %v3970, %v3972
      %v3977 = vadd.f32 %v3961, %v3973
      %v3978 = vadd.f32 %v3962, %v3974
      %3981 = vrot.lane.b32.xlu0 %v446, 2
      %v3982 = vpop.permute.xlu0 %3981
      %3983 = vrot.lane.b32.xlu0 %v447, 2
      %v3984 = vpop.permute.xlu0 %3983
      %v3985 = vsel %vm3940, %v3982, %v3984
      %v3989 = vmul.f32 %v3916, %v3982
      %v3990 = vmul.f32 %v3917, %v3985
      %v3991 = vmul.f32 %v3984, 0.0
      %3995 = vrot.lane.b32.xlu0 %v3989, 126
      %v3996 = vpop.permute.xlu0 %3995
      %3997 = vrot.lane.b32.xlu0 %v3990, 126
      %v3998 = vpop.permute.xlu0 %3997
      %3999 = vrot.lane.b32.xlu0 %v3991, 126
      %v4000 = vpop.permute.xlu0 %3999
      %v4001 = vsel %vm707, %v3996, %v3998
      %v4002 = vsel %vm707, %v3998, %v4000
      %v4005 = vadd.f32 %v3977, %v4001
      %v4006 = vadd.f32 %v3978, %v4002
      %4009 = vrot.lane.b32.xlu0 0.0, 32
      %v4010 = vpop.permute.xlu0 %4009
      %4011 = vrot.lane.b32.xlu0 %v4005, 32
      %v4012 = vpop.permute.xlu0 %4011
      %4013 = vrot.lane.b32.xlu0 %v4006, 32
      %v4014 = vpop.permute.xlu0 %4013
      %vm4015 = vcmask 261120
      %v4016 = vsel %vm4015, %v4010, %v4012
      %v4017 = vsel %vm4015, %v4012, %v4014
      %v4020 = vadd.f32 %v4005, %v4016
      %v4021 = vadd.f32 %v4006, %v4017
      %4022 = vrot.lane.b32.xlu0 0.0, 16
      %v4023 = vpop.permute.xlu0 %4022
      %4024 = vrot.lane.b32.xlu0 %v4005, 16
      %v4025 = vpop.permute.xlu0 %4024
      %4026 = vrot.lane.b32.xlu0 %v4006, 16
      %v4027 = vpop.permute.xlu0 %4026
      %vm4028 = vcmask 130048
      %v4029 = vsel %vm4028, %v4023, %v4025
      %v4030 = vsel %vm4028, %v4025, %v4027
      %v4033 = vadd.f32 %v4020, %v4029
      %v4034 = vadd.f32 %v4021, %v4030
      %4035 = vrot.lane.b32.xlu0 %v4005, 112
      %v4036 = vpop.permute.xlu0 %4035
      %4037 = vrot.lane.b32.xlu0 %v4006, 112
      %v4038 = vpop.permute.xlu0 %4037
      %4039 = vrot.lane.b32.xlu0 0.0, 112
      %v4040 = vpop.permute.xlu0 %4039
      %v4041 = vsel %vm719, %v4036, %v4038
      %v4042 = vsel %vm719, %v4038, %v4040
      %v4045 = vadd.f32 %v4033, %v4041
      %v4046 = vadd.f32 %v4034, %v4042
      %4047 = vrot.lane.b32.xlu0 %v4005, 96
      %v4048 = vpop.permute.xlu0 %4047
      %4049 = vrot.lane.b32.xlu0 %v4006, 96
      %v4050 = vpop.permute.xlu0 %4049
      %4051 = vrot.lane.b32.xlu0 0.0, 96
      %v4052 = vpop.permute.xlu0 %4051
      %v4053 = vsel %vm748, %v4048, %v4050
      %v4054 = vsel %vm748, %v4050, %v4052
      %v4057 = vadd.f32 %v4045, %v4053
      %v4058 = vadd.f32 %v4046, %v4054
      %v4059 = vmul.f32 %v4057, 0.04
      %v4060 = vmul.f32 %v4058, 0.04
      %s4061 = scalar_lea.vmem %s367, 88
      %v4062 = vld [vmem:[%s4061] sm:$0xff]
      %v4063 = vadd.f32 %v4059, %v4060
      %4064 = vadd.xlane.f32.xlu0 %v4063
      %v4065 = vpop.xlane.xlu0 %4064
      %v4066 = vmul.f32 %v4065, %v544
      %v4067 = vsub.f32 %v4059, %v4066
      %v4068 = vsub.f32 %v4060, %v4066
      %v4069 = vmul.f32 %v4067, %v4067
      %v4070 = vmul.f32 %v4068, %v4068
      %v4071 = vadd.f32 %v4069, %v4070
      %4072 = vadd.xlane.f32.xlu0 %v4071
      %v4073 = vpop.xlane.xlu0 %4072
      %v4074 = vmul.f32 %v4073, 0.003921569
      %v4075 = vadd.f32 %v4074, 1e-05
      %v4076 = vrsqrt.pop %v4075
      %v4077 = vmul.f32 %v4067, %v4076
      %v4078 = vmul.f32 %v4068, %v4076
      %4080 = vset.pattern.permute.xlu0 0
      %4081 = vperm.xlu0 %4080, %v4062
      %v4082 = vpop.permute.xlu0 %4081
      %v4084 = vmul.f32 %v4082, %v4077
      %v4085 = vmul.f32 %v4082, %v4078
      %4086 = vset.pattern.permute.xlu0 1
      %4087 = vperm.xlu0 %4086, %v4062
      %v4088 = vpop.permute.xlu0 %4087
      %v4090 = vadd.f32 %v4084, %v4088
      %v4091 = vadd.f32 %v4085, %v4088
      %v4092 = vrot.slane %v4066, 4
      %v4093 = vadd.f32 %v4066, %v4092
      %v4094 = vrot.slane %v4093, 2
      %v4095 = vadd.f32 %v4093, %v4094
      %v4096 = vrot.slane %v4095, 1
      %v4097 = vadd.f32 %v4095, %v4096
      %v4098 = vmul.f32 %v4097, %v577
      %v4099 = vsub.f32 %v4066, %v4098
      %v4100 = vmul.f32 %v4099, %v4099
      %v4101 = vrot.slane %v4100, 4
      %v4102 = vadd.f32 %v4100, %v4101
      %v4103 = vrot.slane %v4102, 2
      %v4104 = vadd.f32 %v4102, %v4103
      %v4105 = vrot.slane %v4104, 1
      %v4106 = vadd.f32 %v4104, %v4105
      %v4107 = vmul.f32 %v4106, 0.14285715
      %v4108 = vmul.f32 %v4062, %v4099
      %v4109 = vadd.f32 %v4107, 1e-05
      %v4110 = vrsqrt.pop %v4109
      %v4111 = vmul.f32 %v4108, %v4110
      %4113 = vset.pattern.permute.xlu0 2
      %4114 = vperm.xlu0 %4113, %v4111
      %v4115 = vpop.permute.xlu0 %4114
      %v4117 = vadd.f32 %v4090, %v4115
      %v4118 = vadd.f32 %v4091, %v4115
      %v4119 = vmul.f32 %v4117, %v618
      %v4120 = vmul.f32 %v4118, %v616
      %v4121 = vmul.f32 %v4117, %v632
      %v4122 = vmul.f32 %v4118, %v630
      %v4123 = vmul.f32 %v4117, %v644
      %v4124 = vmul.f32 %v4118, %v642
      %v4125 = vmul.f32 %v4117, %v652
      %v4126 = vmul.f32 %v4118, %v656
      %v4127 = vmul.f32 %v4117, %v664
      %v4128 = vmul.f32 %v4118, %v668
      %v4129 = vmul.f32 %v4117, %v676
      %v4130 = vmul.f32 %v4118, %v680
      %4133 = vrot.lane.b32.xlu0 %v4117, 127
      %v4134 = vpop.permute.xlu0 %4133
      %4135 = vrot.lane.b32.xlu0 %v4118, 127
      %v4136 = vpop.permute.xlu0 %4135
      %v4137 = vsel %vm643, %v691, %v4134
      %v4138 = vsel %vm643, %v4134, %v4136
      %4141 = vrot.lane.b32.xlu0 %v4121, 126
      %v4142 = vpop.permute.xlu0 %4141
      %4143 = vrot.lane.b32.xlu0 %v4122, 126
      %v4144 = vpop.permute.xlu0 %4143
      %v4145 = vsel %vm707, %v702, %v4142
      %v4146 = vsel %vm707, %v4142, %v4144
      %4149 = vrot.lane.b32.xlu0 %v4123, 112
      %v4150 = vpop.permute.xlu0 %4149
      %4151 = vrot.lane.b32.xlu0 %v4124, 112
      %v4152 = vpop.permute.xlu0 %4151
      %v4153 = vsel %vm719, %v714, %v4150
      %v4154 = vsel %vm719, %v4150, %v4152
      %4155 = vrot.lane.b32.xlu0 %v4117, 111
      %v4156 = vpop.permute.xlu0 %4155
      %4157 = vrot.lane.b32.xlu0 %v4118, 111
      %v4158 = vpop.permute.xlu0 %4157
      %v4159 = vsel %vm617, %v4156, %v4158
      %4162 = vrot.lane.b32.xlu0 %v4125, 110
      %v4163 = vpop.permute.xlu0 %4162
      %4164 = vrot.lane.b32.xlu0 %v4126, 110
      %v4165 = vpop.permute.xlu0 %4164
      %v4166 = vsel %vm736, %v4163, %v4165
      %v4167 = vsel %vm736, %v4165, %v735
      %4170 = vrot.lane.b32.xlu0 %v4127, 96
      %v4171 = vpop.permute.xlu0 %4170
      %4172 = vrot.lane.b32.xlu0 %v4128, 96
      %v4173 = vpop.permute.xlu0 %4172
      %v4174 = vsel %vm748, %v4171, %v4173
      %v4175 = vsel %vm748, %v4173, %v747
      %4176 = vrot.lane.b32.xlu0 %v4117, 95
      %v4177 = vpop.permute.xlu0 %4176
      %4178 = vrot.lane.b32.xlu0 %v4118, 95
      %v4179 = vpop.permute.xlu0 %4178
      %v4180 = vsel %vm757, %v4177, %v4179
      %v4181 = vsel %vm757, %v4179, %v756
      %4184 = vrot.lane.b32.xlu0 %v4129, 94
      %v4185 = vpop.permute.xlu0 %4184
      %4186 = vrot.lane.b32.xlu0 %v4130, 94
      %v4187 = vpop.permute.xlu0 %4186
      %v4188 = vsel %vm769, %v4185, %v4187
      %v4189 = vsel %vm769, %v4187, %v768
      %s4190 = scalar_lea.vmem %s6, 80
      %v4191 = vld [vmem:[%s4190] sm:$0xff]
      %s4192 = scalar_lea.vmem %s7, 80
      %v4193 = vld [vmem:[%s4192] sm:$0xff]
      %4195 = vset.pattern.permute.xlu0 0
      %4196 = vperm.xlu0 %4195, %v4193
      %v4197 = vpop.permute.xlu0 %4196
      %4201 = vrot.lane.b32.xlu0 %v4119, 17
      %v4202 = vpop.permute.xlu0 %4201
      %4203 = vrot.lane.b32.xlu0 %v4120, 17
      %v4204 = vpop.permute.xlu0 %4203
      %4205 = vrot.lane.b32.xlu0 %v4137, 17
      %v4206 = vpop.permute.xlu0 %4205
      %4207 = vrot.lane.b32.xlu0 %v4138, 17
      %v4208 = vpop.permute.xlu0 %4207
      %4209 = vrot.lane.b32.xlu0 %v4136, 17
      %v4210 = vpop.permute.xlu0 %4209
      %4211 = vrot.lane.b32.xlu0 %v4145, 17
      %v4212 = vpop.permute.xlu0 %4211
      %4213 = vrot.lane.b32.xlu0 %v4146, 17
      %v4214 = vpop.permute.xlu0 %4213
      %4215 = vrot.lane.b32.xlu0 %v4144, 17
      %v4216 = vpop.permute.xlu0 %4215
      %4217 = vrot.lane.b32.xlu0 %v4153, 17
      %v4218 = vpop.permute.xlu0 %4217
      %4219 = vrot.lane.b32.xlu0 %v4154, 17
      %v4220 = vpop.permute.xlu0 %4219
      %4221 = vrot.lane.b32.xlu0 %v4152, 17
      %v4222 = vpop.permute.xlu0 %4221
      %4223 = vrot.lane.b32.xlu0 %v4156, 17
      %v4224 = vpop.permute.xlu0 %4223
      %4225 = vrot.lane.b32.xlu0 %v4159, 17
      %v4226 = vpop.permute.xlu0 %4225
      %4227 = vrot.lane.b32.xlu0 %v4158, 17
      %v4228 = vpop.permute.xlu0 %4227
      %4229 = vrot.lane.b32.xlu0 %v4163, 17
      %v4230 = vpop.permute.xlu0 %4229
      %4231 = vrot.lane.b32.xlu0 %v4166, 17
      %v4232 = vpop.permute.xlu0 %4231
      %4233 = vrot.lane.b32.xlu0 %v4167, 17
      %v4234 = vpop.permute.xlu0 %4233
      %4235 = vrot.lane.b32.xlu0 %v4171, 17
      %v4236 = vpop.permute.xlu0 %4235
      %4237 = vrot.lane.b32.xlu0 %v4174, 17
      %v4238 = vpop.permute.xlu0 %4237
      %4239 = vrot.lane.b32.xlu0 %v4175, 17
      %v4240 = vpop.permute.xlu0 %4239
      %4241 = vrot.lane.b32.xlu0 %v4177, 17
      %v4242 = vpop.permute.xlu0 %4241
      %4243 = vrot.lane.b32.xlu0 %v4180, 17
      %v4244 = vpop.permute.xlu0 %4243
      %4245 = vrot.lane.b32.xlu0 %v4181, 17
      %v4246 = vpop.permute.xlu0 %4245
      %4247 = vrot.lane.b32.xlu0 %v4185, 17
      %v4248 = vpop.permute.xlu0 %4247
      %4249 = vrot.lane.b32.xlu0 %v4188, 17
      %v4250 = vpop.permute.xlu0 %4249
      %4251 = vrot.lane.b32.xlu0 %v4189, 17
      %v4252 = vpop.permute.xlu0 %4251
      %v4253 = vsel %vm679, %v783, %v4202
      %v4254 = vsel %vm679, %v4202, %v4204
      %v4255 = vsel %vm679, %v4206, %v4208
      %v4256 = vsel %vm679, %v4208, %v4210
      %v4257 = vsel %vm679, %v4212, %v4214
      %v4258 = vsel %vm679, %v4214, %v4216
      %v4259 = vsel %vm679, %v4218, %v4220
      %v4260 = vsel %vm679, %v4220, %v4222
      %v4261 = vsel %vm679, %v4224, %v4226
      %v4262 = vsel %vm679, %v4226, %v4228
      %v4263 = vsel %vm679, %v4230, %v4232
      %v4264 = vsel %vm679, %v4232, %v4234
      %v4265 = vsel %vm679, %v4236, %v4238
      %v4266 = vsel %vm679, %v4238, %v4240
      %v4267 = vsel %vm679, %v4242, %v4244
      %v4268 = vsel %vm679, %v4244, %v4246
      %v4269 = vsel %vm679, %v4248, %v4250
      %v4270 = vsel %vm679, %v4250, %v4252
      %v4290 = vsel %vm872, %v4191, 0
      %4292 = vmatprep.subr.mxu0 %v4254
      %4293 = vmatpush1.msra.mxu0 %v4253
      %4294 = vmatprep.subr.mxu0 %v4256
      %4295 = vmatpush1.msra.mxu0 %v4255
      %4296 = vmatprep.subr.mxu0 %v4258
      %4297 = vmatpush1.msra.mxu0 %v4257
      %4298 = vmatprep.subr.mxu0 %v4260
      %4299 = vmatpush1.msra.mxu0 %v4259
      %4300 = vmatprep.subr.mxu0 %v4262
      %4301 = vmatpush1.msra.mxu0 %v4261
      %4302 = vmatprep.subr.mxu0 %v4264
      %4303 = vmatpush1.msra.mxu0 %v4263
      %4304 = vmatprep.subr.mxu0 %v4266
      %4305 = vmatpush1.msra.mxu0 %v4265
      %4306 = vmatprep.subr.mxu0 %v4268
      %4307 = vmatpush1.msra.mxu0 %v4267
      %4308 = vmatprep.subr.mxu0 %v4270
      %4309 = vmatpush1.msra.mxu0 %v4269
      %4310 = vmatprep.subr.mxu0 0.0
      %4311 = vmatpush1.msra.mxu0 0.0
      %4312 = vmatprep.subr.mxu0 0.0
      %4313 = vmatpush1.msra.mxu0 0.0
      %4314 = vmatprep.subr.mxu0 0.0
      %4315 = vmatpush1.msra.mxu0 0.0
      %4316 = vmatprep.subr.mxu0 0.0
      %4317 = vmatpush1.msra.mxu0 0.0
      %4318 = vmatprep.subr.mxu0 0.0
      %4319 = vmatpush1.msra.mxu0 0.0
      %4320 = vmatprep.subr.mxu0 0.0
      %4321 = vmatpush1.msra.mxu0 0.0
      %4322 = vmatprep.subr.mxu0 0.0
      %4323 = vmatpush1.msra.mxu0 0.0
      %4324 = vmatprep.subr.mxu0 0.0
      %4325 = vmatpush1.msra.mxu0 0.0
      %4326 = vmatprep.subr.mxu0 0.0
      %4327 = vmatpush1.msra.mxu0 0.0
      %4328 = vmatprep.subr.mxu0 0.0
      %4329 = vmatpush1.msra.mxu0 0.0
      %4330 = vmatprep.subr.mxu0 0.0
      %4331 = vmatpush1.msra.mxu0 0.0
      %4332 = vmatprep.subr.mxu0 0.0
      %4333 = vmatpush1.msra.mxu0 0.0
      %4334 = vmatprep.subr.mxu0 0.0
      %4335 = vmatpush1.msra.mxu0 0.0
      %4336 = vmatprep.subr.mxu0 0.0
      %4337 = vmatpush1.msra.mxu0 0.0
      %4338 = vmatprep.subr.mxu0 0.0
      %4339 = vmatpush1.msra.mxu0 0.0
      %4340 = vmatprep.subr.mxu0 0.0
      %4341 = vmatpush1.msra.mxu0 0.0
      %4342 = vmatprep.subr.mxu0 0.0
      %4343 = vmatpush1.msra.mxu0 0.0
      %4344 = vmatprep.subr.mxu0 0.0
      %4345 = vmatpush1.msra.mxu0 0.0
      %4346 = vmatprep.subr.mxu0 0.0
      %4347 = vmatpush1.msra.mxu0 0.0
      %4348 = vmatprep.subr.mxu0 0.0
      %4349 = vmatpush1.msra.mxu0 0.0
      %4350 = vmatprep.subr.mxu0 0.0
      %4351 = vmatpush1.msra.mxu0 0.0
      %4352 = vmatprep.subr.mxu0 0.0
      %4353 = vmatpush1.msra.mxu0 0.0
      %4354 = vmatprep.subr.mxu0 0.0
      %4355 = vmatpush1.msra.mxu0 0.0
      %4356 = vmatprep.mubr.f32.mxu0 0.0
      %4357 = vmatmul.mubr.f32.gmra.mrb[0].mxu0 %v4290
      %v4358 = vpop.f32.mrb[0].mxu0
      %v4359 = vadd.f32 %v4197, %v4358
      %v4360 = vpop.f32.mrb[0].mxu0
      %v4361 = vadd.f32 %v4197, %v4360
      %4362 = vdwg.mxu0
      %v4363 = vadd.f32 %v3858, %v4359
      %v4364 = vadd.f32 %v3859, %v4361
      %s4365 = scalar_lea.vmem %s367, 96
      %v4366 = vld [vmem:[%s4365] sm:$0xff]
      %v4367 = vadd.f32 %v4359, %v4361
      %4368 = vadd.xlane.f32.xlu0 %v4367
      %v4369 = vpop.xlane.xlu0 %4368
      %v4370 = vmul.f32 %v4369, %v544
      %v4371 = vsub.f32 %v4359, %v4370
      %v4372 = vsub.f32 %v4361, %v4370
      %v4373 = vmul.f32 %v4371, %v4371
      %v4374 = vmul.f32 %v4372, %v4372
      %v4375 = vadd.f32 %v4373, %v4374
      %4376 = vadd.xlane.f32.xlu0 %v4375
      %v4377 = vpop.xlane.xlu0 %4376
      %v4378 = vmul.f32 %v4377, 0.003921569
      %v4379 = vadd.f32 %v4378, 1e-05
      %v4380 = vrsqrt.pop %v4379
      %v4381 = vmul.f32 %v4371, %v4380
      %v4382 = vmul.f32 %v4372, %v4380
      %4384 = vset.pattern.permute.xlu0 0
      %4385 = vperm.xlu0 %4384, %v4366
      %v4386 = vpop.permute.xlu0 %4385
      %v4388 = vmul.f32 %v4386, %v4381
      %v4389 = vmul.f32 %v4386, %v4382
      %4390 = vset.pattern.permute.xlu0 1
      %4391 = vperm.xlu0 %4390, %v4366
      %v4392 = vpop.permute.xlu0 %4391
      %v4394 = vadd.f32 %v4388, %v4392
      %v4395 = vadd.f32 %v4389, %v4392
      %v4396 = vrot.slane %v4370, 4
      %v4397 = vadd.f32 %v4370, %v4396
      %v4398 = vrot.slane %v4397, 2
      %v4399 = vadd.f32 %v4397, %v4398
      %v4400 = vrot.slane %v4399, 1
      %v4401 = vadd.f32 %v4399, %v4400
      %v4402 = vmul.f32 %v4401, %v577
      %v4403 = vsub.f32 %v4370, %v4402
      %v4404 = vmul.f32 %v4403, %v4403
      %v4405 = vrot.slane %v4404, 4
      %v4406 = vadd.f32 %v4404, %v4405
      %v4407 = vrot.slane %v4406, 2
      %v4408 = vadd.f32 %v4406, %v4407
      %v4409 = vrot.slane %v4408, 1
      %v4410 = vadd.f32 %v4408, %v4409
      %v4411 = vmul.f32 %v4410, 0.14285715
      %v4412 = vmul.f32 %v4366, %v4403
      %v4413 = vadd.f32 %v4411, 1e-05
      %v4414 = vrsqrt.pop %v4413
      %v4415 = vmul.f32 %v4412, %v4414
      %4417 = vset.pattern.permute.xlu0 2
      %4418 = vperm.xlu0 %4417, %v4415
      %v4419 = vpop.permute.xlu0 %4418
      %v4421 = vadd.f32 %v4394, %v4419
      %v4422 = vadd.f32 %v4395, %v4419
      %v4423 = vmul.f32 %v4421, %v3924
      %v4424 = vmul.f32 %v4422, %v3923
      %4427 = vrot.lane.b32.xlu0 %v4423, 2
      %v4428 = vpop.permute.xlu0 %4427
      %4429 = vrot.lane.b32.xlu0 %v4424, 2
      %v4430 = vpop.permute.xlu0 %4429
      %v4431 = vsel %vm3940, %v3935, %v4428
      %v4432 = vsel %vm3940, %v4428, %v4430
      %v4435 = vadd.f32 %v4421, %v4431
      %v4436 = vadd.f32 %v4422, %v4432
      %v4437 = vmul.f32 %v4421, %v644
      %v4438 = vmul.f32 %v4422, %v642
      %4441 = vrot.lane.b32.xlu0 %v4437, 1
      %v4442 = vpop.permute.xlu0 %4441
      %4443 = vrot.lane.b32.xlu0 %v4438, 1
      %v4444 = vpop.permute.xlu0 %4443
      %v4445 = vsel %vm655, %v3952, %v4442
      %v4446 = vsel %vm655, %v4442, %v4444
      %v4449 = vadd.f32 %v4435, %v4445
      %v4450 = vadd.f32 %v4436, %v4446
      %v4451 = vmul.f32 %v4421, %v652
      %v4452 = vmul.f32 %v4422, %v656
      %4455 = vrot.lane.b32.xlu0 %v4451, 127
      %v4456 = vpop.permute.xlu0 %4455
      %4457 = vrot.lane.b32.xlu0 %v4452, 127
      %v4458 = vpop.permute.xlu0 %4457
      %v4459 = vsel %vm643, %v4456, %v4458
      %v4460 = vsel %vm643, %v4458, %v3972
      %v4463 = vadd.f32 %v4449, %v4459
      %v4464 = vadd.f32 %v4450, %v4460
      %v4465 = vmul.f32 %v4421, %v3982
      %v4466 = vmul.f32 %v4422, %v3985
      %4469 = vrot.lane.b32.xlu0 %v4465, 126
      %v4470 = vpop.permute.xlu0 %4469
      %4471 = vrot.lane.b32.xlu0 %v4466, 126
      %v4472 = vpop.permute.xlu0 %4471
      %v4473 = vsel %vm707, %v4470, %v4472
      %v4474 = vsel %vm707, %v4472, %v4000
      %v4477 = vadd.f32 %v4463, %v4473
      %v4478 = vadd.f32 %v4464, %v4474
      %4481 = vrot.lane.b32.xlu0 %v4477, 32
      %v4482 = vpop.permute.xlu0 %4481
      %4483 = vrot.lane.b32.xlu0 %v4478, 32
      %v4484 = vpop.permute.xlu0 %4483
      %v4485 = vsel %vm4015, %v4010, %v4482
      %v4486 = vsel %vm4015, %v4482, %v4484
      %v4489 = vadd.f32 %v4477, %v4485
      %v4490 = vadd.f32 %v4478, %v4486
      %4491 = vrot.lane.b32.xlu0 %v4477, 16
      %v4492 = vpop.permute.xlu0 %4491
      %4493 = vrot.lane.b32.xlu0 %v4478, 16
      %v4494 = vpop.permute.xlu0 %4493
      %v4495 = vsel %vm4028, %v4023, %v4492
      %v4496 = vsel %vm4028, %v4492, %v4494
      %v4499 = vadd.f32 %v4489, %v4495
      %v4500 = vadd.f32 %v4490, %v4496
      %4501 = vrot.lane.b32.xlu0 %v4477, 112
      %v4502 = vpop.permute.xlu0 %4501
      %4503 = vrot.lane.b32.xlu0 %v4478, 112
      %v4504 = vpop.permute.xlu0 %4503
      %v4505 = vsel %vm719, %v4502, %v4504
      %v4506 = vsel %vm719, %v4504, %v4040
      %v4509 = vadd.f32 %v4499, %v4505
      %v4510 = vadd.f32 %v4500, %v4506
      %4511 = vrot.lane.b32.xlu0 %v4477, 96
      %v4512 = vpop.permute.xlu0 %4511
      %4513 = vrot.lane.b32.xlu0 %v4478, 96
      %v4514 = vpop.permute.xlu0 %4513
      %v4515 = vsel %vm748, %v4512, %v4514
      %v4516 = vsel %vm748, %v4514, %v4052
      %v4519 = vadd.f32 %v4509, %v4515
      %v4520 = vadd.f32 %v4510, %v4516
      %v4521 = vmul.f32 %v4519, 0.04
      %v4522 = vmul.f32 %v4520, 0.04
      %s4523 = scalar_lea.vmem %s367, 104
      %v4524 = vld [vmem:[%s4523] sm:$0xff]
      %v4525 = vadd.f32 %v4521, %v4522
      %4526 = vadd.xlane.f32.xlu0 %v4525
      %v4527 = vpop.xlane.xlu0 %4526
      %v4528 = vmul.f32 %v4527, %v544
      %v4529 = vsub.f32 %v4521, %v4528
      %v4530 = vsub.f32 %v4522, %v4528
      %v4531 = vmul.f32 %v4529, %v4529
      %v4532 = vmul.f32 %v4530, %v4530
      %v4533 = vadd.f32 %v4531, %v4532
      %4534 = vadd.xlane.f32.xlu0 %v4533
      %v4535 = vpop.xlane.xlu0 %4534
      %v4536 = vmul.f32 %v4535, 0.003921569
      %v4537 = vadd.f32 %v4536, 1e-05
      %v4538 = vrsqrt.pop %v4537
      %v4539 = vmul.f32 %v4529, %v4538
      %v4540 = vmul.f32 %v4530, %v4538
      %4542 = vset.pattern.permute.xlu0 0
      %4543 = vperm.xlu0 %4542, %v4524
      %v4544 = vpop.permute.xlu0 %4543
      %v4546 = vmul.f32 %v4544, %v4539
      %v4547 = vmul.f32 %v4544, %v4540
      %4548 = vset.pattern.permute.xlu0 1
      %4549 = vperm.xlu0 %4548, %v4524
      %v4550 = vpop.permute.xlu0 %4549
      %v4552 = vadd.f32 %v4546, %v4550
      %v4553 = vadd.f32 %v4547, %v4550
      %v4554 = vrot.slane %v4528, 4
      %v4555 = vadd.f32 %v4528, %v4554
      %v4556 = vrot.slane %v4555, 2
      %v4557 = vadd.f32 %v4555, %v4556
      %v4558 = vrot.slane %v4557, 1
      %v4559 = vadd.f32 %v4557, %v4558
      %v4560 = vmul.f32 %v4559, %v577
      %v4561 = vsub.f32 %v4528, %v4560
      %v4562 = vmul.f32 %v4561, %v4561
      %v4563 = vrot.slane %v4562, 4
      %v4564 = vadd.f32 %v4562, %v4563
      %v4565 = vrot.slane %v4564, 2
      %v4566 = vadd.f32 %v4564, %v4565
      %v4567 = vrot.slane %v4566, 1
      %v4568 = vadd.f32 %v4566, %v4567
      %v4569 = vmul.f32 %v4568, 0.14285715
      %v4570 = vmul.f32 %v4524, %v4561
      %v4571 = vadd.f32 %v4569, 1e-05
      %v4572 = vrsqrt.pop %v4571
      %v4573 = vmul.f32 %v4570, %v4572
      %4575 = vset.pattern.permute.xlu0 2
      %4576 = vperm.xlu0 %4575, %v4573
      %v4577 = vpop.permute.xlu0 %4576
      %v4579 = vadd.f32 %v4552, %v4577
      %v4580 = vadd.f32 %v4553, %v4577
      %v4581 = vmul.f32 %v4579, %v618
      %v4582 = vmul.f32 %v4580, %v616
      %v4583 = vmul.f32 %v4579, %v632
      %v4584 = vmul.f32 %v4580, %v630
      %v4585 = vmul.f32 %v4579, %v644
      %v4586 = vmul.f32 %v4580, %v642
      %v4587 = vmul.f32 %v4579, %v652
      %v4588 = vmul.f32 %v4580, %v656
      %v4589 = vmul.f32 %v4579, %v664
      %v4590 = vmul.f32 %v4580, %v668
      %v4591 = vmul.f32 %v4579, %v676
      %v4592 = vmul.f32 %v4580, %v680
      %4595 = vrot.lane.b32.xlu0 %v4579, 127
      %v4596 = vpop.permute.xlu0 %4595
      %4597 = vrot.lane.b32.xlu0 %v4580, 127
      %v4598 = vpop.permute.xlu0 %4597
      %v4599 = vsel %vm643, %v691, %v4596
      %v4600 = vsel %vm643, %v4596, %v4598
      %4603 = vrot.lane.b32.xlu0 %v4583, 126
      %v4604 = vpop.permute.xlu0 %4603
      %4605 = vrot.lane.b32.xlu0 %v4584, 126
      %v4606 = vpop.permute.xlu0 %4605
      %v4607 = vsel %vm707, %v702, %v4604
      %v4608 = vsel %vm707, %v4604, %v4606
      %4611 = vrot.lane.b32.xlu0 %v4585, 112
      %v4612 = vpop.permute.xlu0 %4611
      %4613 = vrot.lane.b32.xlu0 %v4586, 112
      %v4614 = vpop.permute.xlu0 %4613
      %v4615 = vsel %vm719, %v714, %v4612
      %v4616 = vsel %vm719, %v4612, %v4614
      %4617 = vrot.lane.b32.xlu0 %v4579, 111
      %v4618 = vpop.permute.xlu0 %4617
      %4619 = vrot.lane.b32.xlu0 %v4580, 111
      %v4620 = vpop.permute.xlu0 %4619
      %v4621 = vsel %vm617, %v4618, %v4620
      %4624 = vrot.lane.b32.xlu0 %v4587, 110
      %v4625 = vpop.permute.xlu0 %4624
      %4626 = vrot.lane.b32.xlu0 %v4588, 110
      %v4627 = vpop.permute.xlu0 %4626
      %v4628 = vsel %vm736, %v4625, %v4627
      %v4629 = vsel %vm736, %v4627, %v735
      %4632 = vrot.lane.b32.xlu0 %v4589, 96
      %v4633 = vpop.permute.xlu0 %4632
      %4634 = vrot.lane.b32.xlu0 %v4590, 96
      %v4635 = vpop.permute.xlu0 %4634
      %v4636 = vsel %vm748, %v4633, %v4635
      %v4637 = vsel %vm748, %v4635, %v747
      %4638 = vrot.lane.b32.xlu0 %v4579, 95
      %v4639 = vpop.permute.xlu0 %4638
      %4640 = vrot.lane.b32.xlu0 %v4580, 95
      %v4641 = vpop.permute.xlu0 %4640
      %v4642 = vsel %vm757, %v4639, %v4641
      %v4643 = vsel %vm757, %v4641, %v756
      %4646 = vrot.lane.b32.xlu0 %v4591, 94
      %v4647 = vpop.permute.xlu0 %4646
      %4648 = vrot.lane.b32.xlu0 %v4592, 94
      %v4649 = vpop.permute.xlu0 %4648
      %v4650 = vsel %vm769, %v4647, %v4649
      %v4651 = vsel %vm769, %v4649, %v768
      %s4652 = scalar_lea.vmem %s6, 88
      %v4653 = vld [vmem:[%s4652] sm:$0xff]
      %s4654 = scalar_lea.vmem %s7, 88
      %v4655 = vld [vmem:[%s4654] sm:$0xff]
      %4657 = vset.pattern.permute.xlu0 0
      %4658 = vperm.xlu0 %4657, %v4655
      %v4659 = vpop.permute.xlu0 %4658
      %4663 = vrot.lane.b32.xlu0 %v4581, 17
      %v4664 = vpop.permute.xlu0 %4663
      %4665 = vrot.lane.b32.xlu0 %v4582, 17
      %v4666 = vpop.permute.xlu0 %4665
      %4667 = vrot.lane.b32.xlu0 %v4599, 17
      %v4668 = vpop.permute.xlu0 %4667
      %4669 = vrot.lane.b32.xlu0 %v4600, 17
      %v4670 = vpop.permute.xlu0 %4669
      %4671 = vrot.lane.b32.xlu0 %v4598, 17
      %v4672 = vpop.permute.xlu0 %4671
      %4673 = vrot.lane.b32.xlu0 %v4607, 17
      %v4674 = vpop.permute.xlu0 %4673
      %4675 = vrot.lane.b32.xlu0 %v4608, 17
      %v4676 = vpop.permute.xlu0 %4675
      %4677 = vrot.lane.b32.xlu0 %v4606, 17
      %v4678 = vpop.permute.xlu0 %4677
      %4679 = vrot.lane.b32.xlu0 %v4615, 17
      %v4680 = vpop.permute.xlu0 %4679
      %4681 = vrot.lane.b32.xlu0 %v4616, 17
      %v4682 = vpop.permute.xlu0 %4681
      %4683 = vrot.lane.b32.xlu0 %v4614, 17
      %v4684 = vpop.permute.xlu0 %4683
      %4685 = vrot.lane.b32.xlu0 %v4618, 17
      %v4686 = vpop.permute.xlu0 %4685
      %4687 = vrot.lane.b32.xlu0 %v4621, 17
      %v4688 = vpop.permute.xlu0 %4687
      %4689 = vrot.lane.b32.xlu0 %v4620, 17
      %v4690 = vpop.permute.xlu0 %4689
      %4691 = vrot.lane.b32.xlu0 %v4625, 17
      %v4692 = vpop.permute.xlu0 %4691
      %4693 = vrot.lane.b32.xlu0 %v4628, 17
      %v4694 = vpop.permute.xlu0 %4693
      %4695 = vrot.lane.b32.xlu0 %v4629, 17
      %v4696 = vpop.permute.xlu0 %4695
      %4697 = vrot.lane.b32.xlu0 %v4633, 17
      %v4698 = vpop.permute.xlu0 %4697
      %4699 = vrot.lane.b32.xlu0 %v4636, 17
      %v4700 = vpop.permute.xlu0 %4699
      %4701 = vrot.lane.b32.xlu0 %v4637, 17
      %v4702 = vpop.permute.xlu0 %4701
      %4703 = vrot.lane.b32.xlu0 %v4639, 17
      %v4704 = vpop.permute.xlu0 %4703
      %4705 = vrot.lane.b32.xlu0 %v4642, 17
      %v4706 = vpop.permute.xlu0 %4705
      %4707 = vrot.lane.b32.xlu0 %v4643, 17
      %v4708 = vpop.permute.xlu0 %4707
      %4709 = vrot.lane.b32.xlu0 %v4647, 17
      %v4710 = vpop.permute.xlu0 %4709
      %4711 = vrot.lane.b32.xlu0 %v4650, 17
      %v4712 = vpop.permute.xlu0 %4711
      %4713 = vrot.lane.b32.xlu0 %v4651, 17
      %v4714 = vpop.permute.xlu0 %4713
      %v4715 = vsel %vm679, %v783, %v4664
      %v4716 = vsel %vm679, %v4664, %v4666
      %v4717 = vsel %vm679, %v4668, %v4670
      %v4718 = vsel %vm679, %v4670, %v4672
      %v4719 = vsel %vm679, %v4674, %v4676
      %v4720 = vsel %vm679, %v4676, %v4678
      %v4721 = vsel %vm679, %v4680, %v4682
      %v4722 = vsel %vm679, %v4682, %v4684
      %v4723 = vsel %vm679, %v4686, %v4688
      %v4724 = vsel %vm679, %v4688, %v4690
      %v4725 = vsel %vm679, %v4692, %v4694
      %v4726 = vsel %vm679, %v4694, %v4696
      %v4727 = vsel %vm679, %v4698, %v4700
      %v4728 = vsel %vm679, %v4700, %v4702
      %v4729 = vsel %vm679, %v4704, %v4706
      %v4730 = vsel %vm679, %v4706, %v4708
      %v4731 = vsel %vm679, %v4710, %v4712
      %v4732 = vsel %vm679, %v4712, %v4714
      %v4752 = vsel %vm872, %v4653, 0
      %4754 = vmatprep.subr.mxu0 %v4716
      %4755 = vmatpush1.msra.mxu0 %v4715
      %4756 = vmatprep.subr.mxu0 %v4718
      %4757 = vmatpush1.msra.mxu0 %v4717
      %4758 = vmatprep.subr.mxu0 %v4720
      %4759 = vmatpush1.msra.mxu0 %v4719
      %4760 = vmatprep.subr.mxu0 %v4722
      %4761 = vmatpush1.msra.mxu0 %v4721
      %4762 = vmatprep.subr.mxu0 %v4724
      %4763 = vmatpush1.msra.mxu0 %v4723
      %4764 = vmatprep.subr.mxu0 %v4726
      %4765 = vmatpush1.msra.mxu0 %v4725
      %4766 = vmatprep.subr.mxu0 %v4728
      %4767 = vmatpush1.msra.mxu0 %v4727
      %4768 = vmatprep.subr.mxu0 %v4730
      %4769 = vmatpush1.msra.mxu0 %v4729
      %4770 = vmatprep.subr.mxu0 %v4732
      %4771 = vmatpush1.msra.mxu0 %v4731
      %4772 = vmatprep.subr.mxu0 0.0
      %4773 = vmatpush1.msra.mxu0 0.0
      %4774 = vmatprep.subr.mxu0 0.0
      %4775 = vmatpush1.msra.mxu0 0.0
      %4776 = vmatprep.subr.mxu0 0.0
      %4777 = vmatpush1.msra.mxu0 0.0
      %4778 = vmatprep.subr.mxu0 0.0
      %4779 = vmatpush1.msra.mxu0 0.0
      %4780 = vmatprep.subr.mxu0 0.0
      %4781 = vmatpush1.msra.mxu0 0.0
      %4782 = vmatprep.subr.mxu0 0.0
      %4783 = vmatpush1.msra.mxu0 0.0
      %4784 = vmatprep.subr.mxu0 0.0
      %4785 = vmatpush1.msra.mxu0 0.0
      %4786 = vmatprep.subr.mxu0 0.0
      %4787 = vmatpush1.msra.mxu0 0.0
      %4788 = vmatprep.subr.mxu0 0.0
      %4789 = vmatpush1.msra.mxu0 0.0
      %4790 = vmatprep.subr.mxu0 0.0
      %4791 = vmatpush1.msra.mxu0 0.0
      %4792 = vmatprep.subr.mxu0 0.0
      %4793 = vmatpush1.msra.mxu0 0.0
      %4794 = vmatprep.subr.mxu0 0.0
      %4795 = vmatpush1.msra.mxu0 0.0
      %4796 = vmatprep.subr.mxu0 0.0
      %4797 = vmatpush1.msra.mxu0 0.0
      %4798 = vmatprep.subr.mxu0 0.0
      %4799 = vmatpush1.msra.mxu0 0.0
      %4800 = vmatprep.subr.mxu0 0.0
      %4801 = vmatpush1.msra.mxu0 0.0
      %4802 = vmatprep.subr.mxu0 0.0
      %4803 = vmatpush1.msra.mxu0 0.0
      %4804 = vmatprep.subr.mxu0 0.0
      %4805 = vmatpush1.msra.mxu0 0.0
      %4806 = vmatprep.subr.mxu0 0.0
      %4807 = vmatpush1.msra.mxu0 0.0
      %4808 = vmatprep.subr.mxu0 0.0
      %4809 = vmatpush1.msra.mxu0 0.0
      %4810 = vmatprep.subr.mxu0 0.0
      %4811 = vmatpush1.msra.mxu0 0.0
      %4812 = vmatprep.subr.mxu0 0.0
      %4813 = vmatpush1.msra.mxu0 0.0
      %4814 = vmatprep.subr.mxu0 0.0
      %4815 = vmatpush1.msra.mxu0 0.0
      %4816 = vmatprep.subr.mxu0 0.0
      %4817 = vmatpush1.msra.mxu0 0.0
      %4818 = vmatprep.mubr.f32.mxu0 0.0
      %4819 = vmatmul.mubr.f32.gmra.mrb[0].mxu0 %v4752
      %v4820 = vpop.f32.mrb[0].mxu0
      %v4821 = vadd.f32 %v4659, %v4820
      %v4822 = vpop.f32.mrb[0].mxu0
      %v4823 = vadd.f32 %v4659, %v4822
      %4824 = vdwg.mxu0
      %v4825 = vadd.f32 %v4363, %v4821
      %v4826 = vadd.f32 %v4364, %v4823
      %s4827 = scalar_lea.vmem %s367, 112
      %v4828 = vld [vmem:[%s4827] sm:$0xff]
      %v4829 = vadd.f32 %v4825, %v4826
      %4830 = vadd.xlane.f32.xlu0 %v4829
      %v4831 = vpop.xlane.xlu0 %4830
      %v4832 = vmul.f32 %v4831, %v544
      %v4833 = vsub.f32 %v4825, %v4832
      %v4834 = vsub.f32 %v4826, %v4832
      %v4835 = vmul.f32 %v4833, %v4833
      %v4836 = vmul.f32 %v4834, %v4834
      %v4837 = vadd.f32 %v4835, %v4836
      %4838 = vadd.xlane.f32.xlu0 %v4837
      %v4839 = vpop.xlane.xlu0 %4838
      %v4840 = vmul.f32 %v4839, 0.003921569
      %v4841 = vadd.f32 %v4840, 1e-05
      %v4842 = vrsqrt.pop %v4841
      %v4843 = vmul.f32 %v4833, %v4842
      %v4844 = vmul.f32 %v4834, %v4842
      %4846 = vset.pattern.permute.xlu0 0
      %4847 = vperm.xlu0 %4846, %v4828
      %v4848 = vpop.permute.xlu0 %4847
      %v4850 = vmul.f32 %v4848, %v4843
      %v4851 = vmul.f32 %v4848, %v4844
      %4852 = vset.pattern.permute.xlu0 1
      %4853 = vperm.xlu0 %4852, %v4828
      %v4854 = vpop.permute.xlu0 %4853
      %v4856 = vadd.f32 %v4850, %v4854
      %v4857 = vadd.f32 %v4851, %v4854
      %v4858 = vrot.slane %v4832, 4
      %v4859 = vadd.f32 %v4832, %v4858
      %v4860 = vrot.slane %v4859, 2
      %v4861 = vadd.f32 %v4859, %v4860
      %v4862 = vrot.slane %v4861, 1
      %v4863 = vadd.f32 %v4861, %v4862
      %v4864 = vmul.f32 %v4863, %v577
      %v4865 = vsub.f32 %v4832, %v4864
      %v4866 = vmul.f32 %v4865, %v4865
      %v4867 = vrot.slane %v4866, 4
      %v4868 = vadd.f32 %v4866, %v4867
      %v4869 = vrot.slane %v4868, 2
      %v4870 = vadd.f32 %v4868, %v4869
      %v4871 = vrot.slane %v4870, 1
      %v4872 = vadd.f32 %v4870, %v4871
      %v4873 = vmul.f32 %v4872, 0.14285715
      %v4874 = vmul.f32 %v4828, %v4865
      %v4875 = vadd.f32 %v4873, 1e-05
      %v4876 = vrsqrt.pop %v4875
      %v4877 = vmul.f32 %v4874, %v4876
      %4879 = vset.pattern.permute.xlu0 2
      %4880 = vperm.xlu0 %4879, %v4877
      %v4881 = vpop.permute.xlu0 %4880
      %v4883 = vadd.f32 %v4856, %v4881
      %v4884 = vadd.f32 %v4857, %v4881
      %vm4885 = vcmp.gt.f32.partialorder %v4883, 0.0
      %vm4886 = vcmp.gt.f32.partialorder %v4884, 0.0
      %v4887 = vmin.f32 %v4883, 0.0
      %v4888 = vmin.f32 %v4884, 0.0
      %v4889 = vmul.f32 %v4887, 1.442695
      %v4890 = vpow.pop %v4889
      %v4891 = vmul.f32 %v4888, 1.442695
      %v4892 = vpow.pop %v4891
      %v4893 = vsub.f32 %v4890, 1.0
      %v4894 = vsub.f32 %v4892, 1.0
      %v4895 = vsel %vm4885, %v4883, %v4893
      %v4896 = vsel %vm4886, %v4884, %v4894
      %v4897 = vmul.f32 %v4895, %v618
      %v4898 = vmul.f32 %v4896, %v616
      %v4899 = vmul.f32 %v4895, %v632
      %v4900 = vmul.f32 %v4896, %v630
      %v4901 = vmul.f32 %v4895, %v644
      %v4902 = vmul.f32 %v4896, %v642
      %v4903 = vmul.f32 %v4895, %v652
      %v4904 = vmul.f32 %v4896, %v656
      %v4905 = vmul.f32 %v4895, %v664
      %v4906 = vmul.f32 %v4896, %v668
      %v4907 = vmul.f32 %v4895, %v676
      %v4908 = vmul.f32 %v4896, %v680
      %4911 = vrot.lane.b32.xlu0 %v4895, 127
      %v4912 = vpop.permute.xlu0 %4911
      %4913 = vrot.lane.b32.xlu0 %v4896, 127
      %v4914 = vpop.permute.xlu0 %4913
      %v4915 = vsel %vm643, %v691, %v4912
      %v4916 = vsel %vm643, %v4912, %v4914
      %4919 = vrot.lane.b32.xlu0 %v4899, 126
      %v4920 = vpop.permute.xlu0 %4919
      %4921 = vrot.lane.b32.xlu0 %v4900, 126
      %v4922 = vpop.permute.xlu0 %4921
      %v4923 = vsel %vm707, %v702, %v4920
      %v4924 = vsel %vm707, %v4920, %v4922
      %4927 = vrot.lane.b32.xlu0 %v4901, 112
      %v4928 = vpop.permute.xlu0 %4927
      %4929 = vrot.lane.b32.xlu0 %v4902, 112
      %v4930 = vpop.permute.xlu0 %4929
      %v4931 = vsel %vm719, %v714, %v4928
      %v4932 = vsel %vm719, %v4928, %v4930
      %4933 = vrot.lane.b32.xlu0 %v4895, 111
      %v4934 = vpop.permute.xlu0 %4933
      %4935 = vrot.lane.b32.xlu0 %v4896, 111
      %v4936 = vpop.permute.xlu0 %4935
      %v4937 = vsel %vm617, %v4934, %v4936
      %4940 = vrot.lane.b32.xlu0 %v4903, 110
      %v4941 = vpop.permute.xlu0 %4940
      %4942 = vrot.lane.b32.xlu0 %v4904, 110
      %v4943 = vpop.permute.xlu0 %4942
      %v4944 = vsel %vm736, %v4941, %v4943
      %v4945 = vsel %vm736, %v4943, %v735
      %4948 = vrot.lane.b32.xlu0 %v4905, 96
      %v4949 = vpop.permute.xlu0 %4948
      %4950 = vrot.lane.b32.xlu0 %v4906, 96
      %v4951 = vpop.permute.xlu0 %4950
      %v4952 = vsel %vm748, %v4949, %v4951
      %v4953 = vsel %vm748, %v4951, %v747
      %4954 = vrot.lane.b32.xlu0 %v4895, 95
      %v4955 = vpop.permute.xlu0 %4954
      %4956 = vrot.lane.b32.xlu0 %v4896, 95
      %v4957 = vpop.permute.xlu0 %4956
      %v4958 = vsel %vm757, %v4955, %v4957
      %v4959 = vsel %vm757, %v4957, %v756
      %4962 = vrot.lane.b32.xlu0 %v4907, 94
      %v4963 = vpop.permute.xlu0 %4962
      %4964 = vrot.lane.b32.xlu0 %v4908, 94
      %v4965 = vpop.permute.xlu0 %4964
      %v4966 = vsel %vm769, %v4963, %v4965
      %v4967 = vsel %vm769, %v4965, %v768
      %s4968 = scalar_lea.vmem %s6, 96
      %v4969 = vld [vmem:[%s4968] sm:$0xff]
      %s4970 = scalar_lea.vmem %s7, 96
      %v4971 = vld [vmem:[%s4970] sm:$0xff]
      %4973 = vset.pattern.permute.xlu0 0
      %4974 = vperm.xlu0 %4973, %v4971
      %v4975 = vpop.permute.xlu0 %4974
      %4979 = vrot.lane.b32.xlu0 %v4897, 17
      %v4980 = vpop.permute.xlu0 %4979
      %4981 = vrot.lane.b32.xlu0 %v4898, 17
      %v4982 = vpop.permute.xlu0 %4981
      %4983 = vrot.lane.b32.xlu0 %v4915, 17
      %v4984 = vpop.permute.xlu0 %4983
      %4985 = vrot.lane.b32.xlu0 %v4916, 17
      %v4986 = vpop.permute.xlu0 %4985
      %4987 = vrot.lane.b32.xlu0 %v4914, 17
      %v4988 = vpop.permute.xlu0 %4987
      %4989 = vrot.lane.b32.xlu0 %v4923, 17
      %v4990 = vpop.permute.xlu0 %4989
      %4991 = vrot.lane.b32.xlu0 %v4924, 17
      %v4992 = vpop.permute.xlu0 %4991
      %4993 = vrot.lane.b32.xlu0 %v4922, 17
      %v4994 = vpop.permute.xlu0 %4993
      %4995 = vrot.lane.b32.xlu0 %v4931, 17
      %v4996 = vpop.permute.xlu0 %4995
      %4997 = vrot.lane.b32.xlu0 %v4932, 17
      %v4998 = vpop.permute.xlu0 %4997
      %4999 = vrot.lane.b32.xlu0 %v4930, 17
      %v5000 = vpop.permute.xlu0 %4999
      %5001 = vrot.lane.b32.xlu0 %v4934, 17
      %v5002 = vpop.permute.xlu0 %5001
      %5003 = vrot.lane.b32.xlu0 %v4937, 17
      %v5004 = vpop.permute.xlu0 %5003
      %5005 = vrot.lane.b32.xlu0 %v4936, 17
      %v5006 = vpop.permute.xlu0 %5005
      %5007 = vrot.lane.b32.xlu0 %v4941, 17
      %v5008 = vpop.permute.xlu0 %5007
      %5009 = vrot.lane.b32.xlu0 %v4944, 17
      %v5010 = vpop.permute.xlu0 %5009
      %5011 = vrot.lane.b32.xlu0 %v4945, 17
      %v5012 = vpop.permute.xlu0 %5011
      %5013 = vrot.lane.b32.xlu0 %v4949, 17
      %v5014 = vpop.permute.xlu0 %5013
      %5015 = vrot.lane.b32.xlu0 %v4952, 17
      %v5016 = vpop.permute.xlu0 %5015
      %5017 = vrot.lane.b32.xlu0 %v4953, 17
      %v5018 = vpop.permute.xlu0 %5017
      %5019 = vrot.lane.b32.xlu0 %v4955, 17
      %v5020 = vpop.permute.xlu0 %5019
      %5021 = vrot.lane.b32.xlu0 %v4958, 17
      %v5022 = vpop.permute.xlu0 %5021
      %5023 = vrot.lane.b32.xlu0 %v4959, 17
      %v5024 = vpop.permute.xlu0 %5023
      %5025 = vrot.lane.b32.xlu0 %v4963, 17
      %v5026 = vpop.permute.xlu0 %5025
      %5027 = vrot.lane.b32.xlu0 %v4966, 17
      %v5028 = vpop.permute.xlu0 %5027
      %5029 = vrot.lane.b32.xlu0 %v4967, 17
      %v5030 = vpop.permute.xlu0 %5029
      %v5031 = vsel %vm679, %v783, %v4980
      %v5032 = vsel %vm679, %v4980, %v4982
      %v5033 = vsel %vm679, %v4984, %v4986
      %v5034 = vsel %vm679, %v4986, %v4988
      %v5035 = vsel %vm679, %v4990, %v4992
      %v5036 = vsel %vm679, %v4992, %v4994
      %v5037 = vsel %vm679, %v4996, %v4998
      %v5038 = vsel %vm679, %v4998, %v5000
      %v5039 = vsel %vm679, %v5002, %v5004
      %v5040 = vsel %vm679, %v5004, %v5006
      %v5041 = vsel %vm679, %v5008, %v5010
      %v5042 = vsel %vm679, %v5010, %v5012
      %v5043 = vsel %vm679, %v5014, %v5016
      %v5044 = vsel %vm679, %v5016, %v5018
      %v5045 = vsel %vm679, %v5020, %v5022
      %v5046 = vsel %vm679, %v5022, %v5024
      %v5047 = vsel %vm679, %v5026, %v5028
      %v5048 = vsel %vm679, %v5028, %v5030
      %v5068 = vsel %vm872, %v4969, 0
      %5070 = vmatprep.subr.mxu0 %v5032
      %5071 = vmatpush1.msra.mxu0 %v5031
      %5072 = vmatprep.subr.mxu0 %v5034
      %5073 = vmatpush1.msra.mxu0 %v5033
      %5074 = vmatprep.subr.mxu0 %v5036
      %5075 = vmatpush1.msra.mxu0 %v5035
      %5076 = vmatprep.subr.mxu0 %v5038
      %5077 = vmatpush1.msra.mxu0 %v5037
      %5078 = vmatprep.subr.mxu0 %v5040
      %5079 = vmatpush1.msra.mxu0 %v5039
      %5080 = vmatprep.subr.mxu0 %v5042
      %5081 = vmatpush1.msra.mxu0 %v5041
      %5082 = vmatprep.subr.mxu0 %v5044
      %5083 = vmatpush1.msra.mxu0 %v5043
      %5084 = vmatprep.subr.mxu0 %v5046
      %5085 = vmatpush1.msra.mxu0 %v5045
      %5086 = vmatprep.subr.mxu0 %v5048
      %5087 = vmatpush1.msra.mxu0 %v5047
      %5088 = vmatprep.subr.mxu0 0.0
      %5089 = vmatpush1.msra.mxu0 0.0
      %5090 = vmatprep.subr.mxu0 0.0
      %5091 = vmatpush1.msra.mxu0 0.0
      %5092 = vmatprep.subr.mxu0 0.0
      %5093 = vmatpush1.msra.mxu0 0.0
      %5094 = vmatprep.subr.mxu0 0.0
      %5095 = vmatpush1.msra.mxu0 0.0
      %5096 = vmatprep.subr.mxu0 0.0
      %5097 = vmatpush1.msra.mxu0 0.0
      %5098 = vmatprep.subr.mxu0 0.0
      %5099 = vmatpush1.msra.mxu0 0.0
      %5100 = vmatprep.subr.mxu0 0.0
      %5101 = vmatpush1.msra.mxu0 0.0
      %5102 = vmatprep.subr.mxu0 0.0
      %5103 = vmatpush1.msra.mxu0 0.0
      %5104 = vmatprep.subr.mxu0 0.0
      %5105 = vmatpush1.msra.mxu0 0.0
      %5106 = vmatprep.subr.mxu0 0.0
      %5107 = vmatpush1.msra.mxu0 0.0
      %5108 = vmatprep.subr.mxu0 0.0
      %5109 = vmatpush1.msra.mxu0 0.0
      %5110 = vmatprep.subr.mxu0 0.0
      %5111 = vmatpush1.msra.mxu0 0.0
      %5112 = vmatprep.subr.mxu0 0.0
      %5113 = vmatpush1.msra.mxu0 0.0
      %5114 = vmatprep.subr.mxu0 0.0
      %5115 = vmatpush1.msra.mxu0 0.0
      %5116 = vmatprep.subr.mxu0 0.0
      %5117 = vmatpush1.msra.mxu0 0.0
      %5118 = vmatprep.subr.mxu0 0.0
      %5119 = vmatpush1.msra.mxu0 0.0
      %5120 = vmatprep.subr.mxu0 0.0
      %5121 = vmatpush1.msra.mxu0 0.0
      %5122 = vmatprep.subr.mxu0 0.0
      %5123 = vmatpush1.msra.mxu0 0.0
      %5124 = vmatprep.subr.mxu0 0.0
      %5125 = vmatpush1.msra.mxu0 0.0
      %5126 = vmatprep.subr.mxu0 0.0
      %5127 = vmatpush1.msra.mxu0 0.0
      %5128 = vmatprep.subr.mxu0 0.0
      %5129 = vmatpush1.msra.mxu0 0.0
      %5130 = vmatprep.subr.mxu0 0.0
      %5131 = vmatpush1.msra.mxu0 0.0
      %5132 = vmatprep.subr.mxu0 0.0
      %5133 = vmatpush1.msra.mxu0 0.0
      %5134 = vmatprep.mubr.f32.mxu0 0.0
      %5135 = vmatmul.mubr.f32.gmra.mrb[0].mxu0 %v5068
      %v5136 = vpop.f32.mrb[0].mxu0
      %v5137 = vadd.f32 %v4975, %v5136
      %v5138 = vpop.f32.mrb[0].mxu0
      %v5139 = vadd.f32 %v4975, %v5138
      %5140 = vdwg.mxu0
      %s5141 = scalar_lea.vmem %s367, 120
      %v5142 = vld [vmem:[%s5141] sm:$0xff]
      %v5143 = vadd.f32 %v5137, %v5139
      %5144 = vadd.xlane.f32.xlu0 %v5143
      %v5145 = vpop.xlane.xlu0 %5144
      %v5146 = vmul.f32 %v5145, %v544
      %v5147 = vsub.f32 %v5137, %v5146
      %v5148 = vsub.f32 %v5139, %v5146
      %v5149 = vmul.f32 %v5147, %v5147
      %v5150 = vmul.f32 %v5148, %v5148
      %v5151 = vadd.f32 %v5149, %v5150
      %5152 = vadd.xlane.f32.xlu0 %v5151
      %v5153 = vpop.xlane.xlu0 %5152
      %v5154 = vmul.f32 %v5153, 0.003921569
      %v5155 = vadd.f32 %v5154, 1e-05
      %v5156 = vrsqrt.pop %v5155
      %v5157 = vmul.f32 %v5147, %v5156
      %v5158 = vmul.f32 %v5148, %v5156
      %5160 = vset.pattern.permute.xlu0 0
      %5161 = vperm.xlu0 %5160, %v5142
      %v5162 = vpop.permute.xlu0 %5161
      %v5164 = vmul.f32 %v5162, %v5157
      %v5165 = vmul.f32 %v5162, %v5158
      %5166 = vset.pattern.permute.xlu0 1
      %5167 = vperm.xlu0 %5166, %v5142
      %v5168 = vpop.permute.xlu0 %5167
      %v5170 = vadd.f32 %v5164, %v5168
      %v5171 = vadd.f32 %v5165, %v5168
      %v5172 = vrot.slane %v5146, 4
      %v5173 = vadd.f32 %v5146, %v5172
      %v5174 = vrot.slane %v5173, 2
      %v5175 = vadd.f32 %v5173, %v5174
      %v5176 = vrot.slane %v5175, 1
      %v5177 = vadd.f32 %v5175, %v5176
      %v5178 = vmul.f32 %v5177, %v577
      %v5179 = vsub.f32 %v5146, %v5178
      %v5180 = vmul.f32 %v5179, %v5179
      %v5181 = vrot.slane %v5180, 4
      %v5182 = vadd.f32 %v5180, %v5181
      %v5183 = vrot.slane %v5182, 2
      %v5184 = vadd.f32 %v5182, %v5183
      %v5185 = vrot.slane %v5184, 1
      %v5186 = vadd.f32 %v5184, %v5185
      %v5187 = vmul.f32 %v5186, 0.14285715
      %v5188 = vmul.f32 %v5142, %v5179
      %v5189 = vadd.f32 %v5187, 1e-05
      %v5190 = vrsqrt.pop %v5189
      %v5191 = vmul.f32 %v5188, %v5190
      %5193 = vset.pattern.permute.xlu0 2
      %5194 = vperm.xlu0 %5193, %v5191
      %v5195 = vpop.permute.xlu0 %5194
      %v5197 = vadd.f32 %v5170, %v5195
      %v5198 = vadd.f32 %v5171, %v5195
      %vm5199 = vcmp.gt.f32.partialorder %v5197, 0.0
      %vm5200 = vcmp.gt.f32.partialorder %v5198, 0.0
      %v5201 = vmin.f32 %v5197, 0.0
      %v5202 = vmin.f32 %v5198, 0.0
      %v5203 = vmul.f32 %v5201, 1.442695
      %v5204 = vpow.pop %v5203
      %v5205 = vmul.f32 %v5202, 1.442695
      %v5206 = vpow.pop %v5205
      %v5207 = vsub.f32 %v5204, 1.0
      %v5208 = vsub.f32 %v5206, 1.0
      %v5209 = vsel %vm5199, %v5197, %v5207
      %v5210 = vsel %vm5200, %v5198, %v5208
      %v5211 = vmul.f32 %v5209, %v618
      %v5212 = vmul.f32 %v5210, %v616
      %v5213 = vmul.f32 %v5209, %v632
      %v5214 = vmul.f32 %v5210, %v630
      %v5215 = vmul.f32 %v5209, %v644
      %v5216 = vmul.f32 %v5210, %v642
      %v5217 = vmul.f32 %v5209, %v652
      %v5218 = vmul.f32 %v5210, %v656
      %v5219 = vmul.f32 %v5209, %v664
      %v5220 = vmul.f32 %v5210, %v668
      %v5221 = vmul.f32 %v5209, %v676
      %v5222 = vmul.f32 %v5210, %v680
      %5225 = vrot.lane.b32.xlu0 %v5209, 127
      %v5226 = vpop.permute.xlu0 %5225
      %5227 = vrot.lane.b32.xlu0 %v5210, 127
      %v5228 = vpop.permute.xlu0 %5227
      %v5229 = vsel %vm643, %v691, %v5226
      %v5230 = vsel %vm643, %v5226, %v5228
      %5233 = vrot.lane.b32.xlu0 %v5213, 126
      %v5234 = vpop.permute.xlu0 %5233
      %5235 = vrot.lane.b32.xlu0 %v5214, 126
      %v5236 = vpop.permute.xlu0 %5235
      %v5237 = vsel %vm707, %v702, %v5234
      %v5238 = vsel %vm707, %v5234, %v5236
      %5241 = vrot.lane.b32.xlu0 %v5215, 112
      %v5242 = vpop.permute.xlu0 %5241
      %5243 = vrot.lane.b32.xlu0 %v5216, 112
      %v5244 = vpop.permute.xlu0 %5243
      %v5245 = vsel %vm719, %v714, %v5242
      %v5246 = vsel %vm719, %v5242, %v5244
      %5247 = vrot.lane.b32.xlu0 %v5209, 111
      %v5248 = vpop.permute.xlu0 %5247
      %5249 = vrot.lane.b32.xlu0 %v5210, 111
      %v5250 = vpop.permute.xlu0 %5249
      %v5251 = vsel %vm617, %v5248, %v5250
      %5254 = vrot.lane.b32.xlu0 %v5217, 110
      %v5255 = vpop.permute.xlu0 %5254
      %5256 = vrot.lane.b32.xlu0 %v5218, 110
      %v5257 = vpop.permute.xlu0 %5256
      %v5258 = vsel %vm736, %v5255, %v5257
      %v5259 = vsel %vm736, %v5257, %v735
      %5262 = vrot.lane.b32.xlu0 %v5219, 96
      %v5263 = vpop.permute.xlu0 %5262
      %5264 = vrot.lane.b32.xlu0 %v5220, 96
      %v5265 = vpop.permute.xlu0 %5264
      %v5266 = vsel %vm748, %v5263, %v5265
      %v5267 = vsel %vm748, %v5265, %v747
      %5268 = vrot.lane.b32.xlu0 %v5209, 95
      %v5269 = vpop.permute.xlu0 %5268
      %5270 = vrot.lane.b32.xlu0 %v5210, 95
      %v5271 = vpop.permute.xlu0 %5270
      %v5272 = vsel %vm757, %v5269, %v5271
      %v5273 = vsel %vm757, %v5271, %v756
      %5276 = vrot.lane.b32.xlu0 %v5221, 94
      %v5277 = vpop.permute.xlu0 %5276
      %5278 = vrot.lane.b32.xlu0 %v5222, 94
      %v5279 = vpop.permute.xlu0 %5278
      %v5280 = vsel %vm769, %v5277, %v5279
      %v5281 = vsel %vm769, %v5279, %v768
      %s5282 = scalar_lea.vmem %s6, 104
      %v5283 = vld [vmem:[%s5282] sm:$0xff]
      %s5284 = scalar_lea.vmem %s7, 104
      %v5285 = vld [vmem:[%s5284] sm:$0xff]
      %5287 = vset.pattern.permute.xlu0 0
      %5288 = vperm.xlu0 %5287, %v5285
      %v5289 = vpop.permute.xlu0 %5288
      %5293 = vrot.lane.b32.xlu0 %v5211, 17
      %v5294 = vpop.permute.xlu0 %5293
      %5295 = vrot.lane.b32.xlu0 %v5212, 17
      %v5296 = vpop.permute.xlu0 %5295
      %5297 = vrot.lane.b32.xlu0 %v5229, 17
      %v5298 = vpop.permute.xlu0 %5297
      %5299 = vrot.lane.b32.xlu0 %v5230, 17
      %v5300 = vpop.permute.xlu0 %5299
      %5301 = vrot.lane.b32.xlu0 %v5228, 17
      %v5302 = vpop.permute.xlu0 %5301
      %5303 = vrot.lane.b32.xlu0 %v5237, 17
      %v5304 = vpop.permute.xlu0 %5303
      %5305 = vrot.lane.b32.xlu0 %v5238, 17
      %v5306 = vpop.permute.xlu0 %5305
      %5307 = vrot.lane.b32.xlu0 %v5236, 17
      %v5308 = vpop.permute.xlu0 %5307
      %5309 = vrot.lane.b32.xlu0 %v5245, 17
      %v5310 = vpop.permute.xlu0 %5309
      %5311 = vrot.lane.b32.xlu0 %v5246, 17
      %v5312 = vpop.permute.xlu0 %5311
      %5313 = vrot.lane.b32.xlu0 %v5244, 17
      %v5314 = vpop.permute.xlu0 %5313
      %5315 = vrot.lane.b32.xlu0 %v5248, 17
      %v5316 = vpop.permute.xlu0 %5315
      %5317 = vrot.lane.b32.xlu0 %v5251, 17
      %v5318 = vpop.permute.xlu0 %5317
      %5319 = vrot.lane.b32.xlu0 %v5250, 17
      %v5320 = vpop.permute.xlu0 %5319
      %5321 = vrot.lane.b32.xlu0 %v5255, 17
      %v5322 = vpop.permute.xlu0 %5321
      %5323 = vrot.lane.b32.xlu0 %v5258, 17
      %v5324 = vpop.permute.xlu0 %5323
      %5325 = vrot.lane.b32.xlu0 %v5259, 17
      %v5326 = vpop.permute.xlu0 %5325
      %5327 = vrot.lane.b32.xlu0 %v5263, 17
      %v5328 = vpop.permute.xlu0 %5327
      %5329 = vrot.lane.b32.xlu0 %v5266, 17
      %v5330 = vpop.permute.xlu0 %5329
      %5331 = vrot.lane.b32.xlu0 %v5267, 17
      %v5332 = vpop.permute.xlu0 %5331
      %5333 = vrot.lane.b32.xlu0 %v5269, 17
      %v5334 = vpop.permute.xlu0 %5333
      %5335 = vrot.lane.b32.xlu0 %v5272, 17
      %v5336 = vpop.permute.xlu0 %5335
      %5337 = vrot.lane.b32.xlu0 %v5273, 17
      %v5338 = vpop.permute.xlu0 %5337
      %5339 = vrot.lane.b32.xlu0 %v5277, 17
      %v5340 = vpop.permute.xlu0 %5339
      %5341 = vrot.lane.b32.xlu0 %v5280, 17
      %v5342 = vpop.permute.xlu0 %5341
      %5343 = vrot.lane.b32.xlu0 %v5281, 17
      %v5344 = vpop.permute.xlu0 %5343
      %v5345 = vsel %vm679, %v783, %v5294
      %v5346 = vsel %vm679, %v5294, %v5296
      %v5347 = vsel %vm679, %v5298, %v5300
      %v5348 = vsel %vm679, %v5300, %v5302
      %v5349 = vsel %vm679, %v5304, %v5306
      %v5350 = vsel %vm679, %v5306, %v5308
      %v5351 = vsel %vm679, %v5310, %v5312
      %v5352 = vsel %vm679, %v5312, %v5314
      %v5353 = vsel %vm679, %v5316, %v5318
      %v5354 = vsel %vm679, %v5318, %v5320
      %v5355 = vsel %vm679, %v5322, %v5324
      %v5356 = vsel %vm679, %v5324, %v5326
      %v5357 = vsel %vm679, %v5328, %v5330
      %v5358 = vsel %vm679, %v5330, %v5332
      %v5359 = vsel %vm679, %v5334, %v5336
      %v5360 = vsel %vm679, %v5336, %v5338
      %v5361 = vsel %vm679, %v5340, %v5342
      %v5362 = vsel %vm679, %v5342, %v5344
      %v5382 = vsel %vm872, %v5283, 0
      %5384 = vmatprep.subr.mxu0 %v5346
      %5385 = vmatpush1.msra.mxu0 %v5345
      %5386 = vmatprep.subr.mxu0 %v5348
      %5387 = vmatpush1.msra.mxu0 %v5347
      %5388 = vmatprep.subr.mxu0 %v5350
      %5389 = vmatpush1.msra.mxu0 %v5349
      %5390 = vmatprep.subr.mxu0 %v5352
      %5391 = vmatpush1.msra.mxu0 %v5351
      %5392 = vmatprep.subr.mxu0 %v5354
      %5393 = vmatpush1.msra.mxu0 %v5353
      %5394 = vmatprep.subr.mxu0 %v5356
      %5395 = vmatpush1.msra.mxu0 %v5355
      %5396 = vmatprep.subr.mxu0 %v5358
      %5397 = vmatpush1.msra.mxu0 %v5357
      %5398 = vmatprep.subr.mxu0 %v5360
      %5399 = vmatpush1.msra.mxu0 %v5359
      %5400 = vmatprep.subr.mxu0 %v5362
      %5401 = vmatpush1.msra.mxu0 %v5361
      %5402 = vmatprep.subr.mxu0 0.0
      %5403 = vmatpush1.msra.mxu0 0.0
      %5404 = vmatprep.subr.mxu0 0.0
      %5405 = vmatpush1.msra.mxu0 0.0
      %5406 = vmatprep.subr.mxu0 0.0
      %5407 = vmatpush1.msra.mxu0 0.0
      %5408 = vmatprep.subr.mxu0 0.0
      %5409 = vmatpush1.msra.mxu0 0.0
      %5410 = vmatprep.subr.mxu0 0.0
      %5411 = vmatpush1.msra.mxu0 0.0
      %5412 = vmatprep.subr.mxu0 0.0
      %5413 = vmatpush1.msra.mxu0 0.0
      %5414 = vmatprep.subr.mxu0 0.0
      %5415 = vmatpush1.msra.mxu0 0.0
      %5416 = vmatprep.subr.mxu0 0.0
      %5417 = vmatpush1.msra.mxu0 0.0
      %5418 = vmatprep.subr.mxu0 0.0
      %5419 = vmatpush1.msra.mxu0 0.0
      %5420 = vmatprep.subr.mxu0 0.0
      %5421 = vmatpush1.msra.mxu0 0.0
      %5422 = vmatprep.subr.mxu0 0.0
      %5423 = vmatpush1.msra.mxu0 0.0
      %5424 = vmatprep.subr.mxu0 0.0
      %5425 = vmatpush1.msra.mxu0 0.0
      %5426 = vmatprep.subr.mxu0 0.0
      %5427 = vmatpush1.msra.mxu0 0.0
      %5428 = vmatprep.subr.mxu0 0.0
      %5429 = vmatpush1.msra.mxu0 0.0
      %5430 = vmatprep.subr.mxu0 0.0
      %5431 = vmatpush1.msra.mxu0 0.0
      %5432 = vmatprep.subr.mxu0 0.0
      %5433 = vmatpush1.msra.mxu0 0.0
      %5434 = vmatprep.subr.mxu0 0.0
      %5435 = vmatpush1.msra.mxu0 0.0
      %5436 = vmatprep.subr.mxu0 0.0
      %5437 = vmatpush1.msra.mxu0 0.0
      %5438 = vmatprep.subr.mxu0 0.0
      %5439 = vmatpush1.msra.mxu0 0.0
      %5440 = vmatprep.subr.mxu0 0.0
      %5441 = vmatpush1.msra.mxu0 0.0
      %5442 = vmatprep.subr.mxu0 0.0
      %5443 = vmatpush1.msra.mxu0 0.0
      %5444 = vmatprep.subr.mxu0 0.0
      %5445 = vmatpush1.msra.mxu0 0.0
      %5446 = vmatprep.subr.mxu0 0.0
      %5447 = vmatpush1.msra.mxu0 0.0
      %5448 = vmatprep.mubr.f32.mxu0 0.0
      %5449 = vmatmul.mubr.f32.gmra.mrb[0].mxu0 %v5382
      %v5450 = vpop.f32.mrb[0].mxu0
      %v5451 = vadd.f32 %v5289, %v5450
      %v5452 = vpop.f32.mrb[0].mxu0
      %v5453 = vadd.f32 %v5289, %v5452
      %5454 = vdwg.mxu0
      %v5455 = vadd.f32 %v4825, %v5451
      %v5456 = vadd.f32 %v4826, %v5453
      %5457 = vst [vmem:[%s372] sm:$0xff] %v5455
      %5458 = vst [vmem:[%s372 + $0x8] sm:$0xff] %v5456
      %p5459 = scmp.lt.s32.totalorder %s20, 1
      %s5460 = scalar_select %p5459, %s20, 1
      %s5461 = smul.addr %s5460, 2
      %s5462 = smul.addr %s5461, 8
      %s5463 = scalar_lea.vmem %s9, %s5462
      // Predicated region
      $region57: #{refinenet_apply.1} parent=55 // pred_check
        %p5464 = pneg %p242
      $region58: #{refinenet_apply.1} parent=55 // pred_check_branch
        %5466 = sbr.rel (%p5464) target = $region60
      $region59: #{refinenet_apply.1} parent=55 // pred_region
        _
      $region60: #{refinenet_apply.1} parent=55 // pred_fallthru
        _
    $region56: #{refinenet_apply.1} parent=5 // pred_fallthru
      _
    %p5467 = scmp.le.s32.totalorder 2, %s15
    // Predicated region
    $region61: #{refinenet_apply.1} parent=5 // pred_check
      %p5468 = pneg %p5467
    $region62: #{refinenet_apply.1} parent=5 // pred_check_branch
      %5470 = sbr.rel (%p5468) target = $region64
    $region63: #{refinenet_apply.1} parent=5 // pred_region
      %s5471 = ssub.s32 %s15, 2
      // Predicated region
      $region65: #{refinenet_apply.1} parent=63 // pred_check
        %p5472 = pneg %p248
      $region66: #{refinenet_apply.1} parent=63 // pred_check_branch
        %5474 = sbr.rel (%p5472) target = $region68
      $region67: #{refinenet_apply.1} parent=63 // pred_region
        %p5475 = scmp.lt.s32.totalorder %s21, 1
        %s5476 = scalar_select %p5475, %s21, 1
        %s5477 = smul.addr %s5476, 2
        %s5478 = smul.addr %s5477, 8
        %s5479 = scalar_lea.vmem %s9, %s5478
      $region68: #{refinenet_apply.1} parent=63 // pred_fallthru
        _
    $region64: #{refinenet_apply.1} parent=5 // pred_fallthru
      _
  $region6: #{refinenet_apply.1} parent=0 // loop_footer
    %s19 = sadd.s32 1, %s15
  $region7: #{refinenet_apply.1} parent=0 // loop_footer_branch
    %14 = sbr.rel target = $region3
  $region8: #{refinenet_apply.1} parent=0 // loop_exit
    _

</llo_original>
